<compile_context>
chip_gen: v6e
topology: v6e:2x2x1
jax: 0.10.0
libtpu: 0.0.40
codegen_flags: <defaults>
</compile_context>

<pallas_src>
import math
import functools

import numpy as np
import jax
import jax.numpy as jnp
from jax.experimental import pallas as pl
from jax.experimental.pallas import tpu as pltpu

# ---- MIND hyperparameters (PyTorch defaults) --------------------------------
NL = 9                      # non_local_region_size
P = 7                       # patch_size
N = 3                       # neighbor_size
SIGMA2 = 3.0 * 3.0          # gaussian_patch_sigma ** 2
PAD_NL = (NL - 1) // 2      # 4
PAD_P = (P - 1) // 2        # 3
PAD_N = (N - 1) // 2        # 1
EPS = 1e-8

NLL = NL * NL               # 81 non-local channels
NN = N * N                  # 9 neighbor channels
BQ = 4                      # batch elements per grid step (4 inputs + 4 targets = 8 sublanes)


def _round_up(x, m):
    return ((x + m - 1) // m) * m


# Gaussian patch weights (used by the pure-JAX reference only)
GAUSS = [[math.exp(-math.sqrt((x - PAD_P) ** 2 + (y - PAD_P) ** 2) / SIGMA2)
          for y in range(P)] for x in range(P)]


# ---- Host-side constant tables ----------------------------------------------
def _build_tables(H, W):
    """Shift offsets + dense conv matrices in the row-gap ("gapped") layout.

    Gapped layout: pixel (h, w) lives at flat index h*S + w with S = W + 2*PAD_NL;
    the trailing 2*PAD_NL lanes of each row are zeros, so any shift with
    |dj| <= PAD_NL that crosses a row boundary reads an exact zero (matching
    torch's zero padding).  The conv matrices map gapped SOURCE indices to
    compact (HW) DESTINATION indices; gap-source rows are zero.
    """
    S = W + 2 * PAD_NL
    HW, HWg = H * W, H * S
    hc = np.repeat(np.arange(H), W)          # compact-pixel h coordinate
    wc = np.tile(np.arange(W), H)            # compact-pixel w coordinate
    g_of_c = hc * S + wc                     # gapped flat index of each real pixel

    dh = hc[:, None] - hc[None, :]
    dw = wc[:, None] - wc[None, :]
    inwin = (np.abs(dh) <= PAD_P) & (np.abs(dw) <= PAD_P)
    kg_c = np.where(
        inwin,
        np.exp(-np.sqrt(dh.astype(np.float64) ** 2 + dw ** 2) / SIGMA2),
        0.0).astype(np.float32)              # Gaussian 7x7 weights (src, dst)
    ko_c = inwin.astype(np.float32)          # all-ones 7x7 weights

    kg_g = np.zeros((HWg, HW), np.float32)   # gapped-src x compact-dst
    ko_g = np.zeros((HWg, HW), np.float32)
    kg_g[g_of_c] = kg_c                      # gap-source rows stay zero
    ko_g[g_of_c] = ko_c

    # one-hot conv shifts (torch convention) as gapped flat offsets
    s_shifts = tuple((i % NL - PAD_NL) * S + (i // NL - PAD_NL) for i in range(NLL))
    n_shifts = tuple((j % N - PAD_N) * S + (j // N - PAD_N) for j in range(NN))
    # every 3x3 shift is one of the 9x9 shifts (offsets are injective for S>8):
    n_slot = tuple(n_shifts.index(s) if s in n_shifts else -1 for s in s_shifts)
    return S, s_shifts, n_slot, kg_g, ko_g


# ---- Pallas kernel -----------------------------------------------------------
def _mind_loss_kernel(HW, HWg, lpad, s_shifts, n_slot,
                      wg_ref, wo_ref, img_ref, out_ref, d2_ref, nb_ref):
    """One batch chunk: MIND for 4 inputs + 4 targets, L1 partial sum.

    img_ref: (8, L) f32  — sublanes 0..3 inputs, 4..7 targets (gapped rows,
                           zero-padded by >= max|shift| lanes on both sides)
    wg_ref:  (2*HWg, 2*HW) bf16 — fused [[kg_hi, kg_lo], [kg_hi, 0]]
    wo_ref:  (2*HWg, HW)   bf16 — fused [ko; ko]
    d2_ref:  (NLL*8, HWg) f32 scratch;  nb_ref: (NN*8, HWg) f32 scratch
    """
    img = img_ref[...]                       # hoist once (feedback #7)
    orig = img[:, lpad:lpad + HWg]           # 128-aligned lane slice

    # image_shifter (81 one-hot 9x9 shifts): full (8, HWg) vector ops, no masks
    for i in range(NLL):
        o = lpad + s_shifts[i]
        sh = img[:, o:o + HWg]               # static lane slice of resident value
        d = sh - orig                        # OOB reads hit exact zeros (gaps/pads)
        d2_ref[8 * i:8 * (i + 1), :] = d * d
        j = n_slot[i]
        if j >= 0:                           # shift doubles as a 3x3 neighbor
            nb_ref[8 * j:8 * (j + 1), :] = sh

    def split_bf16(x):                       # compensated bf16 operand split
        hi = x.astype(jnp.bfloat16)
        lo = (x - hi.astype(jnp.float32)).astype(jnp.bfloat16)
        return hi, lo

    # Gaussian 7x7 depthwise conv of all 81*8 rows == ONE MXU matmul.
    # [xh | xl] @ [[kg_hi, kg_lo], [kg_hi, 0]]  ->  [(xh+xl)@kg_hi , xh@kg_lo]
    xh, xl = split_bf16(d2_ref[...])
    xk = jnp.concatenate([xh, xl], axis=1)                       # (648, 2*HWg)
    p = jnp.dot(xk, wg_ref[...], preferred_element_type=jnp.float32)
    dx = (p[:, :HW] + p[:, HW:]).reshape(NLL, 8, HW)             # (81, 8, HW)

    # all-ones 7x7 depthwise conv of the 9*8 neighbor rows == ONE MXU matmul.
    nh, nlo = split_bf16(nb_ref[...])
    nk = jnp.concatenate([nh, nlo], axis=1)                      # (72, 2*HWg)
    nb_sum = jnp.dot(nk, wo_ref[...],
                     preferred_element_type=jnp.float32).reshape(NN, 8, HW)

    # Vx = unbiased variance across the 9 neighbor channels (torch .var)
    mean = jnp.mean(nb_sum, axis=0, keepdims=True)
    var = jnp.sum((nb_sum - mean) ** 2, axis=0, keepdims=True) / (NN - 1)

    # Exact divides: only 2/pixel vs 81 exps/pixel on the EUP; approx recip was
    # flagged as a tolerance risk through the near-cancelling MIND difference.
    inv_var = 1.0 / (var + EPS)
    nume = jnp.exp(-dx * inv_var)                                # (81, 8, HW)
    inv_den = 1.0 / jnp.sum(nume, axis=0, keepdims=True)
    mind = nume * inv_den

    # inputs (sublanes 0..3) vs targets (sublanes 4..7); dummy pairs cancel.
    diff = mind[:, :BQ, :] - mind[:, BQ:, :]
    out_ref[...] = jnp.full((1, 128), jnp.sum(jnp.abs(diff)), dtype=jnp.float32)


# ---- Wrapper -----------------------------------------------------------------
def mind_loss_pallas(inp, tar):
    """MINDLoss.forward(input, target) — NCHW (B, 1, H, W) float32 inputs."""
    B, C, H, W = inp.shape
    assert C == 1 and tar.shape == inp.shape
    HW = H * W

    S, s_shifts, n_slot, kg_g, ko_g = _build_tables(H, W)
    HWg = H * S
    halo = PAD_NL * S + PAD_NL                       # max |flat shift|
    lpad = _round_up(halo, 128)                      # keep orig slice lane-aligned
    L = _round_up(lpad + HWg + halo, 128)

    n_steps = _round_up(B, BQ) // BQ
    B_pad = n_steps * BQ

    def prep(x):                                     # (B,1,H,W) -> (n_steps, BQ, HWg)
        g = jnp.pad(x[:, 0].astype(jnp.float32),
                    ((0, B_pad - B), (0, 0), (0, 2 * PAD_NL)))   # row gaps = zeros
        return g.reshape(n_steps, BQ, HWg)

    # sublanes 0..3 = inputs of a batch chunk, 4..7 = matching targets
    imgs = jnp.concatenate([prep(inp), prep(tar)], axis=1)       # (n_steps, 8, HWg)
    imgs = jnp.pad(imgs, ((0, 0), (0, 0), (lpad, L - lpad - HWg)))

    # Host-fused compensated-bf16 conv weights (grid-invariant).
    kg = jnp.asarray(kg_g)
    kg_hi = kg.astype(jnp.bfloat16)
    kg_lo = (kg - kg_hi.astype(jnp.float32)).astype(jnp.bfloat16)
    ko_hi = jnp.asarray(ko_g).astype(jnp.bfloat16)               # 0/1: exact in bf16
    wg_big = jnp.concatenate(
        [jnp.concatenate([kg_hi, kg_lo], axis=1),
         jnp.concatenate([kg_hi, jnp.zeros_like(kg_lo)], axis=1)], axis=0)
    wo_big = jnp.concatenate([ko_hi, ko_hi], axis=0)

    kernel = functools.partial(_mind_loss_kernel, HW, HWg, lpad, s_shifts, n_slot)

    def const_spec(shape):
        return pl.BlockSpec(shape, lambda g: (0, 0))

    partials = pl.pallas_call(
        kernel,
        out_shape=jax.ShapeDtypeStruct((n_steps, 1, 128), jnp.float32),
        grid=(n_steps,),
        in_specs=[
            const_spec((2 * HWg, 2 * HW)),           # fused Gaussian conv matrix
            const_spec((2 * HWg, HW)),               # fused all-ones conv matrix
            pl.BlockSpec((None, 8, L), lambda g: (g, 0, 0)),   # image chunk
        ],
        out_specs=pl.BlockSpec((None, 1, 128), lambda g: (g, 0, 0)),
        scratch_shapes=[
            pltpu.VMEM((NLL * 8, HWg), jnp.float32),  # 81-channel squared diffs
            pltpu.VMEM((NN * 8, HWg), jnp.float32),   # 9 neighbor channels
        ],
        compiler_params=pltpu.CompilerParams(
            dimension_semantics=("parallel",),        # per-chunk partials, no carry
            vmem_limit_bytes=48 * 1024 * 1024),       # <= v7x 64 MiB physical VMEM
    )(wg_big, wo_big, imgs)

    return jnp.sum(partials[:, 0, 0]) / (H * W * NLL)


# ---- Pure-JAX reference (for correctness check only) ------------------------
def _mind_ref(x):
    B, _, H, W = x.shape
    img = x[:, 0].astype(jnp.float32)
    pnl = jnp.pad(img, ((0, 0), (PAD_NL, PAD_NL), (PAD_NL, PAD_NL)))
    diff2 = jnp.stack(
        [(pnl[:, i % NL:i % NL + H, i // NL:i // NL + W] - img) ** 2
         for i in range(NL * NL)], axis=1)
    d2p = jnp.pad(diff2, ((0, 0), (0, 0), (PAD_P, PAD_P), (PAD_P, PAD_P)))
    dx = sum(GAUSS[kx][ky] * d2p[:, :, kx:kx + H, ky:ky + W]
             for kx in range(P) for ky in range(P))
    pn = jnp.pad(img, ((0, 0), (PAD_N, PAD_N), (PAD_N, PAD_N)))
    nbs = jnp.stack([pn[:, j % N:j % N + H, j // N:j // N + W]
                     for j in range(N * N)], axis=1)
    nbp = jnp.pad(nbs, ((0, 0), (0, 0), (PAD_P, PAD_P), (PAD_P, PAD_P)))
    nb_sum = sum(nbp[:, :, kx:kx + H, ky:ky + W]
                 for kx in range(P) for ky in range(P))
    var = jnp.var(nb_sum, axis=1, ddof=1, keepdims=True)
    nume = jnp.exp(-dx / (var + EPS))
    return nume / jnp.sum(nume, axis=1, keepdims=True)


def mind_loss_ref(inp, tar):
    _, _, H, W = inp.shape
    return jnp.sum(jnp.abs(_mind_ref(inp) - _mind_ref(tar))) / (H * W * NL * NL)


# ---- Main --------------------------------------------------------------------
if __name__ == "__main__":
    key = jax.random.PRNGKey(0)
    k1, k2 = jax.random.split(key)
    B, H, W = 2, 16, 16
    inp = jax.random.normal(k1, (B, 1, H, W), dtype=jnp.float32)
    tar = jax.random.normal(k2, (B, 1, H, W), dtype=jnp.float32)

    loss = jax.block_until_ready(mind_loss_pallas(inp, tar))
    ref = jax.block_until_ready(mind_loss_ref(inp, tar))
    # Tolerance allows for the compensated-bf16 MXU matmuls vs the pure-f32
    # VPU reference (same numerics as the previously validated version).
    np.testing.assert_allclose(np.asarray(loss), np.asarray(ref),
                               rtol=2e-3, atol=1e-7)
    print("KERNEL_OK")
</pallas_src>

<mosaic_0001>
module attributes {stable_mosaic.version = 11 : i64} {
  func.func @_mind_loss_kernel(%arg0: i32, %arg1: memref<768x512xbf16, #tpu.memory_space<vmem>>, %arg2: memref<768x256xbf16, #tpu.memory_space<vmem>>, %arg3: memref<1x8x640xf32, #tpu.memory_space<vmem>>, %arg4: memref<1x1x128xf32, #tpu.memory_space<vmem>>, %arg5: memref<648x384xf32, #tpu.memory_space<vmem>>, %arg6: memref<72x384xf32, #tpu.memory_space<vmem>>) attributes {dimension_semantics = [#tpu.dimension_semantics<parallel>], iteration_bounds = array<i64: 1>, scalar_prefetch = 0 : i64, scratch_operands = 2 : i64, tpu.core_type = #tpu.core_type<tc>, window_params = [{pipeline_mode = #tpu.pipeline_mode<synchronous>, transform_indices = @transform_0, window_bounds = array<i64: 768, 512>}, {pipeline_mode = #tpu.pipeline_mode<synchronous>, transform_indices = @transform_1, window_bounds = array<i64: 768, 256>}, {transform_indices = @transform_2, window_bounds = array<i64: 1, 8, 640>}, {transform_indices = @transform_3, window_bounds = array<i64: 1, 1, 128>}]} {
    %c0 = arith.constant 0 : index
    %c0_0 = arith.constant 0 : index
    %c0_1 = arith.constant 0 : index
    %0 = vector.load %arg3[%c0, %c0_0, %c0_1] : memref<1x8x640xf32, #tpu.memory_space<vmem>>, vector<1x8x640xf32>
    %1 = vector.shape_cast %0 : vector<1x8x640xf32> to vector<8x640xf32>
    %2 = vector.extract_strided_slice %1 {offsets = [0, 128], sizes = [8, 384], strides = [1, 1]} : vector<8x640xf32> to vector<8x384xf32>
    %3 = vector.extract_strided_slice %1 {offsets = [0, 28], sizes = [8, 384], strides = [1, 1]} : vector<8x640xf32> to vector<8x384xf32>
    %4 = arith.subf %3, %2 : vector<8x384xf32>
    %5 = arith.mulf %4, %4 : vector<8x384xf32>
    %c0_2 = arith.constant 0 : index
    %c0_3 = arith.constant 0 : index
    %6 = vector.load %arg5[%c0_2, %c0_3] : memref<648x384xf32, #tpu.memory_space<vmem>>, vector<8x384xf32>
    tpu.vector_store %arg5[%c0_2, %c0_3], %5 {strides = array<i32>} : memref<648x384xf32, #tpu.memory_space<vmem>>, vector<8x384xf32>,
    %7 = vector.extract_strided_slice %1 {offsets = [0, 52], sizes = [8, 384], strides = [1, 1]} : vector<8x640xf32> to vector<8x384xf32>
    %8 = arith.subf %7, %2 : vector<8x384xf32>
    %9 = arith.mulf %8, %8 : vector<8x384xf32>
    %c8 = arith.constant 8 : index
    %c0_4 = arith.constant 0 : index
    %10 = vector.load %arg5[%c8, %c0_4] : memref<648x384xf32, #tpu.memory_space<vmem>>, vector<8x384xf32>
    tpu.vector_store %arg5[%c8, %c0_4], %9 {strides = array<i32>} : memref<648x384xf32, #tpu.memory_space<vmem>>, vector<8x384xf32>,
    %11 = vector.extract_strided_slice %1 {offsets = [0, 76], sizes = [8, 384], strides = [1, 1]} : vector<8x640xf32> to vector<8x384xf32>
    %12 = arith.subf %11, %2 : vector<8x384xf32>
    %13 = arith.mulf %12, %12 : vector<8x384xf32>
    %c16 = arith.constant 16 : index
    %c0_5 = arith.constant 0 : index
    %14 = vector.load %arg5[%c16, %c0_5] : memref<648x384xf32, #tpu.memory_space<vmem>>, vector<8x384xf32>
    tpu.vector_store %arg5[%c16, %c0_5], %13 {strides = array<i32>} : memref<648x384xf32, #tpu.memory_space<vmem>>, vector<8x384xf32>,
    %15 = vector.extract_strided_slice %1 {offsets = [0, 100], sizes = [8, 384], strides = [1, 1]} : vector<8x640xf32> to vector<8x384xf32>
    %16 = arith.subf %15, %2 : vector<8x384xf32>
    %17 = arith.mulf %16, %16 : vector<8x384xf32>
    %c24 = arith.constant 24 : index
    %c0_6 = arith.constant 0 : index
    %18 = vector.load %arg5[%c24, %c0_6] : memref<648x384xf32, #tpu.memory_space<vmem>>, vector<8x384xf32>
    tpu.vector_store %arg5[%c24, %c0_6], %17 {strides = array<i32>} : memref<648x384xf32, #tpu.memory_space<vmem>>, vector<8x384xf32>,
    %19 = vector.extract_strided_slice %1 {offsets = [0, 124], sizes = [8, 384], strides = [1, 1]} : vector<8x640xf32> to vector<8x384xf32>
    %20 = arith.subf %19, %2 : vector<8x384xf32>
    %21 = arith.mulf %20, %20 : vector<8x384xf32>
    %c32 = arith.constant 32 : index
    %c0_7 = arith.constant 0 : index
    %22 = vector.load %arg5[%c32, %c0_7] : memref<648x384xf32, #tpu.memory_space<vmem>>, vector<8x384xf32>
    tpu.vector_store %arg5[%c32, %c0_7], %21 {strides = array<i32>} : memref<648x384xf32, #tpu.memory_space<vmem>>, vector<8x384xf32>,
    %23 = vector.extract_strided_slice %1 {offsets = [0, 148], sizes = [8, 384], strides = [1, 1]} : vector<8x640xf32> to vector<8x384xf32>
    %24 = arith.subf %23, %2 : vector<8x384xf32>
    %25 = arith.mulf %24, %24 : vector<8x384xf32>
    %c40 = arith.constant 40 : index
    %c0_8 = arith.constant 0 : index
    %26 = vector.load %arg5[%c40, %c0_8] : memref<648x384xf32, #tpu.memory_space<vmem>>, vector<8x384xf32>
    tpu.vector_store %arg5[%c40, %c0_8], %25 {strides = array<i32>} : memref<648x384xf32, #tpu.memory_space<vmem>>, vector<8x384xf32>,
    %27 = vector.extract_strided_slice %1 {offsets = [0, 172], sizes = [8, 384], strides = [1, 1]} : vector<8x640xf32> to vector<8x384xf32>
    %28 = arith.subf %27, %2 : vector<8x384xf32>
    %29 = arith.mulf %28, %28 : vector<8x384xf32>
    %c48 = arith.constant 48 : index
    %c0_9 = arith.constant 0 : index
    %30 = vector.load %arg5[%c48, %c0_9] : memref<648x384xf32, #tpu.memory_space<vmem>>, vector<8x384xf32>
    tpu.vector_store %arg5[%c48, %c0_9], %29 {strides = array<i32>} : memref<648x384xf32, #tpu.memory_space<vmem>>, vector<8x384xf32>,
    %31 = vector.extract_strided_slice %1 {offsets = [0, 196], sizes = [8, 384], strides = [1, 1]} : vector<8x640xf32> to vector<8x384xf32>
    %32 = arith.subf %31, %2 : vector<8x384xf32>
    %33 = arith.mulf %32, %32 : vector<8x384xf32>
    %c56 = arith.constant 56 : index
    %c0_10 = arith.constant 0 : index
    %34 = vector.load %arg5[%c56, %c0_10] : memref<648x384xf32, #tpu.memory_space<vmem>>, vector<8x384xf32>
    tpu.vector_store %arg5[%c56, %c0_10], %33 {strides = array<i32>} : memref<648x384xf32, #tpu.memory_space<vmem>>, vector<8x384xf32>,
    %35 = vector.extract_strided_slice %1 {offsets = [0, 220], sizes = [8, 384], strides = [1, 1]} : vector<8x640xf32> to vector<8x384xf32>
    %36 = arith.subf %35, %2 : vector<8x384xf32>
    %37 = arith.mulf %36, %36 : vector<8x384xf32>
    %c64 = arith.constant 64 : index
    %c0_11 = arith.constant 0 : index
    %38 = vector.load %arg5[%c64, %c0_11] : memref<648x384xf32, #tpu.memory_space<vmem>>, vector<8x384xf32>
    tpu.vector_store %arg5[%c64, %c0_11], %37 {strides = array<i32>} : memref<648x384xf32, #tpu.memory_space<vmem>>, vector<8x384xf32>,
    %39 = vector.extract_strided_slice %1 {offsets = [0, 29], sizes = [8, 384], strides = [1, 1]} : vector<8x640xf32> to vector<8x384xf32>
    %40 = arith.subf %39, %2 : vector<8x384xf32>
    %41 = arith.mulf %40, %40 : vector<8x384xf32>
    %c72 = arith.constant 72 : index
    %c0_12 = arith.constant 0 : index
    %42 = vector.load %arg5[%c72, %c0_12] : memref<648x384xf32, #tpu.memory_space<vmem>>, vector<8x384xf32>
    tpu.vector_store %arg5[%c72, %c0_12], %41 {strides = array<i32>} : memref<648x384xf32, #tpu.memory_space<vmem>>, vector<8x384xf32>,
    %43 = vector.extract_strided_slice %1 {offsets = [0, 53], sizes = [8, 384], strides = [1, 1]} : vector<8x640xf32> to vector<8x384xf32>
    %44 = arith.subf %43, %2 : vector<8x384xf32>
    %45 = arith.mulf %44, %44 : vector<8x384xf32>
    %c80 = arith.constant 80 : index
    %c0_13 = arith.constant 0 : index
    %46 = vector.load %arg5[%c80, %c0_13] : memref<648x384xf32, #tpu.memory_space<vmem>>, vector<8x384xf32>
    tpu.vector_store %arg5[%c80, %c0_13], %45 {strides = array<i32>} : memref<648x384xf32, #tpu.memory_space<vmem>>, vector<8x384xf32>,
    %47 = vector.extract_strided_slice %1 {offsets = [0, 77], sizes = [8, 384], strides = [1, 1]} : vector<8x640xf32> to vector<8x384xf32>
    %48 = arith.subf %47, %2 : vector<8x384xf32>
    %49 = arith.mulf %48, %48 : vector<8x384xf32>
    %c88 = arith.constant 88 : index
    %c0_14 = arith.constant 0 : index
    %50 = vector.load %arg5[%c88, %c0_14] : memref<648x384xf32, #tpu.memory_space<vmem>>, vector<8x384xf32>
    tpu.vector_store %arg5[%c88, %c0_14], %49 {strides = array<i32>} : memref<648x384xf32, #tpu.memory_space<vmem>>, vector<8x384xf32>,
    %51 = vector.extract_strided_slice %1 {offsets = [0, 101], sizes = [8, 384], strides = [1, 1]} : vector<8x640xf32> to vector<8x384xf32>
    %52 = arith.subf %51, %2 : vector<8x384xf32>
    %53 = arith.mulf %52, %52 : vector<8x384xf32>
    %c96 = arith.constant 96 : index
    %c0_15 = arith.constant 0 : index
    %54 = vector.load %arg5[%c96, %c0_15] : memref<648x384xf32, #tpu.memory_space<vmem>>, vector<8x384xf32>
    tpu.vector_store %arg5[%c96, %c0_15], %53 {strides = array<i32>} : memref<648x384xf32, #tpu.memory_space<vmem>>, vector<8x384xf32>,
    %55 = vector.extract_strided_slice %1 {offsets = [0, 125], sizes = [8, 384], strides = [1, 1]} : vector<8x640xf32> to vector<8x384xf32>
    %56 = arith.subf %55, %2 : vector<8x384xf32>
    %57 = arith.mulf %56, %56 : vector<8x384xf32>
    %c104 = arith.constant 104 : index
    %c0_16 = arith.constant 0 : index
    %58 = vector.load %arg5[%c104, %c0_16] : memref<648x384xf32, #tpu.memory_space<vmem>>, vector<8x384xf32>
    tpu.vector_store %arg5[%c104, %c0_16], %57 {strides = array<i32>} : memref<648x384xf32, #tpu.memory_space<vmem>>, vector<8x384xf32>,
    %59 = vector.extract_strided_slice %1 {offsets = [0, 149], sizes = [8, 384], strides = [1, 1]} : vector<8x640xf32> to vector<8x384xf32>
    %60 = arith.subf %59, %2 : vector<8x384xf32>
    %61 = arith.mulf %60, %60 : vector<8x384xf32>
    %c112 = arith.constant 112 : index
    %c0_17 = arith.constant 0 : index
    %62 = vector.load %arg5[%c112, %c0_17] : memref<648x384xf32, #tpu.memory_space<vmem>>, vector<8x384xf32>
    tpu.vector_store %arg5[%c112, %c0_17], %61 {strides = array<i32>} : memref<648x384xf32, #tpu.memory_space<vmem>>, vector<8x384xf32>,
    %63 = vector.extract_strided_slice %1 {offsets = [0, 173], sizes = [8, 384], strides = [1, 1]} : vector<8x640xf32> to vector<8x384xf32>
    %64 = arith.subf %63, %2 : vector<8x384xf32>
    %65 = arith.mulf %64, %64 : vector<8x384xf32>
    %c120 = arith.constant 120 : index
    %c0_18 = arith.constant 0 : index
    %66 = vector.load %arg5[%c120, %c0_18] : memref<648x384xf32, #tpu.memory_space<vmem>>, vector<8x384xf32>
    tpu.vector_store %arg5[%c120, %c0_18], %65 {strides = array<i32>} : memref<648x384xf32, #tpu.memory_space<vmem>>, vector<8x384xf32>,
    %67 = vector.extract_strided_slice %1 {offsets = [0, 197], sizes = [8, 384], strides = [1, 1]} : vector<8x640xf32> to vector<8x384xf32>
    %68 = arith.subf %67, %2 : vector<8x384xf32>
    %69 = arith.mulf %68, %68 : vector<8x384xf32>
    %c128 = arith.constant 128 : index
    %c0_19 = arith.constant 0 : index
    %70 = vector.load %arg5[%c128, %c0_19] : memref<648x384xf32, #tpu.memory_space<vmem>>, vector<8x384xf32>
    tpu.vector_store %arg5[%c128, %c0_19], %69 {strides = array<i32>} : memref<648x384xf32, #tpu.memory_space<vmem>>, vector<8x384xf32>,
    %71 = vector.extract_strided_slice %1 {offsets = [0, 221], sizes = [8, 384], strides = [1, 1]} : vector<8x640xf32> to vector<8x384xf32>
    %72 = arith.subf %71, %2 : vector<8x384xf32>
    %73 = arith.mulf %72, %72 : vector<8x384xf32>
    %c136 = arith.constant 136 : index
    %c0_20 = arith.constant 0 : index
    %74 = vector.load %arg5[%c136, %c0_20] : memref<648x384xf32, #tpu.memory_space<vmem>>, vector<8x384xf32>
    tpu.vector_store %arg5[%c136, %c0_20], %73 {strides = array<i32>} : memref<648x384xf32, #tpu.memory_space<vmem>>, vector<8x384xf32>,
    %75 = vector.extract_strided_slice %1 {offsets = [0, 30], sizes = [8, 384], strides = [1, 1]} : vector<8x640xf32> to vector<8x384xf32>
    %76 = arith.subf %75, %2 : vector<8x384xf32>
    %77 = arith.mulf %76, %76 : vector<8x384xf32>
    %c144 = arith.constant 144 : index
    %c0_21 = arith.constant 0 : index
    %78 = vector.load %arg5[%c144, %c0_21] : memref<648x384xf32, #tpu.memory_space<vmem>>, vector<8x384xf32>
    tpu.vector_store %arg5[%c144, %c0_21], %77 {strides = array<i32>} : memref<648x384xf32, #tpu.memory_space<vmem>>, vector<8x384xf32>,
    %79 = vector.extract_strided_slice %1 {offsets = [0, 54], sizes = [8, 384], strides = [1, 1]} : vector<8x640xf32> to vector<8x384xf32>
    %80 = arith.subf %79, %2 : vector<8x384xf32>
    %81 = arith.mulf %80, %80 : vector<8x384xf32>
    %c152 = arith.constant 152 : index
    %c0_22 = arith.constant 0 : index
    %82 = vector.load %arg5[%c152, %c0_22] : memref<648x384xf32, #tpu.memory_space<vmem>>, vector<8x384xf32>
    tpu.vector_store %arg5[%c152, %c0_22], %81 {strides = array<i32>} : memref<648x384xf32, #tpu.memory_space<vmem>>, vector<8x384xf32>,
    %83 = vector.extract_strided_slice %1 {offsets = [0, 78], sizes = [8, 384], strides = [1, 1]} : vector<8x640xf32> to vector<8x384xf32>
    %84 = arith.subf %83, %2 : vector<8x384xf32>
    %85 = arith.mulf %84, %84 : vector<8x384xf32>
    %c160 = arith.constant 160 : index
    %c0_23 = arith.constant 0 : index
    %86 = vector.load %arg5[%c160, %c0_23] : memref<648x384xf32, #tpu.memory_space<vmem>>, vector<8x384xf32>
    tpu.vector_store %arg5[%c160, %c0_23], %85 {strides = array<i32>} : memref<648x384xf32, #tpu.memory_space<vmem>>, vector<8x384xf32>,
    %87 = vector.extract_strided_slice %1 {offsets = [0, 102], sizes = [8, 384], strides = [1, 1]} : vector<8x640xf32> to vector<8x384xf32>
    %88 = arith.subf %87, %2 : vector<8x384xf32>
    %89 = arith.mulf %88, %88 : vector<8x384xf32>
    %c168 = arith.constant 168 : index
    %c0_24 = arith.constant 0 : index
    %90 = vector.load %arg5[%c168, %c0_24] : memref<648x384xf32, #tpu.memory_space<vmem>>, vector<8x384xf32>
    tpu.vector_store %arg5[%c168, %c0_24], %89 {strides = array<i32>} : memref<648x384xf32, #tpu.memory_space<vmem>>, vector<8x384xf32>,
    %91 = vector.extract_strided_slice %1 {offsets = [0, 126], sizes = [8, 384], strides = [1, 1]} : vector<8x640xf32> to vector<8x384xf32>
    %92 = arith.subf %91, %2 : vector<8x384xf32>
    %93 = arith.mulf %92, %92 : vector<8x384xf32>
    %c176 = arith.constant 176 : index
    %c0_25 = arith.constant 0 : index
    %94 = vector.load %arg5[%c176, %c0_25] : memref<648x384xf32, #tpu.memory_space<vmem>>, vector<8x384xf32>
    tpu.vector_store %arg5[%c176, %c0_25], %93 {strides = array<i32>} : memref<648x384xf32, #tpu.memory_space<vmem>>, vector<8x384xf32>,
    %95 = vector.extract_strided_slice %1 {offsets = [0, 150], sizes = [8, 384], strides = [1, 1]} : vector<8x640xf32> to vector<8x384xf32>
    %96 = arith.subf %95, %2 : vector<8x384xf32>
    %97 = arith.mulf %96, %96 : vector<8x384xf32>
    %c184 = arith.constant 184 : index
    %c0_26 = arith.constant 0 : index
    %98 = vector.load %arg5[%c184, %c0_26] : memref<648x384xf32, #tpu.memory_space<vmem>>, vector<8x384xf32>
    tpu.vector_store %arg5[%c184, %c0_26], %97 {strides = array<i32>} : memref<648x384xf32, #tpu.memory_space<vmem>>, vector<8x384xf32>,
    %99 = vector.extract_strided_slice %1 {offsets = [0, 174], sizes = [8, 384], strides = [1, 1]} : vector<8x640xf32> to vector<8x384xf32>
    %100 = arith.subf %99, %2 : vector<8x384xf32>
    %101 = arith.mulf %100, %100 : vector<8x384xf32>
    %c192 = arith.constant 192 : index
    %c0_27 = arith.constant 0 : index
    %102 = vector.load %arg5[%c192, %c0_27] : memref<648x384xf32, #tpu.memory_space<vmem>>, vector<8x384xf32>
    tpu.vector_store %arg5[%c192, %c0_27], %101 {strides = array<i32>} : memref<648x384xf32, #tpu.memory_space<vmem>>, vector<8x384xf32>,
    %103 = vector.extract_strided_slice %1 {offsets = [0, 198], sizes = [8, 384], strides = [1, 1]} : vector<8x640xf32> to vector<8x384xf32>
    %104 = arith.subf %103, %2 : vector<8x384xf32>
    %105 = arith.mulf %104, %104 : vector<8x384xf32>
    %c200 = arith.constant 200 : index
    %c0_28 = arith.constant 0 : index
    %106 = vector.load %arg5[%c200, %c0_28] : memref<648x384xf32, #tpu.memory_space<vmem>>, vector<8x384xf32>
    tpu.vector_store %arg5[%c200, %c0_28], %105 {strides = array<i32>} : memref<648x384xf32, #tpu.memory_space<vmem>>, vector<8x384xf32>,
    %107 = vector.extract_strided_slice %1 {offsets = [0, 222], sizes = [8, 384], strides = [1, 1]} : vector<8x640xf32> to vector<8x384xf32>
    %108 = arith.subf %107, %2 : vector<8x384xf32>
    %109 = arith.mulf %108, %108 : vector<8x384xf32>
    %c208 = arith.constant 208 : index
    %c0_29 = arith.constant 0 : index
    %110 = vector.load %arg5[%c208, %c0_29] : memref<648x384xf32, #tpu.memory_space<vmem>>, vector<8x384xf32>
    tpu.vector_store %arg5[%c208, %c0_29], %109 {strides = array<i32>} : memref<648x384xf32, #tpu.memory_space<vmem>>, vector<8x384xf32>,
    %111 = vector.extract_strided_slice %1 {offsets = [0, 31], sizes = [8, 384], strides = [1, 1]} : vector<8x640xf32> to vector<8x384xf32>
    %112 = arith.subf %111, %2 : vector<8x384xf32>
    %113 = arith.mulf %112, %112 : vector<8x384xf32>
    %c216 = arith.constant 216 : index
    %c0_30 = arith.constant 0 : index
    %114 = vector.load %arg5[%c216, %c0_30] : memref<648x384xf32, #tpu.memory_space<vmem>>, vector<8x384xf32>
    tpu.vector_store %arg5[%c216, %c0_30], %113 {strides = array<i32>} : memref<648x384xf32, #tpu.memory_space<vmem>>, vector<8x384xf32>,
    %115 = vector.extract_strided_slice %1 {offsets = [0, 55], sizes = [8, 384], strides = [1, 1]} : vector<8x640xf32> to vector<8x384xf32>
    %116 = arith.subf %115, %2 : vector<8x384xf32>
    %117 = arith.mulf %116, %116 : vector<8x384xf32>
    %c224 = arith.constant 224 : index
    %c0_31 = arith.constant 0 : index
    %118 = vector.load %arg5[%c224, %c0_31] : memref<648x384xf32, #tpu.memory_space<vmem>>, vector<8x384xf32>
    tpu.vector_store %arg5[%c224, %c0_31], %117 {strides = array<i32>} : memref<648x384xf32, #tpu.memory_space<vmem>>, vector<8x384xf32>,
    %119 = vector.extract_strided_slice %1 {offsets = [0, 79], sizes = [8, 384], strides = [1, 1]} : vector<8x640xf32> to vector<8x384xf32>
    %120 = arith.subf %119, %2 : vector<8x384xf32>
    %121 = arith.mulf %120, %120 : vector<8x384xf32>
    %c232 = arith.constant 232 : index
    %c0_32 = arith.constant 0 : index
    %122 = vector.load %arg5[%c232, %c0_32] : memref<648x384xf32, #tpu.memory_space<vmem>>, vector<8x384xf32>
    tpu.vector_store %arg5[%c232, %c0_32], %121 {strides = array<i32>} : memref<648x384xf32, #tpu.memory_space<vmem>>, vector<8x384xf32>,
    %123 = vector.extract_strided_slice %1 {offsets = [0, 103], sizes = [8, 384], strides = [1, 1]} : vector<8x640xf32> to vector<8x384xf32>
    %124 = arith.subf %123, %2 : vector<8x384xf32>
    %125 = arith.mulf %124, %124 : vector<8x384xf32>
    %c240 = arith.constant 240 : index
    %c0_33 = arith.constant 0 : index
    %126 = vector.load %arg5[%c240, %c0_33] : memref<648x384xf32, #tpu.memory_space<vmem>>, vector<8x384xf32>
    tpu.vector_store %arg5[%c240, %c0_33], %125 {strides = array<i32>} : memref<648x384xf32, #tpu.memory_space<vmem>>, vector<8x384xf32>,
    %c0_34 = arith.constant 0 : index
    %c0_35 = arith.constant 0 : index
    %127 = vector.load %arg6[%c0_34, %c0_35] : memref<72x384xf32, #tpu.memory_space<vmem>>, vector<8x384xf32>
    tpu.vector_store %arg6[%c0_34, %c0_35], %123 {strides = array<i32>} : memref<72x384xf32, #tpu.memory_space<vmem>>, vector<8x384xf32>,
    %128 = vector.extract_strided_slice %1 {offsets = [0, 127], sizes = [8, 384], strides = [1, 1]} : vector<8x640xf32> to vector<8x384xf32>
    %129 = arith.subf %128, %2 : vector<8x384xf32>
    %130 = arith.mulf %129, %129 : vector<8x384xf32>
    %c248 = arith.constant 248 : index
    %c0_36 = arith.constant 0 : index
    %131 = vector.load %arg5[%c248, %c0_36] : memref<648x384xf32, #tpu.memory_space<vmem>>, vector<8x384xf32>
    tpu.vector_store %arg5[%c248, %c0_36], %130 {strides = array<i32>} : memref<648x384xf32, #tpu.memory_space<vmem>>, vector<8x384xf32>,
    %c8_37 = arith.constant 8 : index
    %c0_38 = arith.constant 0 : index
    %132 = vector.load %arg6[%c8_37, %c0_38] : memref<72x384xf32, #tpu.memory_space<vmem>>, vector<8x384xf32>
    tpu.vector_store %arg6[%c8_37, %c0_38], %128 {strides = array<i32>} : memref<72x384xf32, #tpu.memory_space<vmem>>, vector<8x384xf32>,
    %133 = vector.extract_strided_slice %1 {offsets = [0, 151], sizes = [8, 384], strides = [1, 1]} : vector<8x640xf32> to vector<8x384xf32>
    %134 = arith.subf %133, %2 : vector<8x384xf32>
    %135 = arith.mulf %134, %134 : vector<8x384xf32>
    %c256 = arith.constant 256 : index
    %c0_39 = arith.constant 0 : index
    %136 = vector.load %arg5[%c256, %c0_39] : memref<648x384xf32, #tpu.memory_space<vmem>>, vector<8x384xf32>
    tpu.vector_store %arg5[%c256, %c0_39], %135 {strides = array<i32>} : memref<648x384xf32, #tpu.memory_space<vmem>>, vector<8x384xf32>,
    %c16_40 = arith.constant 16 : index
    %c0_41 = arith.constant 0 : index
    %137 = vector.load %arg6[%c16_40, %c0_41] : memref<72x384xf32, #tpu.memory_space<vmem>>, vector<8x384xf32>
    tpu.vector_store %arg6[%c16_40, %c0_41], %133 {strides = array<i32>} : memref<72x384xf32, #tpu.memory_space<vmem>>, vector<8x384xf32>,
    %138 = vector.extract_strided_slice %1 {offsets = [0, 175], sizes = [8, 384], strides = [1, 1]} : vector<8x640xf32> to vector<8x384xf32>
    %139 = arith.subf %138, %2 : vector<8x384xf32>
    %140 = arith.mulf %139, %139 : vector<8x384xf32>
    %c264 = arith.constant 264 : index
    %c0_42 = arith.constant 0 : index
    %141 = vector.load %arg5[%c264, %c0_42] : memref<648x384xf32, #tpu.memory_space<vmem>>, vector<8x384xf32>
    tpu.vector_store %arg5[%c264, %c0_42], %140 {strides = array<i32>} : memref<648x384xf32, #tpu.memory_space<vmem>>, vector<8x384xf32>,
    %142 = vector.extract_strided_slice %1 {offsets = [0, 199], sizes = [8, 384], strides = [1, 1]} : vector<8x640xf32> to vector<8x384xf32>
    %143 = arith.subf %142, %2 : vector<8x384xf32>
    %144 = arith.mulf %143, %143 : vector<8x384xf32>
    %c272 = arith.constant 272 : index
    %c0_43 = arith.constant 0 : index
    %145 = vector.load %arg5[%c272, %c0_43] : memref<648x384xf32, #tpu.memory_space<vmem>>, vector<8x384xf32>
    tpu.vector_store %arg5[%c272, %c0_43], %144 {strides = array<i32>} : memref<648x384xf32, #tpu.memory_space<vmem>>, vector<8x384xf32>,
    %146 = vector.extract_strided_slice %1 {offsets = [0, 223], sizes = [8, 384], strides = [1, 1]} : vector<8x640xf32> to vector<8x384xf32>
    %147 = arith.subf %146, %2 : vector<8x384xf32>
    %148 = arith.mulf %147, %147 : vector<8x384xf32>
    %c280 = arith.constant 280 : index
    %c0_44 = arith.constant 0 : index
    %149 = vector.load %arg5[%c280, %c0_44] : memref<648x384xf32, #tpu.memory_space<vmem>>, vector<8x384xf32>
    tpu.vector_store %arg5[%c280, %c0_44], %148 {strides = array<i32>} : memref<648x384xf32, #tpu.memory_space<vmem>>, vector<8x384xf32>,
    %150 = vector.extract_strided_slice %1 {offsets = [0, 32], sizes = [8, 384], strides = [1, 1]} : vector<8x640xf32> to vector<8x384xf32>
    %151 = arith.subf %150, %2 : vector<8x384xf32>
    %152 = arith.mulf %151, %151 : vector<8x384xf32>
    %c288 = arith.constant 288 : index
    %c0_45 = arith.constant 0 : index
    %153 = vector.load %arg5[%c288, %c0_45] : memref<648x384xf32, #tpu.memory_space<vmem>>, vector<8x384xf32>
    tpu.vector_store %arg5[%c288, %c0_45], %152 {strides = array<i32>} : memref<648x384xf32, #tpu.memory_space<vmem>>, vector<8x384xf32>,
    %154 = vector.extract_strided_slice %1 {offsets = [0, 56], sizes = [8, 384], strides = [1, 1]} : vector<8x640xf32> to vector<8x384xf32>
    %155 = arith.subf %154, %2 : vector<8x384xf32>
    %156 = arith.mulf %155, %155 : vector<8x384xf32>
    %c296 = arith.constant 296 : index
    %c0_46 = arith.constant 0 : index
    %157 = vector.load %arg5[%c296, %c0_46] : memref<648x384xf32, #tpu.memory_space<vmem>>, vector<8x384xf32>
    tpu.vector_store %arg5[%c296, %c0_46], %156 {strides = array<i32>} : memref<648x384xf32, #tpu.memory_space<vmem>>, vector<8x384xf32>,
    %158 = vector.extract_strided_slice %1 {offsets = [0, 80], sizes = [8, 384], strides = [1, 1]} : vector<8x640xf32> to vector<8x384xf32>
    %159 = arith.subf %158, %2 : vector<8x384xf32>
    %160 = arith.mulf %159, %159 : vector<8x384xf32>
    %c304 = arith.constant 304 : index
    %c0_47 = arith.constant 0 : index
    %161 = vector.load %arg5[%c304, %c0_47] : memref<648x384xf32, #tpu.memory_space<vmem>>, vector<8x384xf32>
    tpu.vector_store %arg5[%c304, %c0_47], %160 {strides = array<i32>} : memref<648x384xf32, #tpu.memory_space<vmem>>, vector<8x384xf32>,
    %162 = vector.extract_strided_slice %1 {offsets = [0, 104], sizes = [8, 384], strides = [1, 1]} : vector<8x640xf32> to vector<8x384xf32>
    %163 = arith.subf %162, %2 : vector<8x384xf32>
    %164 = arith.mulf %163, %163 : vector<8x384xf32>
    %c312 = arith.constant 312 : index
    %c0_48 = arith.constant 0 : index
    %165 = vector.load %arg5[%c312, %c0_48] : memref<648x384xf32, #tpu.memory_space<vmem>>, vector<8x384xf32>
    tpu.vector_store %arg5[%c312, %c0_48], %164 {strides = array<i32>} : memref<648x384xf32, #tpu.memory_space<vmem>>, vector<8x384xf32>,
    %c24_49 = arith.constant 24 : index
    %c0_50 = arith.constant 0 : index
    %166 = vector.load %arg6[%c24_49, %c0_50] : memref<72x384xf32, #tpu.memory_space<vmem>>, vector<8x384xf32>
    tpu.vector_store %arg6[%c24_49, %c0_50], %162 {strides = array<i32>} : memref<72x384xf32, #tpu.memory_space<vmem>>, vector<8x384xf32>,
    %167 = vector.extract_strided_slice %1 {offsets = [0, 128], sizes = [8, 384], strides = [1, 1]} : vector<8x640xf32> to vector<8x384xf32>
    %168 = arith.subf %167, %2 : vector<8x384xf32>
    %169 = arith.mulf %168, %168 : vector<8x384xf32>
    %c320 = arith.constant 320 : index
    %c0_51 = arith.constant 0 : index
    %170 = vector.load %arg5[%c320, %c0_51] : memref<648x384xf32, #tpu.memory_space<vmem>>, vector<8x384xf32>
    tpu.vector_store %arg5[%c320, %c0_51], %169 {strides = array<i32>} : memref<648x384xf32, #tpu.memory_space<vmem>>, vector<8x384xf32>,
    %c32_52 = arith.constant 32 : index
    %c0_53 = arith.constant 0 : index
    %171 = vector.load %arg6[%c32_52, %c0_53] : memref<72x384xf32, #tpu.memory_space<vmem>>, vector<8x384xf32>
    tpu.vector_store %arg6[%c32_52, %c0_53], %167 {strides = array<i32>} : memref<72x384xf32, #tpu.memory_space<vmem>>, vector<8x384xf32>,
    %172 = vector.extract_strided_slice %1 {offsets = [0, 152], sizes = [8, 384], strides = [1, 1]} : vector<8x640xf32> to vector<8x384xf32>
    %173 = arith.subf %172, %2 : vector<8x384xf32>
    %174 = arith.mulf %173, %173 : vector<8x384xf32>
    %c328 = arith.constant 328 : index
    %c0_54 = arith.constant 0 : index
    %175 = vector.load %arg5[%c328, %c0_54] : memref<648x384xf32, #tpu.memory_space<vmem>>, vector<8x384xf32>
    tpu.vector_store %arg5[%c328, %c0_54], %174 {strides = array<i32>} : memref<648x384xf32, #tpu.memory_space<vmem>>, vector<8x384xf32>,
    %c40_55 = arith.constant 40 : index
    %c0_56 = arith.constant 0 : index
    %176 = vector.load %arg6[%c40_55, %c0_56] : memref<72x384xf32, #tpu.memory_space<vmem>>, vector<8x384xf32>
    tpu.vector_store %arg6[%c40_55, %c0_56], %172 {strides = array<i32>} : memref<72x384xf32, #tpu.memory_space<vmem>>, vector<8x384xf32>,
    %177 = vector.extract_strided_slice %1 {offsets = [0, 176], sizes = [8, 384], strides = [1, 1]} : vector<8x640xf32> to vector<8x384xf32>
    %178 = arith.subf %177, %2 : vector<8x384xf32>
    %179 = arith.mulf %178, %178 : vector<8x384xf32>
    %c336 = arith.constant 336 : index
    %c0_57 = arith.constant 0 : index
    %180 = vector.load %arg5[%c336, %c0_57] : memref<648x384xf32, #tpu.memory_space<vmem>>, vector<8x384xf32>
    tpu.vector_store %arg5[%c336, %c0_57], %179 {strides = array<i32>} : memref<648x384xf32, #tpu.memory_space<vmem>>, vector<8x384xf32>,
    %181 = vector.extract_strided_slice %1 {offsets = [0, 200], sizes = [8, 384], strides = [1, 1]} : vector<8x640xf32> to vector<8x384xf32>
    %182 = arith.subf %181, %2 : vector<8x384xf32>
    %183 = arith.mulf %182, %182 : vector<8x384xf32>
    %c344 = arith.constant 344 : index
    %c0_58 = arith.constant 0 : index
    %184 = vector.load %arg5[%c344, %c0_58] : memref<648x384xf32, #tpu.memory_space<vmem>>, vector<8x384xf32>
    tpu.vector_store %arg5[%c344, %c0_58], %183 {strides = array<i32>} : memref<648x384xf32, #tpu.memory_space<vmem>>, vector<8x384xf32>,
    %185 = vector.extract_strided_slice %1 {offsets = [0, 224], sizes = [8, 384], strides = [1, 1]} : vector<8x640xf32> to vector<8x384xf32>
    %186 = arith.subf %185, %2 : vector<8x384xf32>
    %187 = arith.mulf %186, %186 : vector<8x384xf32>
    %c352 = arith.constant 352 : index
    %c0_59 = arith.constant 0 : index
    %188 = vector.load %arg5[%c352, %c0_59] : memref<648x384xf32, #tpu.memory_space<vmem>>, vector<8x384xf32>
    tpu.vector_store %arg5[%c352, %c0_59], %187 {strides = array<i32>} : memref<648x384xf32, #tpu.memory_space<vmem>>, vector<8x384xf32>,
    %189 = vector.extract_strided_slice %1 {offsets = [0, 33], sizes = [8, 384], strides = [1, 1]} : vector<8x640xf32> to vector<8x384xf32>
    %190 = arith.subf %189, %2 : vector<8x384xf32>
    %191 = arith.mulf %190, %190 : vector<8x384xf32>
    %c360 = arith.constant 360 : index
    %c0_60 = arith.constant 0 : index
    %192 = vector.load %arg5[%c360, %c0_60] : memref<648x384xf32, #tpu.memory_space<vmem>>, vector<8x384xf32>
    tpu.vector_store %arg5[%c360, %c0_60], %191 {strides = array<i32>} : memref<648x384xf32, #tpu.memory_space<vmem>>, vector<8x384xf32>,
    %193 = vector.extract_strided_slice %1 {offsets = [0, 57], sizes = [8, 384], strides = [1, 1]} : vector<8x640xf32> to vector<8x384xf32>
    %194 = arith.subf %193, %2 : vector<8x384xf32>
    %195 = arith.mulf %194, %194 : vector<8x384xf32>
    %c368 = arith.constant 368 : index
    %c0_61 = arith.constant 0 : index
    %196 = vector.load %arg5[%c368, %c0_61] : memref<648x384xf32, #tpu.memory_space<vmem>>, vector<8x384xf32>
    tpu.vector_store %arg5[%c368, %c0_61], %195 {strides = array<i32>} : memref<648x384xf32, #tpu.memory_space<vmem>>, vector<8x384xf32>,
    %197 = vector.extract_strided_slice %1 {offsets = [0, 81], sizes = [8, 384], strides = [1, 1]} : vector<8x640xf32> to vector<8x384xf32>
    %198 = arith.subf %197, %2 : vector<8x384xf32>
    %199 = arith.mulf %198, %198 : vector<8x384xf32>
    %c376 = arith.constant 376 : index
    %c0_62 = arith.constant 0 : index
    %200 = vector.load %arg5[%c376, %c0_62] : memref<648x384xf32, #tpu.memory_space<vmem>>, vector<8x384xf32>
    tpu.vector_store %arg5[%c376, %c0_62], %199 {strides = array<i32>} : memref<648x384xf32, #tpu.memory_space<vmem>>, vector<8x384xf32>,
    %201 = vector.extract_strided_slice %1 {offsets = [0, 105], sizes = [8, 384], strides = [1, 1]} : vector<8x640xf32> to vector<8x384xf32>
    %202 = arith.subf %201, %2 : vector<8x384xf32>
    %203 = arith.mulf %202, %202 : vector<8x384xf32>
    %c384 = arith.constant 384 : index
    %c0_63 = arith.constant 0 : index
    %204 = vector.load %arg5[%c384, %c0_63] : memref<648x384xf32, #tpu.memory_space<vmem>>, vector<8x384xf32>
    tpu.vector_store %arg5[%c384, %c0_63], %203 {strides = array<i32>} : memref<648x384xf32, #tpu.memory_space<vmem>>, vector<8x384xf32>,
    %c48_64 = arith.constant 48 : index
    %c0_65 = arith.constant 0 : index
    %205 = vector.load %arg6[%c48_64, %c0_65] : memref<72x384xf32, #tpu.memory_space<vmem>>, vector<8x384xf32>
    tpu.vector_store %arg6[%c48_64, %c0_65], %201 {strides = array<i32>} : memref<72x384xf32, #tpu.memory_space<vmem>>, vector<8x384xf32>,
    %206 = vector.extract_strided_slice %1 {offsets = [0, 129], sizes = [8, 384], strides = [1, 1]} : vector<8x640xf32> to vector<8x384xf32>
    %207 = arith.subf %206, %2 : vector<8x384xf32>
    %208 = arith.mulf %207, %207 : vector<8x384xf32>
    %c392 = arith.constant 392 : index
    %c0_66 = arith.constant 0 : index
    %209 = vector.load %arg5[%c392, %c0_66] : memref<648x384xf32, #tpu.memory_space<vmem>>, vector<8x384xf32>
    tpu.vector_store %arg5[%c392, %c0_66], %208 {strides = array<i32>} : memref<648x384xf32, #tpu.memory_space<vmem>>, vector<8x384xf32>,
    %c56_67 = arith.constant 56 : index
    %c0_68 = arith.constant 0 : index
    %210 = vector.load %arg6[%c56_67, %c0_68] : memref<72x384xf32, #tpu.memory_space<vmem>>, vector<8x384xf32>
    tpu.vector_store %arg6[%c56_67, %c0_68], %206 {strides = array<i32>} : memref<72x384xf32, #tpu.memory_space<vmem>>, vector<8x384xf32>,
    %211 = vector.extract_strided_slice %1 {offsets = [0, 153], sizes = [8, 384], strides = [1, 1]} : vector<8x640xf32> to vector<8x384xf32>
    %212 = arith.subf %211, %2 : vector<8x384xf32>
    %213 = arith.mulf %212, %212 : vector<8x384xf32>
    %c400 = arith.constant 400 : index
    %c0_69 = arith.constant 0 : index
    %214 = vector.load %arg5[%c400, %c0_69] : memref<648x384xf32, #tpu.memory_space<vmem>>, vector<8x384xf32>
    tpu.vector_store %arg5[%c400, %c0_69], %213 {strides = array<i32>} : memref<648x384xf32, #tpu.memory_space<vmem>>, vector<8x384xf32>,
    %c64_70 = arith.constant 64 : index
    %c0_71 = arith.constant 0 : index
    %215 = vector.load %arg6[%c64_70, %c0_71] : memref<72x384xf32, #tpu.memory_space<vmem>>, vector<8x384xf32>
    tpu.vector_store %arg6[%c64_70, %c0_71], %211 {strides = array<i32>} : memref<72x384xf32, #tpu.memory_space<vmem>>, vector<8x384xf32>,
    %216 = vector.extract_strided_slice %1 {offsets = [0, 177], sizes = [8, 384], strides = [1, 1]} : vector<8x640xf32> to vector<8x384xf32>
    %217 = arith.subf %216, %2 : vector<8x384xf32>
    %218 = arith.mulf %217, %217 : vector<8x384xf32>
    %c408 = arith.constant 408 : index
    %c0_72 = arith.constant 0 : index
    %219 = vector.load %arg5[%c408, %c0_72] : memref<648x384xf32, #tpu.memory_space<vmem>>, vector<8x384xf32>
    tpu.vector_store %arg5[%c408, %c0_72], %218 {strides = array<i32>} : memref<648x384xf32, #tpu.memory_space<vmem>>, vector<8x384xf32>,
    %220 = vector.extract_strided_slice %1 {offsets = [0, 201], sizes = [8, 384], strides = [1, 1]} : vector<8x640xf32> to vector<8x384xf32>
    %221 = arith.subf %220, %2 : vector<8x384xf32>
    %222 = arith.mulf %221, %221 : vector<8x384xf32>
    %c416 = arith.constant 416 : index
    %c0_73 = arith.constant 0 : index
    %223 = vector.load %arg5[%c416, %c0_73] : memref<648x384xf32, #tpu.memory_space<vmem>>, vector<8x384xf32>
    tpu.vector_store %arg5[%c416, %c0_73], %222 {strides = array<i32>} : memref<648x384xf32, #tpu.memory_space<vmem>>, vector<8x384xf32>,
    %224 = vector.extract_strided_slice %1 {offsets = [0, 225], sizes = [8, 384], strides = [1, 1]} : vector<8x640xf32> to vector<8x384xf32>
    %225 = arith.subf %224, %2 : vector<8x384xf32>
    %226 = arith.mulf %225, %225 : vector<8x384xf32>
    %c424 = arith.constant 424 : index
    %c0_74 = arith.constant 0 : index
    %227 = vector.load %arg5[%c424, %c0_74] : memref<648x384xf32, #tpu.memory_space<vmem>>, vector<8x384xf32>
    tpu.vector_store %arg5[%c424, %c0_74], %226 {strides = array<i32>} : memref<648x384xf32, #tpu.memory_space<vmem>>, vector<8x384xf32>,
    %228 = vector.extract_strided_slice %1 {offsets = [0, 34], sizes = [8, 384], strides = [1, 1]} : vector<8x640xf32> to vector<8x384xf32>
    %229 = arith.subf %228, %2 : vector<8x384xf32>
    %230 = arith.mulf %229, %229 : vector<8x384xf32>
    %c432 = arith.constant 432 : index
    %c0_75 = arith.constant 0 : index
    %231 = vector.load %arg5[%c432, %c0_75] : memref<648x384xf32, #tpu.memory_space<vmem>>, vector<8x384xf32>
    tpu.vector_store %arg5[%c432, %c0_75], %230 {strides = array<i32>} : memref<648x384xf32, #tpu.memory_space<vmem>>, vector<8x384xf32>,
    %232 = vector.extract_strided_slice %1 {offsets = [0, 58], sizes = [8, 384], strides = [1, 1]} : vector<8x640xf32> to vector<8x384xf32>
    %233 = arith.subf %232, %2 : vector<8x384xf32>
    %234 = arith.mulf %233, %233 : vector<8x384xf32>
    %c440 = arith.constant 440 : index
    %c0_76 = arith.constant 0 : index
    %235 = vector.load %arg5[%c440, %c0_76] : memref<648x384xf32, #tpu.memory_space<vmem>>, vector<8x384xf32>
    tpu.vector_store %arg5[%c440, %c0_76], %234 {strides = array<i32>} : memref<648x384xf32, #tpu.memory_space<vmem>>, vector<8x384xf32>,
    %236 = vector.extract_strided_slice %1 {offsets = [0, 82], sizes = [8, 384], strides = [1, 1]} : vector<8x640xf32> to vector<8x384xf32>
    %237 = arith.subf %236, %2 : vector<8x384xf32>
    %238 = arith.mulf %237, %237 : vector<8x384xf32>
    %c448 = arith.constant 448 : index
    %c0_77 = arith.constant 0 : index
    %239 = vector.load %arg5[%c448, %c0_77] : memref<648x384xf32, #tpu.memory_space<vmem>>, vector<8x384xf32>
    tpu.vector_store %arg5[%c448, %c0_77], %238 {strides = array<i32>} : memref<648x384xf32, #tpu.memory_space<vmem>>, vector<8x384xf32>,
    %240 = vector.extract_strided_slice %1 {offsets = [0, 106], sizes = [8, 384], strides = [1, 1]} : vector<8x640xf32> to vector<8x384xf32>
    %241 = arith.subf %240, %2 : vector<8x384xf32>
    %242 = arith.mulf %241, %241 : vector<8x384xf32>
    %c456 = arith.constant 456 : index
    %c0_78 = arith.constant 0 : index
    %243 = vector.load %arg5[%c456, %c0_78] : memref<648x384xf32, #tpu.memory_space<vmem>>, vector<8x384xf32>
    tpu.vector_store %arg5[%c456, %c0_78], %242 {strides = array<i32>} : memref<648x384xf32, #tpu.memory_space<vmem>>, vector<8x384xf32>,
    %244 = vector.extract_strided_slice %1 {offsets = [0, 130], sizes = [8, 384], strides = [1, 1]} : vector<8x640xf32> to vector<8x384xf32>
    %245 = arith.subf %244, %2 : vector<8x384xf32>
    %246 = arith.mulf %245, %245 : vector<8x384xf32>
    %c464 = arith.constant 464 : index
    %c0_79 = arith.constant 0 : index
    %247 = vector.load %arg5[%c464, %c0_79] : memref<648x384xf32, #tpu.memory_space<vmem>>, vector<8x384xf32>
    tpu.vector_store %arg5[%c464, %c0_79], %246 {strides = array<i32>} : memref<648x384xf32, #tpu.memory_space<vmem>>, vector<8x384xf32>,
    %248 = vector.extract_strided_slice %1 {offsets = [0, 154], sizes = [8, 384], strides = [1, 1]} : vector<8x640xf32> to vector<8x384xf32>
    %249 = arith.subf %248, %2 : vector<8x384xf32>
    %250 = arith.mulf %249, %249 : vector<8x384xf32>
    %c472 = arith.constant 472 : index
    %c0_80 = arith.constant 0 : index
    %251 = vector.load %arg5[%c472, %c0_80] : memref<648x384xf32, #tpu.memory_space<vmem>>, vector<8x384xf32>
    tpu.vector_store %arg5[%c472, %c0_80], %250 {strides = array<i32>} : memref<648x384xf32, #tpu.memory_space<vmem>>, vector<8x384xf32>,
    %252 = vector.extract_strided_slice %1 {offsets = [0, 178], sizes = [8, 384], strides = [1, 1]} : vector<8x640xf32> to vector<8x384xf32>
    %253 = arith.subf %252, %2 : vector<8x384xf32>
    %254 = arith.mulf %253, %253 : vector<8x384xf32>
    %c480 = arith.constant 480 : index
    %c0_81 = arith.constant 0 : index
    %255 = vector.load %arg5[%c480, %c0_81] : memref<648x384xf32, #tpu.memory_space<vmem>>, vector<8x384xf32>
    tpu.vector_store %arg5[%c480, %c0_81], %254 {strides = array<i32>} : memref<648x384xf32, #tpu.memory_space<vmem>>, vector<8x384xf32>,
    %256 = vector.extract_strided_slice %1 {offsets = [0, 202], sizes = [8, 384], strides = [1, 1]} : vector<8x640xf32> to vector<8x384xf32>
    %257 = arith.subf %256, %2 : vector<8x384xf32>
    %258 = arith.mulf %257, %257 : vector<8x384xf32>
    %c488 = arith.constant 488 : index
    %c0_82 = arith.constant 0 : index
    %259 = vector.load %arg5[%c488, %c0_82] : memref<648x384xf32, #tpu.memory_space<vmem>>, vector<8x384xf32>
    tpu.vector_store %arg5[%c488, %c0_82], %258 {strides = array<i32>} : memref<648x384xf32, #tpu.memory_space<vmem>>, vector<8x384xf32>,
    %260 = vector.extract_strided_slice %1 {offsets = [0, 226], sizes = [8, 384], strides = [1, 1]} : vector<8x640xf32> to vector<8x384xf32>
    %261 = arith.subf %260, %2 : vector<8x384xf32>
    %262 = arith.mulf %261, %261 : vector<8x384xf32>
    %c496 = arith.constant 496 : index
    %c0_83 = arith.constant 0 : index
    %263 = vector.load %arg5[%c496, %c0_83] : memref<648x384xf32, #tpu.memory_space<vmem>>, vector<8x384xf32>
    tpu.vector_store %arg5[%c496, %c0_83], %262 {strides = array<i32>} : memref<648x384xf32, #tpu.memory_space<vmem>>, vector<8x384xf32>,
    %264 = vector.extract_strided_slice %1 {offsets = [0, 35], sizes = [8, 384], strides = [1, 1]} : vector<8x640xf32> to vector<8x384xf32>
    %265 = arith.subf %264, %2 : vector<8x384xf32>
    %266 = arith.mulf %265, %265 : vector<8x384xf32>
    %c504 = arith.constant 504 : index
    %c0_84 = arith.constant 0 : index
    %267 = vector.load %arg5[%c504, %c0_84] : memref<648x384xf32, #tpu.memory_space<vmem>>, vector<8x384xf32>
    tpu.vector_store %arg5[%c504, %c0_84], %266 {strides = array<i32>} : memref<648x384xf32, #tpu.memory_space<vmem>>, vector<8x384xf32>,
    %268 = vector.extract_strided_slice %1 {offsets = [0, 59], sizes = [8, 384], strides = [1, 1]} : vector<8x640xf32> to vector<8x384xf32>
    %269 = arith.subf %268, %2 : vector<8x384xf32>
    %270 = arith.mulf %269, %269 : vector<8x384xf32>
    %c512 = arith.constant 512 : index
    %c0_85 = arith.constant 0 : index
    %271 = vector.load %arg5[%c512, %c0_85] : memref<648x384xf32, #tpu.memory_space<vmem>>, vector<8x384xf32>
    tpu.vector_store %arg5[%c512, %c0_85], %270 {strides = array<i32>} : memref<648x384xf32, #tpu.memory_space<vmem>>, vector<8x384xf32>,
    %272 = vector.extract_strided_slice %1 {offsets = [0, 83], sizes = [8, 384], strides = [1, 1]} : vector<8x640xf32> to vector<8x384xf32>
    %273 = arith.subf %272, %2 : vector<8x384xf32>
    %274 = arith.mulf %273, %273 : vector<8x384xf32>
    %c520 = arith.constant 520 : index
    %c0_86 = arith.constant 0 : index
    %275 = vector.load %arg5[%c520, %c0_86] : memref<648x384xf32, #tpu.memory_space<vmem>>, vector<8x384xf32>
    tpu.vector_store %arg5[%c520, %c0_86], %274 {strides = array<i32>} : memref<648x384xf32, #tpu.memory_space<vmem>>, vector<8x384xf32>,
    %276 = vector.extract_strided_slice %1 {offsets = [0, 107], sizes = [8, 384], strides = [1, 1]} : vector<8x640xf32> to vector<8x384xf32>
    %277 = arith.subf %276, %2 : vector<8x384xf32>
    %278 = arith.mulf %277, %277 : vector<8x384xf32>
    %c528 = arith.constant 528 : index
    %c0_87 = arith.constant 0 : index
    %279 = vector.load %arg5[%c528, %c0_87] : memref<648x384xf32, #tpu.memory_space<vmem>>, vector<8x384xf32>
    tpu.vector_store %arg5[%c528, %c0_87], %278 {strides = array<i32>} : memref<648x384xf32, #tpu.memory_space<vmem>>, vector<8x384xf32>,
    %280 = vector.extract_strided_slice %1 {offsets = [0, 131], sizes = [8, 384], strides = [1, 1]} : vector<8x640xf32> to vector<8x384xf32>
    %281 = arith.subf %280, %2 : vector<8x384xf32>
    %282 = arith.mulf %281, %281 : vector<8x384xf32>
    %c536 = arith.constant 536 : index
    %c0_88 = arith.constant 0 : index
    %283 = vector.load %arg5[%c536, %c0_88] : memref<648x384xf32, #tpu.memory_space<vmem>>, vector<8x384xf32>
    tpu.vector_store %arg5[%c536, %c0_88], %282 {strides = array<i32>} : memref<648x384xf32, #tpu.memory_space<vmem>>, vector<8x384xf32>,
    %284 = vector.extract_strided_slice %1 {offsets = [0, 155], sizes = [8, 384], strides = [1, 1]} : vector<8x640xf32> to vector<8x384xf32>
    %285 = arith.subf %284, %2 : vector<8x384xf32>
    %286 = arith.mulf %285, %285 : vector<8x384xf32>
    %c544 = arith.constant 544 : index
    %c0_89 = arith.constant 0 : index
    %287 = vector.load %arg5[%c544, %c0_89] : memref<648x384xf32, #tpu.memory_space<vmem>>, vector<8x384xf32>
    tpu.vector_store %arg5[%c544, %c0_89], %286 {strides = array<i32>} : memref<648x384xf32, #tpu.memory_space<vmem>>, vector<8x384xf32>,
    %288 = vector.extract_strided_slice %1 {offsets = [0, 179], sizes = [8, 384], strides = [1, 1]} : vector<8x640xf32> to vector<8x384xf32>
    %289 = arith.subf %288, %2 : vector<8x384xf32>
    %290 = arith.mulf %289, %289 : vector<8x384xf32>
    %c552 = arith.constant 552 : index
    %c0_90 = arith.constant 0 : index
    %291 = vector.load %arg5[%c552, %c0_90] : memref<648x384xf32, #tpu.memory_space<vmem>>, vector<8x384xf32>
    tpu.vector_store %arg5[%c552, %c0_90], %290 {strides = array<i32>} : memref<648x384xf32, #tpu.memory_space<vmem>>, vector<8x384xf32>,
    %292 = vector.extract_strided_slice %1 {offsets = [0, 203], sizes = [8, 384], strides = [1, 1]} : vector<8x640xf32> to vector<8x384xf32>
    %293 = arith.subf %292, %2 : vector<8x384xf32>
    %294 = arith.mulf %293, %293 : vector<8x384xf32>
    %c560 = arith.constant 560 : index
    %c0_91 = arith.constant 0 : index
    %295 = vector.load %arg5[%c560, %c0_91] : memref<648x384xf32, #tpu.memory_space<vmem>>, vector<8x384xf32>
    tpu.vector_store %arg5[%c560, %c0_91], %294 {strides = array<i32>} : memref<648x384xf32, #tpu.memory_space<vmem>>, vector<8x384xf32>,
    %296 = vector.extract_strided_slice %1 {offsets = [0, 227], sizes = [8, 384], strides = [1, 1]} : vector<8x640xf32> to vector<8x384xf32>
    %297 = arith.subf %296, %2 : vector<8x384xf32>
    %298 = arith.mulf %297, %297 : vector<8x384xf32>
    %c568 = arith.constant 568 : index
    %c0_92 = arith.constant 0 : index
    %299 = vector.load %arg5[%c568, %c0_92] : memref<648x384xf32, #tpu.memory_space<vmem>>, vector<8x384xf32>
    tpu.vector_store %arg5[%c568, %c0_92], %298 {strides = array<i32>} : memref<648x384xf32, #tpu.memory_space<vmem>>, vector<8x384xf32>,
    %300 = vector.extract_strided_slice %1 {offsets = [0, 36], sizes = [8, 384], strides = [1, 1]} : vector<8x640xf32> to vector<8x384xf32>
    %301 = arith.subf %300, %2 : vector<8x384xf32>
    %302 = arith.mulf %301, %301 : vector<8x384xf32>
    %c576 = arith.constant 576 : index
    %c0_93 = arith.constant 0 : index
    %303 = vector.load %arg5[%c576, %c0_93] : memref<648x384xf32, #tpu.memory_space<vmem>>, vector<8x384xf32>
    tpu.vector_store %arg5[%c576, %c0_93], %302 {strides = array<i32>} : memref<648x384xf32, #tpu.memory_space<vmem>>, vector<8x384xf32>,
    %304 = vector.extract_strided_slice %1 {offsets = [0, 60], sizes = [8, 384], strides = [1, 1]} : vector<8x640xf32> to vector<8x384xf32>
    %305 = arith.subf %304, %2 : vector<8x384xf32>
    %306 = arith.mulf %305, %305 : vector<8x384xf32>
    %c584 = arith.constant 584 : index
    %c0_94 = arith.constant 0 : index
    %307 = vector.load %arg5[%c584, %c0_94] : memref<648x384xf32, #tpu.memory_space<vmem>>, vector<8x384xf32>
    tpu.vector_store %arg5[%c584, %c0_94], %306 {strides = array<i32>} : memref<648x384xf32, #tpu.memory_space<vmem>>, vector<8x384xf32>,
    %308 = vector.extract_strided_slice %1 {offsets = [0, 84], sizes = [8, 384], strides = [1, 1]} : vector<8x640xf32> to vector<8x384xf32>
    %309 = arith.subf %308, %2 : vector<8x384xf32>
    %310 = arith.mulf %309, %309 : vector<8x384xf32>
    %c592 = arith.constant 592 : index
    %c0_95 = arith.constant 0 : index
    %311 = vector.load %arg5[%c592, %c0_95] : memref<648x384xf32, #tpu.memory_space<vmem>>, vector<8x384xf32>
    tpu.vector_store %arg5[%c592, %c0_95], %310 {strides = array<i32>} : memref<648x384xf32, #tpu.memory_space<vmem>>, vector<8x384xf32>,
    %312 = vector.extract_strided_slice %1 {offsets = [0, 108], sizes = [8, 384], strides = [1, 1]} : vector<8x640xf32> to vector<8x384xf32>
    %313 = arith.subf %312, %2 : vector<8x384xf32>
    %314 = arith.mulf %313, %313 : vector<8x384xf32>
    %c600 = arith.constant 600 : index
    %c0_96 = arith.constant 0 : index
    %315 = vector.load %arg5[%c600, %c0_96] : memref<648x384xf32, #tpu.memory_space<vmem>>, vector<8x384xf32>
    tpu.vector_store %arg5[%c600, %c0_96], %314 {strides = array<i32>} : memref<648x384xf32, #tpu.memory_space<vmem>>, vector<8x384xf32>,
    %316 = vector.extract_strided_slice %1 {offsets = [0, 132], sizes = [8, 384], strides = [1, 1]} : vector<8x640xf32> to vector<8x384xf32>
    %317 = arith.subf %316, %2 : vector<8x384xf32>
    %318 = arith.mulf %317, %317 : vector<8x384xf32>
    %c608 = arith.constant 608 : index
    %c0_97 = arith.constant 0 : index
    %319 = vector.load %arg5[%c608, %c0_97] : memref<648x384xf32, #tpu.memory_space<vmem>>, vector<8x384xf32>
    tpu.vector_store %arg5[%c608, %c0_97], %318 {strides = array<i32>} : memref<648x384xf32, #tpu.memory_space<vmem>>, vector<8x384xf32>,
    %320 = vector.extract_strided_slice %1 {offsets = [0, 156], sizes = [8, 384], strides = [1, 1]} : vector<8x640xf32> to vector<8x384xf32>
    %321 = arith.subf %320, %2 : vector<8x384xf32>
    %322 = arith.mulf %321, %321 : vector<8x384xf32>
    %c616 = arith.constant 616 : index
    %c0_98 = arith.constant 0 : index
    %323 = vector.load %arg5[%c616, %c0_98] : memref<648x384xf32, #tpu.memory_space<vmem>>, vector<8x384xf32>
    tpu.vector_store %arg5[%c616, %c0_98], %322 {strides = array<i32>} : memref<648x384xf32, #tpu.memory_space<vmem>>, vector<8x384xf32>,
    %324 = vector.extract_strided_slice %1 {offsets = [0, 180], sizes = [8, 384], strides = [1, 1]} : vector<8x640xf32> to vector<8x384xf32>
    %325 = arith.subf %324, %2 : vector<8x384xf32>
    %326 = arith.mulf %325, %325 : vector<8x384xf32>
    %c624 = arith.constant 624 : index
    %c0_99 = arith.constant 0 : index
    %327 = vector.load %arg5[%c624, %c0_99] : memref<648x384xf32, #tpu.memory_space<vmem>>, vector<8x384xf32>
    tpu.vector_store %arg5[%c624, %c0_99], %326 {strides = array<i32>} : memref<648x384xf32, #tpu.memory_space<vmem>>, vector<8x384xf32>,
    %328 = vector.extract_strided_slice %1 {offsets = [0, 204], sizes = [8, 384], strides = [1, 1]} : vector<8x640xf32> to vector<8x384xf32>
    %329 = arith.subf %328, %2 : vector<8x384xf32>
    %330 = arith.mulf %329, %329 : vector<8x384xf32>
    %c632 = arith.constant 632 : index
    %c0_100 = arith.constant 0 : index
    %331 = vector.load %arg5[%c632, %c0_100] : memref<648x384xf32, #tpu.memory_space<vmem>>, vector<8x384xf32>
    tpu.vector_store %arg5[%c632, %c0_100], %330 {strides = array<i32>} : memref<648x384xf32, #tpu.memory_space<vmem>>, vector<8x384xf32>,
    %332 = vector.extract_strided_slice %1 {offsets = [0, 228], sizes = [8, 384], strides = [1, 1]} : vector<8x640xf32> to vector<8x384xf32>
    %333 = arith.subf %332, %2 : vector<8x384xf32>
    %334 = arith.mulf %333, %333 : vector<8x384xf32>
    %c640 = arith.constant 640 : index
    %c0_101 = arith.constant 0 : index
    %335 = vector.load %arg5[%c640, %c0_101] : memref<648x384xf32, #tpu.memory_space<vmem>>, vector<8x384xf32>
    tpu.vector_store %arg5[%c640, %c0_101], %334 {strides = array<i32>} : memref<648x384xf32, #tpu.memory_space<vmem>>, vector<8x384xf32>,
    %c0_102 = arith.constant 0 : index
    %c0_103 = arith.constant 0 : index
    %336 = vector.load %arg5[%c0_102, %c0_103] : memref<648x384xf32, #tpu.memory_space<vmem>>, vector<648x384xf32>
    %337 = arith.truncf %336 : vector<648x384xf32> to vector<648x384xbf16>
    %338 = arith.extf %337 : vector<648x384xbf16> to vector<648x384xf32>
    %339 = arith.subf %336, %338 : vector<648x384xf32>
    %340 = arith.truncf %339 : vector<648x384xf32> to vector<648x384xbf16>
    %341 = tpu.concatenate %337, %340 in 1 : vector<648x384xbf16>, vector<648x384xbf16> -> vector<648x768xbf16>
    %c0_104 = arith.constant 0 : index
    %c0_105 = arith.constant 0 : index
    %342 = vector.load %arg1[%c0_104, %c0_105] : memref<768x512xbf16, #tpu.memory_space<vmem>>, vector<768x512xbf16>
    %cst = arith.constant dense<0.000000e+00> : vector<648x512xf32>
    %343 = tpu.matmul %341, %342, %cst {dimension_numbers = #tpu.dot_dimension_numbers<[1], [0], [0], [1], [0, 0, 1, 1], [], []>} : vector<648x768xbf16>, vector<768x512xbf16>, vector<648x512xf32> -> vector<648x512xf32>
    %344 = vector.extract_strided_slice %343 {offsets = [0, 0], sizes = [648, 256], strides = [1, 1]} : vector<648x512xf32> to vector<648x256xf32>
    %345 = vector.extract_strided_slice %343 {offsets = [0, 256], sizes = [648, 256], strides = [1, 1]} : vector<648x512xf32> to vector<648x256xf32>
    %346 = arith.addf %344, %345 : vector<648x256xf32>
    %347 = vector.shape_cast %346 : vector<648x256xf32> to vector<81x8x256xf32>
    %c0_106 = arith.constant 0 : index
    %c0_107 = arith.constant 0 : index
    %348 = vector.load %arg6[%c0_106, %c0_107] : memref<72x384xf32, #tpu.memory_space<vmem>>, vector<72x384xf32>
    %349 = arith.truncf %348 : vector<72x384xf32> to vector<72x384xbf16>
    %350 = arith.extf %349 : vector<72x384xbf16> to vector<72x384xf32>
    %351 = arith.subf %348, %350 : vector<72x384xf32>
    %352 = arith.truncf %351 : vector<72x384xf32> to vector<72x384xbf16>
    %353 = tpu.concatenate %349, %352 in 1 : vector<72x384xbf16>, vector<72x384xbf16> -> vector<72x768xbf16>
    %c0_108 = arith.constant 0 : index
    %c0_109 = arith.constant 0 : index
    %354 = vector.load %arg2[%c0_108, %c0_109] : memref<768x256xbf16, #tpu.memory_space<vmem>>, vector<768x256xbf16>
    %cst_110 = arith.constant dense<0.000000e+00> : vector<72x256xf32>
    %355 = tpu.matmul %353, %354, %cst_110 {dimension_numbers = #tpu.dot_dimension_numbers<[1], [0], [0], [1], [0, 0, 1, 1], [], []>} : vector<72x768xbf16>, vector<768x256xbf16>, vector<72x256xf32> -> vector<72x256xf32>
    %356 = vector.shape_cast %355 : vector<72x256xf32> to vector<9x8x256xf32>
    %cst_111 = arith.constant dense<0.000000e+00> : vector<8x256xf32>
    %357 = vector.multi_reduction <add>, %356, %cst_111 [0] : vector<9x8x256xf32> to vector<8x256xf32>
    %358 = vector.shape_cast %357 : vector<8x256xf32> to vector<1x8x256xf32>
    %cst_112 = arith.constant 9.000000e+00 : f32
    %359 = vector.broadcast %cst_112 : f32 to vector<1x8x256xf32>
    %360 = arith.divf %358, %359 : vector<1x8x256xf32>
    %361 = vector.broadcast %360 : vector<1x8x256xf32> to vector<9x8x256xf32>
    %362 = arith.subf %356, %361 : vector<9x8x256xf32>
    %363 = arith.mulf %362, %362 : vector<9x8x256xf32>
    %cst_113 = arith.constant dense<0.000000e+00> : vector<8x256xf32>
    %364 = vector.multi_reduction <add>, %363, %cst_113 [0] : vector<9x8x256xf32> to vector<8x256xf32>
    %365 = vector.shape_cast %364 : vector<8x256xf32> to vector<1x8x256xf32>
    %cst_114 = arith.constant 8.000000e+00 : f32
    %366 = vector.broadcast %cst_114 : f32 to vector<1x8x256xf32>
    %367 = arith.divf %365, %366 : vector<1x8x256xf32>
    %cst_115 = arith.constant 9.99999993E-9 : f32
    %368 = vector.broadcast %cst_115 : f32 to vector<1x8x256xf32>
    %369 = arith.addf %367, %368 : vector<1x8x256xf32>
    %cst_116 = arith.constant 1.000000e+00 : f32
    %370 = vector.broadcast %cst_116 : f32 to vector<1x8x256xf32>
    %371 = arith.divf %370, %369 : vector<1x8x256xf32>
    %cst_117 = arith.constant 0.000000e+00 : f32
    %372 = vector.broadcast %cst_117 : f32 to vector<81x8x256xf32>
    %373 = arith.subf %372, %347 : vector<81x8x256xf32>
    %374 = vector.broadcast %371 : vector<1x8x256xf32> to vector<81x8x256xf32>
    %375 = arith.mulf %373, %374 : vector<81x8x256xf32>
    %376 = math.exp %375 : vector<81x8x256xf32>
    %cst_118 = arith.constant dense<0.000000e+00> : vector<8x256xf32>
    %377 = vector.multi_reduction <add>, %376, %cst_118 [0] : vector<81x8x256xf32> to vector<8x256xf32>
    %378 = vector.shape_cast %377 : vector<8x256xf32> to vector<1x8x256xf32>
    %cst_119 = arith.constant 1.000000e+00 : f32
    %379 = vector.broadcast %cst_119 : f32 to vector<1x8x256xf32>
    %380 = arith.divf %379, %378 : vector<1x8x256xf32>
    %381 = vector.broadcast %380 : vector<1x8x256xf32> to vector<81x8x256xf32>
    %382 = arith.mulf %376, %381 : vector<81x8x256xf32>
    %383 = vector.extract_strided_slice %382 {offsets = [0, 0, 0], sizes = [81, 4, 256], strides = [1, 1, 1]} : vector<81x8x256xf32> to vector<81x4x256xf32>
    %384 = vector.extract_strided_slice %382 {offsets = [0, 4, 0], sizes = [81, 4, 256], strides = [1, 1, 1]} : vector<81x8x256xf32> to vector<81x4x256xf32>
    %385 = arith.subf %383, %384 : vector<81x4x256xf32>
    %386 = math.absf %385 : vector<81x4x256xf32>
    %387 = vector.shape_cast %386 : vector<81x4x256xf32> to vector<1x81x4x256xf32>
    %cst_120 = arith.constant dense<0.000000e+00> : vector<1xf32>
    %388 = vector.multi_reduction <add>, %387, %cst_120 [1, 2, 3] : vector<1x81x4x256xf32> to vector<1xf32>
    %389 = vector.shape_cast %388 : vector<1xf32> to vector<1x1x1x1xf32>
    %390 = vector.extract %389[0, 0, 0, 0] : f32 from vector<1x1x1x1xf32>
    %391 = vector.broadcast %390 : f32 to vector<1x128xf32>
    %c0_121 = arith.constant 0 : index
    %c0_122 = arith.constant 0 : index
    %c0_123 = arith.constant 0 : index
    %392 = vector.load %arg4[%c0_121, %c0_122, %c0_123] : memref<1x1x128xf32, #tpu.memory_space<vmem>>, vector<1x1x128xf32>
    %393 = vector.shape_cast %392 : vector<1x1x128xf32> to vector<1x128xf32>
    %394 = vector.shape_cast %391 : vector<1x128xf32> to vector<1x1x128xf32>
    tpu.vector_store %arg4[%c0_121, %c0_122, %c0_123], %394 {strides = array<i32>} : memref<1x1x128xf32, #tpu.memory_space<vmem>>, vector<1x1x128xf32>,
    return
  }
  func.func @transform_0(%arg0: i32) -> (i32, i32) {
    %c0_i32 = arith.constant 0 : i32
    %c0_i32_0 = arith.constant 0 : i32
    %c0_i32_1 = arith.constant 0 : i32
    return %c0_i32, %c0_i32_0 : i32, i32
  }
  func.func @transform_1(%arg0: i32) -> (i32, i32) {
    %c0_i32 = arith.constant 0 : i32
    %c0_i32_0 = arith.constant 0 : i32
    %c0_i32_1 = arith.constant 0 : i32
    return %c0_i32, %c0_i32_0 : i32, i32
  }
  func.func @transform_2(%arg0: i32) -> (i32, i32, i32) {
    %c0_i32 = arith.constant 0 : i32
    %c0_i32_0 = arith.constant 0 : i32
    %c0_i32_1 = arith.constant 0 : i32
    return %arg0, %c0_i32, %c0_i32_0 : i32, i32, i32
  }
  func.func @transform_3(%arg0: i32) -> (i32, i32, i32) {
    %c0_i32 = arith.constant 0 : i32
    %c0_i32_0 = arith.constant 0 : i32
    %c0_i32_1 = arith.constant 0 : i32
    return %arg0, %c0_i32, %c0_i32_0 : i32, i32, i32
  }
}

</mosaic_0001>

<llo_original>
// kernel: tpu_custom_call.1
$region0: #{tpu_custom_call.1}
  #allocation0 [shape = 'u32[]', space=smem, size = 0x4, offset = 0x4, fixed_abs, tag = 'smem constant byte address 0x4 - core index']
  #allocation1 [shape = 'u32[144,128]{1,0:T(1,128)}', space=vmem, size = 0x12000, scoped, tag = 'internal scratch']
  #allocation2 [shape = 'f32[648,384]{1,0:T(8,128)}', space=vmem, size = 0xf3000, scoped, tag = 'scratch operand']
  #allocation3 [shape = 'f32[72,384]{1,0:T(8,128)}', space=vmem, size = 0x1b000, scoped, tag = 'scratch operand']
  %s0 = inlined_call_operand.hbm [shape: bf16[768,512], index: 0, kind: input, shape index: {}]
  %s1 = inlined_call_operand.hbm [shape: bf16[768,256], index: 1, kind: input, shape index: {}]
  %s2 = inlined_call_operand.hbm [shape: f32[1,8,640], index: 2, kind: input, shape index: {}]
  %s3 = inlined_call_operand.hbm [shape: f32[1,1,128], index: 3, kind: output, shape index: {}]
  %s4 = sld [smem:[#allocation0]]
  $region34: #{tpu_custom_call.1} parent=0
    _
  %s6 = ssub.s32 1, %s4
  %s7 = scalar_select 0, %s6, %s4
  $region1: #{tpu_custom_call.1} parent=0
    #allocation4 [shape = 'u8[786432]{0}', space=vmem, size = 0xc0000, scoped, tag = 'input window, operand 0, single buffered']
    #allocation5 [shape = 's32[1]{0}', space=sflag, size = 0x4, scoped, tag = 'scoped memory for tpu_custom_call.1']
    #allocation6 [shape = 's32[1]{0}', space=sflag, size = 0x4, scoped, tag = 'scoped memory for tpu_custom_call.1']
    #allocation7 [shape = 'u8[393216]{0}', space=vmem, size = 0x60000, scoped, tag = 'input window, operand 1, single buffered']
    #allocation8 [shape = 's32[1]{0}', space=sflag, size = 0x4, scoped, tag = 'scoped memory for tpu_custom_call.1']
    #allocation9 [shape = 'u8[20480]{0}', space=vmem, size = 0x5000, scoped, tag = 'input window, operand 2, single buffered']
    #allocation10 [shape = 'u8[512]{0}', space=vmem, size = 0x400, scoped, tag = 'output window, operand 0, single buffered']
    %8 = vsyncpa [#allocation5], 0
    %9 = vsyncpa [#allocation8], 0
    %10 = vsyncpa [#allocation6], 0
    // Predicated region
    $region2: #{tpu_custom_call.1} parent=1 // pred_check
      _
    $region3: #{tpu_custom_call.1} parent=1 // pred_check_branch
      %12 = sbr.rel (0) target = $region5
    $region4: #{tpu_custom_call.1} parent=1 // pred_region
      %s14 = ssub.s32 24576, 24576
      %15 = vsyncadd [#allocation5], %s14
      %s16 = sshll.u32 [#allocation4], 4
      %s17 = int_to_ptr.vmem [resolvable:$true] %s16
      %22 = dma.hbm_to_vmem [thread:$0]  %s0, 24576, %s17, [#allocation5], 256, 256, 16
    $region5: #{tpu_custom_call.1} parent=1 // pred_fallthru
      _
    // Predicated region
    $region6: #{tpu_custom_call.1} parent=1 // pred_check
      _
    $region7: #{tpu_custom_call.1} parent=1 // pred_check_branch
      %24 = sbr.rel (0) target = $region9
    $region8: #{tpu_custom_call.1} parent=1 // pred_region
      %s26 = ssub.s32 12288, 12288
      %27 = vsyncadd [#allocation8], %s26
      %s28 = sshll.u32 [#allocation7], 4
      %s29 = int_to_ptr.vmem [resolvable:$true] %s28
      %34 = dma.hbm_to_vmem [thread:$0]  %s1, 12288, %s29, [#allocation8], 128, 128, 8
    $region9: #{tpu_custom_call.1} parent=1 // pred_fallthru
      _
    // Predicated region
    $region10: #{tpu_custom_call.1} parent=1 // pred_check
      _
    $region11: #{tpu_custom_call.1} parent=1 // pred_check_branch
      %36 = sbr.rel (0) target = $region13
    $region12: #{tpu_custom_call.1} parent=1 // pred_region
      %s38 = ssub.s32 640, 640
      %39 = vsyncadd [#allocation8], %s38
      %s41 = sshll.u32 [#allocation9], 4
      %s42 = int_to_ptr.vmem [resolvable:$true] %s41
      %44 = dma.hbm_to_vmem [thread:$0]  %s2, 640, %s42, [#allocation8]
    $region13: #{tpu_custom_call.1} parent=1 // pred_fallthru
      _
    // Predicated region
    $region14: #{tpu_custom_call.1} parent=1 // pred_check
      _
    $region15: #{tpu_custom_call.1} parent=1 // pred_check_branch
      %46 = sbr.rel (0) target = $region17
    $region16: #{tpu_custom_call.1} parent=1 // pred_region
      %47 = dma.done [#allocation5], 24576
    $region17: #{tpu_custom_call.1} parent=1 // pred_fallthru
      _
    // Predicated region
    $region18: #{tpu_custom_call.1} parent=1 // pred_check
      _
    $region19: #{tpu_custom_call.1} parent=1 // pred_check_branch
      %49 = sbr.rel (0) target = $region21
    $region20: #{tpu_custom_call.1} parent=1 // pred_region
      %50 = dma.done [#allocation8], 12288
    $region21: #{tpu_custom_call.1} parent=1 // pred_fallthru
      _
    // Predicated region
    $region22: #{tpu_custom_call.1} parent=1 // pred_check
      _
    $region23: #{tpu_custom_call.1} parent=1 // pred_check_branch
      %52 = sbr.rel (0) target = $region25
    $region24: #{tpu_custom_call.1} parent=1 // pred_region
      %53 = dma.done [#allocation8], 640
    $region25: #{tpu_custom_call.1} parent=1 // pred_fallthru
      _
    %v54 = vld [vmem:[#allocation9] sm:$0xff]
    %v55 = vld [vmem:[#allocation9 + $0x8] sm:$0xff]
    %v56 = vld [vmem:[#allocation9 + $0x10] sm:$0xff]
    %v57 = vld [vmem:[#allocation9 + $0x18] sm:$0xff]
    %v58 = vld [vmem:[#allocation9 + $0x20] sm:$0xff]
    %62 = vrot.lane.b32.xlu0 %v55, 28
    %v63 = vpop.permute.xlu0 %62
    %64 = vrot.lane.b32.xlu0 %v56, 28
    %v65 = vpop.permute.xlu0 %64
    %66 = vrot.lane.b32.xlu0 %v57, 28
    %v67 = vpop.permute.xlu0 %66
    %vm68 = vcmask 228352
    %v69 = vsel %vm68, %v63, %v65
    %v70 = vsel %vm68, %v65, %v67
    %v75 = vsub.f32 %v54, %v63
    %v76 = vsub.f32 %v55, %v69
    %v77 = vsub.f32 %v56, %v70
    %v78 = vsub.f32 %v57, %v67
    %v79 = vmul.f32 %v75, %v75
    %v80 = vmul.f32 %v76, %v76
    %v81 = vmul.f32 %v77, %v77
    %v82 = vmul.f32 %v78, %v78
    %87 = vrot.lane.b32.xlu0 %v79, 100
    %v88 = vpop.permute.xlu0 %87
    %89 = vrot.lane.b32.xlu0 %v80, 100
    %v90 = vpop.permute.xlu0 %89
    %91 = vrot.lane.b32.xlu0 %v81, 100
    %v92 = vpop.permute.xlu0 %91
    %93 = vrot.lane.b32.xlu0 %v82, 100
    %v94 = vpop.permute.xlu0 %93
    %vm95 = vcmask 818176
    %v96 = vsel %vm95, %v88, %v90
    %v97 = vsel %vm95, %v90, %v92
    %v98 = vsel %vm95, %v92, %v94
    %102 = vst [vmem:[#allocation2] sm:$0xff] %v96
    %103 = vst [vmem:[#allocation2 + $0x8] sm:$0xff] %v97
    %104 = vst [vmem:[#allocation2 + $0x10] sm:$0xff] %v98
    %105 = vrot.lane.b32.xlu0 %v55, 52
    %v106 = vpop.permute.xlu0 %105
    %107 = vrot.lane.b32.xlu0 %v56, 52
    %v108 = vpop.permute.xlu0 %107
    %109 = vrot.lane.b32.xlu0 %v57, 52
    %v110 = vpop.permute.xlu0 %109
    %vm111 = vcmask 424960
    %v112 = vsel %vm111, %v106, %v108
    %v113 = vsel %vm111, %v108, %v110
    %v118 = vsub.f32 %v54, %v106
    %v119 = vsub.f32 %v55, %v112
    %v120 = vsub.f32 %v56, %v113
    %v121 = vsub.f32 %v57, %v110
    %v122 = vmul.f32 %v118, %v118
    %v123 = vmul.f32 %v119, %v119
    %v124 = vmul.f32 %v120, %v120
    %v125 = vmul.f32 %v121, %v121
    %130 = vrot.lane.b32.xlu0 %v122, 76
    %v131 = vpop.permute.xlu0 %130
    %132 = vrot.lane.b32.xlu0 %v123, 76
    %v133 = vpop.permute.xlu0 %132
    %134 = vrot.lane.b32.xlu0 %v124, 76
    %v135 = vpop.permute.xlu0 %134
    %136 = vrot.lane.b32.xlu0 %v125, 76
    %v137 = vpop.permute.xlu0 %136
    %vm138 = vcmask 621568
    %v139 = vsel %vm138, %v131, %v133
    %v140 = vsel %vm138, %v133, %v135
    %v141 = vsel %vm138, %v135, %v137
    %145 = vst [vmem:[#allocation2 + $0x18] sm:$0xff] %v139
    %146 = vst [vmem:[#allocation2 + $0x20] sm:$0xff] %v140
    %147 = vst [vmem:[#allocation2 + $0x28] sm:$0xff] %v141
    %148 = vrot.lane.b32.xlu0 %v55, 76
    %v149 = vpop.permute.xlu0 %148
    %150 = vrot.lane.b32.xlu0 %v56, 76
    %v151 = vpop.permute.xlu0 %150
    %152 = vrot.lane.b32.xlu0 %v57, 76
    %v153 = vpop.permute.xlu0 %152
    %v154 = vsel %vm138, %v149, %v151
    %v155 = vsel %vm138, %v151, %v153
    %v160 = vsub.f32 %v54, %v149
    %v161 = vsub.f32 %v55, %v154
    %v162 = vsub.f32 %v56, %v155
    %v163 = vsub.f32 %v57, %v153
    %v164 = vmul.f32 %v160, %v160
    %v165 = vmul.f32 %v161, %v161
    %v166 = vmul.f32 %v162, %v162
    %v167 = vmul.f32 %v163, %v163
    %172 = vrot.lane.b32.xlu0 %v164, 52
    %v173 = vpop.permute.xlu0 %172
    %174 = vrot.lane.b32.xlu0 %v165, 52
    %v175 = vpop.permute.xlu0 %174
    %176 = vrot.lane.b32.xlu0 %v166, 52
    %v177 = vpop.permute.xlu0 %176
    %178 = vrot.lane.b32.xlu0 %v167, 52
    %v179 = vpop.permute.xlu0 %178
    %v180 = vsel %vm111, %v173, %v175
    %v181 = vsel %vm111, %v175, %v177
    %v182 = vsel %vm111, %v177, %v179
    %186 = vst [vmem:[#allocation2 + $0x30] sm:$0xff] %v180
    %187 = vst [vmem:[#allocation2 + $0x38] sm:$0xff] %v181
    %188 = vst [vmem:[#allocation2 + $0x40] sm:$0xff] %v182
    %189 = vrot.lane.b32.xlu0 %v55, 100
    %v190 = vpop.permute.xlu0 %189
    %191 = vrot.lane.b32.xlu0 %v56, 100
    %v192 = vpop.permute.xlu0 %191
    %193 = vrot.lane.b32.xlu0 %v57, 100
    %v194 = vpop.permute.xlu0 %193
    %v195 = vsel %vm95, %v190, %v192
    %v196 = vsel %vm95, %v192, %v194
    %v201 = vsub.f32 %v54, %v190
    %v202 = vsub.f32 %v55, %v195
    %v203 = vsub.f32 %v56, %v196
    %v204 = vsub.f32 %v57, %v194
    %v205 = vmul.f32 %v201, %v201
    %v206 = vmul.f32 %v202, %v202
    %v207 = vmul.f32 %v203, %v203
    %v208 = vmul.f32 %v204, %v204
    %213 = vrot.lane.b32.xlu0 %v205, 28
    %v214 = vpop.permute.xlu0 %213
    %215 = vrot.lane.b32.xlu0 %v206, 28
    %v216 = vpop.permute.xlu0 %215
    %217 = vrot.lane.b32.xlu0 %v207, 28
    %v218 = vpop.permute.xlu0 %217
    %219 = vrot.lane.b32.xlu0 %v208, 28
    %v220 = vpop.permute.xlu0 %219
    %v221 = vsel %vm68, %v214, %v216
    %v222 = vsel %vm68, %v216, %v218
    %v223 = vsel %vm68, %v218, %v220
    %227 = vst [vmem:[#allocation2 + $0x48] sm:$0xff] %v221
    %228 = vst [vmem:[#allocation2 + $0x50] sm:$0xff] %v222
    %229 = vst [vmem:[#allocation2 + $0x58] sm:$0xff] %v223
    %230 = vrot.lane.b32.xlu0 %v55, 124
    %v231 = vpop.permute.xlu0 %230
    %232 = vrot.lane.b32.xlu0 %v56, 124
    %v233 = vpop.permute.xlu0 %232
    %234 = vrot.lane.b32.xlu0 %v57, 124
    %v235 = vpop.permute.xlu0 %234
    %vm236 = vcmask 1014784
    %v237 = vsel %vm236, %v231, %v233
    %v238 = vsel %vm236, %v233, %v235
    %v243 = vsub.f32 %v54, %v231
    %v244 = vsub.f32 %v55, %v237
    %v245 = vsub.f32 %v56, %v238
    %v246 = vsub.f32 %v57, %v235
    %v247 = vmul.f32 %v243, %v243
    %v248 = vmul.f32 %v244, %v244
    %v249 = vmul.f32 %v245, %v245
    %v250 = vmul.f32 %v246, %v246
    %255 = vrot.lane.b32.xlu0 %v247, 4
    %v256 = vpop.permute.xlu0 %255
    %257 = vrot.lane.b32.xlu0 %v248, 4
    %v258 = vpop.permute.xlu0 %257
    %259 = vrot.lane.b32.xlu0 %v249, 4
    %v260 = vpop.permute.xlu0 %259
    %261 = vrot.lane.b32.xlu0 %v250, 4
    %v262 = vpop.permute.xlu0 %261
    %vm263 = vcmask 31744
    %v264 = vsel %vm263, %v256, %v258
    %v265 = vsel %vm263, %v258, %v260
    %v266 = vsel %vm263, %v260, %v262
    %270 = vst [vmem:[#allocation2 + $0x60] sm:$0xff] %v264
    %271 = vst [vmem:[#allocation2 + $0x68] sm:$0xff] %v265
    %272 = vst [vmem:[#allocation2 + $0x70] sm:$0xff] %v266
    %273 = vrot.lane.b32.xlu0 %v55, 20
    %v274 = vpop.permute.xlu0 %273
    %275 = vrot.lane.b32.xlu0 %v56, 20
    %v276 = vpop.permute.xlu0 %275
    %277 = vrot.lane.b32.xlu0 %v57, 20
    %v278 = vpop.permute.xlu0 %277
    %vm279 = vcmask 162816
    %v280 = vsel %vm279, %v274, %v276
    %v281 = vsel %vm279, %v276, %v278
    %v286 = vsub.f32 %v55, %v274
    %v287 = vsub.f32 %v56, %v280
    %v288 = vsub.f32 %v57, %v281
    %v289 = vsub.f32 %v58, %v278
    %v290 = vmul.f32 %v286, %v286
    %v291 = vmul.f32 %v287, %v287
    %v292 = vmul.f32 %v288, %v288
    %v293 = vmul.f32 %v289, %v289
    %298 = vrot.lane.b32.xlu0 %v290, 108
    %v299 = vpop.permute.xlu0 %298
    %300 = vrot.lane.b32.xlu0 %v291, 108
    %v301 = vpop.permute.xlu0 %300
    %302 = vrot.lane.b32.xlu0 %v292, 108
    %v303 = vpop.permute.xlu0 %302
    %304 = vrot.lane.b32.xlu0 %v293, 108
    %v305 = vpop.permute.xlu0 %304
    %vm306 = vcmask 883712
    %v307 = vsel %vm306, %v299, %v301
    %v308 = vsel %vm306, %v301, %v303
    %v309 = vsel %vm306, %v303, %v305
    %313 = vst [vmem:[#allocation2 + $0x78] sm:$0xff] %v307
    %314 = vst [vmem:[#allocation2 + $0x80] sm:$0xff] %v308
    %315 = vst [vmem:[#allocation2 + $0x88] sm:$0xff] %v309
    %316 = vrot.lane.b32.xlu0 %v55, 44
    %v317 = vpop.permute.xlu0 %316
    %318 = vrot.lane.b32.xlu0 %v56, 44
    %v319 = vpop.permute.xlu0 %318
    %320 = vrot.lane.b32.xlu0 %v57, 44
    %v321 = vpop.permute.xlu0 %320
    %vm322 = vcmask 359424
    %v323 = vsel %vm322, %v317, %v319
    %v324 = vsel %vm322, %v319, %v321
    %v329 = vsub.f32 %v55, %v317
    %v330 = vsub.f32 %v56, %v323
    %v331 = vsub.f32 %v57, %v324
    %v332 = vsub.f32 %v58, %v321
    %v333 = vmul.f32 %v329, %v329
    %v334 = vmul.f32 %v330, %v330
    %v335 = vmul.f32 %v331, %v331
    %v336 = vmul.f32 %v332, %v332
    %341 = vrot.lane.b32.xlu0 %v333, 84
    %v342 = vpop.permute.xlu0 %341
    %343 = vrot.lane.b32.xlu0 %v334, 84
    %v344 = vpop.permute.xlu0 %343
    %345 = vrot.lane.b32.xlu0 %v335, 84
    %v346 = vpop.permute.xlu0 %345
    %347 = vrot.lane.b32.xlu0 %v336, 84
    %v348 = vpop.permute.xlu0 %347
    %vm349 = vcmask 687104
    %v350 = vsel %vm349, %v342, %v344
    %v351 = vsel %vm349, %v344, %v346
    %v352 = vsel %vm349, %v346, %v348
    %356 = vst [vmem:[#allocation2 + $0x90] sm:$0xff] %v350
    %357 = vst [vmem:[#allocation2 + $0x98] sm:$0xff] %v351
    %358 = vst [vmem:[#allocation2 + $0xa0] sm:$0xff] %v352
    %359 = vrot.lane.b32.xlu0 %v55, 68
    %v360 = vpop.permute.xlu0 %359
    %361 = vrot.lane.b32.xlu0 %v56, 68
    %v362 = vpop.permute.xlu0 %361
    %363 = vrot.lane.b32.xlu0 %v57, 68
    %v364 = vpop.permute.xlu0 %363
    %vm365 = vcmask 556032
    %v366 = vsel %vm365, %v360, %v362
    %v367 = vsel %vm365, %v362, %v364
    %v372 = vsub.f32 %v55, %v360
    %v373 = vsub.f32 %v56, %v366
    %v374 = vsub.f32 %v57, %v367
    %v375 = vsub.f32 %v58, %v364
    %v376 = vmul.f32 %v372, %v372
    %v377 = vmul.f32 %v373, %v373
    %v378 = vmul.f32 %v374, %v374
    %v379 = vmul.f32 %v375, %v375
    %384 = vrot.lane.b32.xlu0 %v376, 60
    %v385 = vpop.permute.xlu0 %384
    %386 = vrot.lane.b32.xlu0 %v377, 60
    %v387 = vpop.permute.xlu0 %386
    %388 = vrot.lane.b32.xlu0 %v378, 60
    %v389 = vpop.permute.xlu0 %388
    %390 = vrot.lane.b32.xlu0 %v379, 60
    %v391 = vpop.permute.xlu0 %390
    %vm392 = vcmask 490496
    %v393 = vsel %vm392, %v385, %v387
    %v394 = vsel %vm392, %v387, %v389
    %v395 = vsel %vm392, %v389, %v391
    %399 = vst [vmem:[#allocation2 + $0xa8] sm:$0xff] %v393
    %400 = vst [vmem:[#allocation2 + $0xb0] sm:$0xff] %v394
    %401 = vst [vmem:[#allocation2 + $0xb8] sm:$0xff] %v395
    %402 = vrot.lane.b32.xlu0 %v55, 92
    %v403 = vpop.permute.xlu0 %402
    %404 = vrot.lane.b32.xlu0 %v56, 92
    %v405 = vpop.permute.xlu0 %404
    %406 = vrot.lane.b32.xlu0 %v57, 92
    %v407 = vpop.permute.xlu0 %406
    %vm408 = vcmask 752640
    %v409 = vsel %vm408, %v403, %v405
    %v410 = vsel %vm408, %v405, %v407
    %v415 = vsub.f32 %v55, %v403
    %v416 = vsub.f32 %v56, %v409
    %v417 = vsub.f32 %v57, %v410
    %v418 = vsub.f32 %v58, %v407
    %v419 = vmul.f32 %v415, %v415
    %v420 = vmul.f32 %v416, %v416
    %v421 = vmul.f32 %v417, %v417
    %v422 = vmul.f32 %v418, %v418
    %427 = vrot.lane.b32.xlu0 %v419, 36
    %v428 = vpop.permute.xlu0 %427
    %429 = vrot.lane.b32.xlu0 %v420, 36
    %v430 = vpop.permute.xlu0 %429
    %431 = vrot.lane.b32.xlu0 %v421, 36
    %v432 = vpop.permute.xlu0 %431
    %433 = vrot.lane.b32.xlu0 %v422, 36
    %v434 = vpop.permute.xlu0 %433
    %vm435 = vcmask 293888
    %v436 = vsel %vm435, %v428, %v430
    %v437 = vsel %vm435, %v430, %v432
    %v438 = vsel %vm435, %v432, %v434
    %442 = vst [vmem:[#allocation2 + $0xc0] sm:$0xff] %v436
    %443 = vst [vmem:[#allocation2 + $0xc8] sm:$0xff] %v437
    %444 = vst [vmem:[#allocation2 + $0xd0] sm:$0xff] %v438
    %445 = vrot.lane.b32.xlu0 %v55, 29
    %v446 = vpop.permute.xlu0 %445
    %447 = vrot.lane.b32.xlu0 %v56, 29
    %v448 = vpop.permute.xlu0 %447
    %449 = vrot.lane.b32.xlu0 %v57, 29
    %v450 = vpop.permute.xlu0 %449
    %vm451 = vcmask 236544
    %v452 = vsel %vm451, %v446, %v448
    %v453 = vsel %vm451, %v448, %v450
    %v458 = vsub.f32 %v54, %v446
    %v459 = vsub.f32 %v55, %v452
    %v460 = vsub.f32 %v56, %v453
    %v461 = vsub.f32 %v57, %v450
    %v462 = vmul.f32 %v458, %v458
    %v463 = vmul.f32 %v459, %v459
    %v464 = vmul.f32 %v460, %v460
    %v465 = vmul.f32 %v461, %v461
    %470 = vrot.lane.b32.xlu0 %v462, 99
    %v471 = vpop.permute.xlu0 %470
    %472 = vrot.lane.b32.xlu0 %v463, 99
    %v473 = vpop.permute.xlu0 %472
    %474 = vrot.lane.b32.xlu0 %v464, 99
    %v475 = vpop.permute.xlu0 %474
    %476 = vrot.lane.b32.xlu0 %v465, 99
    %v477 = vpop.permute.xlu0 %476
    %vm478 = vcmask 809984
    %v479 = vsel %vm478, %v471, %v473
    %v480 = vsel %vm478, %v473, %v475
    %v481 = vsel %vm478, %v475, %v477
    %485 = vst [vmem:[#allocation2 + $0xd8] sm:$0xff] %v479
    %486 = vst [vmem:[#allocation2 + $0xe0] sm:$0xff] %v480
    %487 = vst [vmem:[#allocation2 + $0xe8] sm:$0xff] %v481
    %488 = vrot.lane.b32.xlu0 %v55, 53
    %v489 = vpop.permute.xlu0 %488
    %490 = vrot.lane.b32.xlu0 %v56, 53
    %v491 = vpop.permute.xlu0 %490
    %492 = vrot.lane.b32.xlu0 %v57, 53
    %v493 = vpop.permute.xlu0 %492
    %vm494 = vcmask 433152
    %v495 = vsel %vm494, %v489, %v491
    %v496 = vsel %vm494, %v491, %v493
    %v501 = vsub.f32 %v54, %v489
    %v502 = vsub.f32 %v55, %v495
    %v503 = vsub.f32 %v56, %v496
    %v504 = vsub.f32 %v57, %v493
    %v505 = vmul.f32 %v501, %v501
    %v506 = vmul.f32 %v502, %v502
    %v507 = vmul.f32 %v503, %v503
    %v508 = vmul.f32 %v504, %v504
    %513 = vrot.lane.b32.xlu0 %v505, 75
    %v514 = vpop.permute.xlu0 %513
    %515 = vrot.lane.b32.xlu0 %v506, 75
    %v516 = vpop.permute.xlu0 %515
    %517 = vrot.lane.b32.xlu0 %v507, 75
    %v518 = vpop.permute.xlu0 %517
    %519 = vrot.lane.b32.xlu0 %v508, 75
    %v520 = vpop.permute.xlu0 %519
    %vm521 = vcmask 613376
    %v522 = vsel %vm521, %v514, %v516
    %v523 = vsel %vm521, %v516, %v518
    %v524 = vsel %vm521, %v518, %v520
    %528 = vst [vmem:[#allocation2 + $0xf0] sm:$0xff] %v522
    %529 = vst [vmem:[#allocation2 + $0xf8] sm:$0xff] %v523
    %530 = vst [vmem:[#allocation2 + $0x100] sm:$0xff] %v524
    %531 = vrot.lane.b32.xlu0 %v55, 77
    %v532 = vpop.permute.xlu0 %531
    %533 = vrot.lane.b32.xlu0 %v56, 77
    %v534 = vpop.permute.xlu0 %533
    %535 = vrot.lane.b32.xlu0 %v57, 77
    %v536 = vpop.permute.xlu0 %535
    %vm537 = vcmask 629760
    %v538 = vsel %vm537, %v532, %v534
    %v539 = vsel %vm537, %v534, %v536
    %v544 = vsub.f32 %v54, %v532
    %v545 = vsub.f32 %v55, %v538
    %v546 = vsub.f32 %v56, %v539
    %v547 = vsub.f32 %v57, %v536
    %v548 = vmul.f32 %v544, %v544
    %v549 = vmul.f32 %v545, %v545
    %v550 = vmul.f32 %v546, %v546
    %v551 = vmul.f32 %v547, %v547
    %556 = vrot.lane.b32.xlu0 %v548, 51
    %v557 = vpop.permute.xlu0 %556
    %558 = vrot.lane.b32.xlu0 %v549, 51
    %v559 = vpop.permute.xlu0 %558
    %560 = vrot.lane.b32.xlu0 %v550, 51
    %v561 = vpop.permute.xlu0 %560
    %562 = vrot.lane.b32.xlu0 %v551, 51
    %v563 = vpop.permute.xlu0 %562
    %vm564 = vcmask 416768
    %v565 = vsel %vm564, %v557, %v559
    %v566 = vsel %vm564, %v559, %v561
    %v567 = vsel %vm564, %v561, %v563
    %571 = vst [vmem:[#allocation2 + $0x108] sm:$0xff] %v565
    %572 = vst [vmem:[#allocation2 + $0x110] sm:$0xff] %v566
    %573 = vst [vmem:[#allocation2 + $0x118] sm:$0xff] %v567
    %574 = vrot.lane.b32.xlu0 %v55, 101
    %v575 = vpop.permute.xlu0 %574
    %576 = vrot.lane.b32.xlu0 %v56, 101
    %v577 = vpop.permute.xlu0 %576
    %578 = vrot.lane.b32.xlu0 %v57, 101
    %v579 = vpop.permute.xlu0 %578
    %vm580 = vcmask 826368
    %v581 = vsel %vm580, %v575, %v577
    %v582 = vsel %vm580, %v577, %v579
    %v587 = vsub.f32 %v54, %v575
    %v588 = vsub.f32 %v55, %v581
    %v589 = vsub.f32 %v56, %v582
    %v590 = vsub.f32 %v57, %v579
    %v591 = vmul.f32 %v587, %v587
    %v592 = vmul.f32 %v588, %v588
    %v593 = vmul.f32 %v589, %v589
    %v594 = vmul.f32 %v590, %v590
    %599 = vrot.lane.b32.xlu0 %v591, 27
    %v600 = vpop.permute.xlu0 %599
    %601 = vrot.lane.b32.xlu0 %v592, 27
    %v602 = vpop.permute.xlu0 %601
    %603 = vrot.lane.b32.xlu0 %v593, 27
    %v604 = vpop.permute.xlu0 %603
    %605 = vrot.lane.b32.xlu0 %v594, 27
    %v606 = vpop.permute.xlu0 %605
    %vm607 = vcmask 220160
    %v608 = vsel %vm607, %v600, %v602
    %v609 = vsel %vm607, %v602, %v604
    %v610 = vsel %vm607, %v604, %v606
    %614 = vst [vmem:[#allocation2 + $0x120] sm:$0xff] %v608
    %615 = vst [vmem:[#allocation2 + $0x128] sm:$0xff] %v609
    %616 = vst [vmem:[#allocation2 + $0x130] sm:$0xff] %v610
    %617 = vrot.lane.b32.xlu0 %v55, 125
    %v618 = vpop.permute.xlu0 %617
    %619 = vrot.lane.b32.xlu0 %v56, 125
    %v620 = vpop.permute.xlu0 %619
    %621 = vrot.lane.b32.xlu0 %v57, 125
    %v622 = vpop.permute.xlu0 %621
    %vm623 = vcmask 1022976
    %v624 = vsel %vm623, %v618, %v620
    %v625 = vsel %vm623, %v620, %v622
    %v630 = vsub.f32 %v54, %v618
    %v631 = vsub.f32 %v55, %v624
    %v632 = vsub.f32 %v56, %v625
    %v633 = vsub.f32 %v57, %v622
    %v634 = vmul.f32 %v630, %v630
    %v635 = vmul.f32 %v631, %v631
    %v636 = vmul.f32 %v632, %v632
    %v637 = vmul.f32 %v633, %v633
    %642 = vrot.lane.b32.xlu0 %v634, 3
    %v643 = vpop.permute.xlu0 %642
    %644 = vrot.lane.b32.xlu0 %v635, 3
    %v645 = vpop.permute.xlu0 %644
    %646 = vrot.lane.b32.xlu0 %v636, 3
    %v647 = vpop.permute.xlu0 %646
    %648 = vrot.lane.b32.xlu0 %v637, 3
    %v649 = vpop.permute.xlu0 %648
    %vm650 = vcmask 23552
    %v651 = vsel %vm650, %v643, %v645
    %v652 = vsel %vm650, %v645, %v647
    %v653 = vsel %vm650, %v647, %v649
    %657 = vst [vmem:[#allocation2 + $0x138] sm:$0xff] %v651
    %658 = vst [vmem:[#allocation2 + $0x140] sm:$0xff] %v652
    %659 = vst [vmem:[#allocation2 + $0x148] sm:$0xff] %v653
    %660 = vrot.lane.b32.xlu0 %v55, 21
    %v661 = vpop.permute.xlu0 %660
    %662 = vrot.lane.b32.xlu0 %v56, 21
    %v663 = vpop.permute.xlu0 %662
    %664 = vrot.lane.b32.xlu0 %v57, 21
    %v665 = vpop.permute.xlu0 %664
    %vm666 = vcmask 171008
    %v667 = vsel %vm666, %v661, %v663
    %v668 = vsel %vm666, %v663, %v665
    %v673 = vsub.f32 %v55, %v661
    %v674 = vsub.f32 %v56, %v667
    %v675 = vsub.f32 %v57, %v668
    %v676 = vsub.f32 %v58, %v665
    %v677 = vmul.f32 %v673, %v673
    %v678 = vmul.f32 %v674, %v674
    %v679 = vmul.f32 %v675, %v675
    %v680 = vmul.f32 %v676, %v676
    %685 = vrot.lane.b32.xlu0 %v677, 107
    %v686 = vpop.permute.xlu0 %685
    %687 = vrot.lane.b32.xlu0 %v678, 107
    %v688 = vpop.permute.xlu0 %687
    %689 = vrot.lane.b32.xlu0 %v679, 107
    %v690 = vpop.permute.xlu0 %689
    %691 = vrot.lane.b32.xlu0 %v680, 107
    %v692 = vpop.permute.xlu0 %691
    %vm693 = vcmask 875520
    %v694 = vsel %vm693, %v686, %v688
    %v695 = vsel %vm693, %v688, %v690
    %v696 = vsel %vm693, %v690, %v692
    %700 = vst [vmem:[#allocation2 + $0x150] sm:$0xff] %v694
    %701 = vst [vmem:[#allocation2 + $0x158] sm:$0xff] %v695
    %702 = vst [vmem:[#allocation2 + $0x160] sm:$0xff] %v696
    %703 = vrot.lane.b32.xlu0 %v55, 45
    %v704 = vpop.permute.xlu0 %703
    %705 = vrot.lane.b32.xlu0 %v56, 45
    %v706 = vpop.permute.xlu0 %705
    %707 = vrot.lane.b32.xlu0 %v57, 45
    %v708 = vpop.permute.xlu0 %707
    %vm709 = vcmask 367616
    %v710 = vsel %vm709, %v704, %v706
    %v711 = vsel %vm709, %v706, %v708
    %v716 = vsub.f32 %v55, %v704
    %v717 = vsub.f32 %v56, %v710
    %v718 = vsub.f32 %v57, %v711
    %v719 = vsub.f32 %v58, %v708
    %v720 = vmul.f32 %v716, %v716
    %v721 = vmul.f32 %v717, %v717
    %v722 = vmul.f32 %v718, %v718
    %v723 = vmul.f32 %v719, %v719
    %728 = vrot.lane.b32.xlu0 %v720, 83
    %v729 = vpop.permute.xlu0 %728
    %730 = vrot.lane.b32.xlu0 %v721, 83
    %v731 = vpop.permute.xlu0 %730
    %732 = vrot.lane.b32.xlu0 %v722, 83
    %v733 = vpop.permute.xlu0 %732
    %734 = vrot.lane.b32.xlu0 %v723, 83
    %v735 = vpop.permute.xlu0 %734
    %vm736 = vcmask 678912
    %v737 = vsel %vm736, %v729, %v731
    %v738 = vsel %vm736, %v731, %v733
    %v739 = vsel %vm736, %v733, %v735
    %743 = vst [vmem:[#allocation2 + $0x168] sm:$0xff] %v737
    %744 = vst [vmem:[#allocation2 + $0x170] sm:$0xff] %v738
    %745 = vst [vmem:[#allocation2 + $0x178] sm:$0xff] %v739
    %746 = vrot.lane.b32.xlu0 %v55, 69
    %v747 = vpop.permute.xlu0 %746
    %748 = vrot.lane.b32.xlu0 %v56, 69
    %v749 = vpop.permute.xlu0 %748
    %750 = vrot.lane.b32.xlu0 %v57, 69
    %v751 = vpop.permute.xlu0 %750
    %vm752 = vcmask 564224
    %v753 = vsel %vm752, %v747, %v749
    %v754 = vsel %vm752, %v749, %v751
    %v759 = vsub.f32 %v55, %v747
    %v760 = vsub.f32 %v56, %v753
    %v761 = vsub.f32 %v57, %v754
    %v762 = vsub.f32 %v58, %v751
    %v763 = vmul.f32 %v759, %v759
    %v764 = vmul.f32 %v760, %v760
    %v765 = vmul.f32 %v761, %v761
    %v766 = vmul.f32 %v762, %v762
    %771 = vrot.lane.b32.xlu0 %v763, 59
    %v772 = vpop.permute.xlu0 %771
    %773 = vrot.lane.b32.xlu0 %v764, 59
    %v774 = vpop.permute.xlu0 %773
    %775 = vrot.lane.b32.xlu0 %v765, 59
    %v776 = vpop.permute.xlu0 %775
    %777 = vrot.lane.b32.xlu0 %v766, 59
    %v778 = vpop.permute.xlu0 %777
    %vm779 = vcmask 482304
    %v780 = vsel %vm779, %v772, %v774
    %v781 = vsel %vm779, %v774, %v776
    %v782 = vsel %vm779, %v776, %v778
    %786 = vst [vmem:[#allocation2 + $0x180] sm:$0xff] %v780
    %787 = vst [vmem:[#allocation2 + $0x188] sm:$0xff] %v781
    %788 = vst [vmem:[#allocation2 + $0x190] sm:$0xff] %v782
    %789 = vrot.lane.b32.xlu0 %v55, 93
    %v790 = vpop.permute.xlu0 %789
    %791 = vrot.lane.b32.xlu0 %v56, 93
    %v792 = vpop.permute.xlu0 %791
    %793 = vrot.lane.b32.xlu0 %v57, 93
    %v794 = vpop.permute.xlu0 %793
    %vm795 = vcmask 760832
    %v796 = vsel %vm795, %v790, %v792
    %v797 = vsel %vm795, %v792, %v794
    %v802 = vsub.f32 %v55, %v790
    %v803 = vsub.f32 %v56, %v796
    %v804 = vsub.f32 %v57, %v797
    %v805 = vsub.f32 %v58, %v794
    %v806 = vmul.f32 %v802, %v802
    %v807 = vmul.f32 %v803, %v803
    %v808 = vmul.f32 %v804, %v804
    %v809 = vmul.f32 %v805, %v805
    %814 = vrot.lane.b32.xlu0 %v806, 35
    %v815 = vpop.permute.xlu0 %814
    %816 = vrot.lane.b32.xlu0 %v807, 35
    %v817 = vpop.permute.xlu0 %816
    %818 = vrot.lane.b32.xlu0 %v808, 35
    %v819 = vpop.permute.xlu0 %818
    %820 = vrot.lane.b32.xlu0 %v809, 35
    %v821 = vpop.permute.xlu0 %820
    %vm822 = vcmask 285696
    %v823 = vsel %vm822, %v815, %v817
    %v824 = vsel %vm822, %v817, %v819
    %v825 = vsel %vm822, %v819, %v821
    %829 = vst [vmem:[#allocation2 + $0x198] sm:$0xff] %v823
    %830 = vst [vmem:[#allocation2 + $0x1a0] sm:$0xff] %v824
    %831 = vst [vmem:[#allocation2 + $0x1a8] sm:$0xff] %v825
    %832 = vrot.lane.b32.xlu0 %v55, 30
    %v833 = vpop.permute.xlu0 %832
    %834 = vrot.lane.b32.xlu0 %v56, 30
    %v835 = vpop.permute.xlu0 %834
    %836 = vrot.lane.b32.xlu0 %v57, 30
    %v837 = vpop.permute.xlu0 %836
    %vm838 = vcmask 244736
    %v839 = vsel %vm838, %v833, %v835
    %v840 = vsel %vm838, %v835, %v837
    %v845 = vsub.f32 %v54, %v833
    %v846 = vsub.f32 %v55, %v839
    %v847 = vsub.f32 %v56, %v840
    %v848 = vsub.f32 %v57, %v837
    %v849 = vmul.f32 %v845, %v845
    %v850 = vmul.f32 %v846, %v846
    %v851 = vmul.f32 %v847, %v847
    %v852 = vmul.f32 %v848, %v848
    %857 = vrot.lane.b32.xlu0 %v849, 98
    %v858 = vpop.permute.xlu0 %857
    %859 = vrot.lane.b32.xlu0 %v850, 98
    %v860 = vpop.permute.xlu0 %859
    %861 = vrot.lane.b32.xlu0 %v851, 98
    %v862 = vpop.permute.xlu0 %861
    %863 = vrot.lane.b32.xlu0 %v852, 98
    %v864 = vpop.permute.xlu0 %863
    %vm865 = vcmask 801792
    %v866 = vsel %vm865, %v858, %v860
    %v867 = vsel %vm865, %v860, %v862
    %v868 = vsel %vm865, %v862, %v864
    %872 = vst [vmem:[#allocation2 + $0x1b0] sm:$0xff] %v866
    %873 = vst [vmem:[#allocation2 + $0x1b8] sm:$0xff] %v867
    %874 = vst [vmem:[#allocation2 + $0x1c0] sm:$0xff] %v868
    %875 = vrot.lane.b32.xlu0 %v55, 54
    %v876 = vpop.permute.xlu0 %875
    %877 = vrot.lane.b32.xlu0 %v56, 54
    %v878 = vpop.permute.xlu0 %877
    %879 = vrot.lane.b32.xlu0 %v57, 54
    %v880 = vpop.permute.xlu0 %879
    %vm881 = vcmask 441344
    %v882 = vsel %vm881, %v876, %v878
    %v883 = vsel %vm881, %v878, %v880
    %v888 = vsub.f32 %v54, %v876
    %v889 = vsub.f32 %v55, %v882
    %v890 = vsub.f32 %v56, %v883
    %v891 = vsub.f32 %v57, %v880
    %v892 = vmul.f32 %v888, %v888
    %v893 = vmul.f32 %v889, %v889
    %v894 = vmul.f32 %v890, %v890
    %v895 = vmul.f32 %v891, %v891
    %900 = vrot.lane.b32.xlu0 %v892, 74
    %v901 = vpop.permute.xlu0 %900
    %902 = vrot.lane.b32.xlu0 %v893, 74
    %v903 = vpop.permute.xlu0 %902
    %904 = vrot.lane.b32.xlu0 %v894, 74
    %v905 = vpop.permute.xlu0 %904
    %906 = vrot.lane.b32.xlu0 %v895, 74
    %v907 = vpop.permute.xlu0 %906
    %vm908 = vcmask 605184
    %v909 = vsel %vm908, %v901, %v903
    %v910 = vsel %vm908, %v903, %v905
    %v911 = vsel %vm908, %v905, %v907
    %915 = vst [vmem:[#allocation2 + $0x1c8] sm:$0xff] %v909
    %916 = vst [vmem:[#allocation2 + $0x1d0] sm:$0xff] %v910
    %917 = vst [vmem:[#allocation2 + $0x1d8] sm:$0xff] %v911
    %918 = vrot.lane.b32.xlu0 %v55, 78
    %v919 = vpop.permute.xlu0 %918
    %920 = vrot.lane.b32.xlu0 %v56, 78
    %v921 = vpop.permute.xlu0 %920
    %922 = vrot.lane.b32.xlu0 %v57, 78
    %v923 = vpop.permute.xlu0 %922
    %vm924 = vcmask 637952
    %v925 = vsel %vm924, %v919, %v921
    %v926 = vsel %vm924, %v921, %v923
    %v931 = vsub.f32 %v54, %v919
    %v932 = vsub.f32 %v55, %v925
    %v933 = vsub.f32 %v56, %v926
    %v934 = vsub.f32 %v57, %v923
    %v935 = vmul.f32 %v931, %v931
    %v936 = vmul.f32 %v932, %v932
    %v937 = vmul.f32 %v933, %v933
    %v938 = vmul.f32 %v934, %v934
    %943 = vrot.lane.b32.xlu0 %v935, 50
    %v944 = vpop.permute.xlu0 %943
    %945 = vrot.lane.b32.xlu0 %v936, 50
    %v946 = vpop.permute.xlu0 %945
    %947 = vrot.lane.b32.xlu0 %v937, 50
    %v948 = vpop.permute.xlu0 %947
    %949 = vrot.lane.b32.xlu0 %v938, 50
    %v950 = vpop.permute.xlu0 %949
    %vm951 = vcmask 408576
    %v952 = vsel %vm951, %v944, %v946
    %v953 = vsel %vm951, %v946, %v948
    %v954 = vsel %vm951, %v948, %v950
    %958 = vst [vmem:[#allocation2 + $0x1e0] sm:$0xff] %v952
    %959 = vst [vmem:[#allocation2 + $0x1e8] sm:$0xff] %v953
    %960 = vst [vmem:[#allocation2 + $0x1f0] sm:$0xff] %v954
    %961 = vrot.lane.b32.xlu0 %v55, 102
    %v962 = vpop.permute.xlu0 %961
    %963 = vrot.lane.b32.xlu0 %v56, 102
    %v964 = vpop.permute.xlu0 %963
    %965 = vrot.lane.b32.xlu0 %v57, 102
    %v966 = vpop.permute.xlu0 %965
    %vm967 = vcmask 834560
    %v968 = vsel %vm967, %v962, %v964
    %v969 = vsel %vm967, %v964, %v966
    %v974 = vsub.f32 %v54, %v962
    %v975 = vsub.f32 %v55, %v968
    %v976 = vsub.f32 %v56, %v969
    %v977 = vsub.f32 %v57, %v966
    %v978 = vmul.f32 %v974, %v974
    %v979 = vmul.f32 %v975, %v975
    %v980 = vmul.f32 %v976, %v976
    %v981 = vmul.f32 %v977, %v977
    %986 = vrot.lane.b32.xlu0 %v978, 26
    %v987 = vpop.permute.xlu0 %986
    %988 = vrot.lane.b32.xlu0 %v979, 26
    %v989 = vpop.permute.xlu0 %988
    %990 = vrot.lane.b32.xlu0 %v980, 26
    %v991 = vpop.permute.xlu0 %990
    %992 = vrot.lane.b32.xlu0 %v981, 26
    %v993 = vpop.permute.xlu0 %992
    %vm994 = vcmask 211968
    %v995 = vsel %vm994, %v987, %v989
    %v996 = vsel %vm994, %v989, %v991
    %v997 = vsel %vm994, %v991, %v993
    %1001 = vst [vmem:[#allocation2 + $0x1f8] sm:$0xff] %v995
    %1002 = vst [vmem:[#allocation2 + $0x200] sm:$0xff] %v996
    %1003 = vst [vmem:[#allocation2 + $0x208] sm:$0xff] %v997
    %1004 = vrot.lane.b32.xlu0 %v55, 126
    %v1005 = vpop.permute.xlu0 %1004
    %1006 = vrot.lane.b32.xlu0 %v56, 126
    %v1007 = vpop.permute.xlu0 %1006
    %1008 = vrot.lane.b32.xlu0 %v57, 126
    %v1009 = vpop.permute.xlu0 %1008
    %vm1010 = vcmask 1031168
    %v1011 = vsel %vm1010, %v1005, %v1007
    %v1012 = vsel %vm1010, %v1007, %v1009
    %v1017 = vsub.f32 %v54, %v1005
    %v1018 = vsub.f32 %v55, %v1011
    %v1019 = vsub.f32 %v56, %v1012
    %v1020 = vsub.f32 %v57, %v1009
    %v1021 = vmul.f32 %v1017, %v1017
    %v1022 = vmul.f32 %v1018, %v1018
    %v1023 = vmul.f32 %v1019, %v1019
    %v1024 = vmul.f32 %v1020, %v1020
    %1029 = vrot.lane.b32.xlu0 %v1021, 2
    %v1030 = vpop.permute.xlu0 %1029
    %1031 = vrot.lane.b32.xlu0 %v1022, 2
    %v1032 = vpop.permute.xlu0 %1031
    %1033 = vrot.lane.b32.xlu0 %v1023, 2
    %v1034 = vpop.permute.xlu0 %1033
    %1035 = vrot.lane.b32.xlu0 %v1024, 2
    %v1036 = vpop.permute.xlu0 %1035
    %vm1037 = vcmask 15360
    %v1038 = vsel %vm1037, %v1030, %v1032
    %v1039 = vsel %vm1037, %v1032, %v1034
    %v1040 = vsel %vm1037, %v1034, %v1036
    %1044 = vst [vmem:[#allocation2 + $0x210] sm:$0xff] %v1038
    %1045 = vst [vmem:[#allocation2 + $0x218] sm:$0xff] %v1039
    %1046 = vst [vmem:[#allocation2 + $0x220] sm:$0xff] %v1040
    %1047 = vrot.lane.b32.xlu0 %v55, 22
    %v1048 = vpop.permute.xlu0 %1047
    %1049 = vrot.lane.b32.xlu0 %v56, 22
    %v1050 = vpop.permute.xlu0 %1049
    %1051 = vrot.lane.b32.xlu0 %v57, 22
    %v1052 = vpop.permute.xlu0 %1051
    %vm1053 = vcmask 179200
    %v1054 = vsel %vm1053, %v1048, %v1050
    %v1055 = vsel %vm1053, %v1050, %v1052
    %v1060 = vsub.f32 %v55, %v1048
    %v1061 = vsub.f32 %v56, %v1054
    %v1062 = vsub.f32 %v57, %v1055
    %v1063 = vsub.f32 %v58, %v1052
    %v1064 = vmul.f32 %v1060, %v1060
    %v1065 = vmul.f32 %v1061, %v1061
    %v1066 = vmul.f32 %v1062, %v1062
    %v1067 = vmul.f32 %v1063, %v1063
    %1072 = vrot.lane.b32.xlu0 %v1064, 106
    %v1073 = vpop.permute.xlu0 %1072
    %1074 = vrot.lane.b32.xlu0 %v1065, 106
    %v1075 = vpop.permute.xlu0 %1074
    %1076 = vrot.lane.b32.xlu0 %v1066, 106
    %v1077 = vpop.permute.xlu0 %1076
    %1078 = vrot.lane.b32.xlu0 %v1067, 106
    %v1079 = vpop.permute.xlu0 %1078
    %vm1080 = vcmask 867328
    %v1081 = vsel %vm1080, %v1073, %v1075
    %v1082 = vsel %vm1080, %v1075, %v1077
    %v1083 = vsel %vm1080, %v1077, %v1079
    %1087 = vst [vmem:[#allocation2 + $0x228] sm:$0xff] %v1081
    %1088 = vst [vmem:[#allocation2 + $0x230] sm:$0xff] %v1082
    %1089 = vst [vmem:[#allocation2 + $0x238] sm:$0xff] %v1083
    %1090 = vrot.lane.b32.xlu0 %v55, 46
    %v1091 = vpop.permute.xlu0 %1090
    %1092 = vrot.lane.b32.xlu0 %v56, 46
    %v1093 = vpop.permute.xlu0 %1092
    %1094 = vrot.lane.b32.xlu0 %v57, 46
    %v1095 = vpop.permute.xlu0 %1094
    %vm1096 = vcmask 375808
    %v1097 = vsel %vm1096, %v1091, %v1093
    %v1098 = vsel %vm1096, %v1093, %v1095
    %v1103 = vsub.f32 %v55, %v1091
    %v1104 = vsub.f32 %v56, %v1097
    %v1105 = vsub.f32 %v57, %v1098
    %v1106 = vsub.f32 %v58, %v1095
    %v1107 = vmul.f32 %v1103, %v1103
    %v1108 = vmul.f32 %v1104, %v1104
    %v1109 = vmul.f32 %v1105, %v1105
    %v1110 = vmul.f32 %v1106, %v1106
    %1115 = vrot.lane.b32.xlu0 %v1107, 82
    %v1116 = vpop.permute.xlu0 %1115
    %1117 = vrot.lane.b32.xlu0 %v1108, 82
    %v1118 = vpop.permute.xlu0 %1117
    %1119 = vrot.lane.b32.xlu0 %v1109, 82
    %v1120 = vpop.permute.xlu0 %1119
    %1121 = vrot.lane.b32.xlu0 %v1110, 82
    %v1122 = vpop.permute.xlu0 %1121
    %vm1123 = vcmask 670720
    %v1124 = vsel %vm1123, %v1116, %v1118
    %v1125 = vsel %vm1123, %v1118, %v1120
    %v1126 = vsel %vm1123, %v1120, %v1122
    %1130 = vst [vmem:[#allocation2 + $0x240] sm:$0xff] %v1124
    %1131 = vst [vmem:[#allocation2 + $0x248] sm:$0xff] %v1125
    %1132 = vst [vmem:[#allocation2 + $0x250] sm:$0xff] %v1126
    %1133 = vrot.lane.b32.xlu0 %v55, 70
    %v1134 = vpop.permute.xlu0 %1133
    %1135 = vrot.lane.b32.xlu0 %v56, 70
    %v1136 = vpop.permute.xlu0 %1135
    %1137 = vrot.lane.b32.xlu0 %v57, 70
    %v1138 = vpop.permute.xlu0 %1137
    %vm1139 = vcmask 572416
    %v1140 = vsel %vm1139, %v1134, %v1136
    %v1141 = vsel %vm1139, %v1136, %v1138
    %v1146 = vsub.f32 %v55, %v1134
    %v1147 = vsub.f32 %v56, %v1140
    %v1148 = vsub.f32 %v57, %v1141
    %v1149 = vsub.f32 %v58, %v1138
    %v1150 = vmul.f32 %v1146, %v1146
    %v1151 = vmul.f32 %v1147, %v1147
    %v1152 = vmul.f32 %v1148, %v1148
    %v1153 = vmul.f32 %v1149, %v1149
    %1158 = vrot.lane.b32.xlu0 %v1150, 58
    %v1159 = vpop.permute.xlu0 %1158
    %1160 = vrot.lane.b32.xlu0 %v1151, 58
    %v1161 = vpop.permute.xlu0 %1160
    %1162 = vrot.lane.b32.xlu0 %v1152, 58
    %v1163 = vpop.permute.xlu0 %1162
    %1164 = vrot.lane.b32.xlu0 %v1153, 58
    %v1165 = vpop.permute.xlu0 %1164
    %vm1166 = vcmask 474112
    %v1167 = vsel %vm1166, %v1159, %v1161
    %v1168 = vsel %vm1166, %v1161, %v1163
    %v1169 = vsel %vm1166, %v1163, %v1165
    %1173 = vst [vmem:[#allocation2 + $0x258] sm:$0xff] %v1167
    %1174 = vst [vmem:[#allocation2 + $0x260] sm:$0xff] %v1168
    %1175 = vst [vmem:[#allocation2 + $0x268] sm:$0xff] %v1169
    %1176 = vrot.lane.b32.xlu0 %v55, 94
    %v1177 = vpop.permute.xlu0 %1176
    %1178 = vrot.lane.b32.xlu0 %v56, 94
    %v1179 = vpop.permute.xlu0 %1178
    %1180 = vrot.lane.b32.xlu0 %v57, 94
    %v1181 = vpop.permute.xlu0 %1180
    %vm1182 = vcmask 769024
    %v1183 = vsel %vm1182, %v1177, %v1179
    %v1184 = vsel %vm1182, %v1179, %v1181
    %v1189 = vsub.f32 %v55, %v1177
    %v1190 = vsub.f32 %v56, %v1183
    %v1191 = vsub.f32 %v57, %v1184
    %v1192 = vsub.f32 %v58, %v1181
    %v1193 = vmul.f32 %v1189, %v1189
    %v1194 = vmul.f32 %v1190, %v1190
    %v1195 = vmul.f32 %v1191, %v1191
    %v1196 = vmul.f32 %v1192, %v1192
    %1201 = vrot.lane.b32.xlu0 %v1193, 34
    %v1202 = vpop.permute.xlu0 %1201
    %1203 = vrot.lane.b32.xlu0 %v1194, 34
    %v1204 = vpop.permute.xlu0 %1203
    %1205 = vrot.lane.b32.xlu0 %v1195, 34
    %v1206 = vpop.permute.xlu0 %1205
    %1207 = vrot.lane.b32.xlu0 %v1196, 34
    %v1208 = vpop.permute.xlu0 %1207
    %vm1209 = vcmask 277504
    %v1210 = vsel %vm1209, %v1202, %v1204
    %v1211 = vsel %vm1209, %v1204, %v1206
    %v1212 = vsel %vm1209, %v1206, %v1208
    %1216 = vst [vmem:[#allocation2 + $0x270] sm:$0xff] %v1210
    %1217 = vst [vmem:[#allocation2 + $0x278] sm:$0xff] %v1211
    %1218 = vst [vmem:[#allocation2 + $0x280] sm:$0xff] %v1212
    %1219 = vrot.lane.b32.xlu0 %v55, 31
    %v1220 = vpop.permute.xlu0 %1219
    %1221 = vrot.lane.b32.xlu0 %v56, 31
    %v1222 = vpop.permute.xlu0 %1221
    %1223 = vrot.lane.b32.xlu0 %v57, 31
    %v1224 = vpop.permute.xlu0 %1223
    %vm1225 = vcmask 252928
    %v1226 = vsel %vm1225, %v1220, %v1222
    %v1227 = vsel %vm1225, %v1222, %v1224
    %v1232 = vsub.f32 %v54, %v1220
    %v1233 = vsub.f32 %v55, %v1226
    %v1234 = vsub.f32 %v56, %v1227
    %v1235 = vsub.f32 %v57, %v1224
    %v1236 = vmul.f32 %v1232, %v1232
    %v1237 = vmul.f32 %v1233, %v1233
    %v1238 = vmul.f32 %v1234, %v1234
    %v1239 = vmul.f32 %v1235, %v1235
    %1244 = vrot.lane.b32.xlu0 %v1236, 97
    %v1245 = vpop.permute.xlu0 %1244
    %1246 = vrot.lane.b32.xlu0 %v1237, 97
    %v1247 = vpop.permute.xlu0 %1246
    %1248 = vrot.lane.b32.xlu0 %v1238, 97
    %v1249 = vpop.permute.xlu0 %1248
    %1250 = vrot.lane.b32.xlu0 %v1239, 97
    %v1251 = vpop.permute.xlu0 %1250
    %vm1252 = vcmask 793600
    %v1253 = vsel %vm1252, %v1245, %v1247
    %v1254 = vsel %vm1252, %v1247, %v1249
    %v1255 = vsel %vm1252, %v1249, %v1251
    %1259 = vst [vmem:[#allocation2 + $0x288] sm:$0xff] %v1253
    %1260 = vst [vmem:[#allocation2 + $0x290] sm:$0xff] %v1254
    %1261 = vst [vmem:[#allocation2 + $0x298] sm:$0xff] %v1255
    %1262 = vrot.lane.b32.xlu0 %v55, 55
    %v1263 = vpop.permute.xlu0 %1262
    %1264 = vrot.lane.b32.xlu0 %v56, 55
    %v1265 = vpop.permute.xlu0 %1264
    %1266 = vrot.lane.b32.xlu0 %v57, 55
    %v1267 = vpop.permute.xlu0 %1266
    %vm1268 = vcmask 449536
    %v1269 = vsel %vm1268, %v1263, %v1265
    %v1270 = vsel %vm1268, %v1265, %v1267
    %v1275 = vsub.f32 %v54, %v1263
    %v1276 = vsub.f32 %v55, %v1269
    %v1277 = vsub.f32 %v56, %v1270
    %v1278 = vsub.f32 %v57, %v1267
    %v1279 = vmul.f32 %v1275, %v1275
    %v1280 = vmul.f32 %v1276, %v1276
    %v1281 = vmul.f32 %v1277, %v1277
    %v1282 = vmul.f32 %v1278, %v1278
    %1287 = vrot.lane.b32.xlu0 %v1279, 73
    %v1288 = vpop.permute.xlu0 %1287
    %1289 = vrot.lane.b32.xlu0 %v1280, 73
    %v1290 = vpop.permute.xlu0 %1289
    %1291 = vrot.lane.b32.xlu0 %v1281, 73
    %v1292 = vpop.permute.xlu0 %1291
    %1293 = vrot.lane.b32.xlu0 %v1282, 73
    %v1294 = vpop.permute.xlu0 %1293
    %vm1295 = vcmask 596992
    %v1296 = vsel %vm1295, %v1288, %v1290
    %v1297 = vsel %vm1295, %v1290, %v1292
    %v1298 = vsel %vm1295, %v1292, %v1294
    %1302 = vst [vmem:[#allocation2 + $0x2a0] sm:$0xff] %v1296
    %1303 = vst [vmem:[#allocation2 + $0x2a8] sm:$0xff] %v1297
    %1304 = vst [vmem:[#allocation2 + $0x2b0] sm:$0xff] %v1298
    %1305 = vrot.lane.b32.xlu0 %v55, 79
    %v1306 = vpop.permute.xlu0 %1305
    %1307 = vrot.lane.b32.xlu0 %v56, 79
    %v1308 = vpop.permute.xlu0 %1307
    %1309 = vrot.lane.b32.xlu0 %v57, 79
    %v1310 = vpop.permute.xlu0 %1309
    %vm1311 = vcmask 646144
    %v1312 = vsel %vm1311, %v1306, %v1308
    %v1313 = vsel %vm1311, %v1308, %v1310
    %v1318 = vsub.f32 %v54, %v1306
    %v1319 = vsub.f32 %v55, %v1312
    %v1320 = vsub.f32 %v56, %v1313
    %v1321 = vsub.f32 %v57, %v1310
    %v1322 = vmul.f32 %v1318, %v1318
    %v1323 = vmul.f32 %v1319, %v1319
    %v1324 = vmul.f32 %v1320, %v1320
    %v1325 = vmul.f32 %v1321, %v1321
    %1330 = vrot.lane.b32.xlu0 %v1322, 49
    %v1331 = vpop.permute.xlu0 %1330
    %1332 = vrot.lane.b32.xlu0 %v1323, 49
    %v1333 = vpop.permute.xlu0 %1332
    %1334 = vrot.lane.b32.xlu0 %v1324, 49
    %v1335 = vpop.permute.xlu0 %1334
    %1336 = vrot.lane.b32.xlu0 %v1325, 49
    %v1337 = vpop.permute.xlu0 %1336
    %vm1338 = vcmask 400384
    %v1339 = vsel %vm1338, %v1331, %v1333
    %v1340 = vsel %vm1338, %v1333, %v1335
    %v1341 = vsel %vm1338, %v1335, %v1337
    %1345 = vst [vmem:[#allocation2 + $0x2b8] sm:$0xff] %v1339
    %1346 = vst [vmem:[#allocation2 + $0x2c0] sm:$0xff] %v1340
    %1347 = vst [vmem:[#allocation2 + $0x2c8] sm:$0xff] %v1341
    %1348 = vrot.lane.b32.xlu0 %v55, 103
    %v1349 = vpop.permute.xlu0 %1348
    %1350 = vrot.lane.b32.xlu0 %v56, 103
    %v1351 = vpop.permute.xlu0 %1350
    %1352 = vrot.lane.b32.xlu0 %v57, 103
    %v1353 = vpop.permute.xlu0 %1352
    %vm1354 = vcmask 842752
    %v1355 = vsel %vm1354, %v1349, %v1351
    %v1356 = vsel %vm1354, %v1351, %v1353
    %v1361 = vsub.f32 %v54, %v1349
    %v1362 = vsub.f32 %v55, %v1355
    %v1363 = vsub.f32 %v56, %v1356
    %v1364 = vsub.f32 %v57, %v1353
    %v1365 = vmul.f32 %v1361, %v1361
    %v1366 = vmul.f32 %v1362, %v1362
    %v1367 = vmul.f32 %v1363, %v1363
    %v1368 = vmul.f32 %v1364, %v1364
    %1373 = vrot.lane.b32.xlu0 %v1365, 25
    %v1374 = vpop.permute.xlu0 %1373
    %1375 = vrot.lane.b32.xlu0 %v1366, 25
    %v1376 = vpop.permute.xlu0 %1375
    %1377 = vrot.lane.b32.xlu0 %v1367, 25
    %v1378 = vpop.permute.xlu0 %1377
    %1379 = vrot.lane.b32.xlu0 %v1368, 25
    %v1380 = vpop.permute.xlu0 %1379
    %vm1381 = vcmask 203776
    %v1382 = vsel %vm1381, %v1374, %v1376
    %v1383 = vsel %vm1381, %v1376, %v1378
    %v1384 = vsel %vm1381, %v1378, %v1380
    %1388 = vst [vmem:[#allocation2 + $0x2d0] sm:$0xff] %v1382
    %1389 = vst [vmem:[#allocation2 + $0x2d8] sm:$0xff] %v1383
    %1390 = vst [vmem:[#allocation2 + $0x2e0] sm:$0xff] %v1384
    %1392 = vrot.lane.b32.xlu0 %v54, 25
    %v1393 = vpop.permute.xlu0 %1392
    %1394 = vrot.lane.b32.xlu0 %v55, 25
    %v1395 = vpop.permute.xlu0 %1394
    %1396 = vrot.lane.b32.xlu0 %v56, 25
    %v1397 = vpop.permute.xlu0 %1396
    %1398 = vrot.lane.b32.xlu0 %v57, 25
    %v1399 = vpop.permute.xlu0 %1398
    %v1400 = vsel %vm1381, %v1393, %v1395
    %v1401 = vsel %vm1381, %v1395, %v1397
    %v1402 = vsel %vm1381, %v1397, %v1399
    %1406 = vst [vmem:[#allocation3] sm:$0xff] %v1400
    %1407 = vst [vmem:[#allocation3 + $0x8] sm:$0xff] %v1401
    %1408 = vst [vmem:[#allocation3 + $0x10] sm:$0xff] %v1402
    %1409 = vrot.lane.b32.xlu0 %v55, 127
    %v1410 = vpop.permute.xlu0 %1409
    %1411 = vrot.lane.b32.xlu0 %v56, 127
    %v1412 = vpop.permute.xlu0 %1411
    %1413 = vrot.lane.b32.xlu0 %v57, 127
    %v1414 = vpop.permute.xlu0 %1413
    %vm1415 = vcmask 1039360
    %v1416 = vsel %vm1415, %v1410, %v1412
    %v1417 = vsel %vm1415, %v1412, %v1414
    %v1422 = vsub.f32 %v54, %v1410
    %v1423 = vsub.f32 %v55, %v1416
    %v1424 = vsub.f32 %v56, %v1417
    %v1425 = vsub.f32 %v57, %v1414
    %v1426 = vmul.f32 %v1422, %v1422
    %v1427 = vmul.f32 %v1423, %v1423
    %v1428 = vmul.f32 %v1424, %v1424
    %v1429 = vmul.f32 %v1425, %v1425
    %1434 = vrot.lane.b32.xlu0 %v1426, 1
    %v1435 = vpop.permute.xlu0 %1434
    %1436 = vrot.lane.b32.xlu0 %v1427, 1
    %v1437 = vpop.permute.xlu0 %1436
    %1438 = vrot.lane.b32.xlu0 %v1428, 1
    %v1439 = vpop.permute.xlu0 %1438
    %1440 = vrot.lane.b32.xlu0 %v1429, 1
    %v1441 = vpop.permute.xlu0 %1440
    %vm1442 = vcmask 7168
    %v1443 = vsel %vm1442, %v1435, %v1437
    %v1444 = vsel %vm1442, %v1437, %v1439
    %v1445 = vsel %vm1442, %v1439, %v1441
    %1449 = vst [vmem:[#allocation2 + $0x2e8] sm:$0xff] %v1443
    %1450 = vst [vmem:[#allocation2 + $0x2f0] sm:$0xff] %v1444
    %1451 = vst [vmem:[#allocation2 + $0x2f8] sm:$0xff] %v1445
    %1452 = vrot.lane.b32.xlu0 %v54, 1
    %v1453 = vpop.permute.xlu0 %1452
    %1454 = vrot.lane.b32.xlu0 %v55, 1
    %v1455 = vpop.permute.xlu0 %1454
    %1456 = vrot.lane.b32.xlu0 %v56, 1
    %v1457 = vpop.permute.xlu0 %1456
    %1458 = vrot.lane.b32.xlu0 %v57, 1
    %v1459 = vpop.permute.xlu0 %1458
    %v1460 = vsel %vm1442, %v1453, %v1455
    %v1461 = vsel %vm1442, %v1455, %v1457
    %v1462 = vsel %vm1442, %v1457, %v1459
    %1466 = vst [vmem:[#allocation3 + $0x18] sm:$0xff] %v1460
    %1467 = vst [vmem:[#allocation3 + $0x20] sm:$0xff] %v1461
    %1468 = vst [vmem:[#allocation3 + $0x28] sm:$0xff] %v1462
    %1469 = vrot.lane.b32.xlu0 %v55, 23
    %v1470 = vpop.permute.xlu0 %1469
    %1471 = vrot.lane.b32.xlu0 %v56, 23
    %v1472 = vpop.permute.xlu0 %1471
    %1473 = vrot.lane.b32.xlu0 %v57, 23
    %v1474 = vpop.permute.xlu0 %1473
    %vm1475 = vcmask 187392
    %v1476 = vsel %vm1475, %v1470, %v1472
    %v1477 = vsel %vm1475, %v1472, %v1474
    %v1482 = vsub.f32 %v55, %v1470
    %v1483 = vsub.f32 %v56, %v1476
    %v1484 = vsub.f32 %v57, %v1477
    %v1485 = vsub.f32 %v58, %v1474
    %v1486 = vmul.f32 %v1482, %v1482
    %v1487 = vmul.f32 %v1483, %v1483
    %v1488 = vmul.f32 %v1484, %v1484
    %v1489 = vmul.f32 %v1485, %v1485
    %1494 = vrot.lane.b32.xlu0 %v1486, 105
    %v1495 = vpop.permute.xlu0 %1494
    %1496 = vrot.lane.b32.xlu0 %v1487, 105
    %v1497 = vpop.permute.xlu0 %1496
    %1498 = vrot.lane.b32.xlu0 %v1488, 105
    %v1499 = vpop.permute.xlu0 %1498
    %1500 = vrot.lane.b32.xlu0 %v1489, 105
    %v1501 = vpop.permute.xlu0 %1500
    %vm1502 = vcmask 859136
    %v1503 = vsel %vm1502, %v1495, %v1497
    %v1504 = vsel %vm1502, %v1497, %v1499
    %v1505 = vsel %vm1502, %v1499, %v1501
    %1509 = vst [vmem:[#allocation2 + $0x300] sm:$0xff] %v1503
    %1510 = vst [vmem:[#allocation2 + $0x308] sm:$0xff] %v1504
    %1511 = vst [vmem:[#allocation2 + $0x310] sm:$0xff] %v1505
    %1513 = vrot.lane.b32.xlu0 %v55, 105
    %v1514 = vpop.permute.xlu0 %1513
    %1515 = vrot.lane.b32.xlu0 %v56, 105
    %v1516 = vpop.permute.xlu0 %1515
    %1517 = vrot.lane.b32.xlu0 %v57, 105
    %v1518 = vpop.permute.xlu0 %1517
    %1519 = vrot.lane.b32.xlu0 %v58, 105
    %v1520 = vpop.permute.xlu0 %1519
    %v1521 = vsel %vm1502, %v1514, %v1516
    %v1522 = vsel %vm1502, %v1516, %v1518
    %v1523 = vsel %vm1502, %v1518, %v1520
    %1527 = vst [vmem:[#allocation3 + $0x30] sm:$0xff] %v1521
    %1528 = vst [vmem:[#allocation3 + $0x38] sm:$0xff] %v1522
    %1529 = vst [vmem:[#allocation3 + $0x40] sm:$0xff] %v1523
    %1530 = vrot.lane.b32.xlu0 %v55, 47
    %v1531 = vpop.permute.xlu0 %1530
    %1532 = vrot.lane.b32.xlu0 %v56, 47
    %v1533 = vpop.permute.xlu0 %1532
    %1534 = vrot.lane.b32.xlu0 %v57, 47
    %v1535 = vpop.permute.xlu0 %1534
    %vm1536 = vcmask 384000
    %v1537 = vsel %vm1536, %v1531, %v1533
    %v1538 = vsel %vm1536, %v1533, %v1535
    %v1543 = vsub.f32 %v55, %v1531
    %v1544 = vsub.f32 %v56, %v1537
    %v1545 = vsub.f32 %v57, %v1538
    %v1546 = vsub.f32 %v58, %v1535
    %v1547 = vmul.f32 %v1543, %v1543
    %v1548 = vmul.f32 %v1544, %v1544
    %v1549 = vmul.f32 %v1545, %v1545
    %v1550 = vmul.f32 %v1546, %v1546
    %1555 = vrot.lane.b32.xlu0 %v1547, 81
    %v1556 = vpop.permute.xlu0 %1555
    %1557 = vrot.lane.b32.xlu0 %v1548, 81
    %v1558 = vpop.permute.xlu0 %1557
    %1559 = vrot.lane.b32.xlu0 %v1549, 81
    %v1560 = vpop.permute.xlu0 %1559
    %1561 = vrot.lane.b32.xlu0 %v1550, 81
    %v1562 = vpop.permute.xlu0 %1561
    %vm1563 = vcmask 662528
    %v1564 = vsel %vm1563, %v1556, %v1558
    %v1565 = vsel %vm1563, %v1558, %v1560
    %v1566 = vsel %vm1563, %v1560, %v1562
    %1570 = vst [vmem:[#allocation2 + $0x318] sm:$0xff] %v1564
    %1571 = vst [vmem:[#allocation2 + $0x320] sm:$0xff] %v1565
    %1572 = vst [vmem:[#allocation2 + $0x328] sm:$0xff] %v1566
    %1573 = vrot.lane.b32.xlu0 %v55, 71
    %v1574 = vpop.permute.xlu0 %1573
    %1575 = vrot.lane.b32.xlu0 %v56, 71
    %v1576 = vpop.permute.xlu0 %1575
    %1577 = vrot.lane.b32.xlu0 %v57, 71
    %v1578 = vpop.permute.xlu0 %1577
    %vm1579 = vcmask 580608
    %v1580 = vsel %vm1579, %v1574, %v1576
    %v1581 = vsel %vm1579, %v1576, %v1578
    %v1586 = vsub.f32 %v55, %v1574
    %v1587 = vsub.f32 %v56, %v1580
    %v1588 = vsub.f32 %v57, %v1581
    %v1589 = vsub.f32 %v58, %v1578
    %v1590 = vmul.f32 %v1586, %v1586
    %v1591 = vmul.f32 %v1587, %v1587
    %v1592 = vmul.f32 %v1588, %v1588
    %v1593 = vmul.f32 %v1589, %v1589
    %1598 = vrot.lane.b32.xlu0 %v1590, 57
    %v1599 = vpop.permute.xlu0 %1598
    %1600 = vrot.lane.b32.xlu0 %v1591, 57
    %v1601 = vpop.permute.xlu0 %1600
    %1602 = vrot.lane.b32.xlu0 %v1592, 57
    %v1603 = vpop.permute.xlu0 %1602
    %1604 = vrot.lane.b32.xlu0 %v1593, 57
    %v1605 = vpop.permute.xlu0 %1604
    %vm1606 = vcmask 465920
    %v1607 = vsel %vm1606, %v1599, %v1601
    %v1608 = vsel %vm1606, %v1601, %v1603
    %v1609 = vsel %vm1606, %v1603, %v1605
    %1613 = vst [vmem:[#allocation2 + $0x330] sm:$0xff] %v1607
    %1614 = vst [vmem:[#allocation2 + $0x338] sm:$0xff] %v1608
    %1615 = vst [vmem:[#allocation2 + $0x340] sm:$0xff] %v1609
    %1616 = vrot.lane.b32.xlu0 %v55, 95
    %v1617 = vpop.permute.xlu0 %1616
    %1618 = vrot.lane.b32.xlu0 %v56, 95
    %v1619 = vpop.permute.xlu0 %1618
    %1620 = vrot.lane.b32.xlu0 %v57, 95
    %v1621 = vpop.permute.xlu0 %1620
    %vm1622 = vcmask 777216
    %v1623 = vsel %vm1622, %v1617, %v1619
    %v1624 = vsel %vm1622, %v1619, %v1621
    %v1629 = vsub.f32 %v55, %v1617
    %v1630 = vsub.f32 %v56, %v1623
    %v1631 = vsub.f32 %v57, %v1624
    %v1632 = vsub.f32 %v58, %v1621
    %v1633 = vmul.f32 %v1629, %v1629
    %v1634 = vmul.f32 %v1630, %v1630
    %v1635 = vmul.f32 %v1631, %v1631
    %v1636 = vmul.f32 %v1632, %v1632
    %1641 = vrot.lane.b32.xlu0 %v1633, 33
    %v1642 = vpop.permute.xlu0 %1641
    %1643 = vrot.lane.b32.xlu0 %v1634, 33
    %v1644 = vpop.permute.xlu0 %1643
    %1645 = vrot.lane.b32.xlu0 %v1635, 33
    %v1646 = vpop.permute.xlu0 %1645
    %1647 = vrot.lane.b32.xlu0 %v1636, 33
    %v1648 = vpop.permute.xlu0 %1647
    %vm1649 = vcmask 269312
    %v1650 = vsel %vm1649, %v1642, %v1644
    %v1651 = vsel %vm1649, %v1644, %v1646
    %v1652 = vsel %vm1649, %v1646, %v1648
    %1656 = vst [vmem:[#allocation2 + $0x348] sm:$0xff] %v1650
    %1657 = vst [vmem:[#allocation2 + $0x350] sm:$0xff] %v1651
    %1658 = vst [vmem:[#allocation2 + $0x358] sm:$0xff] %v1652
    %1659 = vrot.lane.b32.xlu0 %v55, 32
    %v1660 = vpop.permute.xlu0 %1659
    %1661 = vrot.lane.b32.xlu0 %v56, 32
    %v1662 = vpop.permute.xlu0 %1661
    %1663 = vrot.lane.b32.xlu0 %v57, 32
    %v1664 = vpop.permute.xlu0 %1663
    %vm1665 = vcmask 261120
    %v1666 = vsel %vm1665, %v1660, %v1662
    %v1667 = vsel %vm1665, %v1662, %v1664
    %v1672 = vsub.f32 %v54, %v1660
    %v1673 = vsub.f32 %v55, %v1666
    %v1674 = vsub.f32 %v56, %v1667
    %v1675 = vsub.f32 %v57, %v1664
    %v1676 = vmul.f32 %v1672, %v1672
    %v1677 = vmul.f32 %v1673, %v1673
    %v1678 = vmul.f32 %v1674, %v1674
    %v1679 = vmul.f32 %v1675, %v1675
    %1684 = vrot.lane.b32.xlu0 %v1676, 96
    %v1685 = vpop.permute.xlu0 %1684
    %1686 = vrot.lane.b32.xlu0 %v1677, 96
    %v1687 = vpop.permute.xlu0 %1686
    %1688 = vrot.lane.b32.xlu0 %v1678, 96
    %v1689 = vpop.permute.xlu0 %1688
    %1690 = vrot.lane.b32.xlu0 %v1679, 96
    %v1691 = vpop.permute.xlu0 %1690
    %vm1692 = vcmask 785408
    %v1693 = vsel %vm1692, %v1685, %v1687
    %v1694 = vsel %vm1692, %v1687, %v1689
    %v1695 = vsel %vm1692, %v1689, %v1691
    %1699 = vst [vmem:[#allocation2 + $0x360] sm:$0xff] %v1693
    %1700 = vst [vmem:[#allocation2 + $0x368] sm:$0xff] %v1694
    %1701 = vst [vmem:[#allocation2 + $0x370] sm:$0xff] %v1695
    %1702 = vrot.lane.b32.xlu0 %v55, 56
    %v1703 = vpop.permute.xlu0 %1702
    %1704 = vrot.lane.b32.xlu0 %v56, 56
    %v1705 = vpop.permute.xlu0 %1704
    %1706 = vrot.lane.b32.xlu0 %v57, 56
    %v1707 = vpop.permute.xlu0 %1706
    %vm1708 = vcmask 457728
    %v1709 = vsel %vm1708, %v1703, %v1705
    %v1710 = vsel %vm1708, %v1705, %v1707
    %v1715 = vsub.f32 %v54, %v1703
    %v1716 = vsub.f32 %v55, %v1709
    %v1717 = vsub.f32 %v56, %v1710
    %v1718 = vsub.f32 %v57, %v1707
    %v1719 = vmul.f32 %v1715, %v1715
    %v1720 = vmul.f32 %v1716, %v1716
    %v1721 = vmul.f32 %v1717, %v1717
    %v1722 = vmul.f32 %v1718, %v1718
    %1727 = vrot.lane.b32.xlu0 %v1719, 72
    %v1728 = vpop.permute.xlu0 %1727
    %1729 = vrot.lane.b32.xlu0 %v1720, 72
    %v1730 = vpop.permute.xlu0 %1729
    %1731 = vrot.lane.b32.xlu0 %v1721, 72
    %v1732 = vpop.permute.xlu0 %1731
    %1733 = vrot.lane.b32.xlu0 %v1722, 72
    %v1734 = vpop.permute.xlu0 %1733
    %vm1735 = vcmask 588800
    %v1736 = vsel %vm1735, %v1728, %v1730
    %v1737 = vsel %vm1735, %v1730, %v1732
    %v1738 = vsel %vm1735, %v1732, %v1734
    %1742 = vst [vmem:[#allocation2 + $0x378] sm:$0xff] %v1736
    %1743 = vst [vmem:[#allocation2 + $0x380] sm:$0xff] %v1737
    %1744 = vst [vmem:[#allocation2 + $0x388] sm:$0xff] %v1738
    %1745 = vrot.lane.b32.xlu0 %v55, 80
    %v1746 = vpop.permute.xlu0 %1745
    %1747 = vrot.lane.b32.xlu0 %v56, 80
    %v1748 = vpop.permute.xlu0 %1747
    %1749 = vrot.lane.b32.xlu0 %v57, 80
    %v1750 = vpop.permute.xlu0 %1749
    %vm1751 = vcmask 654336
    %v1752 = vsel %vm1751, %v1746, %v1748
    %v1753 = vsel %vm1751, %v1748, %v1750
    %v1758 = vsub.f32 %v54, %v1746
    %v1759 = vsub.f32 %v55, %v1752
    %v1760 = vsub.f32 %v56, %v1753
    %v1761 = vsub.f32 %v57, %v1750
    %v1762 = vmul.f32 %v1758, %v1758
    %v1763 = vmul.f32 %v1759, %v1759
    %v1764 = vmul.f32 %v1760, %v1760
    %v1765 = vmul.f32 %v1761, %v1761
    %1770 = vrot.lane.b32.xlu0 %v1762, 48
    %v1771 = vpop.permute.xlu0 %1770
    %1772 = vrot.lane.b32.xlu0 %v1763, 48
    %v1773 = vpop.permute.xlu0 %1772
    %1774 = vrot.lane.b32.xlu0 %v1764, 48
    %v1775 = vpop.permute.xlu0 %1774
    %1776 = vrot.lane.b32.xlu0 %v1765, 48
    %v1777 = vpop.permute.xlu0 %1776
    %vm1778 = vcmask 392192
    %v1779 = vsel %vm1778, %v1771, %v1773
    %v1780 = vsel %vm1778, %v1773, %v1775
    %v1781 = vsel %vm1778, %v1775, %v1777
    %1785 = vst [vmem:[#allocation2 + $0x390] sm:$0xff] %v1779
    %1786 = vst [vmem:[#allocation2 + $0x398] sm:$0xff] %v1780
    %1787 = vst [vmem:[#allocation2 + $0x3a0] sm:$0xff] %v1781
    %1788 = vrot.lane.b32.xlu0 %v55, 104
    %v1789 = vpop.permute.xlu0 %1788
    %1790 = vrot.lane.b32.xlu0 %v56, 104
    %v1791 = vpop.permute.xlu0 %1790
    %1792 = vrot.lane.b32.xlu0 %v57, 104
    %v1793 = vpop.permute.xlu0 %1792
    %vm1794 = vcmask 850944
    %v1795 = vsel %vm1794, %v1789, %v1791
    %v1796 = vsel %vm1794, %v1791, %v1793
    %v1801 = vsub.f32 %v54, %v1789
    %v1802 = vsub.f32 %v55, %v1795
    %v1803 = vsub.f32 %v56, %v1796
    %v1804 = vsub.f32 %v57, %v1793
    %v1805 = vmul.f32 %v1801, %v1801
    %v1806 = vmul.f32 %v1802, %v1802
    %v1807 = vmul.f32 %v1803, %v1803
    %v1808 = vmul.f32 %v1804, %v1804
    %1813 = vrot.lane.b32.xlu0 %v1805, 24
    %v1814 = vpop.permute.xlu0 %1813
    %1815 = vrot.lane.b32.xlu0 %v1806, 24
    %v1816 = vpop.permute.xlu0 %1815
    %1817 = vrot.lane.b32.xlu0 %v1807, 24
    %v1818 = vpop.permute.xlu0 %1817
    %1819 = vrot.lane.b32.xlu0 %v1808, 24
    %v1820 = vpop.permute.xlu0 %1819
    %vm1821 = vcmask 195584
    %v1822 = vsel %vm1821, %v1814, %v1816
    %v1823 = vsel %vm1821, %v1816, %v1818
    %v1824 = vsel %vm1821, %v1818, %v1820
    %1828 = vst [vmem:[#allocation2 + $0x3a8] sm:$0xff] %v1822
    %1829 = vst [vmem:[#allocation2 + $0x3b0] sm:$0xff] %v1823
    %1830 = vst [vmem:[#allocation2 + $0x3b8] sm:$0xff] %v1824
    %1831 = vrot.lane.b32.xlu0 %v54, 24
    %v1832 = vpop.permute.xlu0 %1831
    %1833 = vrot.lane.b32.xlu0 %v55, 24
    %v1834 = vpop.permute.xlu0 %1833
    %1835 = vrot.lane.b32.xlu0 %v56, 24
    %v1836 = vpop.permute.xlu0 %1835
    %1837 = vrot.lane.b32.xlu0 %v57, 24
    %v1838 = vpop.permute.xlu0 %1837
    %v1839 = vsel %vm1821, %v1832, %v1834
    %v1840 = vsel %vm1821, %v1834, %v1836
    %v1841 = vsel %vm1821, %v1836, %v1838
    %1845 = vst [vmem:[#allocation3 + $0x48] sm:$0xff] %v1839
    %1846 = vst [vmem:[#allocation3 + $0x50] sm:$0xff] %v1840
    %1847 = vst [vmem:[#allocation3 + $0x58] sm:$0xff] %v1841
    %v1848 = vsub.f32 %v55, %v55
    %v1849 = vsub.f32 %v56, %v56
    %v1850 = vsub.f32 %v57, %v57
    %v1851 = vmul.f32 %v1848, %v1848
    %v1852 = vmul.f32 %v1849, %v1849
    %v1853 = vmul.f32 %v1850, %v1850
    %1854 = vst [vmem:[#allocation2 + $0x3c0] sm:$0xff] %v1851
    %1855 = vst [vmem:[#allocation2 + $0x3c8] sm:$0xff] %v1852
    %1856 = vst [vmem:[#allocation2 + $0x3d0] sm:$0xff] %v1853
    %1857 = vst [vmem:[#allocation3 + $0x60] sm:$0xff] %v55
    %1858 = vst [vmem:[#allocation3 + $0x68] sm:$0xff] %v56
    %1859 = vst [vmem:[#allocation3 + $0x70] sm:$0xff] %v57
    %v1862 = vsub.f32 %v55, %v1834
    %v1863 = vsub.f32 %v56, %v1840
    %v1864 = vsub.f32 %v57, %v1841
    %v1865 = vsub.f32 %v58, %v1838
    %v1866 = vmul.f32 %v1862, %v1862
    %v1867 = vmul.f32 %v1863, %v1863
    %v1868 = vmul.f32 %v1864, %v1864
    %v1869 = vmul.f32 %v1865, %v1865
    %1874 = vrot.lane.b32.xlu0 %v1866, 104
    %v1875 = vpop.permute.xlu0 %1874
    %1876 = vrot.lane.b32.xlu0 %v1867, 104
    %v1877 = vpop.permute.xlu0 %1876
    %1878 = vrot.lane.b32.xlu0 %v1868, 104
    %v1879 = vpop.permute.xlu0 %1878
    %1880 = vrot.lane.b32.xlu0 %v1869, 104
    %v1881 = vpop.permute.xlu0 %1880
    %v1882 = vsel %vm1794, %v1875, %v1877
    %v1883 = vsel %vm1794, %v1877, %v1879
    %v1884 = vsel %vm1794, %v1879, %v1881
    %1888 = vst [vmem:[#allocation2 + $0x3d8] sm:$0xff] %v1882
    %1889 = vst [vmem:[#allocation2 + $0x3e0] sm:$0xff] %v1883
    %1890 = vst [vmem:[#allocation2 + $0x3e8] sm:$0xff] %v1884
    %1891 = vrot.lane.b32.xlu0 %v58, 104
    %v1892 = vpop.permute.xlu0 %1891
    %v1893 = vsel %vm1794, %v1793, %v1892
    %1895 = vst [vmem:[#allocation3 + $0x78] sm:$0xff] %v1795
    %1896 = vst [vmem:[#allocation3 + $0x80] sm:$0xff] %v1796
    %1897 = vst [vmem:[#allocation3 + $0x88] sm:$0xff] %v1893
    %1898 = vrot.lane.b32.xlu0 %v55, 48
    %v1899 = vpop.permute.xlu0 %1898
    %1900 = vrot.lane.b32.xlu0 %v56, 48
    %v1901 = vpop.permute.xlu0 %1900
    %1902 = vrot.lane.b32.xlu0 %v57, 48
    %v1903 = vpop.permute.xlu0 %1902
    %v1904 = vsel %vm1778, %v1899, %v1901
    %v1905 = vsel %vm1778, %v1901, %v1903
    %v1910 = vsub.f32 %v55, %v1899
    %v1911 = vsub.f32 %v56, %v1904
    %v1912 = vsub.f32 %v57, %v1905
    %v1913 = vsub.f32 %v58, %v1903
    %v1914 = vmul.f32 %v1910, %v1910
    %v1915 = vmul.f32 %v1911, %v1911
    %v1916 = vmul.f32 %v1912, %v1912
    %v1917 = vmul.f32 %v1913, %v1913
    %1922 = vrot.lane.b32.xlu0 %v1914, 80
    %v1923 = vpop.permute.xlu0 %1922
    %1924 = vrot.lane.b32.xlu0 %v1915, 80
    %v1925 = vpop.permute.xlu0 %1924
    %1926 = vrot.lane.b32.xlu0 %v1916, 80
    %v1927 = vpop.permute.xlu0 %1926
    %1928 = vrot.lane.b32.xlu0 %v1917, 80
    %v1929 = vpop.permute.xlu0 %1928
    %v1930 = vsel %vm1751, %v1923, %v1925
    %v1931 = vsel %vm1751, %v1925, %v1927
    %v1932 = vsel %vm1751, %v1927, %v1929
    %1936 = vst [vmem:[#allocation2 + $0x3f0] sm:$0xff] %v1930
    %1937 = vst [vmem:[#allocation2 + $0x3f8] sm:$0xff] %v1931
    %1938 = vst [vmem:[#allocation2 + $0x400] sm:$0xff] %v1932
    %1939 = vrot.lane.b32.xlu0 %v55, 72
    %v1940 = vpop.permute.xlu0 %1939
    %1941 = vrot.lane.b32.xlu0 %v56, 72
    %v1942 = vpop.permute.xlu0 %1941
    %1943 = vrot.lane.b32.xlu0 %v57, 72
    %v1944 = vpop.permute.xlu0 %1943
    %v1945 = vsel %vm1735, %v1940, %v1942
    %v1946 = vsel %vm1735, %v1942, %v1944
    %v1951 = vsub.f32 %v55, %v1940
    %v1952 = vsub.f32 %v56, %v1945
    %v1953 = vsub.f32 %v57, %v1946
    %v1954 = vsub.f32 %v58, %v1944
    %v1955 = vmul.f32 %v1951, %v1951
    %v1956 = vmul.f32 %v1952, %v1952
    %v1957 = vmul.f32 %v1953, %v1953
    %v1958 = vmul.f32 %v1954, %v1954
    %1963 = vrot.lane.b32.xlu0 %v1955, 56
    %v1964 = vpop.permute.xlu0 %1963
    %1965 = vrot.lane.b32.xlu0 %v1956, 56
    %v1966 = vpop.permute.xlu0 %1965
    %1967 = vrot.lane.b32.xlu0 %v1957, 56
    %v1968 = vpop.permute.xlu0 %1967
    %1969 = vrot.lane.b32.xlu0 %v1958, 56
    %v1970 = vpop.permute.xlu0 %1969
    %v1971 = vsel %vm1708, %v1964, %v1966
    %v1972 = vsel %vm1708, %v1966, %v1968
    %v1973 = vsel %vm1708, %v1968, %v1970
    %1977 = vst [vmem:[#allocation2 + $0x408] sm:$0xff] %v1971
    %1978 = vst [vmem:[#allocation2 + $0x410] sm:$0xff] %v1972
    %1979 = vst [vmem:[#allocation2 + $0x418] sm:$0xff] %v1973
    %1980 = vrot.lane.b32.xlu0 %v55, 96
    %v1981 = vpop.permute.xlu0 %1980
    %1982 = vrot.lane.b32.xlu0 %v56, 96
    %v1983 = vpop.permute.xlu0 %1982
    %1984 = vrot.lane.b32.xlu0 %v57, 96
    %v1985 = vpop.permute.xlu0 %1984
    %v1986 = vsel %vm1692, %v1981, %v1983
    %v1987 = vsel %vm1692, %v1983, %v1985
    %v1992 = vsub.f32 %v55, %v1981
    %v1993 = vsub.f32 %v56, %v1986
    %v1994 = vsub.f32 %v57, %v1987
    %v1995 = vsub.f32 %v58, %v1985
    %v1996 = vmul.f32 %v1992, %v1992
    %v1997 = vmul.f32 %v1993, %v1993
    %v1998 = vmul.f32 %v1994, %v1994
    %v1999 = vmul.f32 %v1995, %v1995
    %2004 = vrot.lane.b32.xlu0 %v1996, 32
    %v2005 = vpop.permute.xlu0 %2004
    %2006 = vrot.lane.b32.xlu0 %v1997, 32
    %v2007 = vpop.permute.xlu0 %2006
    %2008 = vrot.lane.b32.xlu0 %v1998, 32
    %v2009 = vpop.permute.xlu0 %2008
    %2010 = vrot.lane.b32.xlu0 %v1999, 32
    %v2011 = vpop.permute.xlu0 %2010
    %v2012 = vsel %vm1665, %v2005, %v2007
    %v2013 = vsel %vm1665, %v2007, %v2009
    %v2014 = vsel %vm1665, %v2009, %v2011
    %2018 = vst [vmem:[#allocation2 + $0x420] sm:$0xff] %v2012
    %2019 = vst [vmem:[#allocation2 + $0x428] sm:$0xff] %v2013
    %2020 = vst [vmem:[#allocation2 + $0x430] sm:$0xff] %v2014
    %2021 = vrot.lane.b32.xlu0 %v55, 33
    %v2022 = vpop.permute.xlu0 %2021
    %2023 = vrot.lane.b32.xlu0 %v56, 33
    %v2024 = vpop.permute.xlu0 %2023
    %2025 = vrot.lane.b32.xlu0 %v57, 33
    %v2026 = vpop.permute.xlu0 %2025
    %v2027 = vsel %vm1649, %v2022, %v2024
    %v2028 = vsel %vm1649, %v2024, %v2026
    %v2033 = vsub.f32 %v54, %v2022
    %v2034 = vsub.f32 %v55, %v2027
    %v2035 = vsub.f32 %v56, %v2028
    %v2036 = vsub.f32 %v57, %v2026
    %v2037 = vmul.f32 %v2033, %v2033
    %v2038 = vmul.f32 %v2034, %v2034
    %v2039 = vmul.f32 %v2035, %v2035
    %v2040 = vmul.f32 %v2036, %v2036
    %2045 = vrot.lane.b32.xlu0 %v2037, 95
    %v2046 = vpop.permute.xlu0 %2045
    %2047 = vrot.lane.b32.xlu0 %v2038, 95
    %v2048 = vpop.permute.xlu0 %2047
    %2049 = vrot.lane.b32.xlu0 %v2039, 95
    %v2050 = vpop.permute.xlu0 %2049
    %2051 = vrot.lane.b32.xlu0 %v2040, 95
    %v2052 = vpop.permute.xlu0 %2051
    %v2053 = vsel %vm1622, %v2046, %v2048
    %v2054 = vsel %vm1622, %v2048, %v2050
    %v2055 = vsel %vm1622, %v2050, %v2052
    %2059 = vst [vmem:[#allocation2 + $0x438] sm:$0xff] %v2053
    %2060 = vst [vmem:[#allocation2 + $0x440] sm:$0xff] %v2054
    %2061 = vst [vmem:[#allocation2 + $0x448] sm:$0xff] %v2055
    %2062 = vrot.lane.b32.xlu0 %v55, 57
    %v2063 = vpop.permute.xlu0 %2062
    %2064 = vrot.lane.b32.xlu0 %v56, 57
    %v2065 = vpop.permute.xlu0 %2064
    %2066 = vrot.lane.b32.xlu0 %v57, 57
    %v2067 = vpop.permute.xlu0 %2066
    %v2068 = vsel %vm1606, %v2063, %v2065
    %v2069 = vsel %vm1606, %v2065, %v2067
    %v2074 = vsub.f32 %v54, %v2063
    %v2075 = vsub.f32 %v55, %v2068
    %v2076 = vsub.f32 %v56, %v2069
    %v2077 = vsub.f32 %v57, %v2067
    %v2078 = vmul.f32 %v2074, %v2074
    %v2079 = vmul.f32 %v2075, %v2075
    %v2080 = vmul.f32 %v2076, %v2076
    %v2081 = vmul.f32 %v2077, %v2077
    %2086 = vrot.lane.b32.xlu0 %v2078, 71
    %v2087 = vpop.permute.xlu0 %2086
    %2088 = vrot.lane.b32.xlu0 %v2079, 71
    %v2089 = vpop.permute.xlu0 %2088
    %2090 = vrot.lane.b32.xlu0 %v2080, 71
    %v2091 = vpop.permute.xlu0 %2090
    %2092 = vrot.lane.b32.xlu0 %v2081, 71
    %v2093 = vpop.permute.xlu0 %2092
    %v2094 = vsel %vm1579, %v2087, %v2089
    %v2095 = vsel %vm1579, %v2089, %v2091
    %v2096 = vsel %vm1579, %v2091, %v2093
    %2100 = vst [vmem:[#allocation2 + $0x450] sm:$0xff] %v2094
    %2101 = vst [vmem:[#allocation2 + $0x458] sm:$0xff] %v2095
    %2102 = vst [vmem:[#allocation2 + $0x460] sm:$0xff] %v2096
    %2103 = vrot.lane.b32.xlu0 %v55, 81
    %v2104 = vpop.permute.xlu0 %2103
    %2105 = vrot.lane.b32.xlu0 %v56, 81
    %v2106 = vpop.permute.xlu0 %2105
    %2107 = vrot.lane.b32.xlu0 %v57, 81
    %v2108 = vpop.permute.xlu0 %2107
    %v2109 = vsel %vm1563, %v2104, %v2106
    %v2110 = vsel %vm1563, %v2106, %v2108
    %v2115 = vsub.f32 %v54, %v2104
    %v2116 = vsub.f32 %v55, %v2109
    %v2117 = vsub.f32 %v56, %v2110
    %v2118 = vsub.f32 %v57, %v2108
    %v2119 = vmul.f32 %v2115, %v2115
    %v2120 = vmul.f32 %v2116, %v2116
    %v2121 = vmul.f32 %v2117, %v2117
    %v2122 = vmul.f32 %v2118, %v2118
    %2127 = vrot.lane.b32.xlu0 %v2119, 47
    %v2128 = vpop.permute.xlu0 %2127
    %2129 = vrot.lane.b32.xlu0 %v2120, 47
    %v2130 = vpop.permute.xlu0 %2129
    %2131 = vrot.lane.b32.xlu0 %v2121, 47
    %v2132 = vpop.permute.xlu0 %2131
    %2133 = vrot.lane.b32.xlu0 %v2122, 47
    %v2134 = vpop.permute.xlu0 %2133
    %v2135 = vsel %vm1536, %v2128, %v2130
    %v2136 = vsel %vm1536, %v2130, %v2132
    %v2137 = vsel %vm1536, %v2132, %v2134
    %2141 = vst [vmem:[#allocation2 + $0x468] sm:$0xff] %v2135
    %2142 = vst [vmem:[#allocation2 + $0x470] sm:$0xff] %v2136
    %2143 = vst [vmem:[#allocation2 + $0x478] sm:$0xff] %v2137
    %v2146 = vsub.f32 %v54, %v1514
    %v2147 = vsub.f32 %v55, %v1521
    %v2148 = vsub.f32 %v56, %v1522
    %v2149 = vsub.f32 %v57, %v1518
    %v2150 = vmul.f32 %v2146, %v2146
    %v2151 = vmul.f32 %v2147, %v2147
    %v2152 = vmul.f32 %v2148, %v2148
    %v2153 = vmul.f32 %v2149, %v2149
    %2158 = vrot.lane.b32.xlu0 %v2150, 23
    %v2159 = vpop.permute.xlu0 %2158
    %2160 = vrot.lane.b32.xlu0 %v2151, 23
    %v2161 = vpop.permute.xlu0 %2160
    %2162 = vrot.lane.b32.xlu0 %v2152, 23
    %v2163 = vpop.permute.xlu0 %2162
    %2164 = vrot.lane.b32.xlu0 %v2153, 23
    %v2165 = vpop.permute.xlu0 %2164
    %v2166 = vsel %vm1475, %v2159, %v2161
    %v2167 = vsel %vm1475, %v2161, %v2163
    %v2168 = vsel %vm1475, %v2163, %v2165
    %2172 = vst [vmem:[#allocation2 + $0x480] sm:$0xff] %v2166
    %2173 = vst [vmem:[#allocation2 + $0x488] sm:$0xff] %v2167
    %2174 = vst [vmem:[#allocation2 + $0x490] sm:$0xff] %v2168
    %2175 = vrot.lane.b32.xlu0 %v54, 23
    %v2176 = vpop.permute.xlu0 %2175
    %v2177 = vsel %vm1475, %v2176, %v1470
    %2179 = vst [vmem:[#allocation3 + $0x90] sm:$0xff] %v2177
    %2180 = vst [vmem:[#allocation3 + $0x98] sm:$0xff] %v1476
    %2181 = vst [vmem:[#allocation3 + $0xa0] sm:$0xff] %v1477
    %v2184 = vsub.f32 %v55, %v1455
    %v2185 = vsub.f32 %v56, %v1461
    %v2186 = vsub.f32 %v57, %v1462
    %v2187 = vsub.f32 %v58, %v1459
    %v2188 = vmul.f32 %v2184, %v2184
    %v2189 = vmul.f32 %v2185, %v2185
    %v2190 = vmul.f32 %v2186, %v2186
    %v2191 = vmul.f32 %v2187, %v2187
    %2196 = vrot.lane.b32.xlu0 %v2188, 127
    %v2197 = vpop.permute.xlu0 %2196
    %2198 = vrot.lane.b32.xlu0 %v2189, 127
    %v2199 = vpop.permute.xlu0 %2198
    %2200 = vrot.lane.b32.xlu0 %v2190, 127
    %v2201 = vpop.permute.xlu0 %2200
    %2202 = vrot.lane.b32.xlu0 %v2191, 127
    %v2203 = vpop.permute.xlu0 %2202
    %v2204 = vsel %vm1415, %v2197, %v2199
    %v2205 = vsel %vm1415, %v2199, %v2201
    %v2206 = vsel %vm1415, %v2201, %v2203
    %2210 = vst [vmem:[#allocation2 + $0x498] sm:$0xff] %v2204
    %2211 = vst [vmem:[#allocation2 + $0x4a0] sm:$0xff] %v2205
    %2212 = vst [vmem:[#allocation2 + $0x4a8] sm:$0xff] %v2206
    %2213 = vrot.lane.b32.xlu0 %v58, 127
    %v2214 = vpop.permute.xlu0 %2213
    %v2215 = vsel %vm1415, %v1414, %v2214
    %2217 = vst [vmem:[#allocation3 + $0xa8] sm:$0xff] %v1416
    %2218 = vst [vmem:[#allocation3 + $0xb0] sm:$0xff] %v1417
    %2219 = vst [vmem:[#allocation3 + $0xb8] sm:$0xff] %v2215
    %v2222 = vsub.f32 %v55, %v1395
    %v2223 = vsub.f32 %v56, %v1401
    %v2224 = vsub.f32 %v57, %v1402
    %v2225 = vsub.f32 %v58, %v1399
    %v2226 = vmul.f32 %v2222, %v2222
    %v2227 = vmul.f32 %v2223, %v2223
    %v2228 = vmul.f32 %v2224, %v2224
    %v2229 = vmul.f32 %v2225, %v2225
    %2234 = vrot.lane.b32.xlu0 %v2226, 103
    %v2235 = vpop.permute.xlu0 %2234
    %2236 = vrot.lane.b32.xlu0 %v2227, 103
    %v2237 = vpop.permute.xlu0 %2236
    %2238 = vrot.lane.b32.xlu0 %v2228, 103
    %v2239 = vpop.permute.xlu0 %2238
    %2240 = vrot.lane.b32.xlu0 %v2229, 103
    %v2241 = vpop.permute.xlu0 %2240
    %v2242 = vsel %vm1354, %v2235, %v2237
    %v2243 = vsel %vm1354, %v2237, %v2239
    %v2244 = vsel %vm1354, %v2239, %v2241
    %2248 = vst [vmem:[#allocation2 + $0x4b0] sm:$0xff] %v2242
    %2249 = vst [vmem:[#allocation2 + $0x4b8] sm:$0xff] %v2243
    %2250 = vst [vmem:[#allocation2 + $0x4c0] sm:$0xff] %v2244
    %2251 = vrot.lane.b32.xlu0 %v58, 103
    %v2252 = vpop.permute.xlu0 %2251
    %v2253 = vsel %vm1354, %v1353, %v2252
    %2255 = vst [vmem:[#allocation3 + $0xc0] sm:$0xff] %v1355
    %2256 = vst [vmem:[#allocation3 + $0xc8] sm:$0xff] %v1356
    %2257 = vst [vmem:[#allocation3 + $0xd0] sm:$0xff] %v2253
    %2258 = vrot.lane.b32.xlu0 %v55, 49
    %v2259 = vpop.permute.xlu0 %2258
    %2260 = vrot.lane.b32.xlu0 %v56, 49
    %v2261 = vpop.permute.xlu0 %2260
    %2262 = vrot.lane.b32.xlu0 %v57, 49
    %v2263 = vpop.permute.xlu0 %2262
    %v2264 = vsel %vm1338, %v2259, %v2261
    %v2265 = vsel %vm1338, %v2261, %v2263
    %v2270 = vsub.f32 %v55, %v2259
    %v2271 = vsub.f32 %v56, %v2264
    %v2272 = vsub.f32 %v57, %v2265
    %v2273 = vsub.f32 %v58, %v2263
    %v2274 = vmul.f32 %v2270, %v2270
    %v2275 = vmul.f32 %v2271, %v2271
    %v2276 = vmul.f32 %v2272, %v2272
    %v2277 = vmul.f32 %v2273, %v2273
    %2282 = vrot.lane.b32.xlu0 %v2274, 79
    %v2283 = vpop.permute.xlu0 %2282
    %2284 = vrot.lane.b32.xlu0 %v2275, 79
    %v2285 = vpop.permute.xlu0 %2284
    %2286 = vrot.lane.b32.xlu0 %v2276, 79
    %v2287 = vpop.permute.xlu0 %2286
    %2288 = vrot.lane.b32.xlu0 %v2277, 79
    %v2289 = vpop.permute.xlu0 %2288
    %v2290 = vsel %vm1311, %v2283, %v2285
    %v2291 = vsel %vm1311, %v2285, %v2287
    %v2292 = vsel %vm1311, %v2287, %v2289
    %2296 = vst [vmem:[#allocation2 + $0x4c8] sm:$0xff] %v2290
    %2297 = vst [vmem:[#allocation2 + $0x4d0] sm:$0xff] %v2291
    %2298 = vst [vmem:[#allocation2 + $0x4d8] sm:$0xff] %v2292
    %2299 = vrot.lane.b32.xlu0 %v55, 73
    %v2300 = vpop.permute.xlu0 %2299
    %2301 = vrot.lane.b32.xlu0 %v56, 73
    %v2302 = vpop.permute.xlu0 %2301
    %2303 = vrot.lane.b32.xlu0 %v57, 73
    %v2304 = vpop.permute.xlu0 %2303
    %v2305 = vsel %vm1295, %v2300, %v2302
    %v2306 = vsel %vm1295, %v2302, %v2304
    %v2311 = vsub.f32 %v55, %v2300
    %v2312 = vsub.f32 %v56, %v2305
    %v2313 = vsub.f32 %v57, %v2306
    %v2314 = vsub.f32 %v58, %v2304
    %v2315 = vmul.f32 %v2311, %v2311
    %v2316 = vmul.f32 %v2312, %v2312
    %v2317 = vmul.f32 %v2313, %v2313
    %v2318 = vmul.f32 %v2314, %v2314
    %2323 = vrot.lane.b32.xlu0 %v2315, 55
    %v2324 = vpop.permute.xlu0 %2323
    %2325 = vrot.lane.b32.xlu0 %v2316, 55
    %v2326 = vpop.permute.xlu0 %2325
    %2327 = vrot.lane.b32.xlu0 %v2317, 55
    %v2328 = vpop.permute.xlu0 %2327
    %2329 = vrot.lane.b32.xlu0 %v2318, 55
    %v2330 = vpop.permute.xlu0 %2329
    %v2331 = vsel %vm1268, %v2324, %v2326
    %v2332 = vsel %vm1268, %v2326, %v2328
    %v2333 = vsel %vm1268, %v2328, %v2330
    %2337 = vst [vmem:[#allocation2 + $0x4e0] sm:$0xff] %v2331
    %2338 = vst [vmem:[#allocation2 + $0x4e8] sm:$0xff] %v2332
    %2339 = vst [vmem:[#allocation2 + $0x4f0] sm:$0xff] %v2333
    %2340 = vrot.lane.b32.xlu0 %v55, 97
    %v2341 = vpop.permute.xlu0 %2340
    %2342 = vrot.lane.b32.xlu0 %v56, 97
    %v2343 = vpop.permute.xlu0 %2342
    %2344 = vrot.lane.b32.xlu0 %v57, 97
    %v2345 = vpop.permute.xlu0 %2344
    %v2346 = vsel %vm1252, %v2341, %v2343
    %v2347 = vsel %vm1252, %v2343, %v2345
    %v2352 = vsub.f32 %v55, %v2341
    %v2353 = vsub.f32 %v56, %v2346
    %v2354 = vsub.f32 %v57, %v2347
    %v2355 = vsub.f32 %v58, %v2345
    %v2356 = vmul.f32 %v2352, %v2352
    %v2357 = vmul.f32 %v2353, %v2353
    %v2358 = vmul.f32 %v2354, %v2354
    %v2359 = vmul.f32 %v2355, %v2355
    %2364 = vrot.lane.b32.xlu0 %v2356, 31
    %v2365 = vpop.permute.xlu0 %2364
    %2366 = vrot.lane.b32.xlu0 %v2357, 31
    %v2367 = vpop.permute.xlu0 %2366
    %2368 = vrot.lane.b32.xlu0 %v2358, 31
    %v2369 = vpop.permute.xlu0 %2368
    %2370 = vrot.lane.b32.xlu0 %v2359, 31
    %v2371 = vpop.permute.xlu0 %2370
    %v2372 = vsel %vm1225, %v2365, %v2367
    %v2373 = vsel %vm1225, %v2367, %v2369
    %v2374 = vsel %vm1225, %v2369, %v2371
    %2378 = vst [vmem:[#allocation2 + $0x4f8] sm:$0xff] %v2372
    %2379 = vst [vmem:[#allocation2 + $0x500] sm:$0xff] %v2373
    %2380 = vst [vmem:[#allocation2 + $0x508] sm:$0xff] %v2374
    %2381 = vrot.lane.b32.xlu0 %v55, 34
    %v2382 = vpop.permute.xlu0 %2381
    %2383 = vrot.lane.b32.xlu0 %v56, 34
    %v2384 = vpop.permute.xlu0 %2383
    %2385 = vrot.lane.b32.xlu0 %v57, 34
    %v2386 = vpop.permute.xlu0 %2385
    %v2387 = vsel %vm1209, %v2382, %v2384
    %v2388 = vsel %vm1209, %v2384, %v2386
    %v2393 = vsub.f32 %v54, %v2382
    %v2394 = vsub.f32 %v55, %v2387
    %v2395 = vsub.f32 %v56, %v2388
    %v2396 = vsub.f32 %v57, %v2386
    %v2397 = vmul.f32 %v2393, %v2393
    %v2398 = vmul.f32 %v2394, %v2394
    %v2399 = vmul.f32 %v2395, %v2395
    %v2400 = vmul.f32 %v2396, %v2396
    %2405 = vrot.lane.b32.xlu0 %v2397, 94
    %v2406 = vpop.permute.xlu0 %2405
    %2407 = vrot.lane.b32.xlu0 %v2398, 94
    %v2408 = vpop.permute.xlu0 %2407
    %2409 = vrot.lane.b32.xlu0 %v2399, 94
    %v2410 = vpop.permute.xlu0 %2409
    %2411 = vrot.lane.b32.xlu0 %v2400, 94
    %v2412 = vpop.permute.xlu0 %2411
    %v2413 = vsel %vm1182, %v2406, %v2408
    %v2414 = vsel %vm1182, %v2408, %v2410
    %v2415 = vsel %vm1182, %v2410, %v2412
    %2419 = vst [vmem:[#allocation2 + $0x510] sm:$0xff] %v2413
    %2420 = vst [vmem:[#allocation2 + $0x518] sm:$0xff] %v2414
    %2421 = vst [vmem:[#allocation2 + $0x520] sm:$0xff] %v2415
    %2422 = vrot.lane.b32.xlu0 %v55, 58
    %v2423 = vpop.permute.xlu0 %2422
    %2424 = vrot.lane.b32.xlu0 %v56, 58
    %v2425 = vpop.permute.xlu0 %2424
    %2426 = vrot.lane.b32.xlu0 %v57, 58
    %v2427 = vpop.permute.xlu0 %2426
    %v2428 = vsel %vm1166, %v2423, %v2425
    %v2429 = vsel %vm1166, %v2425, %v2427
    %v2434 = vsub.f32 %v54, %v2423
    %v2435 = vsub.f32 %v55, %v2428
    %v2436 = vsub.f32 %v56, %v2429
    %v2437 = vsub.f32 %v57, %v2427
    %v2438 = vmul.f32 %v2434, %v2434
    %v2439 = vmul.f32 %v2435, %v2435
    %v2440 = vmul.f32 %v2436, %v2436
    %v2441 = vmul.f32 %v2437, %v2437
    %2446 = vrot.lane.b32.xlu0 %v2438, 70
    %v2447 = vpop.permute.xlu0 %2446
    %2448 = vrot.lane.b32.xlu0 %v2439, 70
    %v2449 = vpop.permute.xlu0 %2448
    %2450 = vrot.lane.b32.xlu0 %v2440, 70
    %v2451 = vpop.permute.xlu0 %2450
    %2452 = vrot.lane.b32.xlu0 %v2441, 70
    %v2453 = vpop.permute.xlu0 %2452
    %v2454 = vsel %vm1139, %v2447, %v2449
    %v2455 = vsel %vm1139, %v2449, %v2451
    %v2456 = vsel %vm1139, %v2451, %v2453
    %2460 = vst [vmem:[#allocation2 + $0x528] sm:$0xff] %v2454
    %2461 = vst [vmem:[#allocation2 + $0x530] sm:$0xff] %v2455
    %2462 = vst [vmem:[#allocation2 + $0x538] sm:$0xff] %v2456
    %2463 = vrot.lane.b32.xlu0 %v55, 82
    %v2464 = vpop.permute.xlu0 %2463
    %2465 = vrot.lane.b32.xlu0 %v56, 82
    %v2466 = vpop.permute.xlu0 %2465
    %2467 = vrot.lane.b32.xlu0 %v57, 82
    %v2468 = vpop.permute.xlu0 %2467
    %v2469 = vsel %vm1123, %v2464, %v2466
    %v2470 = vsel %vm1123, %v2466, %v2468
    %v2475 = vsub.f32 %v54, %v2464
    %v2476 = vsub.f32 %v55, %v2469
    %v2477 = vsub.f32 %v56, %v2470
    %v2478 = vsub.f32 %v57, %v2468
    %v2479 = vmul.f32 %v2475, %v2475
    %v2480 = vmul.f32 %v2476, %v2476
    %v2481 = vmul.f32 %v2477, %v2477
    %v2482 = vmul.f32 %v2478, %v2478
    %2487 = vrot.lane.b32.xlu0 %v2479, 46
    %v2488 = vpop.permute.xlu0 %2487
    %2489 = vrot.lane.b32.xlu0 %v2480, 46
    %v2490 = vpop.permute.xlu0 %2489
    %2491 = vrot.lane.b32.xlu0 %v2481, 46
    %v2492 = vpop.permute.xlu0 %2491
    %2493 = vrot.lane.b32.xlu0 %v2482, 46
    %v2494 = vpop.permute.xlu0 %2493
    %v2495 = vsel %vm1096, %v2488, %v2490
    %v2496 = vsel %vm1096, %v2490, %v2492
    %v2497 = vsel %vm1096, %v2492, %v2494
    %2501 = vst [vmem:[#allocation2 + $0x540] sm:$0xff] %v2495
    %2502 = vst [vmem:[#allocation2 + $0x548] sm:$0xff] %v2496
    %2503 = vst [vmem:[#allocation2 + $0x550] sm:$0xff] %v2497
    %2504 = vrot.lane.b32.xlu0 %v55, 106
    %v2505 = vpop.permute.xlu0 %2504
    %2506 = vrot.lane.b32.xlu0 %v56, 106
    %v2507 = vpop.permute.xlu0 %2506
    %2508 = vrot.lane.b32.xlu0 %v57, 106
    %v2509 = vpop.permute.xlu0 %2508
    %v2510 = vsel %vm1080, %v2505, %v2507
    %v2511 = vsel %vm1080, %v2507, %v2509
    %v2516 = vsub.f32 %v54, %v2505
    %v2517 = vsub.f32 %v55, %v2510
    %v2518 = vsub.f32 %v56, %v2511
    %v2519 = vsub.f32 %v57, %v2509
    %v2520 = vmul.f32 %v2516, %v2516
    %v2521 = vmul.f32 %v2517, %v2517
    %v2522 = vmul.f32 %v2518, %v2518
    %v2523 = vmul.f32 %v2519, %v2519
    %2528 = vrot.lane.b32.xlu0 %v2520, 22
    %v2529 = vpop.permute.xlu0 %2528
    %2530 = vrot.lane.b32.xlu0 %v2521, 22
    %v2531 = vpop.permute.xlu0 %2530
    %2532 = vrot.lane.b32.xlu0 %v2522, 22
    %v2533 = vpop.permute.xlu0 %2532
    %2534 = vrot.lane.b32.xlu0 %v2523, 22
    %v2535 = vpop.permute.xlu0 %2534
    %v2536 = vsel %vm1053, %v2529, %v2531
    %v2537 = vsel %vm1053, %v2531, %v2533
    %v2538 = vsel %vm1053, %v2533, %v2535
    %2542 = vst [vmem:[#allocation2 + $0x558] sm:$0xff] %v2536
    %2543 = vst [vmem:[#allocation2 + $0x560] sm:$0xff] %v2537
    %2544 = vst [vmem:[#allocation2 + $0x568] sm:$0xff] %v2538
    %2545 = vrot.lane.b32.xlu0 %v55, 2
    %v2546 = vpop.permute.xlu0 %2545
    %2547 = vrot.lane.b32.xlu0 %v56, 2
    %v2548 = vpop.permute.xlu0 %2547
    %2549 = vrot.lane.b32.xlu0 %v57, 2
    %v2550 = vpop.permute.xlu0 %2549
    %v2551 = vsel %vm1037, %v2546, %v2548
    %v2552 = vsel %vm1037, %v2548, %v2550
    %v2557 = vsub.f32 %v55, %v2546
    %v2558 = vsub.f32 %v56, %v2551
    %v2559 = vsub.f32 %v57, %v2552
    %v2560 = vsub.f32 %v58, %v2550
    %v2561 = vmul.f32 %v2557, %v2557
    %v2562 = vmul.f32 %v2558, %v2558
    %v2563 = vmul.f32 %v2559, %v2559
    %v2564 = vmul.f32 %v2560, %v2560
    %2569 = vrot.lane.b32.xlu0 %v2561, 126
    %v2570 = vpop.permute.xlu0 %2569
    %2571 = vrot.lane.b32.xlu0 %v2562, 126
    %v2572 = vpop.permute.xlu0 %2571
    %2573 = vrot.lane.b32.xlu0 %v2563, 126
    %v2574 = vpop.permute.xlu0 %2573
    %2575 = vrot.lane.b32.xlu0 %v2564, 126
    %v2576 = vpop.permute.xlu0 %2575
    %v2577 = vsel %vm1010, %v2570, %v2572
    %v2578 = vsel %vm1010, %v2572, %v2574
    %v2579 = vsel %vm1010, %v2574, %v2576
    %2583 = vst [vmem:[#allocation2 + $0x570] sm:$0xff] %v2577
    %2584 = vst [vmem:[#allocation2 + $0x578] sm:$0xff] %v2578
    %2585 = vst [vmem:[#allocation2 + $0x580] sm:$0xff] %v2579
    %2586 = vrot.lane.b32.xlu0 %v55, 26
    %v2587 = vpop.permute.xlu0 %2586
    %2588 = vrot.lane.b32.xlu0 %v56, 26
    %v2589 = vpop.permute.xlu0 %2588
    %2590 = vrot.lane.b32.xlu0 %v57, 26
    %v2591 = vpop.permute.xlu0 %2590
    %v2592 = vsel %vm994, %v2587, %v2589
    %v2593 = vsel %vm994, %v2589, %v2591
    %v2598 = vsub.f32 %v55, %v2587
    %v2599 = vsub.f32 %v56, %v2592
    %v2600 = vsub.f32 %v57, %v2593
    %v2601 = vsub.f32 %v58, %v2591
    %v2602 = vmul.f32 %v2598, %v2598
    %v2603 = vmul.f32 %v2599, %v2599
    %v2604 = vmul.f32 %v2600, %v2600
    %v2605 = vmul.f32 %v2601, %v2601
    %2610 = vrot.lane.b32.xlu0 %v2602, 102
    %v2611 = vpop.permute.xlu0 %2610
    %2612 = vrot.lane.b32.xlu0 %v2603, 102
    %v2613 = vpop.permute.xlu0 %2612
    %2614 = vrot.lane.b32.xlu0 %v2604, 102
    %v2615 = vpop.permute.xlu0 %2614
    %2616 = vrot.lane.b32.xlu0 %v2605, 102
    %v2617 = vpop.permute.xlu0 %2616
    %v2618 = vsel %vm967, %v2611, %v2613
    %v2619 = vsel %vm967, %v2613, %v2615
    %v2620 = vsel %vm967, %v2615, %v2617
    %2624 = vst [vmem:[#allocation2 + $0x588] sm:$0xff] %v2618
    %2625 = vst [vmem:[#allocation2 + $0x590] sm:$0xff] %v2619
    %2626 = vst [vmem:[#allocation2 + $0x598] sm:$0xff] %v2620
    %2627 = vrot.lane.b32.xlu0 %v55, 50
    %v2628 = vpop.permute.xlu0 %2627
    %2629 = vrot.lane.b32.xlu0 %v56, 50
    %v2630 = vpop.permute.xlu0 %2629
    %2631 = vrot.lane.b32.xlu0 %v57, 50
    %v2632 = vpop.permute.xlu0 %2631
    %v2633 = vsel %vm951, %v2628, %v2630
    %v2634 = vsel %vm951, %v2630, %v2632
    %v2639 = vsub.f32 %v55, %v2628
    %v2640 = vsub.f32 %v56, %v2633
    %v2641 = vsub.f32 %v57, %v2634
    %v2642 = vsub.f32 %v58, %v2632
    %v2643 = vmul.f32 %v2639, %v2639
    %v2644 = vmul.f32 %v2640, %v2640
    %v2645 = vmul.f32 %v2641, %v2641
    %v2646 = vmul.f32 %v2642, %v2642
    %2651 = vrot.lane.b32.xlu0 %v2643, 78
    %v2652 = vpop.permute.xlu0 %2651
    %2653 = vrot.lane.b32.xlu0 %v2644, 78
    %v2654 = vpop.permute.xlu0 %2653
    %2655 = vrot.lane.b32.xlu0 %v2645, 78
    %v2656 = vpop.permute.xlu0 %2655
    %2657 = vrot.lane.b32.xlu0 %v2646, 78
    %v2658 = vpop.permute.xlu0 %2657
    %v2659 = vsel %vm924, %v2652, %v2654
    %v2660 = vsel %vm924, %v2654, %v2656
    %v2661 = vsel %vm924, %v2656, %v2658
    %2665 = vst [vmem:[#allocation2 + $0x5a0] sm:$0xff] %v2659
    %2666 = vst [vmem:[#allocation2 + $0x5a8] sm:$0xff] %v2660
    %2667 = vst [vmem:[#allocation2 + $0x5b0] sm:$0xff] %v2661
    %2668 = vrot.lane.b32.xlu0 %v55, 74
    %v2669 = vpop.permute.xlu0 %2668
    %2670 = vrot.lane.b32.xlu0 %v56, 74
    %v2671 = vpop.permute.xlu0 %2670
    %2672 = vrot.lane.b32.xlu0 %v57, 74
    %v2673 = vpop.permute.xlu0 %2672
    %v2674 = vsel %vm908, %v2669, %v2671
    %v2675 = vsel %vm908, %v2671, %v2673
    %v2680 = vsub.f32 %v55, %v2669
    %v2681 = vsub.f32 %v56, %v2674
    %v2682 = vsub.f32 %v57, %v2675
    %v2683 = vsub.f32 %v58, %v2673
    %v2684 = vmul.f32 %v2680, %v2680
    %v2685 = vmul.f32 %v2681, %v2681
    %v2686 = vmul.f32 %v2682, %v2682
    %v2687 = vmul.f32 %v2683, %v2683
    %2692 = vrot.lane.b32.xlu0 %v2684, 54
    %v2693 = vpop.permute.xlu0 %2692
    %2694 = vrot.lane.b32.xlu0 %v2685, 54
    %v2695 = vpop.permute.xlu0 %2694
    %2696 = vrot.lane.b32.xlu0 %v2686, 54
    %v2697 = vpop.permute.xlu0 %2696
    %2698 = vrot.lane.b32.xlu0 %v2687, 54
    %v2699 = vpop.permute.xlu0 %2698
    %v2700 = vsel %vm881, %v2693, %v2695
    %v2701 = vsel %vm881, %v2695, %v2697
    %v2702 = vsel %vm881, %v2697, %v2699
    %2706 = vst [vmem:[#allocation2 + $0x5b8] sm:$0xff] %v2700
    %2707 = vst [vmem:[#allocation2 + $0x5c0] sm:$0xff] %v2701
    %2708 = vst [vmem:[#allocation2 + $0x5c8] sm:$0xff] %v2702
    %2709 = vrot.lane.b32.xlu0 %v55, 98
    %v2710 = vpop.permute.xlu0 %2709
    %2711 = vrot.lane.b32.xlu0 %v56, 98
    %v2712 = vpop.permute.xlu0 %2711
    %2713 = vrot.lane.b32.xlu0 %v57, 98
    %v2714 = vpop.permute.xlu0 %2713
    %v2715 = vsel %vm865, %v2710, %v2712
    %v2716 = vsel %vm865, %v2712, %v2714
    %v2721 = vsub.f32 %v55, %v2710
    %v2722 = vsub.f32 %v56, %v2715
    %v2723 = vsub.f32 %v57, %v2716
    %v2724 = vsub.f32 %v58, %v2714
    %v2725 = vmul.f32 %v2721, %v2721
    %v2726 = vmul.f32 %v2722, %v2722
    %v2727 = vmul.f32 %v2723, %v2723
    %v2728 = vmul.f32 %v2724, %v2724
    %2733 = vrot.lane.b32.xlu0 %v2725, 30
    %v2734 = vpop.permute.xlu0 %2733
    %2735 = vrot.lane.b32.xlu0 %v2726, 30
    %v2736 = vpop.permute.xlu0 %2735
    %2737 = vrot.lane.b32.xlu0 %v2727, 30
    %v2738 = vpop.permute.xlu0 %2737
    %2739 = vrot.lane.b32.xlu0 %v2728, 30
    %v2740 = vpop.permute.xlu0 %2739
    %v2741 = vsel %vm838, %v2734, %v2736
    %v2742 = vsel %vm838, %v2736, %v2738
    %v2743 = vsel %vm838, %v2738, %v2740
    %2747 = vst [vmem:[#allocation2 + $0x5d0] sm:$0xff] %v2741
    %2748 = vst [vmem:[#allocation2 + $0x5d8] sm:$0xff] %v2742
    %2749 = vst [vmem:[#allocation2 + $0x5e0] sm:$0xff] %v2743
    %2750 = vrot.lane.b32.xlu0 %v55, 35
    %v2751 = vpop.permute.xlu0 %2750
    %2752 = vrot.lane.b32.xlu0 %v56, 35
    %v2753 = vpop.permute.xlu0 %2752
    %2754 = vrot.lane.b32.xlu0 %v57, 35
    %v2755 = vpop.permute.xlu0 %2754
    %v2756 = vsel %vm822, %v2751, %v2753
    %v2757 = vsel %vm822, %v2753, %v2755
    %v2762 = vsub.f32 %v54, %v2751
    %v2763 = vsub.f32 %v55, %v2756
    %v2764 = vsub.f32 %v56, %v2757
    %v2765 = vsub.f32 %v57, %v2755
    %v2766 = vmul.f32 %v2762, %v2762
    %v2767 = vmul.f32 %v2763, %v2763
    %v2768 = vmul.f32 %v2764, %v2764
    %v2769 = vmul.f32 %v2765, %v2765
    %2774 = vrot.lane.b32.xlu0 %v2766, 93
    %v2775 = vpop.permute.xlu0 %2774
    %2776 = vrot.lane.b32.xlu0 %v2767, 93
    %v2777 = vpop.permute.xlu0 %2776
    %2778 = vrot.lane.b32.xlu0 %v2768, 93
    %v2779 = vpop.permute.xlu0 %2778
    %2780 = vrot.lane.b32.xlu0 %v2769, 93
    %v2781 = vpop.permute.xlu0 %2780
    %v2782 = vsel %vm795, %v2775, %v2777
    %v2783 = vsel %vm795, %v2777, %v2779
    %v2784 = vsel %vm795, %v2779, %v2781
    %2788 = vst [vmem:[#allocation2 + $0x5e8] sm:$0xff] %v2782
    %2789 = vst [vmem:[#allocation2 + $0x5f0] sm:$0xff] %v2783
    %2790 = vst [vmem:[#allocation2 + $0x5f8] sm:$0xff] %v2784
    %2791 = vrot.lane.b32.xlu0 %v55, 59
    %v2792 = vpop.permute.xlu0 %2791
    %2793 = vrot.lane.b32.xlu0 %v56, 59
    %v2794 = vpop.permute.xlu0 %2793
    %2795 = vrot.lane.b32.xlu0 %v57, 59
    %v2796 = vpop.permute.xlu0 %2795
    %v2797 = vsel %vm779, %v2792, %v2794
    %v2798 = vsel %vm779, %v2794, %v2796
    %v2803 = vsub.f32 %v54, %v2792
    %v2804 = vsub.f32 %v55, %v2797
    %v2805 = vsub.f32 %v56, %v2798
    %v2806 = vsub.f32 %v57, %v2796
    %v2807 = vmul.f32 %v2803, %v2803
    %v2808 = vmul.f32 %v2804, %v2804
    %v2809 = vmul.f32 %v2805, %v2805
    %v2810 = vmul.f32 %v2806, %v2806
    %2815 = vrot.lane.b32.xlu0 %v2807, 69
    %v2816 = vpop.permute.xlu0 %2815
    %2817 = vrot.lane.b32.xlu0 %v2808, 69
    %v2818 = vpop.permute.xlu0 %2817
    %2819 = vrot.lane.b32.xlu0 %v2809, 69
    %v2820 = vpop.permute.xlu0 %2819
    %2821 = vrot.lane.b32.xlu0 %v2810, 69
    %v2822 = vpop.permute.xlu0 %2821
    %v2823 = vsel %vm752, %v2816, %v2818
    %v2824 = vsel %vm752, %v2818, %v2820
    %v2825 = vsel %vm752, %v2820, %v2822
    %2829 = vst [vmem:[#allocation2 + $0x600] sm:$0xff] %v2823
    %2830 = vst [vmem:[#allocation2 + $0x608] sm:$0xff] %v2824
    %2831 = vst [vmem:[#allocation2 + $0x610] sm:$0xff] %v2825
    %2832 = vrot.lane.b32.xlu0 %v55, 83
    %v2833 = vpop.permute.xlu0 %2832
    %2834 = vrot.lane.b32.xlu0 %v56, 83
    %v2835 = vpop.permute.xlu0 %2834
    %2836 = vrot.lane.b32.xlu0 %v57, 83
    %v2837 = vpop.permute.xlu0 %2836
    %v2838 = vsel %vm736, %v2833, %v2835
    %v2839 = vsel %vm736, %v2835, %v2837
    %v2844 = vsub.f32 %v54, %v2833
    %v2845 = vsub.f32 %v55, %v2838
    %v2846 = vsub.f32 %v56, %v2839
    %v2847 = vsub.f32 %v57, %v2837
    %v2848 = vmul.f32 %v2844, %v2844
    %v2849 = vmul.f32 %v2845, %v2845
    %v2850 = vmul.f32 %v2846, %v2846
    %v2851 = vmul.f32 %v2847, %v2847
    %2856 = vrot.lane.b32.xlu0 %v2848, 45
    %v2857 = vpop.permute.xlu0 %2856
    %2858 = vrot.lane.b32.xlu0 %v2849, 45
    %v2859 = vpop.permute.xlu0 %2858
    %2860 = vrot.lane.b32.xlu0 %v2850, 45
    %v2861 = vpop.permute.xlu0 %2860
    %2862 = vrot.lane.b32.xlu0 %v2851, 45
    %v2863 = vpop.permute.xlu0 %2862
    %v2864 = vsel %vm709, %v2857, %v2859
    %v2865 = vsel %vm709, %v2859, %v2861
    %v2866 = vsel %vm709, %v2861, %v2863
    %2870 = vst [vmem:[#allocation2 + $0x618] sm:$0xff] %v2864
    %2871 = vst [vmem:[#allocation2 + $0x620] sm:$0xff] %v2865
    %2872 = vst [vmem:[#allocation2 + $0x628] sm:$0xff] %v2866
    %2873 = vrot.lane.b32.xlu0 %v55, 107
    %v2874 = vpop.permute.xlu0 %2873
    %2875 = vrot.lane.b32.xlu0 %v56, 107
    %v2876 = vpop.permute.xlu0 %2875
    %2877 = vrot.lane.b32.xlu0 %v57, 107
    %v2878 = vpop.permute.xlu0 %2877
    %v2879 = vsel %vm693, %v2874, %v2876
    %v2880 = vsel %vm693, %v2876, %v2878
    %v2885 = vsub.f32 %v54, %v2874
    %v2886 = vsub.f32 %v55, %v2879
    %v2887 = vsub.f32 %v56, %v2880
    %v2888 = vsub.f32 %v57, %v2878
    %v2889 = vmul.f32 %v2885, %v2885
    %v2890 = vmul.f32 %v2886, %v2886
    %v2891 = vmul.f32 %v2887, %v2887
    %v2892 = vmul.f32 %v2888, %v2888
    %2897 = vrot.lane.b32.xlu0 %v2889, 21
    %v2898 = vpop.permute.xlu0 %2897
    %2899 = vrot.lane.b32.xlu0 %v2890, 21
    %v2900 = vpop.permute.xlu0 %2899
    %2901 = vrot.lane.b32.xlu0 %v2891, 21
    %v2902 = vpop.permute.xlu0 %2901
    %2903 = vrot.lane.b32.xlu0 %v2892, 21
    %v2904 = vpop.permute.xlu0 %2903
    %v2905 = vsel %vm666, %v2898, %v2900
    %v2906 = vsel %vm666, %v2900, %v2902
    %v2907 = vsel %vm666, %v2902, %v2904
    %2911 = vst [vmem:[#allocation2 + $0x630] sm:$0xff] %v2905
    %2912 = vst [vmem:[#allocation2 + $0x638] sm:$0xff] %v2906
    %2913 = vst [vmem:[#allocation2 + $0x640] sm:$0xff] %v2907
    %2914 = vrot.lane.b32.xlu0 %v55, 3
    %v2915 = vpop.permute.xlu0 %2914
    %2916 = vrot.lane.b32.xlu0 %v56, 3
    %v2917 = vpop.permute.xlu0 %2916
    %2918 = vrot.lane.b32.xlu0 %v57, 3
    %v2919 = vpop.permute.xlu0 %2918
    %v2920 = vsel %vm650, %v2915, %v2917
    %v2921 = vsel %vm650, %v2917, %v2919
    %v2926 = vsub.f32 %v55, %v2915
    %v2927 = vsub.f32 %v56, %v2920
    %v2928 = vsub.f32 %v57, %v2921
    %v2929 = vsub.f32 %v58, %v2919
    %v2930 = vmul.f32 %v2926, %v2926
    %v2931 = vmul.f32 %v2927, %v2927
    %v2932 = vmul.f32 %v2928, %v2928
    %v2933 = vmul.f32 %v2929, %v2929
    %2938 = vrot.lane.b32.xlu0 %v2930, 125
    %v2939 = vpop.permute.xlu0 %2938
    %2940 = vrot.lane.b32.xlu0 %v2931, 125
    %v2941 = vpop.permute.xlu0 %2940
    %2942 = vrot.lane.b32.xlu0 %v2932, 125
    %v2943 = vpop.permute.xlu0 %2942
    %2944 = vrot.lane.b32.xlu0 %v2933, 125
    %v2945 = vpop.permute.xlu0 %2944
    %v2946 = vsel %vm623, %v2939, %v2941
    %v2947 = vsel %vm623, %v2941, %v2943
    %v2948 = vsel %vm623, %v2943, %v2945
    %2952 = vst [vmem:[#allocation2 + $0x648] sm:$0xff] %v2946
    %2953 = vst [vmem:[#allocation2 + $0x650] sm:$0xff] %v2947
    %2954 = vst [vmem:[#allocation2 + $0x658] sm:$0xff] %v2948
    %2955 = vrot.lane.b32.xlu0 %v55, 27
    %v2956 = vpop.permute.xlu0 %2955
    %2957 = vrot.lane.b32.xlu0 %v56, 27
    %v2958 = vpop.permute.xlu0 %2957
    %2959 = vrot.lane.b32.xlu0 %v57, 27
    %v2960 = vpop.permute.xlu0 %2959
    %v2961 = vsel %vm607, %v2956, %v2958
    %v2962 = vsel %vm607, %v2958, %v2960
    %v2967 = vsub.f32 %v55, %v2956
    %v2968 = vsub.f32 %v56, %v2961
    %v2969 = vsub.f32 %v57, %v2962
    %v2970 = vsub.f32 %v58, %v2960
    %v2971 = vmul.f32 %v2967, %v2967
    %v2972 = vmul.f32 %v2968, %v2968
    %v2973 = vmul.f32 %v2969, %v2969
    %v2974 = vmul.f32 %v2970, %v2970
    %2979 = vrot.lane.b32.xlu0 %v2971, 101
    %v2980 = vpop.permute.xlu0 %2979
    %2981 = vrot.lane.b32.xlu0 %v2972, 101
    %v2982 = vpop.permute.xlu0 %2981
    %2983 = vrot.lane.b32.xlu0 %v2973, 101
    %v2984 = vpop.permute.xlu0 %2983
    %2985 = vrot.lane.b32.xlu0 %v2974, 101
    %v2986 = vpop.permute.xlu0 %2985
    %v2987 = vsel %vm580, %v2980, %v2982
    %v2988 = vsel %vm580, %v2982, %v2984
    %v2989 = vsel %vm580, %v2984, %v2986
    %2993 = vst [vmem:[#allocation2 + $0x660] sm:$0xff] %v2987
    %2994 = vst [vmem:[#allocation2 + $0x668] sm:$0xff] %v2988
    %2995 = vst [vmem:[#allocation2 + $0x670] sm:$0xff] %v2989
    %2996 = vrot.lane.b32.xlu0 %v55, 51
    %v2997 = vpop.permute.xlu0 %2996
    %2998 = vrot.lane.b32.xlu0 %v56, 51
    %v2999 = vpop.permute.xlu0 %2998
    %3000 = vrot.lane.b32.xlu0 %v57, 51
    %v3001 = vpop.permute.xlu0 %3000
    %v3002 = vsel %vm564, %v2997, %v2999
    %v3003 = vsel %vm564, %v2999, %v3001
    %v3008 = vsub.f32 %v55, %v2997
    %v3009 = vsub.f32 %v56, %v3002
    %v3010 = vsub.f32 %v57, %v3003
    %v3011 = vsub.f32 %v58, %v3001
    %v3012 = vmul.f32 %v3008, %v3008
    %v3013 = vmul.f32 %v3009, %v3009
    %v3014 = vmul.f32 %v3010, %v3010
    %v3015 = vmul.f32 %v3011, %v3011
    %3020 = vrot.lane.b32.xlu0 %v3012, 77
    %v3021 = vpop.permute.xlu0 %3020
    %3022 = vrot.lane.b32.xlu0 %v3013, 77
    %v3023 = vpop.permute.xlu0 %3022
    %3024 = vrot.lane.b32.xlu0 %v3014, 77
    %v3025 = vpop.permute.xlu0 %3024
    %3026 = vrot.lane.b32.xlu0 %v3015, 77
    %v3027 = vpop.permute.xlu0 %3026
    %v3028 = vsel %vm537, %v3021, %v3023
    %v3029 = vsel %vm537, %v3023, %v3025
    %v3030 = vsel %vm537, %v3025, %v3027
    %3034 = vst [vmem:[#allocation2 + $0x678] sm:$0xff] %v3028
    %3035 = vst [vmem:[#allocation2 + $0x680] sm:$0xff] %v3029
    %3036 = vst [vmem:[#allocation2 + $0x688] sm:$0xff] %v3030
    %3037 = vrot.lane.b32.xlu0 %v55, 75
    %v3038 = vpop.permute.xlu0 %3037
    %3039 = vrot.lane.b32.xlu0 %v56, 75
    %v3040 = vpop.permute.xlu0 %3039
    %3041 = vrot.lane.b32.xlu0 %v57, 75
    %v3042 = vpop.permute.xlu0 %3041
    %v3043 = vsel %vm521, %v3038, %v3040
    %v3044 = vsel %vm521, %v3040, %v3042
    %v3049 = vsub.f32 %v55, %v3038
    %v3050 = vsub.f32 %v56, %v3043
    %v3051 = vsub.f32 %v57, %v3044
    %v3052 = vsub.f32 %v58, %v3042
    %v3053 = vmul.f32 %v3049, %v3049
    %v3054 = vmul.f32 %v3050, %v3050
    %v3055 = vmul.f32 %v3051, %v3051
    %v3056 = vmul.f32 %v3052, %v3052
    %3061 = vrot.lane.b32.xlu0 %v3053, 53
    %v3062 = vpop.permute.xlu0 %3061
    %3063 = vrot.lane.b32.xlu0 %v3054, 53
    %v3064 = vpop.permute.xlu0 %3063
    %3065 = vrot.lane.b32.xlu0 %v3055, 53
    %v3066 = vpop.permute.xlu0 %3065
    %3067 = vrot.lane.b32.xlu0 %v3056, 53
    %v3068 = vpop.permute.xlu0 %3067
    %v3069 = vsel %vm494, %v3062, %v3064
    %v3070 = vsel %vm494, %v3064, %v3066
    %v3071 = vsel %vm494, %v3066, %v3068
    %3075 = vst [vmem:[#allocation2 + $0x690] sm:$0xff] %v3069
    %3076 = vst [vmem:[#allocation2 + $0x698] sm:$0xff] %v3070
    %3077 = vst [vmem:[#allocation2 + $0x6a0] sm:$0xff] %v3071
    %3078 = vrot.lane.b32.xlu0 %v55, 99
    %v3079 = vpop.permute.xlu0 %3078
    %3080 = vrot.lane.b32.xlu0 %v56, 99
    %v3081 = vpop.permute.xlu0 %3080
    %3082 = vrot.lane.b32.xlu0 %v57, 99
    %v3083 = vpop.permute.xlu0 %3082
    %v3084 = vsel %vm478, %v3079, %v3081
    %v3085 = vsel %vm478, %v3081, %v3083
    %v3090 = vsub.f32 %v55, %v3079
    %v3091 = vsub.f32 %v56, %v3084
    %v3092 = vsub.f32 %v57, %v3085
    %v3093 = vsub.f32 %v58, %v3083
    %v3094 = vmul.f32 %v3090, %v3090
    %v3095 = vmul.f32 %v3091, %v3091
    %v3096 = vmul.f32 %v3092, %v3092
    %v3097 = vmul.f32 %v3093, %v3093
    %3102 = vrot.lane.b32.xlu0 %v3094, 29
    %v3103 = vpop.permute.xlu0 %3102
    %3104 = vrot.lane.b32.xlu0 %v3095, 29
    %v3105 = vpop.permute.xlu0 %3104
    %3106 = vrot.lane.b32.xlu0 %v3096, 29
    %v3107 = vpop.permute.xlu0 %3106
    %3108 = vrot.lane.b32.xlu0 %v3097, 29
    %v3109 = vpop.permute.xlu0 %3108
    %v3110 = vsel %vm451, %v3103, %v3105
    %v3111 = vsel %vm451, %v3105, %v3107
    %v3112 = vsel %vm451, %v3107, %v3109
    %3116 = vst [vmem:[#allocation2 + $0x6a8] sm:$0xff] %v3110
    %3117 = vst [vmem:[#allocation2 + $0x6b0] sm:$0xff] %v3111
    %3118 = vst [vmem:[#allocation2 + $0x6b8] sm:$0xff] %v3112
    %3119 = vrot.lane.b32.xlu0 %v55, 36
    %v3120 = vpop.permute.xlu0 %3119
    %3121 = vrot.lane.b32.xlu0 %v56, 36
    %v3122 = vpop.permute.xlu0 %3121
    %3123 = vrot.lane.b32.xlu0 %v57, 36
    %v3124 = vpop.permute.xlu0 %3123
    %v3125 = vsel %vm435, %v3120, %v3122
    %v3126 = vsel %vm435, %v3122, %v3124
    %v3131 = vsub.f32 %v54, %v3120
    %v3132 = vsub.f32 %v55, %v3125
    %v3133 = vsub.f32 %v56, %v3126
    %v3134 = vsub.f32 %v57, %v3124
    %v3135 = vmul.f32 %v3131, %v3131
    %v3136 = vmul.f32 %v3132, %v3132
    %v3137 = vmul.f32 %v3133, %v3133
    %v3138 = vmul.f32 %v3134, %v3134
    %3143 = vrot.lane.b32.xlu0 %v3135, 92
    %v3144 = vpop.permute.xlu0 %3143
    %3145 = vrot.lane.b32.xlu0 %v3136, 92
    %v3146 = vpop.permute.xlu0 %3145
    %3147 = vrot.lane.b32.xlu0 %v3137, 92
    %v3148 = vpop.permute.xlu0 %3147
    %3149 = vrot.lane.b32.xlu0 %v3138, 92
    %v3150 = vpop.permute.xlu0 %3149
    %v3151 = vsel %vm408, %v3144, %v3146
    %v3152 = vsel %vm408, %v3146, %v3148
    %v3153 = vsel %vm408, %v3148, %v3150
    %3157 = vst [vmem:[#allocation2 + $0x6c0] sm:$0xff] %v3151
    %3158 = vst [vmem:[#allocation2 + $0x6c8] sm:$0xff] %v3152
    %3159 = vst [vmem:[#allocation2 + $0x6d0] sm:$0xff] %v3153
    %3160 = vrot.lane.b32.xlu0 %v55, 60
    %v3161 = vpop.permute.xlu0 %3160
    %3162 = vrot.lane.b32.xlu0 %v56, 60
    %v3163 = vpop.permute.xlu0 %3162
    %3164 = vrot.lane.b32.xlu0 %v57, 60
    %v3165 = vpop.permute.xlu0 %3164
    %v3166 = vsel %vm392, %v3161, %v3163
    %v3167 = vsel %vm392, %v3163, %v3165
    %v3172 = vsub.f32 %v54, %v3161
    %v3173 = vsub.f32 %v55, %v3166
    %v3174 = vsub.f32 %v56, %v3167
    %v3175 = vsub.f32 %v57, %v3165
    %v3176 = vmul.f32 %v3172, %v3172
    %v3177 = vmul.f32 %v3173, %v3173
    %v3178 = vmul.f32 %v3174, %v3174
    %v3179 = vmul.f32 %v3175, %v3175
    %3184 = vrot.lane.b32.xlu0 %v3176, 68
    %v3185 = vpop.permute.xlu0 %3184
    %3186 = vrot.lane.b32.xlu0 %v3177, 68
    %v3187 = vpop.permute.xlu0 %3186
    %3188 = vrot.lane.b32.xlu0 %v3178, 68
    %v3189 = vpop.permute.xlu0 %3188
    %3190 = vrot.lane.b32.xlu0 %v3179, 68
    %v3191 = vpop.permute.xlu0 %3190
    %v3192 = vsel %vm365, %v3185, %v3187
    %v3193 = vsel %vm365, %v3187, %v3189
    %v3194 = vsel %vm365, %v3189, %v3191
    %3198 = vst [vmem:[#allocation2 + $0x6d8] sm:$0xff] %v3192
    %3199 = vst [vmem:[#allocation2 + $0x6e0] sm:$0xff] %v3193
    %3200 = vst [vmem:[#allocation2 + $0x6e8] sm:$0xff] %v3194
    %3201 = vrot.lane.b32.xlu0 %v55, 84
    %v3202 = vpop.permute.xlu0 %3201
    %3203 = vrot.lane.b32.xlu0 %v56, 84
    %v3204 = vpop.permute.xlu0 %3203
    %3205 = vrot.lane.b32.xlu0 %v57, 84
    %v3206 = vpop.permute.xlu0 %3205
    %v3207 = vsel %vm349, %v3202, %v3204
    %v3208 = vsel %vm349, %v3204, %v3206
    %v3213 = vsub.f32 %v54, %v3202
    %v3214 = vsub.f32 %v55, %v3207
    %v3215 = vsub.f32 %v56, %v3208
    %v3216 = vsub.f32 %v57, %v3206
    %v3217 = vmul.f32 %v3213, %v3213
    %v3218 = vmul.f32 %v3214, %v3214
    %v3219 = vmul.f32 %v3215, %v3215
    %v3220 = vmul.f32 %v3216, %v3216
    %3225 = vrot.lane.b32.xlu0 %v3217, 44
    %v3226 = vpop.permute.xlu0 %3225
    %3227 = vrot.lane.b32.xlu0 %v3218, 44
    %v3228 = vpop.permute.xlu0 %3227
    %3229 = vrot.lane.b32.xlu0 %v3219, 44
    %v3230 = vpop.permute.xlu0 %3229
    %3231 = vrot.lane.b32.xlu0 %v3220, 44
    %v3232 = vpop.permute.xlu0 %3231
    %v3233 = vsel %vm322, %v3226, %v3228
    %v3234 = vsel %vm322, %v3228, %v3230
    %v3235 = vsel %vm322, %v3230, %v3232
    %3239 = vst [vmem:[#allocation2 + $0x6f0] sm:$0xff] %v3233
    %3240 = vst [vmem:[#allocation2 + $0x6f8] sm:$0xff] %v3234
    %3241 = vst [vmem:[#allocation2 + $0x700] sm:$0xff] %v3235
    %3242 = vrot.lane.b32.xlu0 %v55, 108
    %v3243 = vpop.permute.xlu0 %3242
    %3244 = vrot.lane.b32.xlu0 %v56, 108
    %v3245 = vpop.permute.xlu0 %3244
    %3246 = vrot.lane.b32.xlu0 %v57, 108
    %v3247 = vpop.permute.xlu0 %3246
    %v3248 = vsel %vm306, %v3243, %v3245
    %v3249 = vsel %vm306, %v3245, %v3247
    %v3254 = vsub.f32 %v54, %v3243
    %v3255 = vsub.f32 %v55, %v3248
    %v3256 = vsub.f32 %v56, %v3249
    %v3257 = vsub.f32 %v57, %v3247
    %v3258 = vmul.f32 %v3254, %v3254
    %v3259 = vmul.f32 %v3255, %v3255
    %v3260 = vmul.f32 %v3256, %v3256
    %v3261 = vmul.f32 %v3257, %v3257
    %3266 = vrot.lane.b32.xlu0 %v3258, 20
    %v3267 = vpop.permute.xlu0 %3266
    %3268 = vrot.lane.b32.xlu0 %v3259, 20
    %v3269 = vpop.permute.xlu0 %3268
    %3270 = vrot.lane.b32.xlu0 %v3260, 20
    %v3271 = vpop.permute.xlu0 %3270
    %3272 = vrot.lane.b32.xlu0 %v3261, 20
    %v3273 = vpop.permute.xlu0 %3272
    %v3274 = vsel %vm279, %v3267, %v3269
    %v3275 = vsel %vm279, %v3269, %v3271
    %v3276 = vsel %vm279, %v3271, %v3273
    %3280 = vst [vmem:[#allocation2 + $0x708] sm:$0xff] %v3274
    %3281 = vst [vmem:[#allocation2 + $0x710] sm:$0xff] %v3275
    %3282 = vst [vmem:[#allocation2 + $0x718] sm:$0xff] %v3276
    %3283 = vrot.lane.b32.xlu0 %v55, 4
    %v3284 = vpop.permute.xlu0 %3283
    %3285 = vrot.lane.b32.xlu0 %v56, 4
    %v3286 = vpop.permute.xlu0 %3285
    %3287 = vrot.lane.b32.xlu0 %v57, 4
    %v3288 = vpop.permute.xlu0 %3287
    %v3289 = vsel %vm263, %v3284, %v3286
    %v3290 = vsel %vm263, %v3286, %v3288
    %v3295 = vsub.f32 %v55, %v3284
    %v3296 = vsub.f32 %v56, %v3289
    %v3297 = vsub.f32 %v57, %v3290
    %v3298 = vsub.f32 %v58, %v3288
    %v3299 = vmul.f32 %v3295, %v3295
    %v3300 = vmul.f32 %v3296, %v3296
    %v3301 = vmul.f32 %v3297, %v3297
    %v3302 = vmul.f32 %v3298, %v3298
    %3307 = vrot.lane.b32.xlu0 %v3299, 124
    %v3308 = vpop.permute.xlu0 %3307
    %3309 = vrot.lane.b32.xlu0 %v3300, 124
    %v3310 = vpop.permute.xlu0 %3309
    %3311 = vrot.lane.b32.xlu0 %v3301, 124
    %v3312 = vpop.permute.xlu0 %3311
    %3313 = vrot.lane.b32.xlu0 %v3302, 124
    %v3314 = vpop.permute.xlu0 %3313
    %v3315 = vsel %vm236, %v3308, %v3310
    %v3316 = vsel %vm236, %v3310, %v3312
    %v3317 = vsel %vm236, %v3312, %v3314
    %3321 = vst [vmem:[#allocation2 + $0x720] sm:$0xff] %v3315
    %3322 = vst [vmem:[#allocation2 + $0x728] sm:$0xff] %v3316
    %3323 = vst [vmem:[#allocation2 + $0x730] sm:$0xff] %v3317
    %v3324 = vsub.f32 %v55, %v63
    %v3325 = vsub.f32 %v56, %v69
    %v3326 = vsub.f32 %v57, %v70
    %v3327 = vsub.f32 %v58, %v67
    %v3328 = vmul.f32 %v3324, %v3324
    %v3329 = vmul.f32 %v3325, %v3325
    %v3330 = vmul.f32 %v3326, %v3326
    %v3331 = vmul.f32 %v3327, %v3327
    %3336 = vrot.lane.b32.xlu0 %v3328, 100
    %v3337 = vpop.permute.xlu0 %3336
    %3338 = vrot.lane.b32.xlu0 %v3329, 100
    %v3339 = vpop.permute.xlu0 %3338
    %3340 = vrot.lane.b32.xlu0 %v3330, 100
    %v3341 = vpop.permute.xlu0 %3340
    %3342 = vrot.lane.b32.xlu0 %v3331, 100
    %v3343 = vpop.permute.xlu0 %3342
    %v3344 = vsel %vm95, %v3337, %v3339
    %v3345 = vsel %vm95, %v3339, %v3341
    %v3346 = vsel %vm95, %v3341, %v3343
    %3350 = vst [vmem:[#allocation2 + $0x738] sm:$0xff] %v3344
    %3351 = vst [vmem:[#allocation2 + $0x740] sm:$0xff] %v3345
    %3352 = vst [vmem:[#allocation2 + $0x748] sm:$0xff] %v3346
    %v3353 = vsub.f32 %v55, %v106
    %v3354 = vsub.f32 %v56, %v112
    %v3355 = vsub.f32 %v57, %v113
    %v3356 = vsub.f32 %v58, %v110
    %v3357 = vmul.f32 %v3353, %v3353
    %v3358 = vmul.f32 %v3354, %v3354
    %v3359 = vmul.f32 %v3355, %v3355
    %v3360 = vmul.f32 %v3356, %v3356
    %3365 = vrot.lane.b32.xlu0 %v3357, 76
    %v3366 = vpop.permute.xlu0 %3365
    %3367 = vrot.lane.b32.xlu0 %v3358, 76
    %v3368 = vpop.permute.xlu0 %3367
    %3369 = vrot.lane.b32.xlu0 %v3359, 76
    %v3370 = vpop.permute.xlu0 %3369
    %3371 = vrot.lane.b32.xlu0 %v3360, 76
    %v3372 = vpop.permute.xlu0 %3371
    %v3373 = vsel %vm138, %v3366, %v3368
    %v3374 = vsel %vm138, %v3368, %v3370
    %v3375 = vsel %vm138, %v3370, %v3372
    %3379 = vst [vmem:[#allocation2 + $0x750] sm:$0xff] %v3373
    %3380 = vst [vmem:[#allocation2 + $0x758] sm:$0xff] %v3374
    %3381 = vst [vmem:[#allocation2 + $0x760] sm:$0xff] %v3375
    %v3382 = vsub.f32 %v55, %v149
    %v3383 = vsub.f32 %v56, %v154
    %v3384 = vsub.f32 %v57, %v155
    %v3385 = vsub.f32 %v58, %v153
    %v3386 = vmul.f32 %v3382, %v3382
    %v3387 = vmul.f32 %v3383, %v3383
    %v3388 = vmul.f32 %v3384, %v3384
    %v3389 = vmul.f32 %v3385, %v3385
    %3394 = vrot.lane.b32.xlu0 %v3386, 52
    %v3395 = vpop.permute.xlu0 %3394
    %3396 = vrot.lane.b32.xlu0 %v3387, 52
    %v3397 = vpop.permute.xlu0 %3396
    %3398 = vrot.lane.b32.xlu0 %v3388, 52
    %v3399 = vpop.permute.xlu0 %3398
    %3400 = vrot.lane.b32.xlu0 %v3389, 52
    %v3401 = vpop.permute.xlu0 %3400
    %v3402 = vsel %vm111, %v3395, %v3397
    %v3403 = vsel %vm111, %v3397, %v3399
    %v3404 = vsel %vm111, %v3399, %v3401
    %3408 = vst [vmem:[#allocation2 + $0x768] sm:$0xff] %v3402
    %3409 = vst [vmem:[#allocation2 + $0x770] sm:$0xff] %v3403
    %3410 = vst [vmem:[#allocation2 + $0x778] sm:$0xff] %v3404
    %v3411 = vsub.f32 %v55, %v190
    %v3412 = vsub.f32 %v56, %v195
    %v3413 = vsub.f32 %v57, %v196
    %v3414 = vsub.f32 %v58, %v194
    %v3415 = vmul.f32 %v3411, %v3411
    %v3416 = vmul.f32 %v3412, %v3412
    %v3417 = vmul.f32 %v3413, %v3413
    %v3418 = vmul.f32 %v3414, %v3414
    %3423 = vrot.lane.b32.xlu0 %v3415, 28
    %v3424 = vpop.permute.xlu0 %3423
    %3425 = vrot.lane.b32.xlu0 %v3416, 28
    %v3426 = vpop.permute.xlu0 %3425
    %3427 = vrot.lane.b32.xlu0 %v3417, 28
    %v3428 = vpop.permute.xlu0 %3427
    %3429 = vrot.lane.b32.xlu0 %v3418, 28
    %v3430 = vpop.permute.xlu0 %3429
    %v3431 = vsel %vm68, %v3424, %v3426
    %v3432 = vsel %vm68, %v3426, %v3428
    %v3433 = vsel %vm68, %v3428, %v3430
    %3437 = vst [vmem:[#allocation2 + $0x780] sm:$0xff] %v3431
    %3438 = vst [vmem:[#allocation2 + $0x788] sm:$0xff] %v3432
    %3439 = vst [vmem:[#allocation2 + $0x790] sm:$0xff] %v3433
    %v3440 = vld [vmem:[#allocation2] sm:$0xff]
    %v3441 = vld [vmem:[#allocation2 + $0x8] sm:$0xff]
    %v3442 = vld [vmem:[#allocation2 + $0x10] sm:$0xff]
    %v3443 = vld [vmem:[#allocation2 + $0x18] sm:$0xff]
    %v3444 = vld [vmem:[#allocation2 + $0x20] sm:$0xff]
    %v3445 = vld [vmem:[#allocation2 + $0x28] sm:$0xff]
    %v3446 = vld [vmem:[#allocation2 + $0x30] sm:$0xff]
    %v3447 = vld [vmem:[#allocation2 + $0x38] sm:$0xff]
    %v3448 = vld [vmem:[#allocation2 + $0x40] sm:$0xff]
    %v3449 = vld [vmem:[#allocation2 + $0x48] sm:$0xff]
    %v3450 = vld [vmem:[#allocation2 + $0x50] sm:$0xff]
    %v3451 = vld [vmem:[#allocation2 + $0x58] sm:$0xff]
    %v3452 = vld [vmem:[#allocation2 + $0x60] sm:$0xff]
    %v3453 = vld [vmem:[#allocation2 + $0x68] sm:$0xff]
    %v3454 = vld [vmem:[#allocation2 + $0x70] sm:$0xff]
    %v3455 = vld [vmem:[#allocation2 + $0x78] sm:$0xff]
    %v3456 = vld [vmem:[#allocation2 + $0x80] sm:$0xff]
    %v3457 = vld [vmem:[#allocation2 + $0x88] sm:$0xff]
    %v3458 = vld [vmem:[#allocation2 + $0x90] sm:$0xff]
    %v3459 = vld [vmem:[#allocation2 + $0x98] sm:$0xff]
    %v3460 = vld [vmem:[#allocation2 + $0xa0] sm:$0xff]
    %v3461 = vld [vmem:[#allocation2 + $0xa8] sm:$0xff]
    %v3462 = vld [vmem:[#allocation2 + $0xb0] sm:$0xff]
    %v3463 = vld [vmem:[#allocation2 + $0xb8] sm:$0xff]
    %v3464 = vld [vmem:[#allocation2 + $0xc0] sm:$0xff]
    %v3465 = vld [vmem:[#allocation2 + $0xc8] sm:$0xff]
    %v3466 = vld [vmem:[#allocation2 + $0xd0] sm:$0xff]
    %v3467 = vld [vmem:[#allocation2 + $0xd8] sm:$0xff]
    %v3468 = vld [vmem:[#allocation2 + $0xe0] sm:$0xff]
    %v3469 = vld [vmem:[#allocation2 + $0xe8] sm:$0xff]
    %v3470 = vld [vmem:[#allocation2 + $0xf0] sm:$0xff]
    %v3471 = vld [vmem:[#allocation2 + $0xf8] sm:$0xff]
    %v3472 = vld [vmem:[#allocation2 + $0x100] sm:$0xff]
    %v3473 = vld [vmem:[#allocation2 + $0x108] sm:$0xff]
    %v3474 = vld [vmem:[#allocation2 + $0x110] sm:$0xff]
    %v3475 = vld [vmem:[#allocation2 + $0x118] sm:$0xff]
    %v3476 = vld [vmem:[#allocation2 + $0x120] sm:$0xff]
    %v3477 = vld [vmem:[#allocation2 + $0x128] sm:$0xff]
    %v3478 = vld [vmem:[#allocation2 + $0x130] sm:$0xff]
    %v3479 = vld [vmem:[#allocation2 + $0x138] sm:$0xff]
    %v3480 = vld [vmem:[#allocation2 + $0x140] sm:$0xff]
    %v3481 = vld [vmem:[#allocation2 + $0x148] sm:$0xff]
    %v3482 = vld [vmem:[#allocation2 + $0x150] sm:$0xff]
    %v3483 = vld [vmem:[#allocation2 + $0x158] sm:$0xff]
    %v3484 = vld [vmem:[#allocation2 + $0x160] sm:$0xff]
    %v3485 = vld [vmem:[#allocation2 + $0x168] sm:$0xff]
    %v3486 = vld [vmem:[#allocation2 + $0x170] sm:$0xff]
    %v3487 = vld [vmem:[#allocation2 + $0x178] sm:$0xff]
    %v3488 = vld [vmem:[#allocation2 + $0x180] sm:$0xff]
    %v3489 = vld [vmem:[#allocation2 + $0x188] sm:$0xff]
    %v3490 = vld [vmem:[#allocation2 + $0x190] sm:$0xff]
    %v3491 = vld [vmem:[#allocation2 + $0x198] sm:$0xff]
    %v3492 = vld [vmem:[#allocation2 + $0x1a0] sm:$0xff]
    %v3493 = vld [vmem:[#allocation2 + $0x1a8] sm:$0xff]
    %v3494 = vld [vmem:[#allocation2 + $0x1b0] sm:$0xff]
    %v3495 = vld [vmem:[#allocation2 + $0x1b8] sm:$0xff]
    %v3496 = vld [vmem:[#allocation2 + $0x1c0] sm:$0xff]
    %v3497 = vld [vmem:[#allocation2 + $0x1c8] sm:$0xff]
    %v3498 = vld [vmem:[#allocation2 + $0x1d0] sm:$0xff]
    %v3499 = vld [vmem:[#allocation2 + $0x1d8] sm:$0xff]
    %v3500 = vld [vmem:[#allocation2 + $0x1e0] sm:$0xff]
    %v3501 = vld [vmem:[#allocation2 + $0x1e8] sm:$0xff]
    %v3502 = vld [vmem:[#allocation2 + $0x1f0] sm:$0xff]
    %v3503 = vld [vmem:[#allocation2 + $0x1f8] sm:$0xff]
    %v3504 = vld [vmem:[#allocation2 + $0x200] sm:$0xff]
    %v3505 = vld [vmem:[#allocation2 + $0x208] sm:$0xff]
    %v3506 = vld [vmem:[#allocation2 + $0x210] sm:$0xff]
    %v3507 = vld [vmem:[#allocation2 + $0x218] sm:$0xff]
    %v3508 = vld [vmem:[#allocation2 + $0x220] sm:$0xff]
    %v3509 = vld [vmem:[#allocation2 + $0x228] sm:$0xff]
    %v3510 = vld [vmem:[#allocation2 + $0x230] sm:$0xff]
    %v3511 = vld [vmem:[#allocation2 + $0x238] sm:$0xff]
    %v3512 = vld [vmem:[#allocation2 + $0x240] sm:$0xff]
    %v3513 = vld [vmem:[#allocation2 + $0x248] sm:$0xff]
    %v3514 = vld [vmem:[#allocation2 + $0x250] sm:$0xff]
    %v3515 = vld [vmem:[#allocation2 + $0x258] sm:$0xff]
    %v3516 = vld [vmem:[#allocation2 + $0x260] sm:$0xff]
    %v3517 = vld [vmem:[#allocation2 + $0x268] sm:$0xff]
    %v3518 = vld [vmem:[#allocation2 + $0x270] sm:$0xff]
    %v3519 = vld [vmem:[#allocation2 + $0x278] sm:$0xff]
    %v3520 = vld [vmem:[#allocation2 + $0x280] sm:$0xff]
    %v3521 = vld [vmem:[#allocation2 + $0x288] sm:$0xff]
    %v3522 = vld [vmem:[#allocation2 + $0x290] sm:$0xff]
    %v3523 = vld [vmem:[#allocation2 + $0x298] sm:$0xff]
    %v3524 = vld [vmem:[#allocation2 + $0x2a0] sm:$0xff]
    %v3525 = vld [vmem:[#allocation2 + $0x2a8] sm:$0xff]
    %v3526 = vld [vmem:[#allocation2 + $0x2b0] sm:$0xff]
    %v3527 = vld [vmem:[#allocation2 + $0x2b8] sm:$0xff]
    %v3528 = vld [vmem:[#allocation2 + $0x2c0] sm:$0xff]
    %v3529 = vld [vmem:[#allocation2 + $0x2c8] sm:$0xff]
    %v3530 = vld [vmem:[#allocation2 + $0x2d0] sm:$0xff]
    %v3531 = vld [vmem:[#allocation2 + $0x2d8] sm:$0xff]
    %v3532 = vld [vmem:[#allocation2 + $0x2e0] sm:$0xff]
    %v3533 = vld [vmem:[#allocation2 + $0x2e8] sm:$0xff]
    %v3534 = vld [vmem:[#allocation2 + $0x2f0] sm:$0xff]
    %v3535 = vld [vmem:[#allocation2 + $0x2f8] sm:$0xff]
    %v3536 = vld [vmem:[#allocation2 + $0x300] sm:$0xff]
    %v3537 = vld [vmem:[#allocation2 + $0x308] sm:$0xff]
    %v3538 = vld [vmem:[#allocation2 + $0x310] sm:$0xff]
    %v3539 = vld [vmem:[#allocation2 + $0x318] sm:$0xff]
    %v3540 = vld [vmem:[#allocation2 + $0x320] sm:$0xff]
    %v3541 = vld [vmem:[#allocation2 + $0x328] sm:$0xff]
    %v3542 = vld [vmem:[#allocation2 + $0x330] sm:$0xff]
    %v3543 = vld [vmem:[#allocation2 + $0x338] sm:$0xff]
    %v3544 = vld [vmem:[#allocation2 + $0x340] sm:$0xff]
    %v3545 = vld [vmem:[#allocation2 + $0x348] sm:$0xff]
    %v3546 = vld [vmem:[#allocation2 + $0x350] sm:$0xff]
    %v3547 = vld [vmem:[#allocation2 + $0x358] sm:$0xff]
    %v3548 = vld [vmem:[#allocation2 + $0x360] sm:$0xff]
    %v3549 = vld [vmem:[#allocation2 + $0x368] sm:$0xff]
    %v3550 = vld [vmem:[#allocation2 + $0x370] sm:$0xff]
    %v3551 = vld [vmem:[#allocation2 + $0x378] sm:$0xff]
    %v3552 = vld [vmem:[#allocation2 + $0x380] sm:$0xff]
    %v3553 = vld [vmem:[#allocation2 + $0x388] sm:$0xff]
    %v3554 = vld [vmem:[#allocation2 + $0x390] sm:$0xff]
    %v3555 = vld [vmem:[#allocation2 + $0x398] sm:$0xff]
    %v3556 = vld [vmem:[#allocation2 + $0x3a0] sm:$0xff]
    %v3557 = vld [vmem:[#allocation2 + $0x3a8] sm:$0xff]
    %v3558 = vld [vmem:[#allocation2 + $0x3b0] sm:$0xff]
    %v3559 = vld [vmem:[#allocation2 + $0x3b8] sm:$0xff]
    %v3560 = vld [vmem:[#allocation2 + $0x3c0] sm:$0xff]
    %v3561 = vld [vmem:[#allocation2 + $0x3c8] sm:$0xff]
    %v3562 = vld [vmem:[#allocation2 + $0x3d0] sm:$0xff]
    %v3563 = vld [vmem:[#allocation2 + $0x3d8] sm:$0xff]
    %v3564 = vld [vmem:[#allocation2 + $0x3e0] sm:$0xff]
    %v3565 = vld [vmem:[#allocation2 + $0x3e8] sm:$0xff]
    %v3566 = vld [vmem:[#allocation2 + $0x3f0] sm:$0xff]
    %v3567 = vld [vmem:[#allocation2 + $0x3f8] sm:$0xff]
    %v3568 = vld [vmem:[#allocation2 + $0x400] sm:$0xff]
    %v3569 = vld [vmem:[#allocation2 + $0x408] sm:$0xff]
    %v3570 = vld [vmem:[#allocation2 + $0x410] sm:$0xff]
    %v3571 = vld [vmem:[#allocation2 + $0x418] sm:$0xff]
    %v3572 = vld [vmem:[#allocation2 + $0x420] sm:$0xff]
    %v3573 = vld [vmem:[#allocation2 + $0x428] sm:$0xff]
    %v3574 = vld [vmem:[#allocation2 + $0x430] sm:$0xff]
    %v3575 = vld [vmem:[#allocation2 + $0x438] sm:$0xff]
    %v3576 = vld [vmem:[#allocation2 + $0x440] sm:$0xff]
    %v3577 = vld [vmem:[#allocation2 + $0x448] sm:$0xff]
    %v3578 = vld [vmem:[#allocation2 + $0x450] sm:$0xff]
    %v3579 = vld [vmem:[#allocation2 + $0x458] sm:$0xff]
    %v3580 = vld [vmem:[#allocation2 + $0x460] sm:$0xff]
    %v3581 = vld [vmem:[#allocation2 + $0x468] sm:$0xff]
    %v3582 = vld [vmem:[#allocation2 + $0x470] sm:$0xff]
    %v3583 = vld [vmem:[#allocation2 + $0x478] sm:$0xff]
    %v3584 = vld [vmem:[#allocation2 + $0x480] sm:$0xff]
    %v3585 = vld [vmem:[#allocation2 + $0x488] sm:$0xff]
    %v3586 = vld [vmem:[#allocation2 + $0x490] sm:$0xff]
    %v3587 = vld [vmem:[#allocation2 + $0x498] sm:$0xff]
    %v3588 = vld [vmem:[#allocation2 + $0x4a0] sm:$0xff]
    %v3589 = vld [vmem:[#allocation2 + $0x4a8] sm:$0xff]
    %v3590 = vld [vmem:[#allocation2 + $0x4b0] sm:$0xff]
    %v3591 = vld [vmem:[#allocation2 + $0x4b8] sm:$0xff]
    %v3592 = vld [vmem:[#allocation2 + $0x4c0] sm:$0xff]
    %v3593 = vld [vmem:[#allocation2 + $0x4c8] sm:$0xff]
    %v3594 = vld [vmem:[#allocation2 + $0x4d0] sm:$0xff]
    %v3595 = vld [vmem:[#allocation2 + $0x4d8] sm:$0xff]
    %v3596 = vld [vmem:[#allocation2 + $0x4e0] sm:$0xff]
    %v3597 = vld [vmem:[#allocation2 + $0x4e8] sm:$0xff]
    %v3598 = vld [vmem:[#allocation2 + $0x4f0] sm:$0xff]
    %v3599 = vld [vmem:[#allocation2 + $0x4f8] sm:$0xff]
    %v3600 = vld [vmem:[#allocation2 + $0x500] sm:$0xff]
    %v3601 = vld [vmem:[#allocation2 + $0x508] sm:$0xff]
    %v3602 = vld [vmem:[#allocation2 + $0x510] sm:$0xff]
    %v3603 = vld [vmem:[#allocation2 + $0x518] sm:$0xff]
    %v3604 = vld [vmem:[#allocation2 + $0x520] sm:$0xff]
    %v3605 = vld [vmem:[#allocation2 + $0x528] sm:$0xff]
    %v3606 = vld [vmem:[#allocation2 + $0x530] sm:$0xff]
    %v3607 = vld [vmem:[#allocation2 + $0x538] sm:$0xff]
    %v3608 = vld [vmem:[#allocation2 + $0x540] sm:$0xff]
    %v3609 = vld [vmem:[#allocation2 + $0x548] sm:$0xff]
    %v3610 = vld [vmem:[#allocation2 + $0x550] sm:$0xff]
    %v3611 = vld [vmem:[#allocation2 + $0x558] sm:$0xff]
    %v3612 = vld [vmem:[#allocation2 + $0x560] sm:$0xff]
    %v3613 = vld [vmem:[#allocation2 + $0x568] sm:$0xff]
    %v3614 = vld [vmem:[#allocation2 + $0x570] sm:$0xff]
    %v3615 = vld [vmem:[#allocation2 + $0x578] sm:$0xff]
    %v3616 = vld [vmem:[#allocation2 + $0x580] sm:$0xff]
    %v3617 = vld [vmem:[#allocation2 + $0x588] sm:$0xff]
    %v3618 = vld [vmem:[#allocation2 + $0x590] sm:$0xff]
    %v3619 = vld [vmem:[#allocation2 + $0x598] sm:$0xff]
    %v3620 = vld [vmem:[#allocation2 + $0x5a0] sm:$0xff]
    %v3621 = vld [vmem:[#allocation2 + $0x5a8] sm:$0xff]
    %v3622 = vld [vmem:[#allocation2 + $0x5b0] sm:$0xff]
    %v3623 = vld [vmem:[#allocation2 + $0x5b8] sm:$0xff]
    %v3624 = vld [vmem:[#allocation2 + $0x5c0] sm:$0xff]
    %v3625 = vld [vmem:[#allocation2 + $0x5c8] sm:$0xff]
    %v3626 = vld [vmem:[#allocation2 + $0x5d0] sm:$0xff]
    %v3627 = vld [vmem:[#allocation2 + $0x5d8] sm:$0xff]
    %v3628 = vld [vmem:[#allocation2 + $0x5e0] sm:$0xff]
    %v3629 = vld [vmem:[#allocation2 + $0x5e8] sm:$0xff]
    %v3630 = vld [vmem:[#allocation2 + $0x5f0] sm:$0xff]
    %v3631 = vld [vmem:[#allocation2 + $0x5f8] sm:$0xff]
    %v3632 = vld [vmem:[#allocation2 + $0x600] sm:$0xff]
    %v3633 = vld [vmem:[#allocation2 + $0x608] sm:$0xff]
    %v3634 = vld [vmem:[#allocation2 + $0x610] sm:$0xff]
    %v3635 = vld [vmem:[#allocation2 + $0x618] sm:$0xff]
    %v3636 = vld [vmem:[#allocation2 + $0x620] sm:$0xff]
    %v3637 = vld [vmem:[#allocation2 + $0x628] sm:$0xff]
    %v3638 = vld [vmem:[#allocation2 + $0x630] sm:$0xff]
    %v3639 = vld [vmem:[#allocation2 + $0x638] sm:$0xff]
    %v3640 = vld [vmem:[#allocation2 + $0x640] sm:$0xff]
    %v3641 = vld [vmem:[#allocation2 + $0x648] sm:$0xff]
    %v3642 = vld [vmem:[#allocation2 + $0x650] sm:$0xff]
    %v3643 = vld [vmem:[#allocation2 + $0x658] sm:$0xff]
    %v3644 = vld [vmem:[#allocation2 + $0x660] sm:$0xff]
    %v3645 = vld [vmem:[#allocation2 + $0x668] sm:$0xff]
    %v3646 = vld [vmem:[#allocation2 + $0x670] sm:$0xff]
    %v3647 = vld [vmem:[#allocation2 + $0x678] sm:$0xff]
    %v3648 = vld [vmem:[#allocation2 + $0x680] sm:$0xff]
    %v3649 = vld [vmem:[#allocation2 + $0x688] sm:$0xff]
    %v3650 = vld [vmem:[#allocation2 + $0x690] sm:$0xff]
    %v3651 = vld [vmem:[#allocation2 + $0x698] sm:$0xff]
    %v3652 = vld [vmem:[#allocation2 + $0x6a0] sm:$0xff]
    %v3653 = vld [vmem:[#allocation2 + $0x6a8] sm:$0xff]
    %v3654 = vld [vmem:[#allocation2 + $0x6b0] sm:$0xff]
    %v3655 = vld [vmem:[#allocation2 + $0x6b8] sm:$0xff]
    %v3656 = vld [vmem:[#allocation2 + $0x6c0] sm:$0xff]
    %v3657 = vld [vmem:[#allocation2 + $0x6c8] sm:$0xff]
    %v3658 = vld [vmem:[#allocation2 + $0x6d0] sm:$0xff]
    %v3659 = vld [vmem:[#allocation2 + $0x6d8] sm:$0xff]
    %v3660 = vld [vmem:[#allocation2 + $0x6e0] sm:$0xff]
    %v3661 = vld [vmem:[#allocation2 + $0x6e8] sm:$0xff]
    %v3662 = vld [vmem:[#allocation2 + $0x6f0] sm:$0xff]
    %v3663 = vld [vmem:[#allocation2 + $0x6f8] sm:$0xff]
    %v3664 = vld [vmem:[#allocation2 + $0x700] sm:$0xff]
    %v3665 = vld [vmem:[#allocation2 + $0x708] sm:$0xff]
    %v3666 = vld [vmem:[#allocation2 + $0x710] sm:$0xff]
    %v3667 = vld [vmem:[#allocation2 + $0x718] sm:$0xff]
    %v3668 = vld [vmem:[#allocation2 + $0x720] sm:$0xff]
    %v3669 = vld [vmem:[#allocation2 + $0x728] sm:$0xff]
    %v3670 = vld [vmem:[#allocation2 + $0x730] sm:$0xff]
    %v3671 = vld [vmem:[#allocation2 + $0x738] sm:$0xff]
    %v3672 = vld [vmem:[#allocation2 + $0x740] sm:$0xff]
    %v3673 = vld [vmem:[#allocation2 + $0x748] sm:$0xff]
    %v3674 = vld [vmem:[#allocation2 + $0x750] sm:$0xff]
    %v3675 = vld [vmem:[#allocation2 + $0x758] sm:$0xff]
    %v3676 = vld [vmem:[#allocation2 + $0x760] sm:$0xff]
    %v3677 = vld [vmem:[#allocation2 + $0x768] sm:$0xff]
    %v3678 = vld [vmem:[#allocation2 + $0x770] sm:$0xff]
    %v3679 = vld [vmem:[#allocation2 + $0x778] sm:$0xff]
    %v3680 = vld [vmem:[#allocation2 + $0x780] sm:$0xff]
    %v3681 = vld [vmem:[#allocation2 + $0x788] sm:$0xff]
    %v3682 = vld [vmem:[#allocation2 + $0x790] sm:$0xff]
    %v3683 = vpack.c.bf16 %v3443, %v3440
    %v3684 = vpack.c.bf16 %v3444, %v3441
    %v3685 = vpack.c.bf16 %v3445, %v3442
    %v3686 = vpack.c.bf16 %v3449, %v3446
    %v3687 = vpack.c.bf16 %v3450, %v3447
    %v3688 = vpack.c.bf16 %v3451, %v3448
    %v3689 = vpack.c.bf16 %v3455, %v3452
    %v3690 = vpack.c.bf16 %v3456, %v3453
    %v3691 = vpack.c.bf16 %v3457, %v3454
    %v3692 = vpack.c.bf16 %v3461, %v3458
    %v3693 = vpack.c.bf16 %v3462, %v3459
    %v3694 = vpack.c.bf16 %v3463, %v3460
    %v3695 = vpack.c.bf16 %v3467, %v3464
    %v3696 = vpack.c.bf16 %v3468, %v3465
    %v3697 = vpack.c.bf16 %v3469, %v3466
    %v3698 = vpack.c.bf16 %v3473, %v3470
    %v3699 = vpack.c.bf16 %v3474, %v3471
    %v3700 = vpack.c.bf16 %v3475, %v3472
    %v3701 = vpack.c.bf16 %v3479, %v3476
    %v3702 = vpack.c.bf16 %v3480, %v3477
    %v3703 = vpack.c.bf16 %v3481, %v3478
    %v3704 = vpack.c.bf16 %v3485, %v3482
    %v3705 = vpack.c.bf16 %v3486, %v3483
    %v3706 = vpack.c.bf16 %v3487, %v3484
    %v3707 = vpack.c.bf16 %v3491, %v3488
    %v3708 = vpack.c.bf16 %v3492, %v3489
    %v3709 = vpack.c.bf16 %v3493, %v3490
    %v3710 = vpack.c.bf16 %v3497, %v3494
    %v3711 = vpack.c.bf16 %v3498, %v3495
    %v3712 = vpack.c.bf16 %v3499, %v3496
    %v3713 = vpack.c.bf16 %v3503, %v3500
    %v3714 = vpack.c.bf16 %v3504, %v3501
    %v3715 = vpack.c.bf16 %v3505, %v3502
    %v3716 = vpack.c.bf16 %v3509, %v3506
    %v3717 = vpack.c.bf16 %v3510, %v3507
    %v3718 = vpack.c.bf16 %v3511, %v3508
    %v3719 = vpack.c.bf16 %v3515, %v3512
    %v3720 = vpack.c.bf16 %v3516, %v3513
    %v3721 = vpack.c.bf16 %v3517, %v3514
    %v3722 = vpack.c.bf16 %v3521, %v3518
    %v3723 = vpack.c.bf16 %v3522, %v3519
    %v3724 = vpack.c.bf16 %v3523, %v3520
    %v3725 = vpack.c.bf16 %v3527, %v3524
    %v3726 = vpack.c.bf16 %v3528, %v3525
    %v3727 = vpack.c.bf16 %v3529, %v3526
    %v3728 = vpack.c.bf16 %v3533, %v3530
    %v3729 = vpack.c.bf16 %v3534, %v3531
    %v3730 = vpack.c.bf16 %v3535, %v3532
    %v3731 = vpack.c.bf16 %v3539, %v3536
    %v3732 = vpack.c.bf16 %v3540, %v3537
    %v3733 = vpack.c.bf16 %v3541, %v3538
    %v3734 = vpack.c.bf16 %v3545, %v3542
    %v3735 = vpack.c.bf16 %v3546, %v3543
    %v3736 = vpack.c.bf16 %v3547, %v3544
    %v3737 = vpack.c.bf16 %v3551, %v3548
    %v3738 = vpack.c.bf16 %v3552, %v3549
    %v3739 = vpack.c.bf16 %v3553, %v3550
    %v3740 = vpack.c.bf16 %v3557, %v3554
    %v3741 = vpack.c.bf16 %v3558, %v3555
    %v3742 = vpack.c.bf16 %v3559, %v3556
    %v3743 = vpack.c.bf16 %v3563, %v3560
    %v3744 = vpack.c.bf16 %v3564, %v3561
    %v3745 = vpack.c.bf16 %v3565, %v3562
    %v3746 = vpack.c.bf16 %v3569, %v3566
    %v3747 = vpack.c.bf16 %v3570, %v3567
    %v3748 = vpack.c.bf16 %v3571, %v3568
    %v3749 = vpack.c.bf16 %v3575, %v3572
    %v3750 = vpack.c.bf16 %v3576, %v3573
    %v3751 = vpack.c.bf16 %v3577, %v3574
    %v3752 = vpack.c.bf16 %v3581, %v3578
    %v3753 = vpack.c.bf16 %v3582, %v3579
    %v3754 = vpack.c.bf16 %v3583, %v3580
    %v3755 = vpack.c.bf16 %v3587, %v3584
    %v3756 = vpack.c.bf16 %v3588, %v3585
    %v3757 = vpack.c.bf16 %v3589, %v3586
    %v3758 = vpack.c.bf16 %v3593, %v3590
    %v3759 = vpack.c.bf16 %v3594, %v3591
    %v3760 = vpack.c.bf16 %v3595, %v3592
    %v3761 = vpack.c.bf16 %v3599, %v3596
    %v3762 = vpack.c.bf16 %v3600, %v3597
    %v3763 = vpack.c.bf16 %v3601, %v3598
    %v3764 = vpack.c.bf16 %v3605, %v3602
    %v3765 = vpack.c.bf16 %v3606, %v3603
    %v3766 = vpack.c.bf16 %v3607, %v3604
    %v3767 = vpack.c.bf16 %v3611, %v3608
    %v3768 = vpack.c.bf16 %v3612, %v3609
    %v3769 = vpack.c.bf16 %v3613, %v3610
    %v3770 = vpack.c.bf16 %v3617, %v3614
    %v3771 = vpack.c.bf16 %v3618, %v3615
    %v3772 = vpack.c.bf16 %v3619, %v3616
    %v3773 = vpack.c.bf16 %v3623, %v3620
    %v3774 = vpack.c.bf16 %v3624, %v3621
    %v3775 = vpack.c.bf16 %v3625, %v3622
    %v3776 = vpack.c.bf16 %v3629, %v3626
    %v3777 = vpack.c.bf16 %v3630, %v3627
    %v3778 = vpack.c.bf16 %v3631, %v3628
    %v3779 = vpack.c.bf16 %v3635, %v3632
    %v3780 = vpack.c.bf16 %v3636, %v3633
    %v3781 = vpack.c.bf16 %v3637, %v3634
    %v3782 = vpack.c.bf16 %v3641, %v3638
    %v3783 = vpack.c.bf16 %v3642, %v3639
    %v3784 = vpack.c.bf16 %v3643, %v3640
    %v3785 = vpack.c.bf16 %v3647, %v3644
    %v3786 = vpack.c.bf16 %v3648, %v3645
    %v3787 = vpack.c.bf16 %v3649, %v3646
    %v3788 = vpack.c.bf16 %v3653, %v3650
    %v3789 = vpack.c.bf16 %v3654, %v3651
    %v3790 = vpack.c.bf16 %v3655, %v3652
    %v3791 = vpack.c.bf16 %v3659, %v3656
    %v3792 = vpack.c.bf16 %v3660, %v3657
    %v3793 = vpack.c.bf16 %v3661, %v3658
    %v3794 = vpack.c.bf16 %v3665, %v3662
    %v3795 = vpack.c.bf16 %v3666, %v3663
    %v3796 = vpack.c.bf16 %v3667, %v3664
    %v3797 = vpack.c.bf16 %v3671, %v3668
    %v3798 = vpack.c.bf16 %v3672, %v3669
    %v3799 = vpack.c.bf16 %v3673, %v3670
    %v3800 = vpack.c.bf16 %v3677, %v3674
    %v3801 = vpack.c.bf16 %v3678, %v3675
    %v3802 = vpack.c.bf16 %v3679, %v3676
    %v3803 = vpack.c.bf16 %v3680, %v3680
    %v3804 = vpack.c.bf16 %v3681, %v3681
    %v3805 = vpack.c.bf16 %v3682, %v3682
    %v3806 = vunpack.c.l.bf16 %v3683
    %v3807 = vunpack.c.l.bf16 %v3684
    %v3808 = vunpack.c.l.bf16 %v3685
    %v3809 = vunpack.c.h.bf16 %v3683
    %v3810 = vunpack.c.h.bf16 %v3684
    %v3811 = vunpack.c.h.bf16 %v3685
    %v3812 = vunpack.c.l.bf16 %v3686
    %v3813 = vunpack.c.l.bf16 %v3687
    %v3814 = vunpack.c.l.bf16 %v3688
    %v3815 = vunpack.c.h.bf16 %v3686
    %v3816 = vunpack.c.h.bf16 %v3687
    %v3817 = vunpack.c.h.bf16 %v3688
    %v3818 = vunpack.c.l.bf16 %v3689
    %v3819 = vunpack.c.l.bf16 %v3690
    %v3820 = vunpack.c.l.bf16 %v3691
    %v3821 = vunpack.c.h.bf16 %v3689
    %v3822 = vunpack.c.h.bf16 %v3690
    %v3823 = vunpack.c.h.bf16 %v3691
    %v3824 = vunpack.c.l.bf16 %v3692
    %v3825 = vunpack.c.l.bf16 %v3693
    %v3826 = vunpack.c.l.bf16 %v3694
    %v3827 = vunpack.c.h.bf16 %v3692
    %v3828 = vunpack.c.h.bf16 %v3693
    %v3829 = vunpack.c.h.bf16 %v3694
    %v3830 = vunpack.c.l.bf16 %v3695
    %v3831 = vunpack.c.l.bf16 %v3696
    %v3832 = vunpack.c.l.bf16 %v3697
    %v3833 = vunpack.c.h.bf16 %v3695
    %v3834 = vunpack.c.h.bf16 %v3696
    %v3835 = vunpack.c.h.bf16 %v3697
    %v3836 = vunpack.c.l.bf16 %v3698
    %v3837 = vunpack.c.l.bf16 %v3699
    %v3838 = vunpack.c.l.bf16 %v3700
    %v3839 = vunpack.c.h.bf16 %v3698
    %v3840 = vunpack.c.h.bf16 %v3699
    %v3841 = vunpack.c.h.bf16 %v3700
    %v3842 = vunpack.c.l.bf16 %v3701
    %v3843 = vunpack.c.l.bf16 %v3702
    %v3844 = vunpack.c.l.bf16 %v3703
    %v3845 = vunpack.c.h.bf16 %v3701
    %v3846 = vunpack.c.h.bf16 %v3702
    %v3847 = vunpack.c.h.bf16 %v3703
    %v3848 = vunpack.c.l.bf16 %v3704
    %v3849 = vunpack.c.l.bf16 %v3705
    %v3850 = vunpack.c.l.bf16 %v3706
    %v3851 = vunpack.c.h.bf16 %v3704
    %v3852 = vunpack.c.h.bf16 %v3705
    %v3853 = vunpack.c.h.bf16 %v3706
    %v3854 = vunpack.c.l.bf16 %v3707
    %v3855 = vunpack.c.l.bf16 %v3708
    %v3856 = vunpack.c.l.bf16 %v3709
    %v3857 = vunpack.c.h.bf16 %v3707
    %v3858 = vunpack.c.h.bf16 %v3708
    %v3859 = vunpack.c.h.bf16 %v3709
    %v3860 = vunpack.c.l.bf16 %v3710
    %v3861 = vunpack.c.l.bf16 %v3711
    %v3862 = vunpack.c.l.bf16 %v3712
    %v3863 = vunpack.c.h.bf16 %v3710
    %v3864 = vunpack.c.h.bf16 %v3711
    %v3865 = vunpack.c.h.bf16 %v3712
    %v3866 = vunpack.c.l.bf16 %v3713
    %v3867 = vunpack.c.l.bf16 %v3714
    %v3868 = vunpack.c.l.bf16 %v3715
    %v3869 = vunpack.c.h.bf16 %v3713
    %v3870 = vunpack.c.h.bf16 %v3714
    %v3871 = vunpack.c.h.bf16 %v3715
    %v3872 = vunpack.c.l.bf16 %v3716
    %v3873 = vunpack.c.l.bf16 %v3717
    %v3874 = vunpack.c.l.bf16 %v3718
    %v3875 = vunpack.c.h.bf16 %v3716
    %v3876 = vunpack.c.h.bf16 %v3717
    %v3877 = vunpack.c.h.bf16 %v3718
    %v3878 = vunpack.c.l.bf16 %v3719
    %v3879 = vunpack.c.l.bf16 %v3720
    %v3880 = vunpack.c.l.bf16 %v3721
    %v3881 = vunpack.c.h.bf16 %v3719
    %v3882 = vunpack.c.h.bf16 %v3720
    %v3883 = vunpack.c.h.bf16 %v3721
    %v3884 = vunpack.c.l.bf16 %v3722
    %v3885 = vunpack.c.l.bf16 %v3723
    %v3886 = vunpack.c.l.bf16 %v3724
    %v3887 = vunpack.c.h.bf16 %v3722
    %v3888 = vunpack.c.h.bf16 %v3723
    %v3889 = vunpack.c.h.bf16 %v3724
    %v3890 = vunpack.c.l.bf16 %v3725
    %v3891 = vunpack.c.l.bf16 %v3726
    %v3892 = vunpack.c.l.bf16 %v3727
    %v3893 = vunpack.c.h.bf16 %v3725
    %v3894 = vunpack.c.h.bf16 %v3726
    %v3895 = vunpack.c.h.bf16 %v3727
    %v3896 = vunpack.c.l.bf16 %v3728
    %v3897 = vunpack.c.l.bf16 %v3729
    %v3898 = vunpack.c.l.bf16 %v3730
    %v3899 = vunpack.c.h.bf16 %v3728
    %v3900 = vunpack.c.h.bf16 %v3729
    %v3901 = vunpack.c.h.bf16 %v3730
    %v3902 = vunpack.c.l.bf16 %v3731
    %v3903 = vunpack.c.l.bf16 %v3732
    %v3904 = vunpack.c.l.bf16 %v3733
    %v3905 = vunpack.c.h.bf16 %v3731
    %v3906 = vunpack.c.h.bf16 %v3732
    %v3907 = vunpack.c.h.bf16 %v3733
    %v3908 = vunpack.c.l.bf16 %v3734
    %v3909 = vunpack.c.l.bf16 %v3735
    %v3910 = vunpack.c.l.bf16 %v3736
    %v3911 = vunpack.c.h.bf16 %v3734
    %v3912 = vunpack.c.h.bf16 %v3735
    %v3913 = vunpack.c.h.bf16 %v3736
    %v3914 = vunpack.c.l.bf16 %v3737
    %v3915 = vunpack.c.l.bf16 %v3738
    %v3916 = vunpack.c.l.bf16 %v3739
    %v3917 = vunpack.c.h.bf16 %v3737
    %v3918 = vunpack.c.h.bf16 %v3738
    %v3919 = vunpack.c.h.bf16 %v3739
    %v3920 = vunpack.c.l.bf16 %v3740
    %v3921 = vunpack.c.l.bf16 %v3741
    %v3922 = vunpack.c.l.bf16 %v3742
    %v3923 = vunpack.c.h.bf16 %v3740
    %v3924 = vunpack.c.h.bf16 %v3741
    %v3925 = vunpack.c.h.bf16 %v3742
    %v3926 = vunpack.c.l.bf16 %v3743
    %v3927 = vunpack.c.l.bf16 %v3744
    %v3928 = vunpack.c.l.bf16 %v3745
    %v3929 = vunpack.c.h.bf16 %v3743
    %v3930 = vunpack.c.h.bf16 %v3744
    %v3931 = vunpack.c.h.bf16 %v3745
    %v3932 = vunpack.c.l.bf16 %v3746
    %v3933 = vunpack.c.l.bf16 %v3747
    %v3934 = vunpack.c.l.bf16 %v3748
    %v3935 = vunpack.c.h.bf16 %v3746
    %v3936 = vunpack.c.h.bf16 %v3747
    %v3937 = vunpack.c.h.bf16 %v3748
    %v3938 = vunpack.c.l.bf16 %v3749
    %v3939 = vunpack.c.l.bf16 %v3750
    %v3940 = vunpack.c.l.bf16 %v3751
    %v3941 = vunpack.c.h.bf16 %v3749
    %v3942 = vunpack.c.h.bf16 %v3750
    %v3943 = vunpack.c.h.bf16 %v3751
    %v3944 = vunpack.c.l.bf16 %v3752
    %v3945 = vunpack.c.l.bf16 %v3753
    %v3946 = vunpack.c.l.bf16 %v3754
    %v3947 = vunpack.c.h.bf16 %v3752
    %v3948 = vunpack.c.h.bf16 %v3753
    %v3949 = vunpack.c.h.bf16 %v3754
    %v3950 = vunpack.c.l.bf16 %v3755
    %v3951 = vunpack.c.l.bf16 %v3756
    %v3952 = vunpack.c.l.bf16 %v3757
    %v3953 = vunpack.c.h.bf16 %v3755
    %v3954 = vunpack.c.h.bf16 %v3756
    %v3955 = vunpack.c.h.bf16 %v3757
    %v3956 = vunpack.c.l.bf16 %v3758
    %v3957 = vunpack.c.l.bf16 %v3759
    %v3958 = vunpack.c.l.bf16 %v3760
    %v3959 = vunpack.c.h.bf16 %v3758
    %v3960 = vunpack.c.h.bf16 %v3759
    %v3961 = vunpack.c.h.bf16 %v3760
    %v3962 = vunpack.c.l.bf16 %v3761
    %v3963 = vunpack.c.l.bf16 %v3762
    %v3964 = vunpack.c.l.bf16 %v3763
    %v3965 = vunpack.c.h.bf16 %v3761
    %v3966 = vunpack.c.h.bf16 %v3762
    %v3967 = vunpack.c.h.bf16 %v3763
    %v3968 = vunpack.c.l.bf16 %v3764
    %v3969 = vunpack.c.l.bf16 %v3765
    %v3970 = vunpack.c.l.bf16 %v3766
    %v3971 = vunpack.c.h.bf16 %v3764
    %v3972 = vunpack.c.h.bf16 %v3765
    %v3973 = vunpack.c.h.bf16 %v3766
    %v3974 = vunpack.c.l.bf16 %v3767
    %v3975 = vunpack.c.l.bf16 %v3768
    %v3976 = vunpack.c.l.bf16 %v3769
    %v3977 = vunpack.c.h.bf16 %v3767
    %v3978 = vunpack.c.h.bf16 %v3768
    %v3979 = vunpack.c.h.bf16 %v3769
    %v3980 = vunpack.c.l.bf16 %v3770
    %v3981 = vunpack.c.l.bf16 %v3771
    %v3982 = vunpack.c.l.bf16 %v3772
    %v3983 = vunpack.c.h.bf16 %v3770
    %v3984 = vunpack.c.h.bf16 %v3771
    %v3985 = vunpack.c.h.bf16 %v3772
    %v3986 = vunpack.c.l.bf16 %v3773
    %v3987 = vunpack.c.l.bf16 %v3774
    %v3988 = vunpack.c.l.bf16 %v3775
    %v3989 = vunpack.c.h.bf16 %v3773
    %v3990 = vunpack.c.h.bf16 %v3774
    %v3991 = vunpack.c.h.bf16 %v3775
    %v3992 = vunpack.c.l.bf16 %v3776
    %v3993 = vunpack.c.l.bf16 %v3777
    %v3994 = vunpack.c.l.bf16 %v3778
    %v3995 = vunpack.c.h.bf16 %v3776
    %v3996 = vunpack.c.h.bf16 %v3777
    %v3997 = vunpack.c.h.bf16 %v3778
    %v3998 = vunpack.c.l.bf16 %v3779
    %v3999 = vunpack.c.l.bf16 %v3780
    %v4000 = vunpack.c.l.bf16 %v3781
    %v4001 = vunpack.c.h.bf16 %v3779
    %v4002 = vunpack.c.h.bf16 %v3780
    %v4003 = vunpack.c.h.bf16 %v3781
    %v4004 = vunpack.c.l.bf16 %v3782
    %v4005 = vunpack.c.l.bf16 %v3783
    %v4006 = vunpack.c.l.bf16 %v3784
    %v4007 = vunpack.c.h.bf16 %v3782
    %v4008 = vunpack.c.h.bf16 %v3783
    %v4009 = vunpack.c.h.bf16 %v3784
    %v4010 = vunpack.c.l.bf16 %v3785
    %v4011 = vunpack.c.l.bf16 %v3786
    %v4012 = vunpack.c.l.bf16 %v3787
    %v4013 = vunpack.c.h.bf16 %v3785
    %v4014 = vunpack.c.h.bf16 %v3786
    %v4015 = vunpack.c.h.bf16 %v3787
    %v4016 = vunpack.c.l.bf16 %v3788
    %v4017 = vunpack.c.l.bf16 %v3789
    %v4018 = vunpack.c.l.bf16 %v3790
    %v4019 = vunpack.c.h.bf16 %v3788
    %v4020 = vunpack.c.h.bf16 %v3789
    %v4021 = vunpack.c.h.bf16 %v3790
    %v4022 = vunpack.c.l.bf16 %v3791
    %v4023 = vunpack.c.l.bf16 %v3792
    %v4024 = vunpack.c.l.bf16 %v3793
    %v4025 = vunpack.c.h.bf16 %v3791
    %v4026 = vunpack.c.h.bf16 %v3792
    %v4027 = vunpack.c.h.bf16 %v3793
    %v4028 = vunpack.c.l.bf16 %v3794
    %v4029 = vunpack.c.l.bf16 %v3795
    %v4030 = vunpack.c.l.bf16 %v3796
    %v4031 = vunpack.c.h.bf16 %v3794
    %v4032 = vunpack.c.h.bf16 %v3795
    %v4033 = vunpack.c.h.bf16 %v3796
    %v4034 = vunpack.c.l.bf16 %v3797
    %v4035 = vunpack.c.l.bf16 %v3798
    %v4036 = vunpack.c.l.bf16 %v3799
    %v4037 = vunpack.c.h.bf16 %v3797
    %v4038 = vunpack.c.h.bf16 %v3798
    %v4039 = vunpack.c.h.bf16 %v3799
    %v4040 = vunpack.c.l.bf16 %v3800
    %v4041 = vunpack.c.l.bf16 %v3801
    %v4042 = vunpack.c.l.bf16 %v3802
    %v4043 = vunpack.c.h.bf16 %v3800
    %v4044 = vunpack.c.h.bf16 %v3801
    %v4045 = vunpack.c.h.bf16 %v3802
    %v4046 = vunpack.c.l.bf16 %v3803
    %v4047 = vunpack.c.l.bf16 %v3804
    %v4048 = vunpack.c.l.bf16 %v3805
    %v4049 = vsub.f32 %v3440, %v3806
    %v4050 = vsub.f32 %v3441, %v3807
    %v4051 = vsub.f32 %v3442, %v3808
    %v4052 = vsub.f32 %v3443, %v3809
    %v4053 = vsub.f32 %v3444, %v3810
    %v4054 = vsub.f32 %v3445, %v3811
    %v4055 = vsub.f32 %v3446, %v3812
    %v4056 = vsub.f32 %v3447, %v3813
    %v4057 = vsub.f32 %v3448, %v3814
    %v4058 = vsub.f32 %v3449, %v3815
    %v4059 = vsub.f32 %v3450, %v3816
    %v4060 = vsub.f32 %v3451, %v3817
    %v4061 = vsub.f32 %v3452, %v3818
    %v4062 = vsub.f32 %v3453, %v3819
    %v4063 = vsub.f32 %v3454, %v3820
    %v4064 = vsub.f32 %v3455, %v3821
    %v4065 = vsub.f32 %v3456, %v3822
    %v4066 = vsub.f32 %v3457, %v3823
    %v4067 = vsub.f32 %v3458, %v3824
    %v4068 = vsub.f32 %v3459, %v3825
    %v4069 = vsub.f32 %v3460, %v3826
    %v4070 = vsub.f32 %v3461, %v3827
    %v4071 = vsub.f32 %v3462, %v3828
    %v4072 = vsub.f32 %v3463, %v3829
    %v4073 = vsub.f32 %v3464, %v3830
    %v4074 = vsub.f32 %v3465, %v3831
    %v4075 = vsub.f32 %v3466, %v3832
    %v4076 = vsub.f32 %v3467, %v3833
    %v4077 = vsub.f32 %v3468, %v3834
    %v4078 = vsub.f32 %v3469, %v3835
    %v4079 = vsub.f32 %v3470, %v3836
    %v4080 = vsub.f32 %v3471, %v3837
    %v4081 = vsub.f32 %v3472, %v3838
    %v4082 = vsub.f32 %v3473, %v3839
    %v4083 = vsub.f32 %v3474, %v3840
    %v4084 = vsub.f32 %v3475, %v3841
    %v4085 = vsub.f32 %v3476, %v3842
    %v4086 = vsub.f32 %v3477, %v3843
    %v4087 = vsub.f32 %v3478, %v3844
    %v4088 = vsub.f32 %v3479, %v3845
    %v4089 = vsub.f32 %v3480, %v3846
    %v4090 = vsub.f32 %v3481, %v3847
    %v4091 = vsub.f32 %v3482, %v3848
    %v4092 = vsub.f32 %v3483, %v3849
    %v4093 = vsub.f32 %v3484, %v3850
    %v4094 = vsub.f32 %v3485, %v3851
    %v4095 = vsub.f32 %v3486, %v3852
    %v4096 = vsub.f32 %v3487, %v3853
    %v4097 = vsub.f32 %v3488, %v3854
    %v4098 = vsub.f32 %v3489, %v3855
    %v4099 = vsub.f32 %v3490, %v3856
    %v4100 = vsub.f32 %v3491, %v3857
    %v4101 = vsub.f32 %v3492, %v3858
    %v4102 = vsub.f32 %v3493, %v3859
    %v4103 = vsub.f32 %v3494, %v3860
    %v4104 = vsub.f32 %v3495, %v3861
    %v4105 = vsub.f32 %v3496, %v3862
    %v4106 = vsub.f32 %v3497, %v3863
    %v4107 = vsub.f32 %v3498, %v3864
    %v4108 = vsub.f32 %v3499, %v3865
    %v4109 = vsub.f32 %v3500, %v3866
    %v4110 = vsub.f32 %v3501, %v3867
    %v4111 = vsub.f32 %v3502, %v3868
    %v4112 = vsub.f32 %v3503, %v3869
    %v4113 = vsub.f32 %v3504, %v3870
    %v4114 = vsub.f32 %v3505, %v3871
    %v4115 = vsub.f32 %v3506, %v3872
    %v4116 = vsub.f32 %v3507, %v3873
    %v4117 = vsub.f32 %v3508, %v3874
    %v4118 = vsub.f32 %v3509, %v3875
    %v4119 = vsub.f32 %v3510, %v3876
    %v4120 = vsub.f32 %v3511, %v3877
    %v4121 = vsub.f32 %v3512, %v3878
    %v4122 = vsub.f32 %v3513, %v3879
    %v4123 = vsub.f32 %v3514, %v3880
    %v4124 = vsub.f32 %v3515, %v3881
    %v4125 = vsub.f32 %v3516, %v3882
    %v4126 = vsub.f32 %v3517, %v3883
    %v4127 = vsub.f32 %v3518, %v3884
    %v4128 = vsub.f32 %v3519, %v3885
    %v4129 = vsub.f32 %v3520, %v3886
    %v4130 = vsub.f32 %v3521, %v3887
    %v4131 = vsub.f32 %v3522, %v3888
    %v4132 = vsub.f32 %v3523, %v3889
    %v4133 = vsub.f32 %v3524, %v3890
    %v4134 = vsub.f32 %v3525, %v3891
    %v4135 = vsub.f32 %v3526, %v3892
    %v4136 = vsub.f32 %v3527, %v3893
    %v4137 = vsub.f32 %v3528, %v3894
    %v4138 = vsub.f32 %v3529, %v3895
    %v4139 = vsub.f32 %v3530, %v3896
    %v4140 = vsub.f32 %v3531, %v3897
    %v4141 = vsub.f32 %v3532, %v3898
    %v4142 = vsub.f32 %v3533, %v3899
    %v4143 = vsub.f32 %v3534, %v3900
    %v4144 = vsub.f32 %v3535, %v3901
    %v4145 = vsub.f32 %v3536, %v3902
    %v4146 = vsub.f32 %v3537, %v3903
    %v4147 = vsub.f32 %v3538, %v3904
    %v4148 = vsub.f32 %v3539, %v3905
    %v4149 = vsub.f32 %v3540, %v3906
    %v4150 = vsub.f32 %v3541, %v3907
    %v4151 = vsub.f32 %v3542, %v3908
    %v4152 = vsub.f32 %v3543, %v3909
    %v4153 = vsub.f32 %v3544, %v3910
    %v4154 = vsub.f32 %v3545, %v3911
    %v4155 = vsub.f32 %v3546, %v3912
    %v4156 = vsub.f32 %v3547, %v3913
    %v4157 = vsub.f32 %v3548, %v3914
    %v4158 = vsub.f32 %v3549, %v3915
    %v4159 = vsub.f32 %v3550, %v3916
    %v4160 = vsub.f32 %v3551, %v3917
    %v4161 = vsub.f32 %v3552, %v3918
    %v4162 = vsub.f32 %v3553, %v3919
    %v4163 = vsub.f32 %v3554, %v3920
    %v4164 = vsub.f32 %v3555, %v3921
    %v4165 = vsub.f32 %v3556, %v3922
    %v4166 = vsub.f32 %v3557, %v3923
    %v4167 = vsub.f32 %v3558, %v3924
    %v4168 = vsub.f32 %v3559, %v3925
    %v4169 = vsub.f32 %v3560, %v3926
    %v4170 = vsub.f32 %v3561, %v3927
    %v4171 = vsub.f32 %v3562, %v3928
    %v4172 = vsub.f32 %v3563, %v3929
    %v4173 = vsub.f32 %v3564, %v3930
    %v4174 = vsub.f32 %v3565, %v3931
    %v4175 = vsub.f32 %v3566, %v3932
    %v4176 = vsub.f32 %v3567, %v3933
    %v4177 = vsub.f32 %v3568, %v3934
    %v4178 = vsub.f32 %v3569, %v3935
    %v4179 = vsub.f32 %v3570, %v3936
    %v4180 = vsub.f32 %v3571, %v3937
    %v4181 = vsub.f32 %v3572, %v3938
    %v4182 = vsub.f32 %v3573, %v3939
    %v4183 = vsub.f32 %v3574, %v3940
    %v4184 = vsub.f32 %v3575, %v3941
    %v4185 = vsub.f32 %v3576, %v3942
    %v4186 = vsub.f32 %v3577, %v3943
    %v4187 = vsub.f32 %v3578, %v3944
    %v4188 = vsub.f32 %v3579, %v3945
    %v4189 = vsub.f32 %v3580, %v3946
    %v4190 = vsub.f32 %v3581, %v3947
    %v4191 = vsub.f32 %v3582, %v3948
    %v4192 = vsub.f32 %v3583, %v3949
    %v4193 = vsub.f32 %v3584, %v3950
    %v4194 = vsub.f32 %v3585, %v3951
    %v4195 = vsub.f32 %v3586, %v3952
    %v4196 = vsub.f32 %v3587, %v3953
    %v4197 = vsub.f32 %v3588, %v3954
    %v4198 = vsub.f32 %v3589, %v3955
    %v4199 = vsub.f32 %v3590, %v3956
    %v4200 = vsub.f32 %v3591, %v3957
    %v4201 = vsub.f32 %v3592, %v3958
    %v4202 = vsub.f32 %v3593, %v3959
    %v4203 = vsub.f32 %v3594, %v3960
    %v4204 = vsub.f32 %v3595, %v3961
    %v4205 = vsub.f32 %v3596, %v3962
    %v4206 = vsub.f32 %v3597, %v3963
    %v4207 = vsub.f32 %v3598, %v3964
    %v4208 = vsub.f32 %v3599, %v3965
    %v4209 = vsub.f32 %v3600, %v3966
    %v4210 = vsub.f32 %v3601, %v3967
    %v4211 = vsub.f32 %v3602, %v3968
    %v4212 = vsub.f32 %v3603, %v3969
    %v4213 = vsub.f32 %v3604, %v3970
    %v4214 = vsub.f32 %v3605, %v3971
    %v4215 = vsub.f32 %v3606, %v3972
    %v4216 = vsub.f32 %v3607, %v3973
    %v4217 = vsub.f32 %v3608, %v3974
    %v4218 = vsub.f32 %v3609, %v3975
    %v4219 = vsub.f32 %v3610, %v3976
    %v4220 = vsub.f32 %v3611, %v3977
    %v4221 = vsub.f32 %v3612, %v3978
    %v4222 = vsub.f32 %v3613, %v3979
    %v4223 = vsub.f32 %v3614, %v3980
    %v4224 = vsub.f32 %v3615, %v3981
    %v4225 = vsub.f32 %v3616, %v3982
    %v4226 = vsub.f32 %v3617, %v3983
    %v4227 = vsub.f32 %v3618, %v3984
    %v4228 = vsub.f32 %v3619, %v3985
    %v4229 = vsub.f32 %v3620, %v3986
    %v4230 = vsub.f32 %v3621, %v3987
    %v4231 = vsub.f32 %v3622, %v3988
    %v4232 = vsub.f32 %v3623, %v3989
    %v4233 = vsub.f32 %v3624, %v3990
    %v4234 = vsub.f32 %v3625, %v3991
    %v4235 = vsub.f32 %v3626, %v3992
    %v4236 = vsub.f32 %v3627, %v3993
    %v4237 = vsub.f32 %v3628, %v3994
    %v4238 = vsub.f32 %v3629, %v3995
    %v4239 = vsub.f32 %v3630, %v3996
    %v4240 = vsub.f32 %v3631, %v3997
    %v4241 = vsub.f32 %v3632, %v3998
    %v4242 = vsub.f32 %v3633, %v3999
    %v4243 = vsub.f32 %v3634, %v4000
    %v4244 = vsub.f32 %v3635, %v4001
    %v4245 = vsub.f32 %v3636, %v4002
    %v4246 = vsub.f32 %v3637, %v4003
    %v4247 = vsub.f32 %v3638, %v4004
    %v4248 = vsub.f32 %v3639, %v4005
    %v4249 = vsub.f32 %v3640, %v4006
    %v4250 = vsub.f32 %v3641, %v4007
    %v4251 = vsub.f32 %v3642, %v4008
    %v4252 = vsub.f32 %v3643, %v4009
    %v4253 = vsub.f32 %v3644, %v4010
    %v4254 = vsub.f32 %v3645, %v4011
    %v4255 = vsub.f32 %v3646, %v4012
    %v4256 = vsub.f32 %v3647, %v4013
    %v4257 = vsub.f32 %v3648, %v4014
    %v4258 = vsub.f32 %v3649, %v4015
    %v4259 = vsub.f32 %v3650, %v4016
    %v4260 = vsub.f32 %v3651, %v4017
    %v4261 = vsub.f32 %v3652, %v4018
    %v4262 = vsub.f32 %v3653, %v4019
    %v4263 = vsub.f32 %v3654, %v4020
    %v4264 = vsub.f32 %v3655, %v4021
    %v4265 = vsub.f32 %v3656, %v4022
    %v4266 = vsub.f32 %v3657, %v4023
    %v4267 = vsub.f32 %v3658, %v4024
    %v4268 = vsub.f32 %v3659, %v4025
    %v4269 = vsub.f32 %v3660, %v4026
    %v4270 = vsub.f32 %v3661, %v4027
    %v4271 = vsub.f32 %v3662, %v4028
    %v4272 = vsub.f32 %v3663, %v4029
    %v4273 = vsub.f32 %v3664, %v4030
    %v4274 = vsub.f32 %v3665, %v4031
    %v4275 = vsub.f32 %v3666, %v4032
    %v4276 = vsub.f32 %v3667, %v4033
    %v4277 = vsub.f32 %v3668, %v4034
    %v4278 = vsub.f32 %v3669, %v4035
    %v4279 = vsub.f32 %v3670, %v4036
    %v4280 = vsub.f32 %v3671, %v4037
    %v4281 = vsub.f32 %v3672, %v4038
    %v4282 = vsub.f32 %v3673, %v4039
    %v4283 = vsub.f32 %v3674, %v4040
    %v4284 = vsub.f32 %v3675, %v4041
    %v4285 = vsub.f32 %v3676, %v4042
    %v4286 = vsub.f32 %v3677, %v4043
    %v4287 = vsub.f32 %v3678, %v4044
    %v4288 = vsub.f32 %v3679, %v4045
    %v4289 = vsub.f32 %v3680, %v4046
    %v4290 = vsub.f32 %v3681, %v4047
    %v4291 = vsub.f32 %v3682, %v4048
    %v4292 = vpack.c.bf16 %v4052, %v4049
    %v4293 = vpack.c.bf16 %v4053, %v4050
    %v4294 = vpack.c.bf16 %v4054, %v4051
    %v4295 = vpack.c.bf16 %v4058, %v4055
    %v4296 = vpack.c.bf16 %v4059, %v4056
    %v4297 = vpack.c.bf16 %v4060, %v4057
    %v4298 = vpack.c.bf16 %v4064, %v4061
    %v4299 = vpack.c.bf16 %v4065, %v4062
    %v4300 = vpack.c.bf16 %v4066, %v4063
    %v4301 = vpack.c.bf16 %v4070, %v4067
    %v4302 = vpack.c.bf16 %v4071, %v4068
    %v4303 = vpack.c.bf16 %v4072, %v4069
    %v4304 = vpack.c.bf16 %v4076, %v4073
    %v4305 = vpack.c.bf16 %v4077, %v4074
    %v4306 = vpack.c.bf16 %v4078, %v4075
    %v4307 = vpack.c.bf16 %v4082, %v4079
    %v4308 = vpack.c.bf16 %v4083, %v4080
    %v4309 = vpack.c.bf16 %v4084, %v4081
    %v4310 = vpack.c.bf16 %v4088, %v4085
    %v4311 = vpack.c.bf16 %v4089, %v4086
    %v4312 = vpack.c.bf16 %v4090, %v4087
    %v4313 = vpack.c.bf16 %v4094, %v4091
    %v4314 = vpack.c.bf16 %v4095, %v4092
    %v4315 = vpack.c.bf16 %v4096, %v4093
    %v4316 = vpack.c.bf16 %v4100, %v4097
    %v4317 = vpack.c.bf16 %v4101, %v4098
    %v4318 = vpack.c.bf16 %v4102, %v4099
    %v4319 = vpack.c.bf16 %v4106, %v4103
    %v4320 = vpack.c.bf16 %v4107, %v4104
    %v4321 = vpack.c.bf16 %v4108, %v4105
    %v4322 = vpack.c.bf16 %v4112, %v4109
    %v4323 = vpack.c.bf16 %v4113, %v4110
    %v4324 = vpack.c.bf16 %v4114, %v4111
    %v4325 = vpack.c.bf16 %v4118, %v4115
    %v4326 = vpack.c.bf16 %v4119, %v4116
    %v4327 = vpack.c.bf16 %v4120, %v4117
    %v4328 = vpack.c.bf16 %v4124, %v4121
    %v4329 = vpack.c.bf16 %v4125, %v4122
    %v4330 = vpack.c.bf16 %v4126, %v4123
    %v4331 = vpack.c.bf16 %v4130, %v4127
    %v4332 = vpack.c.bf16 %v4131, %v4128
    %v4333 = vpack.c.bf16 %v4132, %v4129
    %v4334 = vpack.c.bf16 %v4136, %v4133
    %v4335 = vpack.c.bf16 %v4137, %v4134
    %v4336 = vpack.c.bf16 %v4138, %v4135
    %v4337 = vpack.c.bf16 %v4142, %v4139
    %v4338 = vpack.c.bf16 %v4143, %v4140
    %v4339 = vpack.c.bf16 %v4144, %v4141
    %v4340 = vpack.c.bf16 %v4148, %v4145
    %v4341 = vpack.c.bf16 %v4149, %v4146
    %v4342 = vpack.c.bf16 %v4150, %v4147
    %v4343 = vpack.c.bf16 %v4154, %v4151
    %v4344 = vpack.c.bf16 %v4155, %v4152
    %v4345 = vpack.c.bf16 %v4156, %v4153
    %v4346 = vpack.c.bf16 %v4160, %v4157
    %v4347 = vpack.c.bf16 %v4161, %v4158
    %v4348 = vpack.c.bf16 %v4162, %v4159
    %v4349 = vpack.c.bf16 %v4166, %v4163
    %v4350 = vpack.c.bf16 %v4167, %v4164
    %v4351 = vpack.c.bf16 %v4168, %v4165
    %v4352 = vpack.c.bf16 %v4172, %v4169
    %v4353 = vpack.c.bf16 %v4173, %v4170
    %v4354 = vpack.c.bf16 %v4174, %v4171
    %v4355 = vpack.c.bf16 %v4178, %v4175
    %v4356 = vpack.c.bf16 %v4179, %v4176
    %v4357 = vpack.c.bf16 %v4180, %v4177
    %v4358 = vpack.c.bf16 %v4184, %v4181
    %v4359 = vpack.c.bf16 %v4185, %v4182
    %v4360 = vpack.c.bf16 %v4186, %v4183
    %v4361 = vpack.c.bf16 %v4190, %v4187
    %v4362 = vpack.c.bf16 %v4191, %v4188
    %v4363 = vpack.c.bf16 %v4192, %v4189
    %v4364 = vpack.c.bf16 %v4196, %v4193
    %v4365 = vpack.c.bf16 %v4197, %v4194
    %v4366 = vpack.c.bf16 %v4198, %v4195
    %v4367 = vpack.c.bf16 %v4202, %v4199
    %v4368 = vpack.c.bf16 %v4203, %v4200
    %v4369 = vpack.c.bf16 %v4204, %v4201
    %v4370 = vpack.c.bf16 %v4208, %v4205
    %v4371 = vpack.c.bf16 %v4209, %v4206
    %v4372 = vpack.c.bf16 %v4210, %v4207
    %v4373 = vpack.c.bf16 %v4214, %v4211
    %v4374 = vpack.c.bf16 %v4215, %v4212
    %v4375 = vpack.c.bf16 %v4216, %v4213
    %v4376 = vpack.c.bf16 %v4220, %v4217
    %v4377 = vpack.c.bf16 %v4221, %v4218
    %v4378 = vpack.c.bf16 %v4222, %v4219
    %v4379 = vpack.c.bf16 %v4226, %v4223
    %v4380 = vpack.c.bf16 %v4227, %v4224
    %v4381 = vpack.c.bf16 %v4228, %v4225
    %v4382 = vpack.c.bf16 %v4232, %v4229
    %v4383 = vpack.c.bf16 %v4233, %v4230
    %v4384 = vpack.c.bf16 %v4234, %v4231
    %v4385 = vpack.c.bf16 %v4238, %v4235
    %v4386 = vpack.c.bf16 %v4239, %v4236
    %v4387 = vpack.c.bf16 %v4240, %v4237
    %v4388 = vpack.c.bf16 %v4244, %v4241
    %v4389 = vpack.c.bf16 %v4245, %v4242
    %v4390 = vpack.c.bf16 %v4246, %v4243
    %v4391 = vpack.c.bf16 %v4250, %v4247
    %v4392 = vpack.c.bf16 %v4251, %v4248
    %v4393 = vpack.c.bf16 %v4252, %v4249
    %v4394 = vpack.c.bf16 %v4256, %v4253
    %v4395 = vpack.c.bf16 %v4257, %v4254
    %v4396 = vpack.c.bf16 %v4258, %v4255
    %v4397 = vpack.c.bf16 %v4262, %v4259
    %v4398 = vpack.c.bf16 %v4263, %v4260
    %v4399 = vpack.c.bf16 %v4264, %v4261
    %v4400 = vpack.c.bf16 %v4268, %v4265
    %v4401 = vpack.c.bf16 %v4269, %v4266
    %v4402 = vpack.c.bf16 %v4270, %v4267
    %v4403 = vpack.c.bf16 %v4274, %v4271
    %v4404 = vpack.c.bf16 %v4275, %v4272
    %v4405 = vpack.c.bf16 %v4276, %v4273
    %v4406 = vpack.c.bf16 %v4280, %v4277
    %v4407 = vpack.c.bf16 %v4281, %v4278
    %v4408 = vpack.c.bf16 %v4282, %v4279
    %v4409 = vpack.c.bf16 %v4286, %v4283
    %v4410 = vpack.c.bf16 %v4287, %v4284
    %v4411 = vpack.c.bf16 %v4288, %v4285
    %v4412 = vpack.c.bf16 %v4289, %v4289
    %v4413 = vpack.c.bf16 %v4290, %v4290
    %v4414 = vpack.c.bf16 %v4291, %v4291
    %v4415 = vld [vmem:[#allocation4] sm:$0xff]
    %v4416 = vld [vmem:[#allocation4 + $0x8] sm:$0xff]
    %v4417 = vld [vmem:[#allocation4 + $0x10] sm:$0xff]
    %v4418 = vld [vmem:[#allocation4 + $0x18] sm:$0xff]
    %v4419 = vld [vmem:[#allocation4 + $0x20] sm:$0xff]
    %v4420 = vld [vmem:[#allocation4 + $0x28] sm:$0xff]
    %v4421 = vld [vmem:[#allocation4 + $0x30] sm:$0xff]
    %v4422 = vld [vmem:[#allocation4 + $0x38] sm:$0xff]
    %v4423 = vld [vmem:[#allocation4 + $0x40] sm:$0xff]
    %v4424 = vld [vmem:[#allocation4 + $0x48] sm:$0xff]
    %v4425 = vld [vmem:[#allocation4 + $0x50] sm:$0xff]
    %v4426 = vld [vmem:[#allocation4 + $0x58] sm:$0xff]
    %v4427 = vld [vmem:[#allocation4 + $0x60] sm:$0xff]
    %v4428 = vld [vmem:[#allocation4 + $0x68] sm:$0xff]
    %v4429 = vld [vmem:[#allocation4 + $0x70] sm:$0xff]
    %v4430 = vld [vmem:[#allocation4 + $0x78] sm:$0xff]
    %v4431 = vld [vmem:[#allocation4 + $0x80] sm:$0xff]
    %v4432 = vld [vmem:[#allocation4 + $0x88] sm:$0xff]
    %v4433 = vld [vmem:[#allocation4 + $0x90] sm:$0xff]
    %v4434 = vld [vmem:[#allocation4 + $0x98] sm:$0xff]
    %v4435 = vld [vmem:[#allocation4 + $0xa0] sm:$0xff]
    %v4436 = vld [vmem:[#allocation4 + $0xa8] sm:$0xff]
    %v4437 = vld [vmem:[#allocation4 + $0xb0] sm:$0xff]
    %v4438 = vld [vmem:[#allocation4 + $0xb8] sm:$0xff]
    %v4439 = vld [vmem:[#allocation4 + $0xc0] sm:$0xff]
    %v4440 = vld [vmem:[#allocation4 + $0xc8] sm:$0xff]
    %v4441 = vld [vmem:[#allocation4 + $0xd0] sm:$0xff]
    %v4442 = vld [vmem:[#allocation4 + $0xd8] sm:$0xff]
    %v4443 = vld [vmem:[#allocation4 + $0xe0] sm:$0xff]
    %v4444 = vld [vmem:[#allocation4 + $0xe8] sm:$0xff]
    %v4445 = vld [vmem:[#allocation4 + $0xf0] sm:$0xff]
    %v4446 = vld [vmem:[#allocation4 + $0xf8] sm:$0xff]
    %v4447 = vld [vmem:[#allocation4 + $0x100] sm:$0xff]
    %v4448 = vld [vmem:[#allocation4 + $0x108] sm:$0xff]
    %v4449 = vld [vmem:[#allocation4 + $0x110] sm:$0xff]
    %v4450 = vld [vmem:[#allocation4 + $0x118] sm:$0xff]
    %v4451 = vld [vmem:[#allocation4 + $0x120] sm:$0xff]
    %v4452 = vld [vmem:[#allocation4 + $0x128] sm:$0xff]
    %v4453 = vld [vmem:[#allocation4 + $0x130] sm:$0xff]
    %v4454 = vld [vmem:[#allocation4 + $0x138] sm:$0xff]
    %v4455 = vld [vmem:[#allocation4 + $0x140] sm:$0xff]
    %v4456 = vld [vmem:[#allocation4 + $0x148] sm:$0xff]
    %v4457 = vld [vmem:[#allocation4 + $0x150] sm:$0xff]
    %v4458 = vld [vmem:[#allocation4 + $0x158] sm:$0xff]
    %v4459 = vld [vmem:[#allocation4 + $0x160] sm:$0xff]
    %v4460 = vld [vmem:[#allocation4 + $0x168] sm:$0xff]
    %v4461 = vld [vmem:[#allocation4 + $0x170] sm:$0xff]
    %v4462 = vld [vmem:[#allocation4 + $0x178] sm:$0xff]
    %v4463 = vld [vmem:[#allocation4 + $0x180] sm:$0xff]
    %v4464 = vld [vmem:[#allocation4 + $0x188] sm:$0xff]
    %v4465 = vld [vmem:[#allocation4 + $0x190] sm:$0xff]
    %v4466 = vld [vmem:[#allocation4 + $0x198] sm:$0xff]
    %v4467 = vld [vmem:[#allocation4 + $0x1a0] sm:$0xff]
    %v4468 = vld [vmem:[#allocation4 + $0x1a8] sm:$0xff]
    %v4469 = vld [vmem:[#allocation4 + $0x1b0] sm:$0xff]
    %v4470 = vld [vmem:[#allocation4 + $0x1b8] sm:$0xff]
    %v4471 = vld [vmem:[#allocation4 + $0x1c0] sm:$0xff]
    %v4472 = vld [vmem:[#allocation4 + $0x1c8] sm:$0xff]
    %v4473 = vld [vmem:[#allocation4 + $0x1d0] sm:$0xff]
    %v4474 = vld [vmem:[#allocation4 + $0x1d8] sm:$0xff]
    %v4475 = vld [vmem:[#allocation4 + $0x1e0] sm:$0xff]
    %v4476 = vld [vmem:[#allocation4 + $0x1e8] sm:$0xff]
    %v4477 = vld [vmem:[#allocation4 + $0x1f0] sm:$0xff]
    %v4478 = vld [vmem:[#allocation4 + $0x1f8] sm:$0xff]
    %v4479 = vld [vmem:[#allocation4 + $0x200] sm:$0xff]
    %v4480 = vld [vmem:[#allocation4 + $0x208] sm:$0xff]
    %v4481 = vld [vmem:[#allocation4 + $0x210] sm:$0xff]
    %v4482 = vld [vmem:[#allocation4 + $0x218] sm:$0xff]
    %v4483 = vld [vmem:[#allocation4 + $0x220] sm:$0xff]
    %v4484 = vld [vmem:[#allocation4 + $0x228] sm:$0xff]
    %v4485 = vld [vmem:[#allocation4 + $0x230] sm:$0xff]
    %v4486 = vld [vmem:[#allocation4 + $0x238] sm:$0xff]
    %v4487 = vld [vmem:[#allocation4 + $0x240] sm:$0xff]
    %v4488 = vld [vmem:[#allocation4 + $0x248] sm:$0xff]
    %v4489 = vld [vmem:[#allocation4 + $0x250] sm:$0xff]
    %v4490 = vld [vmem:[#allocation4 + $0x258] sm:$0xff]
    %v4491 = vld [vmem:[#allocation4 + $0x260] sm:$0xff]
    %v4492 = vld [vmem:[#allocation4 + $0x268] sm:$0xff]
    %v4493 = vld [vmem:[#allocation4 + $0x270] sm:$0xff]
    %v4494 = vld [vmem:[#allocation4 + $0x278] sm:$0xff]
    %v4495 = vld [vmem:[#allocation4 + $0x280] sm:$0xff]
    %v4496 = vld [vmem:[#allocation4 + $0x288] sm:$0xff]
    %v4497 = vld [vmem:[#allocation4 + $0x290] sm:$0xff]
    %v4498 = vld [vmem:[#allocation4 + $0x298] sm:$0xff]
    %v4499 = vld [vmem:[#allocation4 + $0x2a0] sm:$0xff]
    %v4500 = vld [vmem:[#allocation4 + $0x2a8] sm:$0xff]
    %v4501 = vld [vmem:[#allocation4 + $0x2b0] sm:$0xff]
    %v4502 = vld [vmem:[#allocation4 + $0x2b8] sm:$0xff]
    %v4503 = vld [vmem:[#allocation4 + $0x2c0] sm:$0xff]
    %v4504 = vld [vmem:[#allocation4 + $0x2c8] sm:$0xff]
    %v4505 = vld [vmem:[#allocation4 + $0x2d0] sm:$0xff]
    %v4506 = vld [vmem:[#allocation4 + $0x2d8] sm:$0xff]
    %v4507 = vld [vmem:[#allocation4 + $0x2e0] sm:$0xff]
    %v4508 = vld [vmem:[#allocation4 + $0x2e8] sm:$0xff]
    %v4509 = vld [vmem:[#allocation4 + $0x2f0] sm:$0xff]
    %v4510 = vld [vmem:[#allocation4 + $0x2f8] sm:$0xff]
    %v4511 = vld [vmem:[#allocation4 + $0x300] sm:$0xff]
    %v4512 = vld [vmem:[#allocation4 + $0x308] sm:$0xff]
    %v4513 = vld [vmem:[#allocation4 + $0x310] sm:$0xff]
    %v4514 = vld [vmem:[#allocation4 + $0x318] sm:$0xff]
    %v4515 = vld [vmem:[#allocation4 + $0x320] sm:$0xff]
    %v4516 = vld [vmem:[#allocation4 + $0x328] sm:$0xff]
    %v4517 = vld [vmem:[#allocation4 + $0x330] sm:$0xff]
    %v4518 = vld [vmem:[#allocation4 + $0x338] sm:$0xff]
    %v4519 = vld [vmem:[#allocation4 + $0x340] sm:$0xff]
    %v4520 = vld [vmem:[#allocation4 + $0x348] sm:$0xff]
    %v4521 = vld [vmem:[#allocation4 + $0x350] sm:$0xff]
    %v4522 = vld [vmem:[#allocation4 + $0x358] sm:$0xff]
    %v4523 = vld [vmem:[#allocation4 + $0x360] sm:$0xff]
    %v4524 = vld [vmem:[#allocation4 + $0x368] sm:$0xff]
    %v4525 = vld [vmem:[#allocation4 + $0x370] sm:$0xff]
    %v4526 = vld [vmem:[#allocation4 + $0x378] sm:$0xff]
    %v4527 = vld [vmem:[#allocation4 + $0x380] sm:$0xff]
    %v4528 = vld [vmem:[#allocation4 + $0x388] sm:$0xff]
    %v4529 = vld [vmem:[#allocation4 + $0x390] sm:$0xff]
    %v4530 = vld [vmem:[#allocation4 + $0x398] sm:$0xff]
    %v4531 = vld [vmem:[#allocation4 + $0x3a0] sm:$0xff]
    %v4532 = vld [vmem:[#allocation4 + $0x3a8] sm:$0xff]
    %v4533 = vld [vmem:[#allocation4 + $0x3b0] sm:$0xff]
    %v4534 = vld [vmem:[#allocation4 + $0x3b8] sm:$0xff]
    %v4535 = vld [vmem:[#allocation4 + $0x3c0] sm:$0xff]
    %v4536 = vld [vmem:[#allocation4 + $0x3c8] sm:$0xff]
    %v4537 = vld [vmem:[#allocation4 + $0x3d0] sm:$0xff]
    %v4538 = vld [vmem:[#allocation4 + $0x3d8] sm:$0xff]
    %v4539 = vld [vmem:[#allocation4 + $0x3e0] sm:$0xff]
    %v4540 = vld [vmem:[#allocation4 + $0x3e8] sm:$0xff]
    %v4541 = vld [vmem:[#allocation4 + $0x3f0] sm:$0xff]
    %v4542 = vld [vmem:[#allocation4 + $0x3f8] sm:$0xff]
    %v4543 = vld [vmem:[#allocation4 + $0x400] sm:$0xff]
    %v4544 = vld [vmem:[#allocation4 + $0x408] sm:$0xff]
    %v4545 = vld [vmem:[#allocation4 + $0x410] sm:$0xff]
    %v4546 = vld [vmem:[#allocation4 + $0x418] sm:$0xff]
    %v4547 = vld [vmem:[#allocation4 + $0x420] sm:$0xff]
    %v4548 = vld [vmem:[#allocation4 + $0x428] sm:$0xff]
    %v4549 = vld [vmem:[#allocation4 + $0x430] sm:$0xff]
    %v4550 = vld [vmem:[#allocation4 + $0x438] sm:$0xff]
    %v4551 = vld [vmem:[#allocation4 + $0x440] sm:$0xff]
    %v4552 = vld [vmem:[#allocation4 + $0x448] sm:$0xff]
    %v4553 = vld [vmem:[#allocation4 + $0x450] sm:$0xff]
    %v4554 = vld [vmem:[#allocation4 + $0x458] sm:$0xff]
    %v4555 = vld [vmem:[#allocation4 + $0x460] sm:$0xff]
    %v4556 = vld [vmem:[#allocation4 + $0x468] sm:$0xff]
    %v4557 = vld [vmem:[#allocation4 + $0x470] sm:$0xff]
    %v4558 = vld [vmem:[#allocation4 + $0x478] sm:$0xff]
    %v4559 = vld [vmem:[#allocation4 + $0x480] sm:$0xff]
    %v4560 = vld [vmem:[#allocation4 + $0x488] sm:$0xff]
    %v4561 = vld [vmem:[#allocation4 + $0x490] sm:$0xff]
    %v4562 = vld [vmem:[#allocation4 + $0x498] sm:$0xff]
    %v4563 = vld [vmem:[#allocation4 + $0x4a0] sm:$0xff]
    %v4564 = vld [vmem:[#allocation4 + $0x4a8] sm:$0xff]
    %v4565 = vld [vmem:[#allocation4 + $0x4b0] sm:$0xff]
    %v4566 = vld [vmem:[#allocation4 + $0x4b8] sm:$0xff]
    %v4567 = vld [vmem:[#allocation4 + $0x4c0] sm:$0xff]
    %v4568 = vld [vmem:[#allocation4 + $0x4c8] sm:$0xff]
    %v4569 = vld [vmem:[#allocation4 + $0x4d0] sm:$0xff]
    %v4570 = vld [vmem:[#allocation4 + $0x4d8] sm:$0xff]
    %v4571 = vld [vmem:[#allocation4 + $0x4e0] sm:$0xff]
    %v4572 = vld [vmem:[#allocation4 + $0x4e8] sm:$0xff]
    %v4573 = vld [vmem:[#allocation4 + $0x4f0] sm:$0xff]
    %v4574 = vld [vmem:[#allocation4 + $0x4f8] sm:$0xff]
    %v4575 = vld [vmem:[#allocation4 + $0x500] sm:$0xff]
    %v4576 = vld [vmem:[#allocation4 + $0x508] sm:$0xff]
    %v4577 = vld [vmem:[#allocation4 + $0x510] sm:$0xff]
    %v4578 = vld [vmem:[#allocation4 + $0x518] sm:$0xff]
    %v4579 = vld [vmem:[#allocation4 + $0x520] sm:$0xff]
    %v4580 = vld [vmem:[#allocation4 + $0x528] sm:$0xff]
    %v4581 = vld [vmem:[#allocation4 + $0x530] sm:$0xff]
    %v4582 = vld [vmem:[#allocation4 + $0x538] sm:$0xff]
    %v4583 = vld [vmem:[#allocation4 + $0x540] sm:$0xff]
    %v4584 = vld [vmem:[#allocation4 + $0x548] sm:$0xff]
    %v4585 = vld [vmem:[#allocation4 + $0x550] sm:$0xff]
    %v4586 = vld [vmem:[#allocation4 + $0x558] sm:$0xff]
    %v4587 = vld [vmem:[#allocation4 + $0x560] sm:$0xff]
    %v4588 = vld [vmem:[#allocation4 + $0x568] sm:$0xff]
    %v4589 = vld [vmem:[#allocation4 + $0x570] sm:$0xff]
    %v4590 = vld [vmem:[#allocation4 + $0x578] sm:$0xff]
    %v4591 = vld [vmem:[#allocation4 + $0x580] sm:$0xff]
    %v4592 = vld [vmem:[#allocation4 + $0x588] sm:$0xff]
    %v4593 = vld [vmem:[#allocation4 + $0x590] sm:$0xff]
    %v4594 = vld [vmem:[#allocation4 + $0x598] sm:$0xff]
    %v4595 = vld [vmem:[#allocation4 + $0x5a0] sm:$0xff]
    %v4596 = vld [vmem:[#allocation4 + $0x5a8] sm:$0xff]
    %v4597 = vld [vmem:[#allocation4 + $0x5b0] sm:$0xff]
    %v4598 = vld [vmem:[#allocation4 + $0x5b8] sm:$0xff]
    %v4599 = vld [vmem:[#allocation4 + $0x5c0] sm:$0xff]
    %v4600 = vld [vmem:[#allocation4 + $0x5c8] sm:$0xff]
    %v4601 = vld [vmem:[#allocation4 + $0x5d0] sm:$0xff]
    %v4602 = vld [vmem:[#allocation4 + $0x5d8] sm:$0xff]
    %v4603 = vld [vmem:[#allocation4 + $0x5e0] sm:$0xff]
    %v4604 = vld [vmem:[#allocation4 + $0x5e8] sm:$0xff]
    %v4605 = vld [vmem:[#allocation4 + $0x5f0] sm:$0xff]
    %v4606 = vld [vmem:[#allocation4 + $0x5f8] sm:$0xff]
    %v4799 = vunpack.c.l.b16 %v4415
    %v4800 = vunpack.c.h.b16 %v4415
    %v4801 = vunpack.c.l.b16 %v4416
    %v4802 = vunpack.c.h.b16 %v4416
    %v4803 = vunpack.c.l.b16 %v4417
    %v4804 = vunpack.c.h.b16 %v4417
    %v4805 = vunpack.c.l.b16 %v4418
    %v4806 = vunpack.c.h.b16 %v4418
    %v4807 = vunpack.c.l.b16 %v4419
    %v4808 = vunpack.c.h.b16 %v4419
    %v4809 = vunpack.c.l.b16 %v4420
    %v4810 = vunpack.c.h.b16 %v4420
    %v4811 = vunpack.c.l.b16 %v4421
    %v4812 = vunpack.c.h.b16 %v4421
    %v4813 = vunpack.c.l.b16 %v4422
    %v4814 = vunpack.c.h.b16 %v4422
    %v4815 = vunpack.c.l.b16 %v4423
    %v4816 = vunpack.c.h.b16 %v4423
    %v4817 = vunpack.c.l.b16 %v4424
    %v4818 = vunpack.c.h.b16 %v4424
    %v4819 = vunpack.c.l.b16 %v4425
    %v4820 = vunpack.c.h.b16 %v4425
    %v4821 = vunpack.c.l.b16 %v4426
    %v4822 = vunpack.c.h.b16 %v4426
    %v4823 = vunpack.c.l.b16 %v4427
    %v4824 = vunpack.c.h.b16 %v4427
    %v4825 = vunpack.c.l.b16 %v4428
    %v4826 = vunpack.c.h.b16 %v4428
    %v4827 = vunpack.c.l.b16 %v4429
    %v4828 = vunpack.c.h.b16 %v4429
    %v4829 = vunpack.c.l.b16 %v4430
    %v4830 = vunpack.c.h.b16 %v4430
    %v4831 = vunpack.c.l.b16 %v4431
    %v4832 = vunpack.c.h.b16 %v4431
    %v4833 = vunpack.c.l.b16 %v4432
    %v4834 = vunpack.c.h.b16 %v4432
    %v4835 = vunpack.c.l.b16 %v4433
    %v4836 = vunpack.c.h.b16 %v4433
    %v4837 = vunpack.c.l.b16 %v4434
    %v4838 = vunpack.c.h.b16 %v4434
    %v4839 = vunpack.c.l.b16 %v4435
    %v4840 = vunpack.c.h.b16 %v4435
    %v4841 = vunpack.c.l.b16 %v4436
    %v4842 = vunpack.c.h.b16 %v4436
    %v4843 = vunpack.c.l.b16 %v4437
    %v4844 = vunpack.c.h.b16 %v4437
    %v4845 = vunpack.c.l.b16 %v4438
    %v4846 = vunpack.c.h.b16 %v4438
    %v4847 = vunpack.c.l.b16 %v4439
    %v4848 = vunpack.c.h.b16 %v4439
    %v4849 = vunpack.c.l.b16 %v4440
    %v4850 = vunpack.c.h.b16 %v4440
    %v4851 = vunpack.c.l.b16 %v4441
    %v4852 = vunpack.c.h.b16 %v4441
    %v4853 = vunpack.c.l.b16 %v4442
    %v4854 = vunpack.c.h.b16 %v4442
    %v4855 = vunpack.c.l.b16 %v4443
    %v4856 = vunpack.c.h.b16 %v4443
    %v4857 = vunpack.c.l.b16 %v4444
    %v4858 = vunpack.c.h.b16 %v4444
    %v4859 = vunpack.c.l.b16 %v4445
    %v4860 = vunpack.c.h.b16 %v4445
    %v4861 = vunpack.c.l.b16 %v4446
    %v4862 = vunpack.c.h.b16 %v4446
    %v4863 = vunpack.c.l.b16 %v4447
    %v4864 = vunpack.c.h.b16 %v4447
    %v4865 = vunpack.c.l.b16 %v4448
    %v4866 = vunpack.c.h.b16 %v4448
    %v4867 = vunpack.c.l.b16 %v4449
    %v4868 = vunpack.c.h.b16 %v4449
    %v4869 = vunpack.c.l.b16 %v4450
    %v4870 = vunpack.c.h.b16 %v4450
    %v4871 = vunpack.c.l.b16 %v4451
    %v4872 = vunpack.c.h.b16 %v4451
    %v4873 = vunpack.c.l.b16 %v4452
    %v4874 = vunpack.c.h.b16 %v4452
    %v4875 = vunpack.c.l.b16 %v4453
    %v4876 = vunpack.c.h.b16 %v4453
    %v4877 = vunpack.c.l.b16 %v4454
    %v4878 = vunpack.c.h.b16 %v4454
    %v4879 = vunpack.c.l.b16 %v4455
    %v4880 = vunpack.c.h.b16 %v4455
    %v4881 = vunpack.c.l.b16 %v4456
    %v4882 = vunpack.c.h.b16 %v4456
    %v4883 = vunpack.c.l.b16 %v4457
    %v4884 = vunpack.c.h.b16 %v4457
    %v4885 = vunpack.c.l.b16 %v4458
    %v4886 = vunpack.c.h.b16 %v4458
    %v4887 = vunpack.c.l.b16 %v4459
    %v4888 = vunpack.c.h.b16 %v4459
    %v4889 = vunpack.c.l.b16 %v4460
    %v4890 = vunpack.c.h.b16 %v4460
    %v4891 = vunpack.c.l.b16 %v4461
    %v4892 = vunpack.c.h.b16 %v4461
    %v4893 = vunpack.c.l.b16 %v4462
    %v4894 = vunpack.c.h.b16 %v4462
    %v4895 = vunpack.c.l.b16 %v4463
    %v4896 = vunpack.c.h.b16 %v4463
    %v4897 = vunpack.c.l.b16 %v4464
    %v4898 = vunpack.c.h.b16 %v4464
    %v4899 = vunpack.c.l.b16 %v4465
    %v4900 = vunpack.c.h.b16 %v4465
    %v4901 = vunpack.c.l.b16 %v4466
    %v4902 = vunpack.c.h.b16 %v4466
    %v4903 = vunpack.c.l.b16 %v4467
    %v4904 = vunpack.c.h.b16 %v4467
    %v4905 = vunpack.c.l.b16 %v4468
    %v4906 = vunpack.c.h.b16 %v4468
    %v4907 = vunpack.c.l.b16 %v4469
    %v4908 = vunpack.c.h.b16 %v4469
    %v4909 = vunpack.c.l.b16 %v4470
    %v4910 = vunpack.c.h.b16 %v4470
    %v4911 = vunpack.c.l.b16 %v4471
    %v4912 = vunpack.c.h.b16 %v4471
    %v4913 = vunpack.c.l.b16 %v4472
    %v4914 = vunpack.c.h.b16 %v4472
    %v4915 = vunpack.c.l.b16 %v4473
    %v4916 = vunpack.c.h.b16 %v4473
    %v4917 = vunpack.c.l.b16 %v4474
    %v4918 = vunpack.c.h.b16 %v4474
    %v4919 = vunpack.c.l.b16 %v4475
    %v4920 = vunpack.c.h.b16 %v4475
    %v4921 = vunpack.c.l.b16 %v4476
    %v4922 = vunpack.c.h.b16 %v4476
    %v4923 = vunpack.c.l.b16 %v4477
    %v4924 = vunpack.c.h.b16 %v4477
    %v4925 = vunpack.c.l.b16 %v4478
    %v4926 = vunpack.c.h.b16 %v4478
    %v4927 = vunpack.c.l.b16 %v4479
    %v4928 = vunpack.c.h.b16 %v4479
    %v4929 = vunpack.c.l.b16 %v4480
    %v4930 = vunpack.c.h.b16 %v4480
    %v4931 = vunpack.c.l.b16 %v4481
    %v4932 = vunpack.c.h.b16 %v4481
    %v4933 = vunpack.c.l.b16 %v4482
    %v4934 = vunpack.c.h.b16 %v4482
    %v4935 = vunpack.c.l.b16 %v4483
    %v4936 = vunpack.c.h.b16 %v4483
    %v4937 = vunpack.c.l.b16 %v4484
    %v4938 = vunpack.c.h.b16 %v4484
    %v4939 = vunpack.c.l.b16 %v4485
    %v4940 = vunpack.c.h.b16 %v4485
    %v4941 = vunpack.c.l.b16 %v4486
    %v4942 = vunpack.c.h.b16 %v4486
    %v4943 = vunpack.c.l.b16 %v4487
    %v4944 = vunpack.c.h.b16 %v4487
    %v4945 = vunpack.c.l.b16 %v4488
    %v4946 = vunpack.c.h.b16 %v4488
    %v4947 = vunpack.c.l.b16 %v4489
    %v4948 = vunpack.c.h.b16 %v4489
    %v4949 = vunpack.c.l.b16 %v4490
    %v4950 = vunpack.c.h.b16 %v4490
    %v4951 = vunpack.c.l.b16 %v4491
    %v4952 = vunpack.c.h.b16 %v4491
    %v4953 = vunpack.c.l.b16 %v4492
    %v4954 = vunpack.c.h.b16 %v4492
    %v4955 = vunpack.c.l.b16 %v4493
    %v4956 = vunpack.c.h.b16 %v4493
    %v4957 = vunpack.c.l.b16 %v4494
    %v4958 = vunpack.c.h.b16 %v4494
    %v4959 = vunpack.c.l.b16 %v4495
    %v4960 = vunpack.c.h.b16 %v4495
    %v4961 = vunpack.c.l.b16 %v4496
    %v4962 = vunpack.c.h.b16 %v4496
    %v4963 = vunpack.c.l.b16 %v4497
    %v4964 = vunpack.c.h.b16 %v4497
    %v4965 = vunpack.c.l.b16 %v4498
    %v4966 = vunpack.c.h.b16 %v4498
    %v4967 = vunpack.c.l.b16 %v4499
    %v4968 = vunpack.c.h.b16 %v4499
    %v4969 = vunpack.c.l.b16 %v4500
    %v4970 = vunpack.c.h.b16 %v4500
    %v4971 = vunpack.c.l.b16 %v4501
    %v4972 = vunpack.c.h.b16 %v4501
    %v4973 = vunpack.c.l.b16 %v4502
    %v4974 = vunpack.c.h.b16 %v4502
    %v4975 = vunpack.c.l.b16 %v4503
    %v4976 = vunpack.c.h.b16 %v4503
    %v4977 = vunpack.c.l.b16 %v4504
    %v4978 = vunpack.c.h.b16 %v4504
    %v4979 = vunpack.c.l.b16 %v4505
    %v4980 = vunpack.c.h.b16 %v4505
    %v4981 = vunpack.c.l.b16 %v4506
    %v4982 = vunpack.c.h.b16 %v4506
    %v4983 = vunpack.c.l.b16 %v4507
    %v4984 = vunpack.c.h.b16 %v4507
    %v4985 = vunpack.c.l.b16 %v4508
    %v4986 = vunpack.c.h.b16 %v4508
    %v4987 = vunpack.c.l.b16 %v4509
    %v4988 = vunpack.c.h.b16 %v4509
    %v4989 = vunpack.c.l.b16 %v4510
    %v4990 = vunpack.c.h.b16 %v4510
    %v4991 = vunpack.c.l.b16 %v4511
    %v4992 = vunpack.c.h.b16 %v4511
    %v4993 = vunpack.c.l.b16 %v4512
    %v4994 = vunpack.c.h.b16 %v4512
    %v4995 = vunpack.c.l.b16 %v4513
    %v4996 = vunpack.c.h.b16 %v4513
    %v4997 = vunpack.c.l.b16 %v4514
    %v4998 = vunpack.c.h.b16 %v4514
    %v4999 = vunpack.c.l.b16 %v4515
    %v5000 = vunpack.c.h.b16 %v4515
    %v5001 = vunpack.c.l.b16 %v4516
    %v5002 = vunpack.c.h.b16 %v4516
    %v5003 = vunpack.c.l.b16 %v4517
    %v5004 = vunpack.c.h.b16 %v4517
    %v5005 = vunpack.c.l.b16 %v4518
    %v5006 = vunpack.c.h.b16 %v4518
    %v5007 = vunpack.c.l.b16 %v4519
    %v5008 = vunpack.c.h.b16 %v4519
    %v5009 = vunpack.c.l.b16 %v4520
    %v5010 = vunpack.c.h.b16 %v4520
    %v5011 = vunpack.c.l.b16 %v4521
    %v5012 = vunpack.c.h.b16 %v4521
    %v5013 = vunpack.c.l.b16 %v4522
    %v5014 = vunpack.c.h.b16 %v4522
    %v5015 = vunpack.c.l.b16 %v4523
    %v5016 = vunpack.c.h.b16 %v4523
    %v5017 = vunpack.c.l.b16 %v4524
    %v5018 = vunpack.c.h.b16 %v4524
    %v5019 = vunpack.c.l.b16 %v4525
    %v5020 = vunpack.c.h.b16 %v4525
    %v5021 = vunpack.c.l.b16 %v4526
    %v5022 = vunpack.c.h.b16 %v4526
    %v5023 = vunpack.c.l.b16 %v4527
    %v5024 = vunpack.c.h.b16 %v4527
    %v5025 = vunpack.c.l.b16 %v4528
    %v5026 = vunpack.c.h.b16 %v4528
    %v5027 = vunpack.c.l.b16 %v4529
    %v5028 = vunpack.c.h.b16 %v4529
    %v5029 = vunpack.c.l.b16 %v4530
    %v5030 = vunpack.c.h.b16 %v4530
    %v5031 = vunpack.c.l.b16 %v4531
    %v5032 = vunpack.c.h.b16 %v4531
    %v5033 = vunpack.c.l.b16 %v4532
    %v5034 = vunpack.c.h.b16 %v4532
    %v5035 = vunpack.c.l.b16 %v4533
    %v5036 = vunpack.c.h.b16 %v4533
    %v5037 = vunpack.c.l.b16 %v4534
    %v5038 = vunpack.c.h.b16 %v4534
    %v5039 = vunpack.c.l.b16 %v4535
    %v5040 = vunpack.c.h.b16 %v4535
    %v5041 = vunpack.c.l.b16 %v4536
    %v5042 = vunpack.c.h.b16 %v4536
    %v5043 = vunpack.c.l.b16 %v4537
    %v5044 = vunpack.c.h.b16 %v4537
    %v5045 = vunpack.c.l.b16 %v4538
    %v5046 = vunpack.c.h.b16 %v4538
    %v5047 = vunpack.c.l.b16 %v4539
    %v5048 = vunpack.c.h.b16 %v4539
    %v5049 = vunpack.c.l.b16 %v4540
    %v5050 = vunpack.c.h.b16 %v4540
    %v5051 = vunpack.c.l.b16 %v4541
    %v5052 = vunpack.c.h.b16 %v4541
    %v5053 = vunpack.c.l.b16 %v4542
    %v5054 = vunpack.c.h.b16 %v4542
    %v5055 = vunpack.c.l.b16 %v4543
    %v5056 = vunpack.c.h.b16 %v4543
    %v5057 = vunpack.c.l.b16 %v4544
    %v5058 = vunpack.c.h.b16 %v4544
    %v5059 = vunpack.c.l.b16 %v4545
    %v5060 = vunpack.c.h.b16 %v4545
    %v5061 = vunpack.c.l.b16 %v4546
    %v5062 = vunpack.c.h.b16 %v4546
    %v5063 = vunpack.c.l.b16 %v4547
    %v5064 = vunpack.c.h.b16 %v4547
    %v5065 = vunpack.c.l.b16 %v4548
    %v5066 = vunpack.c.h.b16 %v4548
    %v5067 = vunpack.c.l.b16 %v4549
    %v5068 = vunpack.c.h.b16 %v4549
    %v5069 = vunpack.c.l.b16 %v4550
    %v5070 = vunpack.c.h.b16 %v4550
    %v5071 = vunpack.c.l.b16 %v4551
    %v5072 = vunpack.c.h.b16 %v4551
    %v5073 = vunpack.c.l.b16 %v4552
    %v5074 = vunpack.c.h.b16 %v4552
    %v5075 = vunpack.c.l.b16 %v4553
    %v5076 = vunpack.c.h.b16 %v4553
    %v5077 = vunpack.c.l.b16 %v4554
    %v5078 = vunpack.c.h.b16 %v4554
    %v5079 = vunpack.c.l.b16 %v4555
    %v5080 = vunpack.c.h.b16 %v4555
    %v5081 = vunpack.c.l.b16 %v4556
    %v5082 = vunpack.c.h.b16 %v4556
    %v5083 = vunpack.c.l.b16 %v4557
    %v5084 = vunpack.c.h.b16 %v4557
    %v5085 = vunpack.c.l.b16 %v4558
    %v5086 = vunpack.c.h.b16 %v4558
    %v5087 = vunpack.c.l.b16 %v4559
    %v5088 = vunpack.c.h.b16 %v4559
    %v5089 = vunpack.c.l.b16 %v4560
    %v5090 = vunpack.c.h.b16 %v4560
    %v5091 = vunpack.c.l.b16 %v4561
    %v5092 = vunpack.c.h.b16 %v4561
    %v5093 = vunpack.c.l.b16 %v4562
    %v5094 = vunpack.c.h.b16 %v4562
    %v5095 = vunpack.c.l.b16 %v4563
    %v5096 = vunpack.c.h.b16 %v4563
    %v5097 = vunpack.c.l.b16 %v4564
    %v5098 = vunpack.c.h.b16 %v4564
    %v5099 = vunpack.c.l.b16 %v4565
    %v5100 = vunpack.c.h.b16 %v4565
    %v5101 = vunpack.c.l.b16 %v4566
    %v5102 = vunpack.c.h.b16 %v4566
    %v5103 = vunpack.c.l.b16 %v4567
    %v5104 = vunpack.c.h.b16 %v4567
    %v5105 = vunpack.c.l.b16 %v4568
    %v5106 = vunpack.c.h.b16 %v4568
    %v5107 = vunpack.c.l.b16 %v4569
    %v5108 = vunpack.c.h.b16 %v4569
    %v5109 = vunpack.c.l.b16 %v4570
    %v5110 = vunpack.c.h.b16 %v4570
    %v5111 = vunpack.c.l.b16 %v4571
    %v5112 = vunpack.c.h.b16 %v4571
    %v5113 = vunpack.c.l.b16 %v4572
    %v5114 = vunpack.c.h.b16 %v4572
    %v5115 = vunpack.c.l.b16 %v4573
    %v5116 = vunpack.c.h.b16 %v4573
    %v5117 = vunpack.c.l.b16 %v4574
    %v5118 = vunpack.c.h.b16 %v4574
    %v5119 = vunpack.c.l.b16 %v4575
    %v5120 = vunpack.c.h.b16 %v4575
    %v5121 = vunpack.c.l.b16 %v4576
    %v5122 = vunpack.c.h.b16 %v4576
    %v5123 = vunpack.c.l.b16 %v4577
    %v5124 = vunpack.c.h.b16 %v4577
    %v5125 = vunpack.c.l.b16 %v4578
    %v5126 = vunpack.c.h.b16 %v4578
    %v5127 = vunpack.c.l.b16 %v4579
    %v5128 = vunpack.c.h.b16 %v4579
    %v5129 = vunpack.c.l.b16 %v4580
    %v5130 = vunpack.c.h.b16 %v4580
    %v5131 = vunpack.c.l.b16 %v4581
    %v5132 = vunpack.c.h.b16 %v4581
    %v5133 = vunpack.c.l.b16 %v4582
    %v5134 = vunpack.c.h.b16 %v4582
    %v5135 = vunpack.c.l.b16 %v4583
    %v5136 = vunpack.c.h.b16 %v4583
    %v5137 = vunpack.c.l.b16 %v4584
    %v5138 = vunpack.c.h.b16 %v4584
    %v5139 = vunpack.c.l.b16 %v4585
    %v5140 = vunpack.c.h.b16 %v4585
    %v5141 = vunpack.c.l.b16 %v4586
    %v5142 = vunpack.c.h.b16 %v4586
    %v5143 = vunpack.c.l.b16 %v4587
    %v5144 = vunpack.c.h.b16 %v4587
    %v5145 = vunpack.c.l.b16 %v4588
    %v5146 = vunpack.c.h.b16 %v4588
    %v5147 = vunpack.c.l.b16 %v4589
    %v5148 = vunpack.c.h.b16 %v4589
    %v5149 = vunpack.c.l.b16 %v4590
    %v5150 = vunpack.c.h.b16 %v4590
    %v5151 = vunpack.c.l.b16 %v4591
    %v5152 = vunpack.c.h.b16 %v4591
    %v5153 = vunpack.c.l.b16 %v4592
    %v5154 = vunpack.c.h.b16 %v4592
    %v5155 = vunpack.c.l.b16 %v4593
    %v5156 = vunpack.c.h.b16 %v4593
    %v5157 = vunpack.c.l.b16 %v4594
    %v5158 = vunpack.c.h.b16 %v4594
    %v5159 = vunpack.c.l.b16 %v4595
    %v5160 = vunpack.c.h.b16 %v4595
    %v5161 = vunpack.c.l.b16 %v4596
    %v5162 = vunpack.c.h.b16 %v4596
    %v5163 = vunpack.c.l.b16 %v4597
    %v5164 = vunpack.c.h.b16 %v4597
    %v5165 = vunpack.c.l.b16 %v4598
    %v5166 = vunpack.c.h.b16 %v4598
    %v5167 = vunpack.c.l.b16 %v4599
    %v5168 = vunpack.c.h.b16 %v4599
    %v5169 = vunpack.c.l.b16 %v4600
    %v5170 = vunpack.c.h.b16 %v4600
    %v5171 = vunpack.c.l.b16 %v4601
    %v5172 = vunpack.c.h.b16 %v4601
    %v5173 = vunpack.c.l.b16 %v4602
    %v5174 = vunpack.c.h.b16 %v4602
    %v5175 = vunpack.c.l.b16 %v4603
    %v5176 = vunpack.c.h.b16 %v4603
    %v5177 = vunpack.c.l.b16 %v4604
    %v5178 = vunpack.c.h.b16 %v4604
    %v5179 = vunpack.c.l.b16 %v4605
    %v5180 = vunpack.c.h.b16 %v4605
    %v5181 = vunpack.c.l.b16 %v4606
    %v5182 = vunpack.c.h.b16 %v4606
    %v5183 = vpack.c.b16 %v4803, %v4799
    %v5184 = vpack.c.b16 %v4804, %v4800
    %v5185 = vpack.c.b16 %v4805, %v4801
    %v5186 = vpack.c.b16 %v4806, %v4802
    %v5187 = vpack.c.b16 %v4811, %v4807
    %v5188 = vpack.c.b16 %v4812, %v4808
    %v5189 = vpack.c.b16 %v4813, %v4809
    %v5190 = vpack.c.b16 %v4814, %v4810
    %v5191 = vpack.c.b16 %v4819, %v4815
    %v5192 = vpack.c.b16 %v4820, %v4816
    %v5193 = vpack.c.b16 %v4821, %v4817
    %v5194 = vpack.c.b16 %v4822, %v4818
    %v5195 = vpack.c.b16 %v4827, %v4823
    %v5196 = vpack.c.b16 %v4828, %v4824
    %v5197 = vpack.c.b16 %v4829, %v4825
    %v5198 = vpack.c.b16 %v4830, %v4826
    %v5199 = vpack.c.b16 %v4835, %v4831
    %v5200 = vpack.c.b16 %v4836, %v4832
    %v5201 = vpack.c.b16 %v4837, %v4833
    %v5202 = vpack.c.b16 %v4838, %v4834
    %v5203 = vpack.c.b16 %v4843, %v4839
    %v5204 = vpack.c.b16 %v4844, %v4840
    %v5205 = vpack.c.b16 %v4845, %v4841
    %v5206 = vpack.c.b16 %v4846, %v4842
    %v5207 = vpack.c.b16 %v4851, %v4847
    %v5208 = vpack.c.b16 %v4852, %v4848
    %v5209 = vpack.c.b16 %v4853, %v4849
    %v5210 = vpack.c.b16 %v4854, %v4850
    %v5211 = vpack.c.b16 %v4859, %v4855
    %v5212 = vpack.c.b16 %v4860, %v4856
    %v5213 = vpack.c.b16 %v4861, %v4857
    %v5214 = vpack.c.b16 %v4862, %v4858
    %v5215 = vpack.c.b16 %v4867, %v4863
    %v5216 = vpack.c.b16 %v4868, %v4864
    %v5217 = vpack.c.b16 %v4869, %v4865
    %v5218 = vpack.c.b16 %v4870, %v4866
    %v5219 = vpack.c.b16 %v4875, %v4871
    %v5220 = vpack.c.b16 %v4876, %v4872
    %v5221 = vpack.c.b16 %v4877, %v4873
    %v5222 = vpack.c.b16 %v4878, %v4874
    %v5223 = vpack.c.b16 %v4883, %v4879
    %v5224 = vpack.c.b16 %v4884, %v4880
    %v5225 = vpack.c.b16 %v4885, %v4881
    %v5226 = vpack.c.b16 %v4886, %v4882
    %v5227 = vpack.c.b16 %v4891, %v4887
    %v5228 = vpack.c.b16 %v4892, %v4888
    %v5229 = vpack.c.b16 %v4893, %v4889
    %v5230 = vpack.c.b16 %v4894, %v4890
    %v5231 = vpack.c.b16 %v4899, %v4895
    %v5232 = vpack.c.b16 %v4900, %v4896
    %v5233 = vpack.c.b16 %v4901, %v4897
    %v5234 = vpack.c.b16 %v4902, %v4898
    %v5235 = vpack.c.b16 %v4907, %v4903
    %v5236 = vpack.c.b16 %v4908, %v4904
    %v5237 = vpack.c.b16 %v4909, %v4905
    %v5238 = vpack.c.b16 %v4910, %v4906
    %v5239 = vpack.c.b16 %v4915, %v4911
    %v5240 = vpack.c.b16 %v4916, %v4912
    %v5241 = vpack.c.b16 %v4917, %v4913
    %v5242 = vpack.c.b16 %v4918, %v4914
    %v5243 = vpack.c.b16 %v4923, %v4919
    %v5244 = vpack.c.b16 %v4924, %v4920
    %v5245 = vpack.c.b16 %v4925, %v4921
    %v5246 = vpack.c.b16 %v4926, %v4922
    %v5247 = vpack.c.b16 %v4931, %v4927
    %v5248 = vpack.c.b16 %v4932, %v4928
    %v5249 = vpack.c.b16 %v4933, %v4929
    %v5250 = vpack.c.b16 %v4934, %v4930
    %v5251 = vpack.c.b16 %v4939, %v4935
    %v5252 = vpack.c.b16 %v4940, %v4936
    %v5253 = vpack.c.b16 %v4941, %v4937
    %v5254 = vpack.c.b16 %v4942, %v4938
    %v5255 = vpack.c.b16 %v4947, %v4943
    %v5256 = vpack.c.b16 %v4948, %v4944
    %v5257 = vpack.c.b16 %v4949, %v4945
    %v5258 = vpack.c.b16 %v4950, %v4946
    %v5259 = vpack.c.b16 %v4955, %v4951
    %v5260 = vpack.c.b16 %v4956, %v4952
    %v5261 = vpack.c.b16 %v4957, %v4953
    %v5262 = vpack.c.b16 %v4958, %v4954
    %v5263 = vpack.c.b16 %v4963, %v4959
    %v5264 = vpack.c.b16 %v4964, %v4960
    %v5265 = vpack.c.b16 %v4965, %v4961
    %v5266 = vpack.c.b16 %v4966, %v4962
    %v5267 = vpack.c.b16 %v4971, %v4967
    %v5268 = vpack.c.b16 %v4972, %v4968
    %v5269 = vpack.c.b16 %v4973, %v4969
    %v5270 = vpack.c.b16 %v4974, %v4970
    %v5271 = vpack.c.b16 %v4979, %v4975
    %v5272 = vpack.c.b16 %v4980, %v4976
    %v5273 = vpack.c.b16 %v4981, %v4977
    %v5274 = vpack.c.b16 %v4982, %v4978
    %v5275 = vpack.c.b16 %v4987, %v4983
    %v5276 = vpack.c.b16 %v4988, %v4984
    %v5277 = vpack.c.b16 %v4989, %v4985
    %v5278 = vpack.c.b16 %v4990, %v4986
    %v5279 = vpack.c.b16 %v4995, %v4991
    %v5280 = vpack.c.b16 %v4996, %v4992
    %v5281 = vpack.c.b16 %v4997, %v4993
    %v5282 = vpack.c.b16 %v4998, %v4994
    %v5283 = vpack.c.b16 %v5003, %v4999
    %v5284 = vpack.c.b16 %v5004, %v5000
    %v5285 = vpack.c.b16 %v5005, %v5001
    %v5286 = vpack.c.b16 %v5006, %v5002
    %v5287 = vpack.c.b16 %v5011, %v5007
    %v5288 = vpack.c.b16 %v5012, %v5008
    %v5289 = vpack.c.b16 %v5013, %v5009
    %v5290 = vpack.c.b16 %v5014, %v5010
    %v5291 = vpack.c.b16 %v5019, %v5015
    %v5292 = vpack.c.b16 %v5020, %v5016
    %v5293 = vpack.c.b16 %v5021, %v5017
    %v5294 = vpack.c.b16 %v5022, %v5018
    %v5295 = vpack.c.b16 %v5027, %v5023
    %v5296 = vpack.c.b16 %v5028, %v5024
    %v5297 = vpack.c.b16 %v5029, %v5025
    %v5298 = vpack.c.b16 %v5030, %v5026
    %v5299 = vpack.c.b16 %v5035, %v5031
    %v5300 = vpack.c.b16 %v5036, %v5032
    %v5301 = vpack.c.b16 %v5037, %v5033
    %v5302 = vpack.c.b16 %v5038, %v5034
    %v5303 = vpack.c.b16 %v5043, %v5039
    %v5304 = vpack.c.b16 %v5044, %v5040
    %v5305 = vpack.c.b16 %v5045, %v5041
    %v5306 = vpack.c.b16 %v5046, %v5042
    %v5307 = vpack.c.b16 %v5051, %v5047
    %v5308 = vpack.c.b16 %v5052, %v5048
    %v5309 = vpack.c.b16 %v5053, %v5049
    %v5310 = vpack.c.b16 %v5054, %v5050
    %v5311 = vpack.c.b16 %v5059, %v5055
    %v5312 = vpack.c.b16 %v5060, %v5056
    %v5313 = vpack.c.b16 %v5061, %v5057
    %v5314 = vpack.c.b16 %v5062, %v5058
    %v5315 = vpack.c.b16 %v5067, %v5063
    %v5316 = vpack.c.b16 %v5068, %v5064
    %v5317 = vpack.c.b16 %v5069, %v5065
    %v5318 = vpack.c.b16 %v5070, %v5066
    %v5319 = vpack.c.b16 %v5075, %v5071
    %v5320 = vpack.c.b16 %v5076, %v5072
    %v5321 = vpack.c.b16 %v5077, %v5073
    %v5322 = vpack.c.b16 %v5078, %v5074
    %v5323 = vpack.c.b16 %v5083, %v5079
    %v5324 = vpack.c.b16 %v5084, %v5080
    %v5325 = vpack.c.b16 %v5085, %v5081
    %v5326 = vpack.c.b16 %v5086, %v5082
    %v5327 = vpack.c.b16 %v5091, %v5087
    %v5328 = vpack.c.b16 %v5092, %v5088
    %v5329 = vpack.c.b16 %v5093, %v5089
    %v5330 = vpack.c.b16 %v5094, %v5090
    %v5331 = vpack.c.b16 %v5099, %v5095
    %v5332 = vpack.c.b16 %v5100, %v5096
    %v5333 = vpack.c.b16 %v5101, %v5097
    %v5334 = vpack.c.b16 %v5102, %v5098
    %v5335 = vpack.c.b16 %v5107, %v5103
    %v5336 = vpack.c.b16 %v5108, %v5104
    %v5337 = vpack.c.b16 %v5109, %v5105
    %v5338 = vpack.c.b16 %v5110, %v5106
    %v5339 = vpack.c.b16 %v5115, %v5111
    %v5340 = vpack.c.b16 %v5116, %v5112
    %v5341 = vpack.c.b16 %v5117, %v5113
    %v5342 = vpack.c.b16 %v5118, %v5114
    %v5343 = vpack.c.b16 %v5123, %v5119
    %v5344 = vpack.c.b16 %v5124, %v5120
    %v5345 = vpack.c.b16 %v5125, %v5121
    %v5346 = vpack.c.b16 %v5126, %v5122
    %v5347 = vpack.c.b16 %v5131, %v5127
    %v5348 = vpack.c.b16 %v5132, %v5128
    %v5349 = vpack.c.b16 %v5133, %v5129
    %v5350 = vpack.c.b16 %v5134, %v5130
    %v5351 = vpack.c.b16 %v5139, %v5135
    %v5352 = vpack.c.b16 %v5140, %v5136
    %v5353 = vpack.c.b16 %v5141, %v5137
    %v5354 = vpack.c.b16 %v5142, %v5138
    %v5355 = vpack.c.b16 %v5147, %v5143
    %v5356 = vpack.c.b16 %v5148, %v5144
    %v5357 = vpack.c.b16 %v5149, %v5145
    %v5358 = vpack.c.b16 %v5150, %v5146
    %v5359 = vpack.c.b16 %v5155, %v5151
    %v5360 = vpack.c.b16 %v5156, %v5152
    %v5361 = vpack.c.b16 %v5157, %v5153
    %v5362 = vpack.c.b16 %v5158, %v5154
    %v5363 = vpack.c.b16 %v5163, %v5159
    %v5364 = vpack.c.b16 %v5164, %v5160
    %v5365 = vpack.c.b16 %v5165, %v5161
    %v5366 = vpack.c.b16 %v5166, %v5162
    %v5367 = vpack.c.b16 %v5171, %v5167
    %v5368 = vpack.c.b16 %v5172, %v5168
    %v5369 = vpack.c.b16 %v5173, %v5169
    %v5370 = vpack.c.b16 %v5174, %v5170
    %v5371 = vpack.c.b16 %v5179, %v5175
    %v5372 = vpack.c.b16 %v5180, %v5176
    %v5373 = vpack.c.b16 %v5181, %v5177
    %v5374 = vpack.c.b16 %v5182, %v5178
    %5567 = vmatprep.subr.bf16.mxu0 %v5212
    %5568 = vmatpush1.bf16.msra.mxu0 %v5211
    %5569 = vmatprep.subr.bf16.mxu0 %v5208
    %5570 = vmatpush1.bf16.msra.mxu0 %v5207
    %5571 = vmatprep.subr.bf16.mxu0 %v5204
    %5572 = vmatpush1.bf16.msra.mxu0 %v5203
    %5573 = vmatprep.subr.bf16.mxu0 %v5200
    %5574 = vmatpush1.bf16.msra.mxu0 %v5199
    %5575 = vmatprep.subr.bf16.mxu0 %v5196
    %5576 = vmatpush1.bf16.msra.mxu0 %v5195
    %5577 = vmatprep.subr.bf16.mxu0 %v5192
    %5578 = vmatpush1.bf16.msra.mxu0 %v5191
    %5579 = vmatprep.subr.bf16.mxu0 %v5188
    %5580 = vmatpush1.bf16.msra.mxu0 %v5187
    %5581 = vmatprep.subr.bf16.mxu0 %v5184
    %5582 = vmatpush1.bf16.msra.mxu0 %v5183
    %5583 = vmatprep.subr.bf16.mxu0 %v5244
    %5584 = vmatpush2.bf16.msra.mxu0 %v5243
    %5585 = vmatprep.subr.bf16.mxu0 %v5240
    %5586 = vmatpush2.bf16.msra.mxu0 %v5239
    %5587 = vmatprep.subr.bf16.mxu0 %v5236
    %5588 = vmatpush2.bf16.msra.mxu0 %v5235
    %5589 = vmatprep.subr.bf16.mxu0 %v5232
    %5590 = vmatpush2.bf16.msra.mxu0 %v5231
    %5591 = vmatprep.subr.bf16.mxu0 %v5228
    %5592 = vmatpush2.bf16.msra.mxu0 %v5227
    %5593 = vmatprep.subr.bf16.mxu0 %v5224
    %5594 = vmatpush2.bf16.msra.mxu0 %v5223
    %5595 = vmatprep.subr.bf16.mxu0 %v5220
    %5596 = vmatpush2.bf16.msra.mxu0 %v5219
    %5597 = vmatprep.subr.bf16.mxu0 %v5216
    %5598 = vmatpush2.bf16.msra.mxu0 %v5215
    %5599 = vmatprep.mubr.bf16.mxu0 %v3684
    %5600 = vmatmul.mubr.bf16.gmra.mxu0 %v3683
    %v5601 = vpop.f32.mrf.mxu0
    %v5602 = vadd.f32 0.0, %v5601
    %v5603 = vpop.f32.mrf.mxu0
    %v5604 = vadd.f32 0.0, %v5603
    %v5605 = vpop.f32.mrf.mxu0
    %v5606 = vadd.f32 0.0, %v5605
    %v5607 = vpop.f32.mrf.mxu0
    %v5608 = vadd.f32 0.0, %v5607
    %5609 = vmatprep.mubr.bf16.mxu0 %v3687
    %5610 = vmatmul.mubr.bf16.gmra.mxu0 %v3686
    %v5611 = vpop.f32.mrf.mxu0
    %v5612 = vadd.f32 0.0, %v5611
    %v5613 = vpop.f32.mrf.mxu0
    %v5614 = vadd.f32 0.0, %v5613
    %v5615 = vpop.f32.mrf.mxu0
    %v5616 = vadd.f32 0.0, %v5615
    %v5617 = vpop.f32.mrf.mxu0
    %v5618 = vadd.f32 0.0, %v5617
    %5619 = vmatprep.mubr.bf16.mxu0 %v3690
    %5620 = vmatmul.mubr.bf16.gmra.mxu0 %v3689
    %v5621 = vpop.f32.mrf.mxu0
    %v5622 = vadd.f32 0.0, %v5621
    %v5623 = vpop.f32.mrf.mxu0
    %v5624 = vadd.f32 0.0, %v5623
    %v5625 = vpop.f32.mrf.mxu0
    %v5626 = vadd.f32 0.0, %v5625
    %v5627 = vpop.f32.mrf.mxu0
    %v5628 = vadd.f32 0.0, %v5627
    %5629 = vmatprep.mubr.bf16.mxu0 %v3693
    %5630 = vmatmul.mubr.bf16.gmra.mxu0 %v3692
    %v5631 = vpop.f32.mrf.mxu0
    %v5632 = vadd.f32 0.0, %v5631
    %v5633 = vpop.f32.mrf.mxu0
    %v5634 = vadd.f32 0.0, %v5633
    %v5635 = vpop.f32.mrf.mxu0
    %v5636 = vadd.f32 0.0, %v5635
    %v5637 = vpop.f32.mrf.mxu0
    %v5638 = vadd.f32 0.0, %v5637
    %5639 = vmatprep.mubr.bf16.mxu0 %v3696
    %5640 = vmatmul.mubr.bf16.gmra.mxu0 %v3695
    %v5641 = vpop.f32.mrf.mxu0
    %v5642 = vadd.f32 0.0, %v5641
    %v5643 = vpop.f32.mrf.mxu0
    %v5644 = vadd.f32 0.0, %v5643
    %v5645 = vpop.f32.mrf.mxu0
    %v5646 = vadd.f32 0.0, %v5645
    %v5647 = vpop.f32.mrf.mxu0
    %v5648 = vadd.f32 0.0, %v5647
    %5649 = vmatprep.mubr.bf16.mxu0 %v3699
    %5650 = vmatmul.mubr.bf16.gmra.mxu0 %v3698
    %v5651 = vpop.f32.mrf.mxu0
    %v5652 = vadd.f32 0.0, %v5651
    %v5653 = vpop.f32.mrf.mxu0
    %v5654 = vadd.f32 0.0, %v5653
    %v5655 = vpop.f32.mrf.mxu0
    %v5656 = vadd.f32 0.0, %v5655
    %v5657 = vpop.f32.mrf.mxu0
    %v5658 = vadd.f32 0.0, %v5657
    %5659 = vmatprep.mubr.bf16.mxu0 %v3702
    %5660 = vmatmul.mubr.bf16.gmra.mxu0 %v3701
    %v5661 = vpop.f32.mrf.mxu0
    %v5662 = vadd.f32 0.0, %v5661
    %v5663 = vpop.f32.mrf.mxu0
    %v5664 = vadd.f32 0.0, %v5663
    %v5665 = vpop.f32.mrf.mxu0
    %v5666 = vadd.f32 0.0, %v5665
    %v5667 = vpop.f32.mrf.mxu0
    %v5668 = vadd.f32 0.0, %v5667
    %5669 = vmatprep.mubr.bf16.mxu0 %v3705
    %5670 = vmatmul.mubr.bf16.gmra.mxu0 %v3704
    %v5671 = vpop.f32.mrf.mxu0
    %v5672 = vadd.f32 0.0, %v5671
    %v5673 = vpop.f32.mrf.mxu0
    %v5674 = vadd.f32 0.0, %v5673
    %v5675 = vpop.f32.mrf.mxu0
    %v5676 = vadd.f32 0.0, %v5675
    %v5677 = vpop.f32.mrf.mxu0
    %v5678 = vadd.f32 0.0, %v5677
    %5679 = vmatprep.mubr.bf16.mxu0 %v3708
    %5680 = vmatmul.mubr.bf16.gmra.mxu0 %v3707
    %v5681 = vpop.f32.mrf.mxu0
    %v5682 = vadd.f32 0.0, %v5681
    %v5683 = vpop.f32.mrf.mxu0
    %v5684 = vadd.f32 0.0, %v5683
    %v5685 = vpop.f32.mrf.mxu0
    %v5686 = vadd.f32 0.0, %v5685
    %v5687 = vpop.f32.mrf.mxu0
    %v5688 = vadd.f32 0.0, %v5687
    %5689 = vmatprep.mubr.bf16.mxu0 %v3711
    %5690 = vmatmul.mubr.bf16.gmra.mxu0 %v3710
    %v5691 = vpop.f32.mrf.mxu0
    %v5692 = vadd.f32 0.0, %v5691
    %v5693 = vpop.f32.mrf.mxu0
    %v5694 = vadd.f32 0.0, %v5693
    %v5695 = vpop.f32.mrf.mxu0
    %v5696 = vadd.f32 0.0, %v5695
    %v5697 = vpop.f32.mrf.mxu0
    %v5698 = vadd.f32 0.0, %v5697
    %5699 = vmatprep.mubr.bf16.mxu0 %v3714
    %5700 = vmatmul.mubr.bf16.gmra.mxu0 %v3713
    %v5701 = vpop.f32.mrf.mxu0
    %v5702 = vadd.f32 0.0, %v5701
    %v5703 = vpop.f32.mrf.mxu0
    %v5704 = vadd.f32 0.0, %v5703
    %v5705 = vpop.f32.mrf.mxu0
    %v5706 = vadd.f32 0.0, %v5705
    %v5707 = vpop.f32.mrf.mxu0
    %v5708 = vadd.f32 0.0, %v5707
    %5709 = vmatprep.mubr.bf16.mxu0 %v3717
    %5710 = vmatmul.mubr.bf16.gmra.mxu0 %v3716
    %v5711 = vpop.f32.mrf.mxu0
    %v5712 = vadd.f32 0.0, %v5711
    %v5713 = vpop.f32.mrf.mxu0
    %v5714 = vadd.f32 0.0, %v5713
    %v5715 = vpop.f32.mrf.mxu0
    %v5716 = vadd.f32 0.0, %v5715
    %v5717 = vpop.f32.mrf.mxu0
    %v5718 = vadd.f32 0.0, %v5717
    %5719 = vmatprep.mubr.bf16.mxu0 %v3720
    %5720 = vmatmul.mubr.bf16.gmra.mxu0 %v3719
    %v5721 = vpop.f32.mrf.mxu0
    %v5722 = vadd.f32 0.0, %v5721
    %v5723 = vpop.f32.mrf.mxu0
    %v5724 = vadd.f32 0.0, %v5723
    %v5725 = vpop.f32.mrf.mxu0
    %v5726 = vadd.f32 0.0, %v5725
    %v5727 = vpop.f32.mrf.mxu0
    %v5728 = vadd.f32 0.0, %v5727
    %5729 = vmatprep.mubr.bf16.mxu0 %v3723
    %5730 = vmatmul.mubr.bf16.gmra.mxu0 %v3722
    %v5731 = vpop.f32.mrf.mxu0
    %v5732 = vadd.f32 0.0, %v5731
    %v5733 = vpop.f32.mrf.mxu0
    %v5734 = vadd.f32 0.0, %v5733
    %v5735 = vpop.f32.mrf.mxu0
    %v5736 = vadd.f32 0.0, %v5735
    %v5737 = vpop.f32.mrf.mxu0
    %v5738 = vadd.f32 0.0, %v5737
    %5739 = vmatprep.mubr.bf16.mxu0 %v3726
    %5740 = vmatmul.mubr.bf16.gmra.mxu0 %v3725
    %v5741 = vpop.f32.mrf.mxu0
    %v5742 = vadd.f32 0.0, %v5741
    %v5743 = vpop.f32.mrf.mxu0
    %v5744 = vadd.f32 0.0, %v5743
    %v5745 = vpop.f32.mrf.mxu0
    %v5746 = vadd.f32 0.0, %v5745
    %v5747 = vpop.f32.mrf.mxu0
    %v5748 = vadd.f32 0.0, %v5747
    %5749 = vmatprep.mubr.bf16.mxu0 %v3729
    %5750 = vmatmul.mubr.bf16.gmra.mxu0 %v3728
    %v5751 = vpop.f32.mrf.mxu0
    %v5752 = vadd.f32 0.0, %v5751
    %v5753 = vpop.f32.mrf.mxu0
    %v5754 = vadd.f32 0.0, %v5753
    %v5755 = vpop.f32.mrf.mxu0
    %v5756 = vadd.f32 0.0, %v5755
    %v5757 = vpop.f32.mrf.mxu0
    %v5758 = vadd.f32 0.0, %v5757
    %5759 = vmatprep.mubr.bf16.mxu0 %v3732
    %5760 = vmatmul.mubr.bf16.gmra.mxu0 %v3731
    %v5761 = vpop.f32.mrf.mxu0
    %v5762 = vadd.f32 0.0, %v5761
    %v5763 = vpop.f32.mrf.mxu0
    %v5764 = vadd.f32 0.0, %v5763
    %v5765 = vpop.f32.mrf.mxu0
    %v5766 = vadd.f32 0.0, %v5765
    %v5767 = vpop.f32.mrf.mxu0
    %v5768 = vadd.f32 0.0, %v5767
    %5769 = vmatprep.mubr.bf16.mxu0 %v3735
    %5770 = vmatmul.mubr.bf16.gmra.mxu0 %v3734
    %v5771 = vpop.f32.mrf.mxu0
    %v5772 = vadd.f32 0.0, %v5771
    %v5773 = vpop.f32.mrf.mxu0
    %v5774 = vadd.f32 0.0, %v5773
    %v5775 = vpop.f32.mrf.mxu0
    %v5776 = vadd.f32 0.0, %v5775
    %v5777 = vpop.f32.mrf.mxu0
    %v5778 = vadd.f32 0.0, %v5777
    %5779 = vmatprep.mubr.bf16.mxu0 %v3738
    %5780 = vmatmul.mubr.bf16.gmra.mxu0 %v3737
    %v5781 = vpop.f32.mrf.mxu0
    %v5782 = vadd.f32 0.0, %v5781
    %v5783 = vpop.f32.mrf.mxu0
    %v5784 = vadd.f32 0.0, %v5783
    %v5785 = vpop.f32.mrf.mxu0
    %v5786 = vadd.f32 0.0, %v5785
    %v5787 = vpop.f32.mrf.mxu0
    %v5788 = vadd.f32 0.0, %v5787
    %5789 = vmatprep.mubr.bf16.mxu0 %v3741
    %5790 = vmatmul.mubr.bf16.gmra.mxu0 %v3740
    %v5791 = vpop.f32.mrf.mxu0
    %v5792 = vadd.f32 0.0, %v5791
    %v5793 = vpop.f32.mrf.mxu0
    %v5794 = vadd.f32 0.0, %v5793
    %v5795 = vpop.f32.mrf.mxu0
    %v5796 = vadd.f32 0.0, %v5795
    %v5797 = vpop.f32.mrf.mxu0
    %v5798 = vadd.f32 0.0, %v5797
    %5799 = vmatprep.mubr.bf16.mxu0 %v3744
    %5800 = vmatmul.mubr.bf16.gmra.mxu0 %v3743
    %v5801 = vpop.f32.mrf.mxu0
    %v5802 = vadd.f32 0.0, %v5801
    %v5803 = vpop.f32.mrf.mxu0
    %v5804 = vadd.f32 0.0, %v5803
    %v5805 = vpop.f32.mrf.mxu0
    %v5806 = vadd.f32 0.0, %v5805
    %v5807 = vpop.f32.mrf.mxu0
    %v5808 = vadd.f32 0.0, %v5807
    %5809 = vmatprep.mubr.bf16.mxu0 %v3747
    %5810 = vmatmul.mubr.bf16.gmra.mxu0 %v3746
    %v5811 = vpop.f32.mrf.mxu0
    %v5812 = vadd.f32 0.0, %v5811
    %v5813 = vpop.f32.mrf.mxu0
    %v5814 = vadd.f32 0.0, %v5813
    %v5815 = vpop.f32.mrf.mxu0
    %v5816 = vadd.f32 0.0, %v5815
    %v5817 = vpop.f32.mrf.mxu0
    %v5818 = vadd.f32 0.0, %v5817
    %5819 = vmatprep.mubr.bf16.mxu0 %v3750
    %5820 = vmatmul.mubr.bf16.gmra.mxu0 %v3749
    %v5821 = vpop.f32.mrf.mxu0
    %v5822 = vadd.f32 0.0, %v5821
    %v5823 = vpop.f32.mrf.mxu0
    %v5824 = vadd.f32 0.0, %v5823
    %v5825 = vpop.f32.mrf.mxu0
    %v5826 = vadd.f32 0.0, %v5825
    %v5827 = vpop.f32.mrf.mxu0
    %v5828 = vadd.f32 0.0, %v5827
    %5829 = vmatprep.mubr.bf16.mxu0 %v3753
    %5830 = vmatmul.mubr.bf16.gmra.mxu0 %v3752
    %v5831 = vpop.f32.mrf.mxu0
    %v5832 = vadd.f32 0.0, %v5831
    %v5833 = vpop.f32.mrf.mxu0
    %v5834 = vadd.f32 0.0, %v5833
    %v5835 = vpop.f32.mrf.mxu0
    %v5836 = vadd.f32 0.0, %v5835
    %v5837 = vpop.f32.mrf.mxu0
    %v5838 = vadd.f32 0.0, %v5837
    %5839 = vmatprep.mubr.bf16.mxu0 %v3756
    %5840 = vmatmul.mubr.bf16.gmra.mxu0 %v3755
    %v5841 = vpop.f32.mrf.mxu0
    %v5842 = vadd.f32 0.0, %v5841
    %v5843 = vpop.f32.mrf.mxu0
    %v5844 = vadd.f32 0.0, %v5843
    %v5845 = vpop.f32.mrf.mxu0
    %v5846 = vadd.f32 0.0, %v5845
    %v5847 = vpop.f32.mrf.mxu0
    %v5848 = vadd.f32 0.0, %v5847
    %5849 = vmatprep.mubr.bf16.mxu0 %v3759
    %5850 = vmatmul.mubr.bf16.gmra.mxu0 %v3758
    %v5851 = vpop.f32.mrf.mxu0
    %v5852 = vadd.f32 0.0, %v5851
    %v5853 = vpop.f32.mrf.mxu0
    %v5854 = vadd.f32 0.0, %v5853
    %v5855 = vpop.f32.mrf.mxu0
    %v5856 = vadd.f32 0.0, %v5855
    %v5857 = vpop.f32.mrf.mxu0
    %v5858 = vadd.f32 0.0, %v5857
    %5859 = vmatprep.mubr.bf16.mxu0 %v3762
    %5860 = vmatmul.mubr.bf16.gmra.mxu0 %v3761
    %v5861 = vpop.f32.mrf.mxu0
    %v5862 = vadd.f32 0.0, %v5861
    %v5863 = vpop.f32.mrf.mxu0
    %v5864 = vadd.f32 0.0, %v5863
    %v5865 = vpop.f32.mrf.mxu0
    %v5866 = vadd.f32 0.0, %v5865
    %v5867 = vpop.f32.mrf.mxu0
    %v5868 = vadd.f32 0.0, %v5867
    %5869 = vmatprep.mubr.bf16.mxu0 %v3765
    %5870 = vmatmul.mubr.bf16.gmra.mxu0 %v3764
    %v5871 = vpop.f32.mrf.mxu0
    %v5872 = vadd.f32 0.0, %v5871
    %v5873 = vpop.f32.mrf.mxu0
    %v5874 = vadd.f32 0.0, %v5873
    %v5875 = vpop.f32.mrf.mxu0
    %v5876 = vadd.f32 0.0, %v5875
    %v5877 = vpop.f32.mrf.mxu0
    %v5878 = vadd.f32 0.0, %v5877
    %5879 = vmatprep.mubr.bf16.mxu0 %v3768
    %5880 = vmatmul.mubr.bf16.gmra.mxu0 %v3767
    %v5881 = vpop.f32.mrf.mxu0
    %v5882 = vadd.f32 0.0, %v5881
    %v5883 = vpop.f32.mrf.mxu0
    %v5884 = vadd.f32 0.0, %v5883
    %v5885 = vpop.f32.mrf.mxu0
    %v5886 = vadd.f32 0.0, %v5885
    %v5887 = vpop.f32.mrf.mxu0
    %v5888 = vadd.f32 0.0, %v5887
    %5889 = vmatprep.mubr.bf16.mxu0 %v3771
    %5890 = vmatmul.mubr.bf16.gmra.mxu0 %v3770
    %v5891 = vpop.f32.mrf.mxu0
    %v5892 = vadd.f32 0.0, %v5891
    %v5893 = vpop.f32.mrf.mxu0
    %v5894 = vadd.f32 0.0, %v5893
    %v5895 = vpop.f32.mrf.mxu0
    %v5896 = vadd.f32 0.0, %v5895
    %v5897 = vpop.f32.mrf.mxu0
    %v5898 = vadd.f32 0.0, %v5897
    %5899 = vmatprep.mubr.bf16.mxu0 %v3774
    %5900 = vmatmul.mubr.bf16.gmra.mxu0 %v3773
    %v5901 = vpop.f32.mrf.mxu0
    %v5902 = vadd.f32 0.0, %v5901
    %v5903 = vpop.f32.mrf.mxu0
    %v5904 = vadd.f32 0.0, %v5903
    %v5905 = vpop.f32.mrf.mxu0
    %v5906 = vadd.f32 0.0, %v5905
    %v5907 = vpop.f32.mrf.mxu0
    %v5908 = vadd.f32 0.0, %v5907
    %5909 = vmatprep.mubr.bf16.mxu0 %v3777
    %5910 = vmatmul.mubr.bf16.gmra.mxu0 %v3776
    %v5911 = vpop.f32.mrf.mxu0
    %v5912 = vadd.f32 0.0, %v5911
    %v5913 = vpop.f32.mrf.mxu0
    %v5914 = vadd.f32 0.0, %v5913
    %v5915 = vpop.f32.mrf.mxu0
    %v5916 = vadd.f32 0.0, %v5915
    %v5917 = vpop.f32.mrf.mxu0
    %v5918 = vadd.f32 0.0, %v5917
    %5919 = vmatprep.mubr.bf16.mxu0 %v3780
    %5920 = vmatmul.mubr.bf16.gmra.mxu0 %v3779
    %v5921 = vpop.f32.mrf.mxu0
    %v5922 = vadd.f32 0.0, %v5921
    %v5923 = vpop.f32.mrf.mxu0
    %v5924 = vadd.f32 0.0, %v5923
    %v5925 = vpop.f32.mrf.mxu0
    %v5926 = vadd.f32 0.0, %v5925
    %v5927 = vpop.f32.mrf.mxu0
    %v5928 = vadd.f32 0.0, %v5927
    %5929 = vmatprep.mubr.bf16.mxu0 %v3783
    %5930 = vmatmul.mubr.bf16.gmra.mxu0 %v3782
    %v5931 = vpop.f32.mrf.mxu0
    %v5932 = vadd.f32 0.0, %v5931
    %v5933 = vpop.f32.mrf.mxu0
    %v5934 = vadd.f32 0.0, %v5933
    %v5935 = vpop.f32.mrf.mxu0
    %v5936 = vadd.f32 0.0, %v5935
    %v5937 = vpop.f32.mrf.mxu0
    %v5938 = vadd.f32 0.0, %v5937
    %5939 = vmatprep.mubr.bf16.mxu0 %v3786
    %5940 = vmatmul.mubr.bf16.gmra.mxu0 %v3785
    %v5941 = vpop.f32.mrf.mxu0
    %v5942 = vadd.f32 0.0, %v5941
    %v5943 = vpop.f32.mrf.mxu0
    %v5944 = vadd.f32 0.0, %v5943
    %v5945 = vpop.f32.mrf.mxu0
    %v5946 = vadd.f32 0.0, %v5945
    %v5947 = vpop.f32.mrf.mxu0
    %v5948 = vadd.f32 0.0, %v5947
    %5949 = vmatprep.mubr.bf16.mxu0 %v3789
    %5950 = vmatmul.mubr.bf16.gmra.mxu0 %v3788
    %v5951 = vpop.f32.mrf.mxu0
    %v5952 = vadd.f32 0.0, %v5951
    %v5953 = vpop.f32.mrf.mxu0
    %v5954 = vadd.f32 0.0, %v5953
    %v5955 = vpop.f32.mrf.mxu0
    %v5956 = vadd.f32 0.0, %v5955
    %v5957 = vpop.f32.mrf.mxu0
    %v5958 = vadd.f32 0.0, %v5957
    %5959 = vmatprep.mubr.bf16.mxu0 %v3792
    %5960 = vmatmul.mubr.bf16.gmra.mxu0 %v3791
    %v5961 = vpop.f32.mrf.mxu0
    %v5962 = vadd.f32 0.0, %v5961
    %v5963 = vpop.f32.mrf.mxu0
    %v5964 = vadd.f32 0.0, %v5963
    %v5965 = vpop.f32.mrf.mxu0
    %v5966 = vadd.f32 0.0, %v5965
    %v5967 = vpop.f32.mrf.mxu0
    %v5968 = vadd.f32 0.0, %v5967
    %5969 = vmatprep.mubr.bf16.mxu0 %v3795
    %5970 = vmatmul.mubr.bf16.gmra.mxu0 %v3794
    %v5971 = vpop.f32.mrf.mxu0
    %v5972 = vadd.f32 0.0, %v5971
    %v5973 = vpop.f32.mrf.mxu0
    %v5974 = vadd.f32 0.0, %v5973
    %v5975 = vpop.f32.mrf.mxu0
    %v5976 = vadd.f32 0.0, %v5975
    %v5977 = vpop.f32.mrf.mxu0
    %v5978 = vadd.f32 0.0, %v5977
    %5979 = vmatprep.mubr.bf16.mxu0 %v3798
    %5980 = vmatmul.mubr.bf16.gmra.mxu0 %v3797
    %v5981 = vpop.f32.mrf.mxu0
    %v5982 = vadd.f32 0.0, %v5981
    %v5983 = vpop.f32.mrf.mxu0
    %v5984 = vadd.f32 0.0, %v5983
    %v5985 = vpop.f32.mrf.mxu0
    %v5986 = vadd.f32 0.0, %v5985
    %v5987 = vpop.f32.mrf.mxu0
    %v5988 = vadd.f32 0.0, %v5987
    %5989 = vmatprep.mubr.bf16.mxu0 %v3801
    %5990 = vmatmul.mubr.bf16.gmra.mxu0 %v3800
    %v5991 = vpop.f32.mrf.mxu0
    %v5992 = vadd.f32 0.0, %v5991
    %v5993 = vpop.f32.mrf.mxu0
    %v5994 = vadd.f32 0.0, %v5993
    %v5995 = vpop.f32.mrf.mxu0
    %v5996 = vadd.f32 0.0, %v5995
    %v5997 = vpop.f32.mrf.mxu0
    %v5998 = vadd.f32 0.0, %v5997
    %5999 = vmatprep.mubr.bf16.mxu0 %v3804
    %6000 = vmatmul.mubr.bf16.gmra.mxu0 %v3803
    %v6001 = vpop.f32.mrf.mxu0
    %v6002 = vadd.f32 0.0, %v6001
    %v6003 = vpop.f32.mrf.mxu0
    %v6004 = vadd.f32 0.0, %v6003
    %v6005 = vpop.f32.mrf.mxu0
    %v6006 = vpop.f32.mrf.mxu0
    %6007 = vdwg.mxu0
    %6008 = vmatprep.subr.bf16.mxu0 %v5276
    %6009 = vmatpush1.bf16.msra.mxu0 %v5275
    %6010 = vmatprep.subr.bf16.mxu0 %v5272
    %6011 = vmatpush1.bf16.msra.mxu0 %v5271
    %6012 = vmatprep.subr.bf16.mxu0 %v5268
    %6013 = vmatpush1.bf16.msra.mxu0 %v5267
    %6014 = vmatprep.subr.bf16.mxu0 %v5264
    %6015 = vmatpush1.bf16.msra.mxu0 %v5263
    %6016 = vmatprep.subr.bf16.mxu0 %v5260
    %6017 = vmatpush1.bf16.msra.mxu0 %v5259
    %6018 = vmatprep.subr.bf16.mxu0 %v5256
    %6019 = vmatpush1.bf16.msra.mxu0 %v5255
    %6020 = vmatprep.subr.bf16.mxu0 %v5252
    %6021 = vmatpush1.bf16.msra.mxu0 %v5251
    %6022 = vmatprep.subr.bf16.mxu0 %v5248
    %6023 = vmatpush1.bf16.msra.mxu0 %v5247
    %6024 = vmatprep.subr.bf16.mxu0 %v5308
    %6025 = vmatpush2.bf16.msra.mxu0 %v5307
    %6026 = vmatprep.subr.bf16.mxu0 %v5304
    %6027 = vmatpush2.bf16.msra.mxu0 %v5303
    %6028 = vmatprep.subr.bf16.mxu0 %v5300
    %6029 = vmatpush2.bf16.msra.mxu0 %v5299
    %6030 = vmatprep.subr.bf16.mxu0 %v5296
    %6031 = vmatpush2.bf16.msra.mxu0 %v5295
    %6032 = vmatprep.subr.bf16.mxu0 %v5292
    %6033 = vmatpush2.bf16.msra.mxu0 %v5291
    %6034 = vmatprep.subr.bf16.mxu0 %v5288
    %6035 = vmatpush2.bf16.msra.mxu0 %v5287
    %6036 = vmatprep.subr.bf16.mxu0 %v5284
    %6037 = vmatpush2.bf16.msra.mxu0 %v5283
    %6038 = vmatprep.subr.bf16.mxu0 %v5280
    %6039 = vmatpush2.bf16.msra.mxu0 %v5279
    %6040 = vmatprep.mubr.bf16.mxu0 %v4292
    %6041 = vmatmul.mubr.bf16.gmra.mxu0 %v3685
    %v6042 = vpop.f32.mrf.mxu0
    %v6043 = vadd.f32 %v5602, %v6042
    %v6044 = vpop.f32.mrf.mxu0
    %v6045 = vadd.f32 %v5604, %v6044
    %v6046 = vpop.f32.mrf.mxu0
    %v6047 = vadd.f32 %v5606, %v6046
    %v6048 = vpop.f32.mrf.mxu0
    %v6049 = vadd.f32 %v5608, %v6048
    %6050 = vmatprep.mubr.bf16.mxu0 %v4295
    %6051 = vmatmul.mubr.bf16.gmra.mxu0 %v3688
    %v6052 = vpop.f32.mrf.mxu0
    %v6053 = vadd.f32 %v5612, %v6052
    %v6054 = vpop.f32.mrf.mxu0
    %v6055 = vadd.f32 %v5614, %v6054
    %v6056 = vpop.f32.mrf.mxu0
    %v6057 = vadd.f32 %v5616, %v6056
    %v6058 = vpop.f32.mrf.mxu0
    %v6059 = vadd.f32 %v5618, %v6058
    %6060 = vmatprep.mubr.bf16.mxu0 %v4298
    %6061 = vmatmul.mubr.bf16.gmra.mxu0 %v3691
    %v6062 = vpop.f32.mrf.mxu0
    %v6063 = vadd.f32 %v5622, %v6062
    %v6064 = vpop.f32.mrf.mxu0
    %v6065 = vadd.f32 %v5624, %v6064
    %v6066 = vpop.f32.mrf.mxu0
    %v6067 = vadd.f32 %v5626, %v6066
    %v6068 = vpop.f32.mrf.mxu0
    %v6069 = vadd.f32 %v5628, %v6068
    %6070 = vmatprep.mubr.bf16.mxu0 %v4301
    %6071 = vmatmul.mubr.bf16.gmra.mxu0 %v3694
    %v6072 = vpop.f32.mrf.mxu0
    %v6073 = vadd.f32 %v5632, %v6072
    %v6074 = vpop.f32.mrf.mxu0
    %v6075 = vadd.f32 %v5634, %v6074
    %v6076 = vpop.f32.mrf.mxu0
    %v6077 = vadd.f32 %v5636, %v6076
    %v6078 = vpop.f32.mrf.mxu0
    %v6079 = vadd.f32 %v5638, %v6078
    %6080 = vmatprep.mubr.bf16.mxu0 %v4304
    %6081 = vmatmul.mubr.bf16.gmra.mxu0 %v3697
    %v6082 = vpop.f32.mrf.mxu0
    %v6083 = vadd.f32 %v5642, %v6082
    %v6084 = vpop.f32.mrf.mxu0
    %v6085 = vadd.f32 %v5644, %v6084
    %v6086 = vpop.f32.mrf.mxu0
    %v6087 = vadd.f32 %v5646, %v6086
    %v6088 = vpop.f32.mrf.mxu0
    %v6089 = vadd.f32 %v5648, %v6088
    %6090 = vmatprep.mubr.bf16.mxu0 %v4307
    %6091 = vmatmul.mubr.bf16.gmra.mxu0 %v3700
    %v6092 = vpop.f32.mrf.mxu0
    %v6093 = vadd.f32 %v5652, %v6092
    %v6094 = vpop.f32.mrf.mxu0
    %v6095 = vadd.f32 %v5654, %v6094
    %v6096 = vpop.f32.mrf.mxu0
    %v6097 = vadd.f32 %v5656, %v6096
    %v6098 = vpop.f32.mrf.mxu0
    %v6099 = vadd.f32 %v5658, %v6098
    %6100 = vmatprep.mubr.bf16.mxu0 %v4310
    %6101 = vmatmul.mubr.bf16.gmra.mxu0 %v3703
    %v6102 = vpop.f32.mrf.mxu0
    %v6103 = vadd.f32 %v5662, %v6102
    %v6104 = vpop.f32.mrf.mxu0
    %v6105 = vadd.f32 %v5664, %v6104
    %v6106 = vpop.f32.mrf.mxu0
    %v6107 = vadd.f32 %v5666, %v6106
    %v6108 = vpop.f32.mrf.mxu0
    %v6109 = vadd.f32 %v5668, %v6108
    %6110 = vmatprep.mubr.bf16.mxu0 %v4313
    %6111 = vmatmul.mubr.bf16.gmra.mxu0 %v3706
    %v6112 = vpop.f32.mrf.mxu0
    %v6113 = vadd.f32 %v5672, %v6112
    %v6114 = vpop.f32.mrf.mxu0
    %v6115 = vadd.f32 %v5674, %v6114
    %v6116 = vpop.f32.mrf.mxu0
    %v6117 = vadd.f32 %v5676, %v6116
    %v6118 = vpop.f32.mrf.mxu0
    %v6119 = vadd.f32 %v5678, %v6118
    %6120 = vmatprep.mubr.bf16.mxu0 %v4316
    %6121 = vmatmul.mubr.bf16.gmra.mxu0 %v3709
    %v6122 = vpop.f32.mrf.mxu0
    %v6123 = vadd.f32 %v5682, %v6122
    %v6124 = vpop.f32.mrf.mxu0
    %v6125 = vadd.f32 %v5684, %v6124
    %v6126 = vpop.f32.mrf.mxu0
    %v6127 = vadd.f32 %v5686, %v6126
    %v6128 = vpop.f32.mrf.mxu0
    %v6129 = vadd.f32 %v5688, %v6128
    %6130 = vmatprep.mubr.bf16.mxu0 %v4319
    %6131 = vmatmul.mubr.bf16.gmra.mxu0 %v3712
    %v6132 = vpop.f32.mrf.mxu0
    %v6133 = vadd.f32 %v5692, %v6132
    %v6134 = vpop.f32.mrf.mxu0
    %v6135 = vadd.f32 %v5694, %v6134
    %v6136 = vpop.f32.mrf.mxu0
    %v6137 = vadd.f32 %v5696, %v6136
    %v6138 = vpop.f32.mrf.mxu0
    %v6139 = vadd.f32 %v5698, %v6138
    %6140 = vmatprep.mubr.bf16.mxu0 %v4322
    %6141 = vmatmul.mubr.bf16.gmra.mxu0 %v3715
    %v6142 = vpop.f32.mrf.mxu0
    %v6143 = vadd.f32 %v5702, %v6142
    %v6144 = vpop.f32.mrf.mxu0
    %v6145 = vadd.f32 %v5704, %v6144
    %v6146 = vpop.f32.mrf.mxu0
    %v6147 = vadd.f32 %v5706, %v6146
    %v6148 = vpop.f32.mrf.mxu0
    %v6149 = vadd.f32 %v5708, %v6148
    %6150 = vmatprep.mubr.bf16.mxu0 %v4325
    %6151 = vmatmul.mubr.bf16.gmra.mxu0 %v3718
    %v6152 = vpop.f32.mrf.mxu0
    %v6153 = vadd.f32 %v5712, %v6152
    %v6154 = vpop.f32.mrf.mxu0
    %v6155 = vadd.f32 %v5714, %v6154
    %v6156 = vpop.f32.mrf.mxu0
    %v6157 = vadd.f32 %v5716, %v6156
    %v6158 = vpop.f32.mrf.mxu0
    %v6159 = vadd.f32 %v5718, %v6158
    %6160 = vmatprep.mubr.bf16.mxu0 %v4328
    %6161 = vmatmul.mubr.bf16.gmra.mxu0 %v3721
    %v6162 = vpop.f32.mrf.mxu0
    %v6163 = vadd.f32 %v5722, %v6162
    %v6164 = vpop.f32.mrf.mxu0
    %v6165 = vadd.f32 %v5724, %v6164
    %v6166 = vpop.f32.mrf.mxu0
    %v6167 = vadd.f32 %v5726, %v6166
    %v6168 = vpop.f32.mrf.mxu0
    %v6169 = vadd.f32 %v5728, %v6168
    %6170 = vmatprep.mubr.bf16.mxu0 %v4331
    %6171 = vmatmul.mubr.bf16.gmra.mxu0 %v3724
    %v6172 = vpop.f32.mrf.mxu0
    %v6173 = vadd.f32 %v5732, %v6172
    %v6174 = vpop.f32.mrf.mxu0
    %v6175 = vadd.f32 %v5734, %v6174
    %v6176 = vpop.f32.mrf.mxu0
    %v6177 = vadd.f32 %v5736, %v6176
    %v6178 = vpop.f32.mrf.mxu0
    %v6179 = vadd.f32 %v5738, %v6178
    %6180 = vmatprep.mubr.bf16.mxu0 %v4334
    %6181 = vmatmul.mubr.bf16.gmra.mxu0 %v3727
    %v6182 = vpop.f32.mrf.mxu0
    %v6183 = vadd.f32 %v5742, %v6182
    %v6184 = vpop.f32.mrf.mxu0
    %v6185 = vadd.f32 %v5744, %v6184
    %v6186 = vpop.f32.mrf.mxu0
    %v6187 = vadd.f32 %v5746, %v6186
    %v6188 = vpop.f32.mrf.mxu0
    %v6189 = vadd.f32 %v5748, %v6188
    %6190 = vmatprep.mubr.bf16.mxu0 %v4337
    %6191 = vmatmul.mubr.bf16.gmra.mxu0 %v3730
    %v6192 = vpop.f32.mrf.mxu0
    %v6193 = vadd.f32 %v5752, %v6192
    %v6194 = vpop.f32.mrf.mxu0
    %v6195 = vadd.f32 %v5754, %v6194
    %v6196 = vpop.f32.mrf.mxu0
    %v6197 = vadd.f32 %v5756, %v6196
    %v6198 = vpop.f32.mrf.mxu0
    %v6199 = vadd.f32 %v5758, %v6198
    %6200 = vmatprep.mubr.bf16.mxu0 %v4340
    %6201 = vmatmul.mubr.bf16.gmra.mxu0 %v3733
    %v6202 = vpop.f32.mrf.mxu0
    %v6203 = vadd.f32 %v5762, %v6202
    %v6204 = vpop.f32.mrf.mxu0
    %v6205 = vadd.f32 %v5764, %v6204
    %v6206 = vpop.f32.mrf.mxu0
    %v6207 = vadd.f32 %v5766, %v6206
    %v6208 = vpop.f32.mrf.mxu0
    %v6209 = vadd.f32 %v5768, %v6208
    %6210 = vmatprep.mubr.bf16.mxu0 %v4343
    %6211 = vmatmul.mubr.bf16.gmra.mxu0 %v3736
    %v6212 = vpop.f32.mrf.mxu0
    %v6213 = vadd.f32 %v5772, %v6212
    %v6214 = vpop.f32.mrf.mxu0
    %v6215 = vadd.f32 %v5774, %v6214
    %v6216 = vpop.f32.mrf.mxu0
    %v6217 = vadd.f32 %v5776, %v6216
    %v6218 = vpop.f32.mrf.mxu0
    %v6219 = vadd.f32 %v5778, %v6218
    %6220 = vmatprep.mubr.bf16.mxu0 %v4346
    %6221 = vmatmul.mubr.bf16.gmra.mxu0 %v3739
    %v6222 = vpop.f32.mrf.mxu0
    %v6223 = vadd.f32 %v5782, %v6222
    %v6224 = vpop.f32.mrf.mxu0
    %v6225 = vadd.f32 %v5784, %v6224
    %v6226 = vpop.f32.mrf.mxu0
    %v6227 = vadd.f32 %v5786, %v6226
    %v6228 = vpop.f32.mrf.mxu0
    %v6229 = vadd.f32 %v5788, %v6228
    %6230 = vmatprep.mubr.bf16.mxu0 %v4349
    %6231 = vmatmul.mubr.bf16.gmra.mxu0 %v3742
    %v6232 = vpop.f32.mrf.mxu0
    %v6233 = vadd.f32 %v5792, %v6232
    %v6234 = vpop.f32.mrf.mxu0
    %v6235 = vadd.f32 %v5794, %v6234
    %v6236 = vpop.f32.mrf.mxu0
    %v6237 = vadd.f32 %v5796, %v6236
    %v6238 = vpop.f32.mrf.mxu0
    %v6239 = vadd.f32 %v5798, %v6238
    %6240 = vmatprep.mubr.bf16.mxu0 %v4352
    %6241 = vmatmul.mubr.bf16.gmra.mxu0 %v3745
    %v6242 = vpop.f32.mrf.mxu0
    %v6243 = vadd.f32 %v5802, %v6242
    %v6244 = vpop.f32.mrf.mxu0
    %v6245 = vadd.f32 %v5804, %v6244
    %v6246 = vpop.f32.mrf.mxu0
    %v6247 = vadd.f32 %v5806, %v6246
    %v6248 = vpop.f32.mrf.mxu0
    %v6249 = vadd.f32 %v5808, %v6248
    %6250 = vmatprep.mubr.bf16.mxu0 %v4355
    %6251 = vmatmul.mubr.bf16.gmra.mxu0 %v3748
    %v6252 = vpop.f32.mrf.mxu0
    %v6253 = vadd.f32 %v5812, %v6252
    %v6254 = vpop.f32.mrf.mxu0
    %v6255 = vadd.f32 %v5814, %v6254
    %v6256 = vpop.f32.mrf.mxu0
    %v6257 = vadd.f32 %v5816, %v6256
    %v6258 = vpop.f32.mrf.mxu0
    %v6259 = vadd.f32 %v5818, %v6258
    %6260 = vmatprep.mubr.bf16.mxu0 %v4358
    %6261 = vmatmul.mubr.bf16.gmra.mxu0 %v3751
    %v6262 = vpop.f32.mrf.mxu0
    %v6263 = vadd.f32 %v5822, %v6262
    %v6264 = vpop.f32.mrf.mxu0
    %v6265 = vadd.f32 %v5824, %v6264
    %v6266 = vpop.f32.mrf.mxu0
    %v6267 = vadd.f32 %v5826, %v6266
    %v6268 = vpop.f32.mrf.mxu0
    %v6269 = vadd.f32 %v5828, %v6268
    %6270 = vmatprep.mubr.bf16.mxu0 %v4361
    %6271 = vmatmul.mubr.bf16.gmra.mxu0 %v3754
    %v6272 = vpop.f32.mrf.mxu0
    %v6273 = vadd.f32 %v5832, %v6272
    %v6274 = vpop.f32.mrf.mxu0
    %v6275 = vadd.f32 %v5834, %v6274
    %v6276 = vpop.f32.mrf.mxu0
    %v6277 = vadd.f32 %v5836, %v6276
    %v6278 = vpop.f32.mrf.mxu0
    %v6279 = vadd.f32 %v5838, %v6278
    %6280 = vmatprep.mubr.bf16.mxu0 %v4364
    %6281 = vmatmul.mubr.bf16.gmra.mxu0 %v3757
    %v6282 = vpop.f32.mrf.mxu0
    %v6283 = vadd.f32 %v5842, %v6282
    %v6284 = vpop.f32.mrf.mxu0
    %v6285 = vadd.f32 %v5844, %v6284
    %v6286 = vpop.f32.mrf.mxu0
    %v6287 = vadd.f32 %v5846, %v6286
    %v6288 = vpop.f32.mrf.mxu0
    %v6289 = vadd.f32 %v5848, %v6288
    %6290 = vmatprep.mubr.bf16.mxu0 %v4367
    %6291 = vmatmul.mubr.bf16.gmra.mxu0 %v3760
    %v6292 = vpop.f32.mrf.mxu0
    %v6293 = vadd.f32 %v5852, %v6292
    %v6294 = vpop.f32.mrf.mxu0
    %v6295 = vadd.f32 %v5854, %v6294
    %v6296 = vpop.f32.mrf.mxu0
    %v6297 = vadd.f32 %v5856, %v6296
    %v6298 = vpop.f32.mrf.mxu0
    %v6299 = vadd.f32 %v5858, %v6298
    %6300 = vmatprep.mubr.bf16.mxu0 %v4370
    %6301 = vmatmul.mubr.bf16.gmra.mxu0 %v3763
    %v6302 = vpop.f32.mrf.mxu0
    %v6303 = vadd.f32 %v5862, %v6302
    %v6304 = vpop.f32.mrf.mxu0
    %v6305 = vadd.f32 %v5864, %v6304
    %v6306 = vpop.f32.mrf.mxu0
    %v6307 = vadd.f32 %v5866, %v6306
    %v6308 = vpop.f32.mrf.mxu0
    %v6309 = vadd.f32 %v5868, %v6308
    %6310 = vmatprep.mubr.bf16.mxu0 %v4373
    %6311 = vmatmul.mubr.bf16.gmra.mxu0 %v3766
    %v6312 = vpop.f32.mrf.mxu0
    %v6313 = vadd.f32 %v5872, %v6312
    %v6314 = vpop.f32.mrf.mxu0
    %v6315 = vadd.f32 %v5874, %v6314
    %v6316 = vpop.f32.mrf.mxu0
    %v6317 = vadd.f32 %v5876, %v6316
    %v6318 = vpop.f32.mrf.mxu0
    %v6319 = vadd.f32 %v5878, %v6318
    %6320 = vmatprep.mubr.bf16.mxu0 %v4376
    %6321 = vmatmul.mubr.bf16.gmra.mxu0 %v3769
    %v6322 = vpop.f32.mrf.mxu0
    %v6323 = vadd.f32 %v5882, %v6322
    %v6324 = vpop.f32.mrf.mxu0
    %v6325 = vadd.f32 %v5884, %v6324
    %v6326 = vpop.f32.mrf.mxu0
    %v6327 = vadd.f32 %v5886, %v6326
    %v6328 = vpop.f32.mrf.mxu0
    %v6329 = vadd.f32 %v5888, %v6328
    %6330 = vmatprep.mubr.bf16.mxu0 %v4379
    %6331 = vmatmul.mubr.bf16.gmra.mxu0 %v3772
    %v6332 = vpop.f32.mrf.mxu0
    %v6333 = vadd.f32 %v5892, %v6332
    %v6334 = vpop.f32.mrf.mxu0
    %v6335 = vadd.f32 %v5894, %v6334
    %v6336 = vpop.f32.mrf.mxu0
    %v6337 = vadd.f32 %v5896, %v6336
    %v6338 = vpop.f32.mrf.mxu0
    %v6339 = vadd.f32 %v5898, %v6338
    %6340 = vmatprep.mubr.bf16.mxu0 %v4382
    %6341 = vmatmul.mubr.bf16.gmra.mxu0 %v3775
    %v6342 = vpop.f32.mrf.mxu0
    %v6343 = vadd.f32 %v5902, %v6342
    %v6344 = vpop.f32.mrf.mxu0
    %v6345 = vadd.f32 %v5904, %v6344
    %v6346 = vpop.f32.mrf.mxu0
    %v6347 = vadd.f32 %v5906, %v6346
    %v6348 = vpop.f32.mrf.mxu0
    %v6349 = vadd.f32 %v5908, %v6348
    %6350 = vmatprep.mubr.bf16.mxu0 %v4385
    %6351 = vmatmul.mubr.bf16.gmra.mxu0 %v3778
    %v6352 = vpop.f32.mrf.mxu0
    %v6353 = vadd.f32 %v5912, %v6352
    %v6354 = vpop.f32.mrf.mxu0
    %v6355 = vadd.f32 %v5914, %v6354
    %v6356 = vpop.f32.mrf.mxu0
    %v6357 = vadd.f32 %v5916, %v6356
    %v6358 = vpop.f32.mrf.mxu0
    %v6359 = vadd.f32 %v5918, %v6358
    %6360 = vmatprep.mubr.bf16.mxu0 %v4388
    %6361 = vmatmul.mubr.bf16.gmra.mxu0 %v3781
    %v6362 = vpop.f32.mrf.mxu0
    %v6363 = vadd.f32 %v5922, %v6362
    %v6364 = vpop.f32.mrf.mxu0
    %v6365 = vadd.f32 %v5924, %v6364
    %v6366 = vpop.f32.mrf.mxu0
    %v6367 = vadd.f32 %v5926, %v6366
    %v6368 = vpop.f32.mrf.mxu0
    %v6369 = vadd.f32 %v5928, %v6368
    %6370 = vmatprep.mubr.bf16.mxu0 %v4391
    %6371 = vmatmul.mubr.bf16.gmra.mxu0 %v3784
    %v6372 = vpop.f32.mrf.mxu0
    %v6373 = vadd.f32 %v5932, %v6372
    %v6374 = vpop.f32.mrf.mxu0
    %v6375 = vadd.f32 %v5934, %v6374
    %v6376 = vpop.f32.mrf.mxu0
    %v6377 = vadd.f32 %v5936, %v6376
    %v6378 = vpop.f32.mrf.mxu0
    %v6379 = vadd.f32 %v5938, %v6378
    %6380 = vmatprep.mubr.bf16.mxu0 %v4394
    %6381 = vmatmul.mubr.bf16.gmra.mxu0 %v3787
    %v6382 = vpop.f32.mrf.mxu0
    %v6383 = vadd.f32 %v5942, %v6382
    %v6384 = vpop.f32.mrf.mxu0
    %v6385 = vadd.f32 %v5944, %v6384
    %v6386 = vpop.f32.mrf.mxu0
    %v6387 = vadd.f32 %v5946, %v6386
    %v6388 = vpop.f32.mrf.mxu0
    %v6389 = vadd.f32 %v5948, %v6388
    %6390 = vmatprep.mubr.bf16.mxu0 %v4397
    %6391 = vmatmul.mubr.bf16.gmra.mxu0 %v3790
    %v6392 = vpop.f32.mrf.mxu0
    %v6393 = vadd.f32 %v5952, %v6392
    %v6394 = vpop.f32.mrf.mxu0
    %v6395 = vadd.f32 %v5954, %v6394
    %v6396 = vpop.f32.mrf.mxu0
    %v6397 = vadd.f32 %v5956, %v6396
    %v6398 = vpop.f32.mrf.mxu0
    %v6399 = vadd.f32 %v5958, %v6398
    %6400 = vmatprep.mubr.bf16.mxu0 %v4400
    %6401 = vmatmul.mubr.bf16.gmra.mxu0 %v3793
    %v6402 = vpop.f32.mrf.mxu0
    %v6403 = vadd.f32 %v5962, %v6402
    %v6404 = vpop.f32.mrf.mxu0
    %v6405 = vadd.f32 %v5964, %v6404
    %v6406 = vpop.f32.mrf.mxu0
    %v6407 = vadd.f32 %v5966, %v6406
    %v6408 = vpop.f32.mrf.mxu0
    %v6409 = vadd.f32 %v5968, %v6408
    %6410 = vmatprep.mubr.bf16.mxu0 %v4403
    %6411 = vmatmul.mubr.bf16.gmra.mxu0 %v3796
    %v6412 = vpop.f32.mrf.mxu0
    %v6413 = vadd.f32 %v5972, %v6412
    %v6414 = vpop.f32.mrf.mxu0
    %v6415 = vadd.f32 %v5974, %v6414
    %v6416 = vpop.f32.mrf.mxu0
    %v6417 = vadd.f32 %v5976, %v6416
    %v6418 = vpop.f32.mrf.mxu0
    %v6419 = vadd.f32 %v5978, %v6418
    %6420 = vmatprep.mubr.bf16.mxu0 %v4406
    %6421 = vmatmul.mubr.bf16.gmra.mxu0 %v3799
    %v6422 = vpop.f32.mrf.mxu0
    %v6423 = vadd.f32 %v5982, %v6422
    %v6424 = vpop.f32.mrf.mxu0
    %v6425 = vadd.f32 %v5984, %v6424
    %v6426 = vpop.f32.mrf.mxu0
    %v6427 = vadd.f32 %v5986, %v6426
    %v6428 = vpop.f32.mrf.mxu0
    %v6429 = vadd.f32 %v5988, %v6428
    %6430 = vmatprep.mubr.bf16.mxu0 %v4409
    %6431 = vmatmul.mubr.bf16.gmra.mxu0 %v3802
    %v6432 = vpop.f32.mrf.mxu0
    %v6433 = vadd.f32 %v5992, %v6432
    %v6434 = vpop.f32.mrf.mxu0
    %v6435 = vadd.f32 %v5994, %v6434
    %v6436 = vpop.f32.mrf.mxu0
    %v6437 = vadd.f32 %v5996, %v6436
    %v6438 = vpop.f32.mrf.mxu0
    %v6439 = vadd.f32 %v5998, %v6438
    %6440 = vmatprep.mubr.bf16.mxu0 %v4412
    %6441 = vmatmul.mubr.bf16.gmra.mxu0 %v3805
    %v6442 = vpop.f32.mrf.mxu0
    %v6443 = vadd.f32 %v6002, %v6442
    %v6444 = vpop.f32.mrf.mxu0
    %v6445 = vadd.f32 %v6004, %v6444
    %v6446 = vpop.f32.mrf.mxu0
    %v6447 = vpop.f32.mrf.mxu0
    %6448 = vdwg.mxu0
    %6449 = vmatprep.subr.bf16.mxu0 %v5340
    %6450 = vmatpush1.bf16.msra.mxu0 %v5339
    %6451 = vmatprep.subr.bf16.mxu0 %v5336
    %6452 = vmatpush1.bf16.msra.mxu0 %v5335
    %6453 = vmatprep.subr.bf16.mxu0 %v5332
    %6454 = vmatpush1.bf16.msra.mxu0 %v5331
    %6455 = vmatprep.subr.bf16.mxu0 %v5328
    %6456 = vmatpush1.bf16.msra.mxu0 %v5327
    %6457 = vmatprep.subr.bf16.mxu0 %v5324
    %6458 = vmatpush1.bf16.msra.mxu0 %v5323
    %6459 = vmatprep.subr.bf16.mxu0 %v5320
    %6460 = vmatpush1.bf16.msra.mxu0 %v5319
    %6461 = vmatprep.subr.bf16.mxu0 %v5316
    %6462 = vmatpush1.bf16.msra.mxu0 %v5315
    %6463 = vmatprep.subr.bf16.mxu0 %v5312
    %6464 = vmatpush1.bf16.msra.mxu0 %v5311
    %6465 = vmatprep.subr.bf16.mxu0 %v5372
    %6466 = vmatpush2.bf16.msra.mxu0 %v5371
    %6467 = vmatprep.subr.bf16.mxu0 %v5368
    %6468 = vmatpush2.bf16.msra.mxu0 %v5367
    %6469 = vmatprep.subr.bf16.mxu0 %v5364
    %6470 = vmatpush2.bf16.msra.mxu0 %v5363
    %6471 = vmatprep.subr.bf16.mxu0 %v5360
    %6472 = vmatpush2.bf16.msra.mxu0 %v5359
    %6473 = vmatprep.subr.bf16.mxu0 %v5356
    %6474 = vmatpush2.bf16.msra.mxu0 %v5355
    %6475 = vmatprep.subr.bf16.mxu0 %v5352
    %6476 = vmatpush2.bf16.msra.mxu0 %v5351
    %6477 = vmatprep.subr.bf16.mxu0 %v5348
    %6478 = vmatpush2.bf16.msra.mxu0 %v5347
    %6479 = vmatprep.subr.bf16.mxu0 %v5344
    %6480 = vmatpush2.bf16.msra.mxu0 %v5343
    %6481 = vmatprep.mubr.bf16.mxu0 %v4294
    %6482 = vmatmul.mubr.bf16.gmra.mxu0 %v4293
    %v6483 = vpop.f32.mrf.mxu0
    %v6484 = vadd.f32 %v6043, %v6483
    %v6485 = vpop.f32.mrf.mxu0
    %v6486 = vadd.f32 %v6045, %v6485
    %v6487 = vpop.f32.mrf.mxu0
    %v6488 = vadd.f32 %v6047, %v6487
    %v6489 = vpop.f32.mrf.mxu0
    %v6490 = vadd.f32 %v6049, %v6489
    %6491 = vmatprep.mubr.bf16.mxu0 %v4297
    %6492 = vmatmul.mubr.bf16.gmra.mxu0 %v4296
    %v6493 = vpop.f32.mrf.mxu0
    %v6494 = vadd.f32 %v6053, %v6493
    %v6495 = vpop.f32.mrf.mxu0
    %v6496 = vadd.f32 %v6055, %v6495
    %v6497 = vpop.f32.mrf.mxu0
    %v6498 = vadd.f32 %v6057, %v6497
    %v6499 = vpop.f32.mrf.mxu0
    %v6500 = vadd.f32 %v6059, %v6499
    %6501 = vmatprep.mubr.bf16.mxu0 %v4300
    %6502 = vmatmul.mubr.bf16.gmra.mxu0 %v4299
    %v6503 = vpop.f32.mrf.mxu0
    %v6504 = vadd.f32 %v6063, %v6503
    %v6505 = vpop.f32.mrf.mxu0
    %v6506 = vadd.f32 %v6065, %v6505
    %v6507 = vpop.f32.mrf.mxu0
    %v6508 = vadd.f32 %v6067, %v6507
    %v6509 = vpop.f32.mrf.mxu0
    %v6510 = vadd.f32 %v6069, %v6509
    %6511 = vmatprep.mubr.bf16.mxu0 %v4303
    %6512 = vmatmul.mubr.bf16.gmra.mxu0 %v4302
    %v6513 = vpop.f32.mrf.mxu0
    %v6514 = vadd.f32 %v6073, %v6513
    %v6515 = vpop.f32.mrf.mxu0
    %v6516 = vadd.f32 %v6075, %v6515
    %v6517 = vpop.f32.mrf.mxu0
    %v6518 = vadd.f32 %v6077, %v6517
    %v6519 = vpop.f32.mrf.mxu0
    %v6520 = vadd.f32 %v6079, %v6519
    %6521 = vmatprep.mubr.bf16.mxu0 %v4306
    %6522 = vmatmul.mubr.bf16.gmra.mxu0 %v4305
    %v6523 = vpop.f32.mrf.mxu0
    %v6524 = vadd.f32 %v6083, %v6523
    %v6525 = vpop.f32.mrf.mxu0
    %v6526 = vadd.f32 %v6085, %v6525
    %v6527 = vpop.f32.mrf.mxu0
    %v6528 = vadd.f32 %v6087, %v6527
    %v6529 = vpop.f32.mrf.mxu0
    %v6530 = vadd.f32 %v6089, %v6529
    %6531 = vmatprep.mubr.bf16.mxu0 %v4309
    %6532 = vmatmul.mubr.bf16.gmra.mxu0 %v4308
    %v6533 = vpop.f32.mrf.mxu0
    %v6534 = vadd.f32 %v6093, %v6533
    %v6535 = vpop.f32.mrf.mxu0
    %v6536 = vadd.f32 %v6095, %v6535
    %v6537 = vpop.f32.mrf.mxu0
    %v6538 = vadd.f32 %v6097, %v6537
    %v6539 = vpop.f32.mrf.mxu0
    %v6540 = vadd.f32 %v6099, %v6539
    %6541 = vmatprep.mubr.bf16.mxu0 %v4312
    %6542 = vmatmul.mubr.bf16.gmra.mxu0 %v4311
    %v6543 = vpop.f32.mrf.mxu0
    %v6544 = vadd.f32 %v6103, %v6543
    %v6545 = vpop.f32.mrf.mxu0
    %v6546 = vadd.f32 %v6105, %v6545
    %v6547 = vpop.f32.mrf.mxu0
    %v6548 = vadd.f32 %v6107, %v6547
    %v6549 = vpop.f32.mrf.mxu0
    %v6550 = vadd.f32 %v6109, %v6549
    %6551 = vmatprep.mubr.bf16.mxu0 %v4315
    %6552 = vmatmul.mubr.bf16.gmra.mxu0 %v4314
    %v6553 = vpop.f32.mrf.mxu0
    %v6554 = vadd.f32 %v6113, %v6553
    %v6555 = vpop.f32.mrf.mxu0
    %v6556 = vadd.f32 %v6115, %v6555
    %v6557 = vpop.f32.mrf.mxu0
    %v6558 = vadd.f32 %v6117, %v6557
    %v6559 = vpop.f32.mrf.mxu0
    %v6560 = vadd.f32 %v6119, %v6559
    %6561 = vmatprep.mubr.bf16.mxu0 %v4318
    %6562 = vmatmul.mubr.bf16.gmra.mxu0 %v4317
    %v6563 = vpop.f32.mrf.mxu0
    %v6564 = vadd.f32 %v6123, %v6563
    %v6565 = vpop.f32.mrf.mxu0
    %v6566 = vadd.f32 %v6125, %v6565
    %v6567 = vpop.f32.mrf.mxu0
    %v6568 = vadd.f32 %v6127, %v6567
    %v6569 = vpop.f32.mrf.mxu0
    %v6570 = vadd.f32 %v6129, %v6569
    %6571 = vmatprep.mubr.bf16.mxu0 %v4321
    %6572 = vmatmul.mubr.bf16.gmra.mxu0 %v4320
    %v6573 = vpop.f32.mrf.mxu0
    %v6574 = vadd.f32 %v6133, %v6573
    %v6575 = vpop.f32.mrf.mxu0
    %v6576 = vadd.f32 %v6135, %v6575
    %v6577 = vpop.f32.mrf.mxu0
    %v6578 = vadd.f32 %v6137, %v6577
    %v6579 = vpop.f32.mrf.mxu0
    %v6580 = vadd.f32 %v6139, %v6579
    %6581 = vmatprep.mubr.bf16.mxu0 %v4324
    %6582 = vmatmul.mubr.bf16.gmra.mxu0 %v4323
    %v6583 = vpop.f32.mrf.mxu0
    %v6584 = vadd.f32 %v6143, %v6583
    %v6585 = vpop.f32.mrf.mxu0
    %v6586 = vadd.f32 %v6145, %v6585
    %v6587 = vpop.f32.mrf.mxu0
    %v6588 = vadd.f32 %v6147, %v6587
    %v6589 = vpop.f32.mrf.mxu0
    %v6590 = vadd.f32 %v6149, %v6589
    %6591 = vmatprep.mubr.bf16.mxu0 %v4327
    %6592 = vmatmul.mubr.bf16.gmra.mxu0 %v4326
    %v6593 = vpop.f32.mrf.mxu0
    %v6594 = vadd.f32 %v6153, %v6593
    %v6595 = vpop.f32.mrf.mxu0
    %v6596 = vadd.f32 %v6155, %v6595
    %v6597 = vpop.f32.mrf.mxu0
    %v6598 = vadd.f32 %v6157, %v6597
    %v6599 = vpop.f32.mrf.mxu0
    %v6600 = vadd.f32 %v6159, %v6599
    %6601 = vmatprep.mubr.bf16.mxu0 %v4330
    %6602 = vmatmul.mubr.bf16.gmra.mxu0 %v4329
    %v6603 = vpop.f32.mrf.mxu0
    %v6604 = vadd.f32 %v6163, %v6603
    %v6605 = vpop.f32.mrf.mxu0
    %v6606 = vadd.f32 %v6165, %v6605
    %v6607 = vpop.f32.mrf.mxu0
    %v6608 = vadd.f32 %v6167, %v6607
    %v6609 = vpop.f32.mrf.mxu0
    %v6610 = vadd.f32 %v6169, %v6609
    %6611 = vmatprep.mubr.bf16.mxu0 %v4333
    %6612 = vmatmul.mubr.bf16.gmra.mxu0 %v4332
    %v6613 = vpop.f32.mrf.mxu0
    %v6614 = vadd.f32 %v6173, %v6613
    %v6615 = vpop.f32.mrf.mxu0
    %v6616 = vadd.f32 %v6175, %v6615
    %v6617 = vpop.f32.mrf.mxu0
    %v6618 = vadd.f32 %v6177, %v6617
    %v6619 = vpop.f32.mrf.mxu0
    %v6620 = vadd.f32 %v6179, %v6619
    %6621 = vmatprep.mubr.bf16.mxu0 %v4336
    %6622 = vmatmul.mubr.bf16.gmra.mxu0 %v4335
    %v6623 = vpop.f32.mrf.mxu0
    %v6624 = vadd.f32 %v6183, %v6623
    %v6625 = vpop.f32.mrf.mxu0
    %v6626 = vadd.f32 %v6185, %v6625
    %v6627 = vpop.f32.mrf.mxu0
    %v6628 = vadd.f32 %v6187, %v6627
    %v6629 = vpop.f32.mrf.mxu0
    %v6630 = vadd.f32 %v6189, %v6629
    %6631 = vmatprep.mubr.bf16.mxu0 %v4339
    %6632 = vmatmul.mubr.bf16.gmra.mxu0 %v4338
    %v6633 = vpop.f32.mrf.mxu0
    %v6634 = vadd.f32 %v6193, %v6633
    %v6635 = vpop.f32.mrf.mxu0
    %v6636 = vadd.f32 %v6195, %v6635
    %v6637 = vpop.f32.mrf.mxu0
    %v6638 = vadd.f32 %v6197, %v6637
    %v6639 = vpop.f32.mrf.mxu0
    %v6640 = vadd.f32 %v6199, %v6639
    %6641 = vmatprep.mubr.bf16.mxu0 %v4342
    %6642 = vmatmul.mubr.bf16.gmra.mxu0 %v4341
    %v6643 = vpop.f32.mrf.mxu0
    %v6644 = vadd.f32 %v6203, %v6643
    %v6645 = vpop.f32.mrf.mxu0
    %v6646 = vadd.f32 %v6205, %v6645
    %v6647 = vpop.f32.mrf.mxu0
    %v6648 = vadd.f32 %v6207, %v6647
    %v6649 = vpop.f32.mrf.mxu0
    %v6650 = vadd.f32 %v6209, %v6649
    %6651 = vmatprep.mubr.bf16.mxu0 %v4345
    %6652 = vmatmul.mubr.bf16.gmra.mxu0 %v4344
    %v6653 = vpop.f32.mrf.mxu0
    %v6654 = vadd.f32 %v6213, %v6653
    %v6655 = vpop.f32.mrf.mxu0
    %v6656 = vadd.f32 %v6215, %v6655
    %v6657 = vpop.f32.mrf.mxu0
    %v6658 = vadd.f32 %v6217, %v6657
    %v6659 = vpop.f32.mrf.mxu0
    %v6660 = vadd.f32 %v6219, %v6659
    %6661 = vmatprep.mubr.bf16.mxu0 %v4348
    %6662 = vmatmul.mubr.bf16.gmra.mxu0 %v4347
    %v6663 = vpop.f32.mrf.mxu0
    %v6664 = vadd.f32 %v6223, %v6663
    %v6665 = vpop.f32.mrf.mxu0
    %v6666 = vadd.f32 %v6225, %v6665
    %v6667 = vpop.f32.mrf.mxu0
    %v6668 = vadd.f32 %v6227, %v6667
    %v6669 = vpop.f32.mrf.mxu0
    %v6670 = vadd.f32 %v6229, %v6669
    %6671 = vmatprep.mubr.bf16.mxu0 %v4351
    %6672 = vmatmul.mubr.bf16.gmra.mxu0 %v4350
    %v6673 = vpop.f32.mrf.mxu0
    %v6674 = vadd.f32 %v6233, %v6673
    %v6675 = vpop.f32.mrf.mxu0
    %v6676 = vadd.f32 %v6235, %v6675
    %v6677 = vpop.f32.mrf.mxu0
    %v6678 = vadd.f32 %v6237, %v6677
    %v6679 = vpop.f32.mrf.mxu0
    %v6680 = vadd.f32 %v6239, %v6679
    %6681 = vmatprep.mubr.bf16.mxu0 %v4354
    %6682 = vmatmul.mubr.bf16.gmra.mxu0 %v4353
    %v6683 = vpop.f32.mrf.mxu0
    %v6684 = vadd.f32 %v6243, %v6683
    %v6685 = vpop.f32.mrf.mxu0
    %v6686 = vadd.f32 %v6245, %v6685
    %v6687 = vpop.f32.mrf.mxu0
    %v6688 = vadd.f32 %v6247, %v6687
    %v6689 = vpop.f32.mrf.mxu0
    %v6690 = vadd.f32 %v6249, %v6689
    %6691 = vmatprep.mubr.bf16.mxu0 %v4357
    %6692 = vmatmul.mubr.bf16.gmra.mxu0 %v4356
    %v6693 = vpop.f32.mrf.mxu0
    %v6694 = vadd.f32 %v6253, %v6693
    %v6695 = vpop.f32.mrf.mxu0
    %v6696 = vadd.f32 %v6255, %v6695
    %v6697 = vpop.f32.mrf.mxu0
    %v6698 = vadd.f32 %v6257, %v6697
    %v6699 = vpop.f32.mrf.mxu0
    %v6700 = vadd.f32 %v6259, %v6699
    %6701 = vmatprep.mubr.bf16.mxu0 %v4360
    %6702 = vmatmul.mubr.bf16.gmra.mxu0 %v4359
    %v6703 = vpop.f32.mrf.mxu0
    %v6704 = vadd.f32 %v6263, %v6703
    %v6705 = vpop.f32.mrf.mxu0
    %v6706 = vadd.f32 %v6265, %v6705
    %v6707 = vpop.f32.mrf.mxu0
    %v6708 = vadd.f32 %v6267, %v6707
    %v6709 = vpop.f32.mrf.mxu0
    %v6710 = vadd.f32 %v6269, %v6709
    %6711 = vmatprep.mubr.bf16.mxu0 %v4363
    %6712 = vmatmul.mubr.bf16.gmra.mxu0 %v4362
    %v6713 = vpop.f32.mrf.mxu0
    %v6714 = vadd.f32 %v6273, %v6713
    %v6715 = vpop.f32.mrf.mxu0
    %v6716 = vadd.f32 %v6275, %v6715
    %v6717 = vpop.f32.mrf.mxu0
    %v6718 = vadd.f32 %v6277, %v6717
    %v6719 = vpop.f32.mrf.mxu0
    %v6720 = vadd.f32 %v6279, %v6719
    %6721 = vmatprep.mubr.bf16.mxu0 %v4366
    %6722 = vmatmul.mubr.bf16.gmra.mxu0 %v4365
    %v6723 = vpop.f32.mrf.mxu0
    %v6724 = vadd.f32 %v6283, %v6723
    %v6725 = vpop.f32.mrf.mxu0
    %v6726 = vadd.f32 %v6285, %v6725
    %v6727 = vpop.f32.mrf.mxu0
    %v6728 = vadd.f32 %v6287, %v6727
    %v6729 = vpop.f32.mrf.mxu0
    %v6730 = vadd.f32 %v6289, %v6729
    %6731 = vmatprep.mubr.bf16.mxu0 %v4369
    %6732 = vmatmul.mubr.bf16.gmra.mxu0 %v4368
    %v6733 = vpop.f32.mrf.mxu0
    %v6734 = vadd.f32 %v6293, %v6733
    %v6735 = vpop.f32.mrf.mxu0
    %v6736 = vadd.f32 %v6295, %v6735
    %v6737 = vpop.f32.mrf.mxu0
    %v6738 = vadd.f32 %v6297, %v6737
    %v6739 = vpop.f32.mrf.mxu0
    %v6740 = vadd.f32 %v6299, %v6739
    %6741 = vmatprep.mubr.bf16.mxu0 %v4372
    %6742 = vmatmul.mubr.bf16.gmra.mxu0 %v4371
    %v6743 = vpop.f32.mrf.mxu0
    %v6744 = vadd.f32 %v6303, %v6743
    %v6745 = vpop.f32.mrf.mxu0
    %v6746 = vadd.f32 %v6305, %v6745
    %v6747 = vpop.f32.mrf.mxu0
    %v6748 = vadd.f32 %v6307, %v6747
    %v6749 = vpop.f32.mrf.mxu0
    %v6750 = vadd.f32 %v6309, %v6749
    %6751 = vmatprep.mubr.bf16.mxu0 %v4375
    %6752 = vmatmul.mubr.bf16.gmra.mxu0 %v4374
    %v6753 = vpop.f32.mrf.mxu0
    %v6754 = vadd.f32 %v6313, %v6753
    %v6755 = vpop.f32.mrf.mxu0
    %v6756 = vadd.f32 %v6315, %v6755
    %v6757 = vpop.f32.mrf.mxu0
    %v6758 = vadd.f32 %v6317, %v6757
    %v6759 = vpop.f32.mrf.mxu0
    %v6760 = vadd.f32 %v6319, %v6759
    %6761 = vmatprep.mubr.bf16.mxu0 %v4378
    %6762 = vmatmul.mubr.bf16.gmra.mxu0 %v4377
    %v6763 = vpop.f32.mrf.mxu0
    %v6764 = vadd.f32 %v6323, %v6763
    %v6765 = vpop.f32.mrf.mxu0
    %v6766 = vadd.f32 %v6325, %v6765
    %v6767 = vpop.f32.mrf.mxu0
    %v6768 = vadd.f32 %v6327, %v6767
    %v6769 = vpop.f32.mrf.mxu0
    %v6770 = vadd.f32 %v6329, %v6769
    %6771 = vmatprep.mubr.bf16.mxu0 %v4381
    %6772 = vmatmul.mubr.bf16.gmra.mxu0 %v4380
    %v6773 = vpop.f32.mrf.mxu0
    %v6774 = vadd.f32 %v6333, %v6773
    %v6775 = vpop.f32.mrf.mxu0
    %v6776 = vadd.f32 %v6335, %v6775
    %v6777 = vpop.f32.mrf.mxu0
    %v6778 = vadd.f32 %v6337, %v6777
    %v6779 = vpop.f32.mrf.mxu0
    %v6780 = vadd.f32 %v6339, %v6779
    %6781 = vmatprep.mubr.bf16.mxu0 %v4384
    %6782 = vmatmul.mubr.bf16.gmra.mxu0 %v4383
    %v6783 = vpop.f32.mrf.mxu0
    %v6784 = vadd.f32 %v6343, %v6783
    %v6785 = vpop.f32.mrf.mxu0
    %v6786 = vadd.f32 %v6345, %v6785
    %v6787 = vpop.f32.mrf.mxu0
    %v6788 = vadd.f32 %v6347, %v6787
    %v6789 = vpop.f32.mrf.mxu0
    %v6790 = vadd.f32 %v6349, %v6789
    %6791 = vmatprep.mubr.bf16.mxu0 %v4387
    %6792 = vmatmul.mubr.bf16.gmra.mxu0 %v4386
    %v6793 = vpop.f32.mrf.mxu0
    %v6794 = vadd.f32 %v6353, %v6793
    %v6795 = vpop.f32.mrf.mxu0
    %v6796 = vadd.f32 %v6355, %v6795
    %v6797 = vpop.f32.mrf.mxu0
    %v6798 = vadd.f32 %v6357, %v6797
    %v6799 = vpop.f32.mrf.mxu0
    %v6800 = vadd.f32 %v6359, %v6799
    %6801 = vmatprep.mubr.bf16.mxu0 %v4390
    %6802 = vmatmul.mubr.bf16.gmra.mxu0 %v4389
    %v6803 = vpop.f32.mrf.mxu0
    %v6804 = vadd.f32 %v6363, %v6803
    %v6805 = vpop.f32.mrf.mxu0
    %v6806 = vadd.f32 %v6365, %v6805
    %v6807 = vpop.f32.mrf.mxu0
    %v6808 = vadd.f32 %v6367, %v6807
    %v6809 = vpop.f32.mrf.mxu0
    %v6810 = vadd.f32 %v6369, %v6809
    %6811 = vmatprep.mubr.bf16.mxu0 %v4393
    %6812 = vmatmul.mubr.bf16.gmra.mxu0 %v4392
    %v6813 = vpop.f32.mrf.mxu0
    %v6814 = vadd.f32 %v6373, %v6813
    %v6815 = vpop.f32.mrf.mxu0
    %v6816 = vadd.f32 %v6375, %v6815
    %v6817 = vpop.f32.mrf.mxu0
    %v6818 = vadd.f32 %v6377, %v6817
    %v6819 = vpop.f32.mrf.mxu0
    %v6820 = vadd.f32 %v6379, %v6819
    %6821 = vmatprep.mubr.bf16.mxu0 %v4396
    %6822 = vmatmul.mubr.bf16.gmra.mxu0 %v4395
    %v6823 = vpop.f32.mrf.mxu0
    %v6824 = vadd.f32 %v6383, %v6823
    %v6825 = vpop.f32.mrf.mxu0
    %v6826 = vadd.f32 %v6385, %v6825
    %v6827 = vpop.f32.mrf.mxu0
    %v6828 = vadd.f32 %v6387, %v6827
    %v6829 = vpop.f32.mrf.mxu0
    %v6830 = vadd.f32 %v6389, %v6829
    %6831 = vmatprep.mubr.bf16.mxu0 %v4399
    %6832 = vmatmul.mubr.bf16.gmra.mxu0 %v4398
    %v6833 = vpop.f32.mrf.mxu0
    %v6834 = vadd.f32 %v6393, %v6833
    %v6835 = vpop.f32.mrf.mxu0
    %v6836 = vadd.f32 %v6395, %v6835
    %v6837 = vpop.f32.mrf.mxu0
    %v6838 = vadd.f32 %v6397, %v6837
    %v6839 = vpop.f32.mrf.mxu0
    %v6840 = vadd.f32 %v6399, %v6839
    %6841 = vmatprep.mubr.bf16.mxu0 %v4402
    %6842 = vmatmul.mubr.bf16.gmra.mxu0 %v4401
    %v6843 = vpop.f32.mrf.mxu0
    %v6844 = vadd.f32 %v6403, %v6843
    %v6845 = vpop.f32.mrf.mxu0
    %v6846 = vadd.f32 %v6405, %v6845
    %v6847 = vpop.f32.mrf.mxu0
    %v6848 = vadd.f32 %v6407, %v6847
    %v6849 = vpop.f32.mrf.mxu0
    %v6850 = vadd.f32 %v6409, %v6849
    %6851 = vmatprep.mubr.bf16.mxu0 %v4405
    %6852 = vmatmul.mubr.bf16.gmra.mxu0 %v4404
    %v6853 = vpop.f32.mrf.mxu0
    %v6854 = vadd.f32 %v6413, %v6853
    %v6855 = vpop.f32.mrf.mxu0
    %v6856 = vadd.f32 %v6415, %v6855
    %v6857 = vpop.f32.mrf.mxu0
    %v6858 = vadd.f32 %v6417, %v6857
    %v6859 = vpop.f32.mrf.mxu0
    %v6860 = vadd.f32 %v6419, %v6859
    %6861 = vmatprep.mubr.bf16.mxu0 %v4408
    %6862 = vmatmul.mubr.bf16.gmra.mxu0 %v4407
    %v6863 = vpop.f32.mrf.mxu0
    %v6864 = vadd.f32 %v6423, %v6863
    %v6865 = vpop.f32.mrf.mxu0
    %v6866 = vadd.f32 %v6425, %v6865
    %v6867 = vpop.f32.mrf.mxu0
    %v6868 = vadd.f32 %v6427, %v6867
    %v6869 = vpop.f32.mrf.mxu0
    %v6870 = vadd.f32 %v6429, %v6869
    %6871 = vmatprep.mubr.bf16.mxu0 %v4411
    %6872 = vmatmul.mubr.bf16.gmra.mxu0 %v4410
    %v6873 = vpop.f32.mrf.mxu0
    %v6874 = vadd.f32 %v6433, %v6873
    %v6875 = vpop.f32.mrf.mxu0
    %v6876 = vadd.f32 %v6435, %v6875
    %v6877 = vpop.f32.mrf.mxu0
    %v6878 = vadd.f32 %v6437, %v6877
    %v6879 = vpop.f32.mrf.mxu0
    %v6880 = vadd.f32 %v6439, %v6879
    %6881 = vmatprep.mubr.bf16.mxu0 %v4414
    %6882 = vmatmul.mubr.bf16.gmra.mxu0 %v4413
    %v6883 = vpop.f32.mrf.mxu0
    %v6884 = vadd.f32 %v6443, %v6883
    %v6885 = vpop.f32.mrf.mxu0
    %v6886 = vadd.f32 %v6445, %v6885
    %v6887 = vpop.f32.mrf.mxu0
    %v6888 = vpop.f32.mrf.mxu0
    %6889 = vdwg.mxu0
    %6890 = vmatprep.subr.bf16.mxu0 %v5214
    %6891 = vmatpush1.bf16.msra.mxu0 %v5213
    %6892 = vmatprep.subr.bf16.mxu0 %v5210
    %6893 = vmatpush1.bf16.msra.mxu0 %v5209
    %6894 = vmatprep.subr.bf16.mxu0 %v5206
    %6895 = vmatpush1.bf16.msra.mxu0 %v5205
    %6896 = vmatprep.subr.bf16.mxu0 %v5202
    %6897 = vmatpush1.bf16.msra.mxu0 %v5201
    %6898 = vmatprep.subr.bf16.mxu0 %v5198
    %6899 = vmatpush1.bf16.msra.mxu0 %v5197
    %6900 = vmatprep.subr.bf16.mxu0 %v5194
    %6901 = vmatpush1.bf16.msra.mxu0 %v5193
    %6902 = vmatprep.subr.bf16.mxu0 %v5190
    %6903 = vmatpush1.bf16.msra.mxu0 %v5189
    %6904 = vmatprep.subr.bf16.mxu0 %v5186
    %6905 = vmatpush1.bf16.msra.mxu0 %v5185
    %6906 = vmatprep.subr.bf16.mxu0 %v5246
    %6907 = vmatpush2.bf16.msra.mxu0 %v5245
    %6908 = vmatprep.subr.bf16.mxu0 %v5242
    %6909 = vmatpush2.bf16.msra.mxu0 %v5241
    %6910 = vmatprep.subr.bf16.mxu0 %v5238
    %6911 = vmatpush2.bf16.msra.mxu0 %v5237
    %6912 = vmatprep.subr.bf16.mxu0 %v5234
    %6913 = vmatpush2.bf16.msra.mxu0 %v5233
    %6914 = vmatprep.subr.bf16.mxu0 %v5230
    %6915 = vmatpush2.bf16.msra.mxu0 %v5229
    %6916 = vmatprep.subr.bf16.mxu0 %v5226
    %6917 = vmatpush2.bf16.msra.mxu0 %v5225
    %6918 = vmatprep.subr.bf16.mxu0 %v5222
    %6919 = vmatpush2.bf16.msra.mxu0 %v5221
    %6920 = vmatprep.subr.bf16.mxu0 %v5218
    %6921 = vmatpush2.bf16.msra.mxu0 %v5217
    %6922 = vmatprep.mubr.bf16.mxu0 %v3684
    %6923 = vmatmul.mubr.bf16.gmra.mxu0 %v3683
    %v6924 = vpop.f32.mrf.mxu0
    %v6925 = vadd.f32 0.0, %v6924
    %v6926 = vpop.f32.mrf.mxu0
    %v6927 = vadd.f32 0.0, %v6926
    %v6928 = vpop.f32.mrf.mxu0
    %v6929 = vadd.f32 0.0, %v6928
    %v6930 = vpop.f32.mrf.mxu0
    %v6931 = vadd.f32 0.0, %v6930
    %6932 = vmatprep.mubr.bf16.mxu0 %v3687
    %6933 = vmatmul.mubr.bf16.gmra.mxu0 %v3686
    %v6934 = vpop.f32.mrf.mxu0
    %v6935 = vadd.f32 0.0, %v6934
    %v6936 = vpop.f32.mrf.mxu0
    %v6937 = vadd.f32 0.0, %v6936
    %v6938 = vpop.f32.mrf.mxu0
    %v6939 = vadd.f32 0.0, %v6938
    %v6940 = vpop.f32.mrf.mxu0
    %v6941 = vadd.f32 0.0, %v6940
    %6942 = vmatprep.mubr.bf16.mxu0 %v3690
    %6943 = vmatmul.mubr.bf16.gmra.mxu0 %v3689
    %v6944 = vpop.f32.mrf.mxu0
    %v6945 = vadd.f32 0.0, %v6944
    %v6946 = vpop.f32.mrf.mxu0
    %v6947 = vadd.f32 0.0, %v6946
    %v6948 = vpop.f32.mrf.mxu0
    %v6949 = vadd.f32 0.0, %v6948
    %v6950 = vpop.f32.mrf.mxu0
    %v6951 = vadd.f32 0.0, %v6950
    %6952 = vmatprep.mubr.bf16.mxu0 %v3693
    %6953 = vmatmul.mubr.bf16.gmra.mxu0 %v3692
    %v6954 = vpop.f32.mrf.mxu0
    %v6955 = vadd.f32 0.0, %v6954
    %v6956 = vpop.f32.mrf.mxu0
    %v6957 = vadd.f32 0.0, %v6956
    %v6958 = vpop.f32.mrf.mxu0
    %v6959 = vadd.f32 0.0, %v6958
    %v6960 = vpop.f32.mrf.mxu0
    %v6961 = vadd.f32 0.0, %v6960
    %6962 = vmatprep.mubr.bf16.mxu0 %v3696
    %6963 = vmatmul.mubr.bf16.gmra.mxu0 %v3695
    %v6964 = vpop.f32.mrf.mxu0
    %v6965 = vadd.f32 0.0, %v6964
    %v6966 = vpop.f32.mrf.mxu0
    %v6967 = vadd.f32 0.0, %v6966
    %v6968 = vpop.f32.mrf.mxu0
    %v6969 = vadd.f32 0.0, %v6968
    %v6970 = vpop.f32.mrf.mxu0
    %v6971 = vadd.f32 0.0, %v6970
    %6972 = vmatprep.mubr.bf16.mxu0 %v3699
    %6973 = vmatmul.mubr.bf16.gmra.mxu0 %v3698
    %v6974 = vpop.f32.mrf.mxu0
    %v6975 = vadd.f32 0.0, %v6974
    %v6976 = vpop.f32.mrf.mxu0
    %v6977 = vadd.f32 0.0, %v6976
    %v6978 = vpop.f32.mrf.mxu0
    %v6979 = vadd.f32 0.0, %v6978
    %v6980 = vpop.f32.mrf.mxu0
    %v6981 = vadd.f32 0.0, %v6980
    %6982 = vmatprep.mubr.bf16.mxu0 %v3702
    %6983 = vmatmul.mubr.bf16.gmra.mxu0 %v3701
    %v6984 = vpop.f32.mrf.mxu0
    %v6985 = vadd.f32 0.0, %v6984
    %v6986 = vpop.f32.mrf.mxu0
    %v6987 = vadd.f32 0.0, %v6986
    %v6988 = vpop.f32.mrf.mxu0
    %v6989 = vadd.f32 0.0, %v6988
    %v6990 = vpop.f32.mrf.mxu0
    %v6991 = vadd.f32 0.0, %v6990
    %6992 = vmatprep.mubr.bf16.mxu0 %v3705
    %6993 = vmatmul.mubr.bf16.gmra.mxu0 %v3704
    %v6994 = vpop.f32.mrf.mxu0
    %v6995 = vadd.f32 0.0, %v6994
    %v6996 = vpop.f32.mrf.mxu0
    %v6997 = vadd.f32 0.0, %v6996
    %v6998 = vpop.f32.mrf.mxu0
    %v6999 = vadd.f32 0.0, %v6998
    %v7000 = vpop.f32.mrf.mxu0
    %v7001 = vadd.f32 0.0, %v7000
    %7002 = vmatprep.mubr.bf16.mxu0 %v3708
    %7003 = vmatmul.mubr.bf16.gmra.mxu0 %v3707
    %v7004 = vpop.f32.mrf.mxu0
    %v7005 = vadd.f32 0.0, %v7004
    %v7006 = vpop.f32.mrf.mxu0
    %v7007 = vadd.f32 0.0, %v7006
    %v7008 = vpop.f32.mrf.mxu0
    %v7009 = vadd.f32 0.0, %v7008
    %v7010 = vpop.f32.mrf.mxu0
    %v7011 = vadd.f32 0.0, %v7010
    %7012 = vmatprep.mubr.bf16.mxu0 %v3711
    %7013 = vmatmul.mubr.bf16.gmra.mxu0 %v3710
    %v7014 = vpop.f32.mrf.mxu0
    %v7015 = vadd.f32 0.0, %v7014
    %v7016 = vpop.f32.mrf.mxu0
    %v7017 = vadd.f32 0.0, %v7016
    %v7018 = vpop.f32.mrf.mxu0
    %v7019 = vadd.f32 0.0, %v7018
    %v7020 = vpop.f32.mrf.mxu0
    %v7021 = vadd.f32 0.0, %v7020
    %7022 = vmatprep.mubr.bf16.mxu0 %v3714
    %7023 = vmatmul.mubr.bf16.gmra.mxu0 %v3713
    %v7024 = vpop.f32.mrf.mxu0
    %v7025 = vadd.f32 0.0, %v7024
    %v7026 = vpop.f32.mrf.mxu0
    %v7027 = vadd.f32 0.0, %v7026
    %v7028 = vpop.f32.mrf.mxu0
    %v7029 = vadd.f32 0.0, %v7028
    %v7030 = vpop.f32.mrf.mxu0
    %v7031 = vadd.f32 0.0, %v7030
    %7032 = vmatprep.mubr.bf16.mxu0 %v3717
    %7033 = vmatmul.mubr.bf16.gmra.mxu0 %v3716
    %v7034 = vpop.f32.mrf.mxu0
    %v7035 = vadd.f32 0.0, %v7034
    %v7036 = vpop.f32.mrf.mxu0
    %v7037 = vadd.f32 0.0, %v7036
    %v7038 = vpop.f32.mrf.mxu0
    %v7039 = vadd.f32 0.0, %v7038
    %v7040 = vpop.f32.mrf.mxu0
    %v7041 = vadd.f32 0.0, %v7040
    %7042 = vmatprep.mubr.bf16.mxu0 %v3720
    %7043 = vmatmul.mubr.bf16.gmra.mxu0 %v3719
    %v7044 = vpop.f32.mrf.mxu0
    %v7045 = vadd.f32 0.0, %v7044
    %v7046 = vpop.f32.mrf.mxu0
    %v7047 = vadd.f32 0.0, %v7046
    %v7048 = vpop.f32.mrf.mxu0
    %v7049 = vadd.f32 0.0, %v7048
    %v7050 = vpop.f32.mrf.mxu0
    %v7051 = vadd.f32 0.0, %v7050
    %7052 = vmatprep.mubr.bf16.mxu0 %v3723
    %7053 = vmatmul.mubr.bf16.gmra.mxu0 %v3722
    %v7054 = vpop.f32.mrf.mxu0
    %v7055 = vadd.f32 0.0, %v7054
    %v7056 = vpop.f32.mrf.mxu0
    %v7057 = vadd.f32 0.0, %v7056
    %v7058 = vpop.f32.mrf.mxu0
    %v7059 = vadd.f32 0.0, %v7058
    %v7060 = vpop.f32.mrf.mxu0
    %v7061 = vadd.f32 0.0, %v7060
    %7062 = vmatprep.mubr.bf16.mxu0 %v3726
    %7063 = vmatmul.mubr.bf16.gmra.mxu0 %v3725
    %v7064 = vpop.f32.mrf.mxu0
    %v7065 = vadd.f32 0.0, %v7064
    %v7066 = vpop.f32.mrf.mxu0
    %v7067 = vadd.f32 0.0, %v7066
    %v7068 = vpop.f32.mrf.mxu0
    %v7069 = vadd.f32 0.0, %v7068
    %v7070 = vpop.f32.mrf.mxu0
    %v7071 = vadd.f32 0.0, %v7070
    %7072 = vmatprep.mubr.bf16.mxu0 %v3729
    %7073 = vmatmul.mubr.bf16.gmra.mxu0 %v3728
    %v7074 = vpop.f32.mrf.mxu0
    %v7075 = vadd.f32 0.0, %v7074
    %v7076 = vpop.f32.mrf.mxu0
    %v7077 = vadd.f32 0.0, %v7076
    %v7078 = vpop.f32.mrf.mxu0
    %v7079 = vadd.f32 0.0, %v7078
    %v7080 = vpop.f32.mrf.mxu0
    %v7081 = vadd.f32 0.0, %v7080
    %7082 = vmatprep.mubr.bf16.mxu0 %v3732
    %7083 = vmatmul.mubr.bf16.gmra.mxu0 %v3731
    %v7084 = vpop.f32.mrf.mxu0
    %v7085 = vadd.f32 0.0, %v7084
    %v7086 = vpop.f32.mrf.mxu0
    %v7087 = vadd.f32 0.0, %v7086
    %v7088 = vpop.f32.mrf.mxu0
    %v7089 = vadd.f32 0.0, %v7088
    %v7090 = vpop.f32.mrf.mxu0
    %v7091 = vadd.f32 0.0, %v7090
    %7092 = vmatprep.mubr.bf16.mxu0 %v3735
    %7093 = vmatmul.mubr.bf16.gmra.mxu0 %v3734
    %v7094 = vpop.f32.mrf.mxu0
    %v7095 = vadd.f32 0.0, %v7094
    %v7096 = vpop.f32.mrf.mxu0
    %v7097 = vadd.f32 0.0, %v7096
    %v7098 = vpop.f32.mrf.mxu0
    %v7099 = vadd.f32 0.0, %v7098
    %v7100 = vpop.f32.mrf.mxu0
    %v7101 = vadd.f32 0.0, %v7100
    %7102 = vmatprep.mubr.bf16.mxu0 %v3738
    %7103 = vmatmul.mubr.bf16.gmra.mxu0 %v3737
    %v7104 = vpop.f32.mrf.mxu0
    %v7105 = vadd.f32 0.0, %v7104
    %v7106 = vpop.f32.mrf.mxu0
    %v7107 = vadd.f32 0.0, %v7106
    %v7108 = vpop.f32.mrf.mxu0
    %v7109 = vadd.f32 0.0, %v7108
    %v7110 = vpop.f32.mrf.mxu0
    %v7111 = vadd.f32 0.0, %v7110
    %7112 = vmatprep.mubr.bf16.mxu0 %v3741
    %7113 = vmatmul.mubr.bf16.gmra.mxu0 %v3740
    %v7114 = vpop.f32.mrf.mxu0
    %v7115 = vadd.f32 0.0, %v7114
    %v7116 = vpop.f32.mrf.mxu0
    %v7117 = vadd.f32 0.0, %v7116
    %v7118 = vpop.f32.mrf.mxu0
    %v7119 = vadd.f32 0.0, %v7118
    %v7120 = vpop.f32.mrf.mxu0
    %v7121 = vadd.f32 0.0, %v7120
    %7122 = vmatprep.mubr.bf16.mxu0 %v3744
    %7123 = vmatmul.mubr.bf16.gmra.mxu0 %v3743
    %v7124 = vpop.f32.mrf.mxu0
    %v7125 = vadd.f32 0.0, %v7124
    %v7126 = vpop.f32.mrf.mxu0
    %v7127 = vadd.f32 0.0, %v7126
    %v7128 = vpop.f32.mrf.mxu0
    %v7129 = vadd.f32 0.0, %v7128
    %v7130 = vpop.f32.mrf.mxu0
    %v7131 = vadd.f32 0.0, %v7130
    %7132 = vmatprep.mubr.bf16.mxu0 %v3747
    %7133 = vmatmul.mubr.bf16.gmra.mxu0 %v3746
    %v7134 = vpop.f32.mrf.mxu0
    %v7135 = vadd.f32 0.0, %v7134
    %v7136 = vpop.f32.mrf.mxu0
    %v7137 = vadd.f32 0.0, %v7136
    %v7138 = vpop.f32.mrf.mxu0
    %v7139 = vadd.f32 0.0, %v7138
    %v7140 = vpop.f32.mrf.mxu0
    %v7141 = vadd.f32 0.0, %v7140
    %7142 = vmatprep.mubr.bf16.mxu0 %v3750
    %7143 = vmatmul.mubr.bf16.gmra.mxu0 %v3749
    %v7144 = vpop.f32.mrf.mxu0
    %v7145 = vadd.f32 0.0, %v7144
    %v7146 = vpop.f32.mrf.mxu0
    %v7147 = vadd.f32 0.0, %v7146
    %v7148 = vpop.f32.mrf.mxu0
    %v7149 = vadd.f32 0.0, %v7148
    %v7150 = vpop.f32.mrf.mxu0
    %v7151 = vadd.f32 0.0, %v7150
    %7152 = vmatprep.mubr.bf16.mxu0 %v3753
    %7153 = vmatmul.mubr.bf16.gmra.mxu0 %v3752
    %v7154 = vpop.f32.mrf.mxu0
    %v7155 = vadd.f32 0.0, %v7154
    %v7156 = vpop.f32.mrf.mxu0
    %v7157 = vadd.f32 0.0, %v7156
    %v7158 = vpop.f32.mrf.mxu0
    %v7159 = vadd.f32 0.0, %v7158
    %v7160 = vpop.f32.mrf.mxu0
    %v7161 = vadd.f32 0.0, %v7160
    %7162 = vmatprep.mubr.bf16.mxu0 %v3756
    %7163 = vmatmul.mubr.bf16.gmra.mxu0 %v3755
    %v7164 = vpop.f32.mrf.mxu0
    %v7165 = vadd.f32 0.0, %v7164
    %v7166 = vpop.f32.mrf.mxu0
    %v7167 = vadd.f32 0.0, %v7166
    %v7168 = vpop.f32.mrf.mxu0
    %v7169 = vadd.f32 0.0, %v7168
    %v7170 = vpop.f32.mrf.mxu0
    %v7171 = vadd.f32 0.0, %v7170
    %7172 = vmatprep.mubr.bf16.mxu0 %v3759
    %7173 = vmatmul.mubr.bf16.gmra.mxu0 %v3758
    %v7174 = vpop.f32.mrf.mxu0
    %v7175 = vadd.f32 0.0, %v7174
    %v7176 = vpop.f32.mrf.mxu0
    %v7177 = vadd.f32 0.0, %v7176
    %v7178 = vpop.f32.mrf.mxu0
    %v7179 = vadd.f32 0.0, %v7178
    %v7180 = vpop.f32.mrf.mxu0
    %v7181 = vadd.f32 0.0, %v7180
    %7182 = vmatprep.mubr.bf16.mxu0 %v3762
    %7183 = vmatmul.mubr.bf16.gmra.mxu0 %v3761
    %v7184 = vpop.f32.mrf.mxu0
    %v7185 = vadd.f32 0.0, %v7184
    %v7186 = vpop.f32.mrf.mxu0
    %v7187 = vadd.f32 0.0, %v7186
    %v7188 = vpop.f32.mrf.mxu0
    %v7189 = vadd.f32 0.0, %v7188
    %v7190 = vpop.f32.mrf.mxu0
    %v7191 = vadd.f32 0.0, %v7190
    %7192 = vmatprep.mubr.bf16.mxu0 %v3765
    %7193 = vmatmul.mubr.bf16.gmra.mxu0 %v3764
    %v7194 = vpop.f32.mrf.mxu0
    %v7195 = vadd.f32 0.0, %v7194
    %v7196 = vpop.f32.mrf.mxu0
    %v7197 = vadd.f32 0.0, %v7196
    %v7198 = vpop.f32.mrf.mxu0
    %v7199 = vadd.f32 0.0, %v7198
    %v7200 = vpop.f32.mrf.mxu0
    %v7201 = vadd.f32 0.0, %v7200
    %7202 = vmatprep.mubr.bf16.mxu0 %v3768
    %7203 = vmatmul.mubr.bf16.gmra.mxu0 %v3767
    %v7204 = vpop.f32.mrf.mxu0
    %v7205 = vadd.f32 0.0, %v7204
    %v7206 = vpop.f32.mrf.mxu0
    %v7207 = vadd.f32 0.0, %v7206
    %v7208 = vpop.f32.mrf.mxu0
    %v7209 = vadd.f32 0.0, %v7208
    %v7210 = vpop.f32.mrf.mxu0
    %v7211 = vadd.f32 0.0, %v7210
    %7212 = vmatprep.mubr.bf16.mxu0 %v3771
    %7213 = vmatmul.mubr.bf16.gmra.mxu0 %v3770
    %v7214 = vpop.f32.mrf.mxu0
    %v7215 = vadd.f32 0.0, %v7214
    %v7216 = vpop.f32.mrf.mxu0
    %v7217 = vadd.f32 0.0, %v7216
    %v7218 = vpop.f32.mrf.mxu0
    %v7219 = vadd.f32 0.0, %v7218
    %v7220 = vpop.f32.mrf.mxu0
    %v7221 = vadd.f32 0.0, %v7220
    %7222 = vmatprep.mubr.bf16.mxu0 %v3774
    %7223 = vmatmul.mubr.bf16.gmra.mxu0 %v3773
    %v7224 = vpop.f32.mrf.mxu0
    %v7225 = vadd.f32 0.0, %v7224
    %v7226 = vpop.f32.mrf.mxu0
    %v7227 = vadd.f32 0.0, %v7226
    %v7228 = vpop.f32.mrf.mxu0
    %v7229 = vadd.f32 0.0, %v7228
    %v7230 = vpop.f32.mrf.mxu0
    %v7231 = vadd.f32 0.0, %v7230
    %7232 = vmatprep.mubr.bf16.mxu0 %v3777
    %7233 = vmatmul.mubr.bf16.gmra.mxu0 %v3776
    %v7234 = vpop.f32.mrf.mxu0
    %v7235 = vadd.f32 0.0, %v7234
    %v7236 = vpop.f32.mrf.mxu0
    %v7237 = vadd.f32 0.0, %v7236
    %v7238 = vpop.f32.mrf.mxu0
    %v7239 = vadd.f32 0.0, %v7238
    %v7240 = vpop.f32.mrf.mxu0
    %v7241 = vadd.f32 0.0, %v7240
    %7242 = vmatprep.mubr.bf16.mxu0 %v3780
    %7243 = vmatmul.mubr.bf16.gmra.mxu0 %v3779
    %v7244 = vpop.f32.mrf.mxu0
    %v7245 = vadd.f32 0.0, %v7244
    %v7246 = vpop.f32.mrf.mxu0
    %v7247 = vadd.f32 0.0, %v7246
    %v7248 = vpop.f32.mrf.mxu0
    %v7249 = vadd.f32 0.0, %v7248
    %v7250 = vpop.f32.mrf.mxu0
    %v7251 = vadd.f32 0.0, %v7250
    %7252 = vmatprep.mubr.bf16.mxu0 %v3783
    %7253 = vmatmul.mubr.bf16.gmra.mxu0 %v3782
    %v7254 = vpop.f32.mrf.mxu0
    %v7255 = vadd.f32 0.0, %v7254
    %v7256 = vpop.f32.mrf.mxu0
    %v7257 = vadd.f32 0.0, %v7256
    %v7258 = vpop.f32.mrf.mxu0
    %v7259 = vadd.f32 0.0, %v7258
    %v7260 = vpop.f32.mrf.mxu0
    %v7261 = vadd.f32 0.0, %v7260
    %7262 = vmatprep.mubr.bf16.mxu0 %v3786
    %7263 = vmatmul.mubr.bf16.gmra.mxu0 %v3785
    %v7264 = vpop.f32.mrf.mxu0
    %v7265 = vadd.f32 0.0, %v7264
    %v7266 = vpop.f32.mrf.mxu0
    %v7267 = vadd.f32 0.0, %v7266
    %v7268 = vpop.f32.mrf.mxu0
    %v7269 = vadd.f32 0.0, %v7268
    %v7270 = vpop.f32.mrf.mxu0
    %v7271 = vadd.f32 0.0, %v7270
    %7272 = vmatprep.mubr.bf16.mxu0 %v3789
    %7273 = vmatmul.mubr.bf16.gmra.mxu0 %v3788
    %v7274 = vpop.f32.mrf.mxu0
    %v7275 = vadd.f32 0.0, %v7274
    %v7276 = vpop.f32.mrf.mxu0
    %v7277 = vadd.f32 0.0, %v7276
    %v7278 = vpop.f32.mrf.mxu0
    %v7279 = vadd.f32 0.0, %v7278
    %v7280 = vpop.f32.mrf.mxu0
    %v7281 = vadd.f32 0.0, %v7280
    %7282 = vmatprep.mubr.bf16.mxu0 %v3792
    %7283 = vmatmul.mubr.bf16.gmra.mxu0 %v3791
    %v7284 = vpop.f32.mrf.mxu0
    %v7285 = vadd.f32 0.0, %v7284
    %v7286 = vpop.f32.mrf.mxu0
    %v7287 = vadd.f32 0.0, %v7286
    %v7288 = vpop.f32.mrf.mxu0
    %v7289 = vadd.f32 0.0, %v7288
    %v7290 = vpop.f32.mrf.mxu0
    %v7291 = vadd.f32 0.0, %v7290
    %7292 = vmatprep.mubr.bf16.mxu0 %v3795
    %7293 = vmatmul.mubr.bf16.gmra.mxu0 %v3794
    %v7294 = vpop.f32.mrf.mxu0
    %v7295 = vadd.f32 0.0, %v7294
    %v7296 = vpop.f32.mrf.mxu0
    %v7297 = vadd.f32 0.0, %v7296
    %v7298 = vpop.f32.mrf.mxu0
    %v7299 = vadd.f32 0.0, %v7298
    %v7300 = vpop.f32.mrf.mxu0
    %v7301 = vadd.f32 0.0, %v7300
    %7302 = vmatprep.mubr.bf16.mxu0 %v3798
    %7303 = vmatmul.mubr.bf16.gmra.mxu0 %v3797
    %v7304 = vpop.f32.mrf.mxu0
    %v7305 = vadd.f32 0.0, %v7304
    %v7306 = vpop.f32.mrf.mxu0
    %v7307 = vadd.f32 0.0, %v7306
    %v7308 = vpop.f32.mrf.mxu0
    %v7309 = vadd.f32 0.0, %v7308
    %v7310 = vpop.f32.mrf.mxu0
    %v7311 = vadd.f32 0.0, %v7310
    %7312 = vmatprep.mubr.bf16.mxu0 %v3801
    %7313 = vmatmul.mubr.bf16.gmra.mxu0 %v3800
    %v7314 = vpop.f32.mrf.mxu0
    %v7315 = vadd.f32 0.0, %v7314
    %v7316 = vpop.f32.mrf.mxu0
    %v7317 = vadd.f32 0.0, %v7316
    %v7318 = vpop.f32.mrf.mxu0
    %v7319 = vadd.f32 0.0, %v7318
    %v7320 = vpop.f32.mrf.mxu0
    %v7321 = vadd.f32 0.0, %v7320
    %7322 = vmatprep.mubr.bf16.mxu0 %v3804
    %7323 = vmatmul.mubr.bf16.gmra.mxu0 %v3803
    %v7324 = vpop.f32.mrf.mxu0
    %v7325 = vadd.f32 0.0, %v7324
    %v7326 = vpop.f32.mrf.mxu0
    %v7327 = vadd.f32 0.0, %v7326
    %v7328 = vpop.f32.mrf.mxu0
    %v7329 = vpop.f32.mrf.mxu0
    %7330 = vdwg.mxu0
    %7331 = vmatprep.subr.bf16.mxu0 %v5278
    %7332 = vmatpush1.bf16.msra.mxu0 %v5277
    %7333 = vmatprep.subr.bf16.mxu0 %v5274
    %7334 = vmatpush1.bf16.msra.mxu0 %v5273
    %7335 = vmatprep.subr.bf16.mxu0 %v5270
    %7336 = vmatpush1.bf16.msra.mxu0 %v5269
    %7337 = vmatprep.subr.bf16.mxu0 %v5266
    %7338 = vmatpush1.bf16.msra.mxu0 %v5265
    %7339 = vmatprep.subr.bf16.mxu0 %v5262
    %7340 = vmatpush1.bf16.msra.mxu0 %v5261
    %7341 = vmatprep.subr.bf16.mxu0 %v5258
    %7342 = vmatpush1.bf16.msra.mxu0 %v5257
    %7343 = vmatprep.subr.bf16.mxu0 %v5254
    %7344 = vmatpush1.bf16.msra.mxu0 %v5253
    %7345 = vmatprep.subr.bf16.mxu0 %v5250
    %7346 = vmatpush1.bf16.msra.mxu0 %v5249
    %7347 = vmatprep.subr.bf16.mxu0 %v5310
    %7348 = vmatpush2.bf16.msra.mxu0 %v5309
    %7349 = vmatprep.subr.bf16.mxu0 %v5306
    %7350 = vmatpush2.bf16.msra.mxu0 %v5305
    %7351 = vmatprep.subr.bf16.mxu0 %v5302
    %7352 = vmatpush2.bf16.msra.mxu0 %v5301
    %7353 = vmatprep.subr.bf16.mxu0 %v5298
    %7354 = vmatpush2.bf16.msra.mxu0 %v5297
    %7355 = vmatprep.subr.bf16.mxu0 %v5294
    %7356 = vmatpush2.bf16.msra.mxu0 %v5293
    %7357 = vmatprep.subr.bf16.mxu0 %v5290
    %7358 = vmatpush2.bf16.msra.mxu0 %v5289
    %7359 = vmatprep.subr.bf16.mxu0 %v5286
    %7360 = vmatpush2.bf16.msra.mxu0 %v5285
    %7361 = vmatprep.subr.bf16.mxu0 %v5282
    %7362 = vmatpush2.bf16.msra.mxu0 %v5281
    %7363 = vmatprep.mubr.bf16.mxu0 %v4292
    %7364 = vmatmul.mubr.bf16.gmra.mxu0 %v3685
    %v7365 = vpop.f32.mrf.mxu0
    %v7366 = vadd.f32 %v6925, %v7365
    %v7367 = vpop.f32.mrf.mxu0
    %v7368 = vadd.f32 %v6927, %v7367
    %v7369 = vpop.f32.mrf.mxu0
    %v7370 = vadd.f32 %v6929, %v7369
    %v7371 = vpop.f32.mrf.mxu0
    %v7372 = vadd.f32 %v6931, %v7371
    %7373 = vmatprep.mubr.bf16.mxu0 %v4295
    %7374 = vmatmul.mubr.bf16.gmra.mxu0 %v3688
    %v7375 = vpop.f32.mrf.mxu0
    %v7376 = vadd.f32 %v6935, %v7375
    %v7377 = vpop.f32.mrf.mxu0
    %v7378 = vadd.f32 %v6937, %v7377
    %v7379 = vpop.f32.mrf.mxu0
    %v7380 = vadd.f32 %v6939, %v7379
    %v7381 = vpop.f32.mrf.mxu0
    %v7382 = vadd.f32 %v6941, %v7381
    %7383 = vmatprep.mubr.bf16.mxu0 %v4298
    %7384 = vmatmul.mubr.bf16.gmra.mxu0 %v3691
    %v7385 = vpop.f32.mrf.mxu0
    %v7386 = vadd.f32 %v6945, %v7385
    %v7387 = vpop.f32.mrf.mxu0
    %v7388 = vadd.f32 %v6947, %v7387
    %v7389 = vpop.f32.mrf.mxu0
    %v7390 = vadd.f32 %v6949, %v7389
    %v7391 = vpop.f32.mrf.mxu0
    %v7392 = vadd.f32 %v6951, %v7391
    %7393 = vmatprep.mubr.bf16.mxu0 %v4301
    %7394 = vmatmul.mubr.bf16.gmra.mxu0 %v3694
    %v7395 = vpop.f32.mrf.mxu0
    %v7396 = vadd.f32 %v6955, %v7395
    %v7397 = vpop.f32.mrf.mxu0
    %v7398 = vadd.f32 %v6957, %v7397
    %v7399 = vpop.f32.mrf.mxu0
    %v7400 = vadd.f32 %v6959, %v7399
    %v7401 = vpop.f32.mrf.mxu0
    %v7402 = vadd.f32 %v6961, %v7401
    %7403 = vmatprep.mubr.bf16.mxu0 %v4304
    %7404 = vmatmul.mubr.bf16.gmra.mxu0 %v3697
    %v7405 = vpop.f32.mrf.mxu0
    %v7406 = vadd.f32 %v6965, %v7405
    %v7407 = vpop.f32.mrf.mxu0
    %v7408 = vadd.f32 %v6967, %v7407
    %v7409 = vpop.f32.mrf.mxu0
    %v7410 = vadd.f32 %v6969, %v7409
    %v7411 = vpop.f32.mrf.mxu0
    %v7412 = vadd.f32 %v6971, %v7411
    %7413 = vmatprep.mubr.bf16.mxu0 %v4307
    %7414 = vmatmul.mubr.bf16.gmra.mxu0 %v3700
    %v7415 = vpop.f32.mrf.mxu0
    %v7416 = vadd.f32 %v6975, %v7415
    %v7417 = vpop.f32.mrf.mxu0
    %v7418 = vadd.f32 %v6977, %v7417
    %v7419 = vpop.f32.mrf.mxu0
    %v7420 = vadd.f32 %v6979, %v7419
    %v7421 = vpop.f32.mrf.mxu0
    %v7422 = vadd.f32 %v6981, %v7421
    %7423 = vmatprep.mubr.bf16.mxu0 %v4310
    %7424 = vmatmul.mubr.bf16.gmra.mxu0 %v3703
    %v7425 = vpop.f32.mrf.mxu0
    %v7426 = vadd.f32 %v6985, %v7425
    %v7427 = vpop.f32.mrf.mxu0
    %v7428 = vadd.f32 %v6987, %v7427
    %v7429 = vpop.f32.mrf.mxu0
    %v7430 = vadd.f32 %v6989, %v7429
    %v7431 = vpop.f32.mrf.mxu0
    %v7432 = vadd.f32 %v6991, %v7431
    %7433 = vmatprep.mubr.bf16.mxu0 %v4313
    %7434 = vmatmul.mubr.bf16.gmra.mxu0 %v3706
    %v7435 = vpop.f32.mrf.mxu0
    %v7436 = vadd.f32 %v6995, %v7435
    %v7437 = vpop.f32.mrf.mxu0
    %v7438 = vadd.f32 %v6997, %v7437
    %v7439 = vpop.f32.mrf.mxu0
    %v7440 = vadd.f32 %v6999, %v7439
    %v7441 = vpop.f32.mrf.mxu0
    %v7442 = vadd.f32 %v7001, %v7441
    %7443 = vmatprep.mubr.bf16.mxu0 %v4316
    %7444 = vmatmul.mubr.bf16.gmra.mxu0 %v3709
    %v7445 = vpop.f32.mrf.mxu0
    %v7446 = vadd.f32 %v7005, %v7445
    %v7447 = vpop.f32.mrf.mxu0
    %v7448 = vadd.f32 %v7007, %v7447
    %v7449 = vpop.f32.mrf.mxu0
    %v7450 = vadd.f32 %v7009, %v7449
    %v7451 = vpop.f32.mrf.mxu0
    %v7452 = vadd.f32 %v7011, %v7451
    %7453 = vmatprep.mubr.bf16.mxu0 %v4319
    %7454 = vmatmul.mubr.bf16.gmra.mxu0 %v3712
    %v7455 = vpop.f32.mrf.mxu0
    %v7456 = vadd.f32 %v7015, %v7455
    %v7457 = vpop.f32.mrf.mxu0
    %v7458 = vadd.f32 %v7017, %v7457
    %v7459 = vpop.f32.mrf.mxu0
    %v7460 = vadd.f32 %v7019, %v7459
    %v7461 = vpop.f32.mrf.mxu0
    %v7462 = vadd.f32 %v7021, %v7461
    %7463 = vmatprep.mubr.bf16.mxu0 %v4322
    %7464 = vmatmul.mubr.bf16.gmra.mxu0 %v3715
    %v7465 = vpop.f32.mrf.mxu0
    %v7466 = vadd.f32 %v7025, %v7465
    %v7467 = vpop.f32.mrf.mxu0
    %v7468 = vadd.f32 %v7027, %v7467
    %v7469 = vpop.f32.mrf.mxu0
    %v7470 = vadd.f32 %v7029, %v7469
    %v7471 = vpop.f32.mrf.mxu0
    %v7472 = vadd.f32 %v7031, %v7471
    %7473 = vmatprep.mubr.bf16.mxu0 %v4325
    %7474 = vmatmul.mubr.bf16.gmra.mxu0 %v3718
    %v7475 = vpop.f32.mrf.mxu0
    %v7476 = vadd.f32 %v7035, %v7475
    %v7477 = vpop.f32.mrf.mxu0
    %v7478 = vadd.f32 %v7037, %v7477
    %v7479 = vpop.f32.mrf.mxu0
    %v7480 = vadd.f32 %v7039, %v7479
    %v7481 = vpop.f32.mrf.mxu0
    %v7482 = vadd.f32 %v7041, %v7481
    %7483 = vmatprep.mubr.bf16.mxu0 %v4328
    %7484 = vmatmul.mubr.bf16.gmra.mxu0 %v3721
    %v7485 = vpop.f32.mrf.mxu0
    %v7486 = vadd.f32 %v7045, %v7485
    %v7487 = vpop.f32.mrf.mxu0
    %v7488 = vadd.f32 %v7047, %v7487
    %v7489 = vpop.f32.mrf.mxu0
    %v7490 = vadd.f32 %v7049, %v7489
    %v7491 = vpop.f32.mrf.mxu0
    %v7492 = vadd.f32 %v7051, %v7491
    %7493 = vmatprep.mubr.bf16.mxu0 %v4331
    %7494 = vmatmul.mubr.bf16.gmra.mxu0 %v3724
    %v7495 = vpop.f32.mrf.mxu0
    %v7496 = vadd.f32 %v7055, %v7495
    %v7497 = vpop.f32.mrf.mxu0
    %v7498 = vadd.f32 %v7057, %v7497
    %v7499 = vpop.f32.mrf.mxu0
    %v7500 = vadd.f32 %v7059, %v7499
    %v7501 = vpop.f32.mrf.mxu0
    %v7502 = vadd.f32 %v7061, %v7501
    %7503 = vmatprep.mubr.bf16.mxu0 %v4334
    %7504 = vmatmul.mubr.bf16.gmra.mxu0 %v3727
    %v7505 = vpop.f32.mrf.mxu0
    %v7506 = vadd.f32 %v7065, %v7505
    %v7507 = vpop.f32.mrf.mxu0
    %v7508 = vadd.f32 %v7067, %v7507
    %v7509 = vpop.f32.mrf.mxu0
    %v7510 = vadd.f32 %v7069, %v7509
    %v7511 = vpop.f32.mrf.mxu0
    %v7512 = vadd.f32 %v7071, %v7511
    %7513 = vmatprep.mubr.bf16.mxu0 %v4337
    %7514 = vmatmul.mubr.bf16.gmra.mxu0 %v3730
    %v7515 = vpop.f32.mrf.mxu0
    %v7516 = vadd.f32 %v7075, %v7515
    %v7517 = vpop.f32.mrf.mxu0
    %v7518 = vadd.f32 %v7077, %v7517
    %v7519 = vpop.f32.mrf.mxu0
    %v7520 = vadd.f32 %v7079, %v7519
    %v7521 = vpop.f32.mrf.mxu0
    %v7522 = vadd.f32 %v7081, %v7521
    %7523 = vmatprep.mubr.bf16.mxu0 %v4340
    %7524 = vmatmul.mubr.bf16.gmra.mxu0 %v3733
    %v7525 = vpop.f32.mrf.mxu0
    %v7526 = vadd.f32 %v7085, %v7525
    %v7527 = vpop.f32.mrf.mxu0
    %v7528 = vadd.f32 %v7087, %v7527
    %v7529 = vpop.f32.mrf.mxu0
    %v7530 = vadd.f32 %v7089, %v7529
    %v7531 = vpop.f32.mrf.mxu0
    %v7532 = vadd.f32 %v7091, %v7531
    %7533 = vmatprep.mubr.bf16.mxu0 %v4343
    %7534 = vmatmul.mubr.bf16.gmra.mxu0 %v3736
    %v7535 = vpop.f32.mrf.mxu0
    %v7536 = vadd.f32 %v7095, %v7535
    %v7537 = vpop.f32.mrf.mxu0
    %v7538 = vadd.f32 %v7097, %v7537
    %v7539 = vpop.f32.mrf.mxu0
    %v7540 = vadd.f32 %v7099, %v7539
    %v7541 = vpop.f32.mrf.mxu0
    %v7542 = vadd.f32 %v7101, %v7541
    %7543 = vmatprep.mubr.bf16.mxu0 %v4346
    %7544 = vmatmul.mubr.bf16.gmra.mxu0 %v3739
    %v7545 = vpop.f32.mrf.mxu0
    %v7546 = vadd.f32 %v7105, %v7545
    %v7547 = vpop.f32.mrf.mxu0
    %v7548 = vadd.f32 %v7107, %v7547
    %v7549 = vpop.f32.mrf.mxu0
    %v7550 = vadd.f32 %v7109, %v7549
    %v7551 = vpop.f32.mrf.mxu0
    %v7552 = vadd.f32 %v7111, %v7551
    %7553 = vmatprep.mubr.bf16.mxu0 %v4349
    %7554 = vmatmul.mubr.bf16.gmra.mxu0 %v3742
    %v7555 = vpop.f32.mrf.mxu0
    %v7556 = vadd.f32 %v7115, %v7555
    %v7557 = vpop.f32.mrf.mxu0
    %v7558 = vadd.f32 %v7117, %v7557
    %v7559 = vpop.f32.mrf.mxu0
    %v7560 = vadd.f32 %v7119, %v7559
    %v7561 = vpop.f32.mrf.mxu0
    %v7562 = vadd.f32 %v7121, %v7561
    %7563 = vmatprep.mubr.bf16.mxu0 %v4352
    %7564 = vmatmul.mubr.bf16.gmra.mxu0 %v3745
    %v7565 = vpop.f32.mrf.mxu0
    %v7566 = vadd.f32 %v7125, %v7565
    %v7567 = vpop.f32.mrf.mxu0
    %v7568 = vadd.f32 %v7127, %v7567
    %v7569 = vpop.f32.mrf.mxu0
    %v7570 = vadd.f32 %v7129, %v7569
    %v7571 = vpop.f32.mrf.mxu0
    %v7572 = vadd.f32 %v7131, %v7571
    %7573 = vmatprep.mubr.bf16.mxu0 %v4355
    %7574 = vmatmul.mubr.bf16.gmra.mxu0 %v3748
    %v7575 = vpop.f32.mrf.mxu0
    %v7576 = vadd.f32 %v7135, %v7575
    %v7577 = vpop.f32.mrf.mxu0
    %v7578 = vadd.f32 %v7137, %v7577
    %v7579 = vpop.f32.mrf.mxu0
    %v7580 = vadd.f32 %v7139, %v7579
    %v7581 = vpop.f32.mrf.mxu0
    %v7582 = vadd.f32 %v7141, %v7581
    %7583 = vmatprep.mubr.bf16.mxu0 %v4358
    %7584 = vmatmul.mubr.bf16.gmra.mxu0 %v3751
    %v7585 = vpop.f32.mrf.mxu0
    %v7586 = vadd.f32 %v7145, %v7585
    %v7587 = vpop.f32.mrf.mxu0
    %v7588 = vadd.f32 %v7147, %v7587
    %v7589 = vpop.f32.mrf.mxu0
    %v7590 = vadd.f32 %v7149, %v7589
    %v7591 = vpop.f32.mrf.mxu0
    %v7592 = vadd.f32 %v7151, %v7591
    %7593 = vmatprep.mubr.bf16.mxu0 %v4361
    %7594 = vmatmul.mubr.bf16.gmra.mxu0 %v3754
    %v7595 = vpop.f32.mrf.mxu0
    %v7596 = vadd.f32 %v7155, %v7595
    %v7597 = vpop.f32.mrf.mxu0
    %v7598 = vadd.f32 %v7157, %v7597
    %v7599 = vpop.f32.mrf.mxu0
    %v7600 = vadd.f32 %v7159, %v7599
    %v7601 = vpop.f32.mrf.mxu0
    %v7602 = vadd.f32 %v7161, %v7601
    %7603 = vmatprep.mubr.bf16.mxu0 %v4364
    %7604 = vmatmul.mubr.bf16.gmra.mxu0 %v3757
    %v7605 = vpop.f32.mrf.mxu0
    %v7606 = vadd.f32 %v7165, %v7605
    %v7607 = vpop.f32.mrf.mxu0
    %v7608 = vadd.f32 %v7167, %v7607
    %v7609 = vpop.f32.mrf.mxu0
    %v7610 = vadd.f32 %v7169, %v7609
    %v7611 = vpop.f32.mrf.mxu0
    %v7612 = vadd.f32 %v7171, %v7611
    %7613 = vmatprep.mubr.bf16.mxu0 %v4367
    %7614 = vmatmul.mubr.bf16.gmra.mxu0 %v3760
    %v7615 = vpop.f32.mrf.mxu0
    %v7616 = vadd.f32 %v7175, %v7615
    %v7617 = vpop.f32.mrf.mxu0
    %v7618 = vadd.f32 %v7177, %v7617
    %v7619 = vpop.f32.mrf.mxu0
    %v7620 = vadd.f32 %v7179, %v7619
    %v7621 = vpop.f32.mrf.mxu0
    %v7622 = vadd.f32 %v7181, %v7621
    %7623 = vmatprep.mubr.bf16.mxu0 %v4370
    %7624 = vmatmul.mubr.bf16.gmra.mxu0 %v3763
    %v7625 = vpop.f32.mrf.mxu0
    %v7626 = vadd.f32 %v7185, %v7625
    %v7627 = vpop.f32.mrf.mxu0
    %v7628 = vadd.f32 %v7187, %v7627
    %v7629 = vpop.f32.mrf.mxu0
    %v7630 = vadd.f32 %v7189, %v7629
    %v7631 = vpop.f32.mrf.mxu0
    %v7632 = vadd.f32 %v7191, %v7631
    %7633 = vmatprep.mubr.bf16.mxu0 %v4373
    %7634 = vmatmul.mubr.bf16.gmra.mxu0 %v3766
    %v7635 = vpop.f32.mrf.mxu0
    %v7636 = vadd.f32 %v7195, %v7635
    %v7637 = vpop.f32.mrf.mxu0
    %v7638 = vadd.f32 %v7197, %v7637
    %v7639 = vpop.f32.mrf.mxu0
    %v7640 = vadd.f32 %v7199, %v7639
    %v7641 = vpop.f32.mrf.mxu0
    %v7642 = vadd.f32 %v7201, %v7641
    %7643 = vmatprep.mubr.bf16.mxu0 %v4376
    %7644 = vmatmul.mubr.bf16.gmra.mxu0 %v3769
    %v7645 = vpop.f32.mrf.mxu0
    %v7646 = vadd.f32 %v7205, %v7645
    %v7647 = vpop.f32.mrf.mxu0
    %v7648 = vadd.f32 %v7207, %v7647
    %v7649 = vpop.f32.mrf.mxu0
    %v7650 = vadd.f32 %v7209, %v7649
    %v7651 = vpop.f32.mrf.mxu0
    %v7652 = vadd.f32 %v7211, %v7651
    %7653 = vmatprep.mubr.bf16.mxu0 %v4379
    %7654 = vmatmul.mubr.bf16.gmra.mxu0 %v3772
    %v7655 = vpop.f32.mrf.mxu0
    %v7656 = vadd.f32 %v7215, %v7655
    %v7657 = vpop.f32.mrf.mxu0
    %v7658 = vadd.f32 %v7217, %v7657
    %v7659 = vpop.f32.mrf.mxu0
    %v7660 = vadd.f32 %v7219, %v7659
    %v7661 = vpop.f32.mrf.mxu0
    %v7662 = vadd.f32 %v7221, %v7661
    %7663 = vmatprep.mubr.bf16.mxu0 %v4382
    %7664 = vmatmul.mubr.bf16.gmra.mxu0 %v3775
    %v7665 = vpop.f32.mrf.mxu0
    %v7666 = vadd.f32 %v7225, %v7665
    %v7667 = vpop.f32.mrf.mxu0
    %v7668 = vadd.f32 %v7227, %v7667
    %v7669 = vpop.f32.mrf.mxu0
    %v7670 = vadd.f32 %v7229, %v7669
    %v7671 = vpop.f32.mrf.mxu0
    %v7672 = vadd.f32 %v7231, %v7671
    %7673 = vmatprep.mubr.bf16.mxu0 %v4385
    %7674 = vmatmul.mubr.bf16.gmra.mxu0 %v3778
    %v7675 = vpop.f32.mrf.mxu0
    %v7676 = vadd.f32 %v7235, %v7675
    %v7677 = vpop.f32.mrf.mxu0
    %v7678 = vadd.f32 %v7237, %v7677
    %v7679 = vpop.f32.mrf.mxu0
    %v7680 = vadd.f32 %v7239, %v7679
    %v7681 = vpop.f32.mrf.mxu0
    %v7682 = vadd.f32 %v7241, %v7681
    %7683 = vmatprep.mubr.bf16.mxu0 %v4388
    %7684 = vmatmul.mubr.bf16.gmra.mxu0 %v3781
    %v7685 = vpop.f32.mrf.mxu0
    %v7686 = vadd.f32 %v7245, %v7685
    %v7687 = vpop.f32.mrf.mxu0
    %v7688 = vadd.f32 %v7247, %v7687
    %v7689 = vpop.f32.mrf.mxu0
    %v7690 = vadd.f32 %v7249, %v7689
    %v7691 = vpop.f32.mrf.mxu0
    %v7692 = vadd.f32 %v7251, %v7691
    %7693 = vmatprep.mubr.bf16.mxu0 %v4391
    %7694 = vmatmul.mubr.bf16.gmra.mxu0 %v3784
    %v7695 = vpop.f32.mrf.mxu0
    %v7696 = vadd.f32 %v7255, %v7695
    %v7697 = vpop.f32.mrf.mxu0
    %v7698 = vadd.f32 %v7257, %v7697
    %v7699 = vpop.f32.mrf.mxu0
    %v7700 = vadd.f32 %v7259, %v7699
    %v7701 = vpop.f32.mrf.mxu0
    %v7702 = vadd.f32 %v7261, %v7701
    %7703 = vmatprep.mubr.bf16.mxu0 %v4394
    %7704 = vmatmul.mubr.bf16.gmra.mxu0 %v3787
    %v7705 = vpop.f32.mrf.mxu0
    %v7706 = vadd.f32 %v7265, %v7705
    %v7707 = vpop.f32.mrf.mxu0
    %v7708 = vadd.f32 %v7267, %v7707
    %v7709 = vpop.f32.mrf.mxu0
    %v7710 = vadd.f32 %v7269, %v7709
    %v7711 = vpop.f32.mrf.mxu0
    %v7712 = vadd.f32 %v7271, %v7711
    %7713 = vmatprep.mubr.bf16.mxu0 %v4397
    %7714 = vmatmul.mubr.bf16.gmra.mxu0 %v3790
    %v7715 = vpop.f32.mrf.mxu0
    %v7716 = vadd.f32 %v7275, %v7715
    %v7717 = vpop.f32.mrf.mxu0
    %v7718 = vadd.f32 %v7277, %v7717
    %v7719 = vpop.f32.mrf.mxu0
    %v7720 = vadd.f32 %v7279, %v7719
    %v7721 = vpop.f32.mrf.mxu0
    %v7722 = vadd.f32 %v7281, %v7721
    %7723 = vmatprep.mubr.bf16.mxu0 %v4400
    %7724 = vmatmul.mubr.bf16.gmra.mxu0 %v3793
    %v7725 = vpop.f32.mrf.mxu0
    %v7726 = vadd.f32 %v7285, %v7725
    %v7727 = vpop.f32.mrf.mxu0
    %v7728 = vadd.f32 %v7287, %v7727
    %v7729 = vpop.f32.mrf.mxu0
    %v7730 = vadd.f32 %v7289, %v7729
    %v7731 = vpop.f32.mrf.mxu0
    %v7732 = vadd.f32 %v7291, %v7731
    %7733 = vmatprep.mubr.bf16.mxu0 %v4403
    %7734 = vmatmul.mubr.bf16.gmra.mxu0 %v3796
    %v7735 = vpop.f32.mrf.mxu0
    %v7736 = vadd.f32 %v7295, %v7735
    %v7737 = vpop.f32.mrf.mxu0
    %v7738 = vadd.f32 %v7297, %v7737
    %v7739 = vpop.f32.mrf.mxu0
    %v7740 = vadd.f32 %v7299, %v7739
    %v7741 = vpop.f32.mrf.mxu0
    %v7742 = vadd.f32 %v7301, %v7741
    %7743 = vmatprep.mubr.bf16.mxu0 %v4406
    %7744 = vmatmul.mubr.bf16.gmra.mxu0 %v3799
    %v7745 = vpop.f32.mrf.mxu0
    %v7746 = vadd.f32 %v7305, %v7745
    %v7747 = vpop.f32.mrf.mxu0
    %v7748 = vadd.f32 %v7307, %v7747
    %v7749 = vpop.f32.mrf.mxu0
    %v7750 = vadd.f32 %v7309, %v7749
    %v7751 = vpop.f32.mrf.mxu0
    %v7752 = vadd.f32 %v7311, %v7751
    %7753 = vmatprep.mubr.bf16.mxu0 %v4409
    %7754 = vmatmul.mubr.bf16.gmra.mxu0 %v3802
    %v7755 = vpop.f32.mrf.mxu0
    %v7756 = vadd.f32 %v7315, %v7755
    %v7757 = vpop.f32.mrf.mxu0
    %v7758 = vadd.f32 %v7317, %v7757
    %v7759 = vpop.f32.mrf.mxu0
    %v7760 = vadd.f32 %v7319, %v7759
    %v7761 = vpop.f32.mrf.mxu0
    %v7762 = vadd.f32 %v7321, %v7761
    %7763 = vmatprep.mubr.bf16.mxu0 %v4412
    %7764 = vmatmul.mubr.bf16.gmra.mxu0 %v3805
    %v7765 = vpop.f32.mrf.mxu0
    %v7766 = vadd.f32 %v7325, %v7765
    %v7767 = vpop.f32.mrf.mxu0
    %v7768 = vadd.f32 %v7327, %v7767
    %v7769 = vpop.f32.mrf.mxu0
    %v7770 = vpop.f32.mrf.mxu0
    %7771 = vdwg.mxu0
    %7772 = vmatprep.subr.bf16.mxu0 %v5342
    %7773 = vmatpush1.bf16.msra.mxu0 %v5341
    %7774 = vmatprep.subr.bf16.mxu0 %v5338
    %7775 = vmatpush1.bf16.msra.mxu0 %v5337
    %7776 = vmatprep.subr.bf16.mxu0 %v5334
    %7777 = vmatpush1.bf16.msra.mxu0 %v5333
    %7778 = vmatprep.subr.bf16.mxu0 %v5330
    %7779 = vmatpush1.bf16.msra.mxu0 %v5329
    %7780 = vmatprep.subr.bf16.mxu0 %v5326
    %7781 = vmatpush1.bf16.msra.mxu0 %v5325
    %7782 = vmatprep.subr.bf16.mxu0 %v5322
    %7783 = vmatpush1.bf16.msra.mxu0 %v5321
    %7784 = vmatprep.subr.bf16.mxu0 %v5318
    %7785 = vmatpush1.bf16.msra.mxu0 %v5317
    %7786 = vmatprep.subr.bf16.mxu0 %v5314
    %7787 = vmatpush1.bf16.msra.mxu0 %v5313
    %7788 = vmatprep.subr.bf16.mxu0 %v5374
    %7789 = vmatpush2.bf16.msra.mxu0 %v5373
    %7790 = vmatprep.subr.bf16.mxu0 %v5370
    %7791 = vmatpush2.bf16.msra.mxu0 %v5369
    %7792 = vmatprep.subr.bf16.mxu0 %v5366
    %7793 = vmatpush2.bf16.msra.mxu0 %v5365
    %7794 = vmatprep.subr.bf16.mxu0 %v5362
    %7795 = vmatpush2.bf16.msra.mxu0 %v5361
    %7796 = vmatprep.subr.bf16.mxu0 %v5358
    %7797 = vmatpush2.bf16.msra.mxu0 %v5357
    %7798 = vmatprep.subr.bf16.mxu0 %v5354
    %7799 = vmatpush2.bf16.msra.mxu0 %v5353
    %7800 = vmatprep.subr.bf16.mxu0 %v5350
    %7801 = vmatpush2.bf16.msra.mxu0 %v5349
    %7802 = vmatprep.subr.bf16.mxu0 %v5346
    %7803 = vmatpush2.bf16.msra.mxu0 %v5345
    %7804 = vmatprep.mubr.bf16.mxu0 %v4294
    %7805 = vmatmul.mubr.bf16.gmra.mxu0 %v4293
    %v7806 = vpop.f32.mrf.mxu0
    %v7807 = vadd.f32 %v7366, %v7806
    %v7808 = vpop.f32.mrf.mxu0
    %v7809 = vadd.f32 %v7368, %v7808
    %v7810 = vpop.f32.mrf.mxu0
    %v7811 = vadd.f32 %v7370, %v7810
    %v7812 = vpop.f32.mrf.mxu0
    %v7813 = vadd.f32 %v7372, %v7812
    %7814 = vmatprep.mubr.bf16.mxu0 %v4297
    %7815 = vmatmul.mubr.bf16.gmra.mxu0 %v4296
    %v7816 = vpop.f32.mrf.mxu0
    %v7817 = vadd.f32 %v7376, %v7816
    %v7818 = vpop.f32.mrf.mxu0
    %v7819 = vadd.f32 %v7378, %v7818
    %v7820 = vpop.f32.mrf.mxu0
    %v7821 = vadd.f32 %v7380, %v7820
    %v7822 = vpop.f32.mrf.mxu0
    %v7823 = vadd.f32 %v7382, %v7822
    %7824 = vmatprep.mubr.bf16.mxu0 %v4300
    %7825 = vmatmul.mubr.bf16.gmra.mxu0 %v4299
    %v7826 = vpop.f32.mrf.mxu0
    %v7827 = vadd.f32 %v7386, %v7826
    %v7828 = vpop.f32.mrf.mxu0
    %v7829 = vadd.f32 %v7388, %v7828
    %v7830 = vpop.f32.mrf.mxu0
    %v7831 = vadd.f32 %v7390, %v7830
    %v7832 = vpop.f32.mrf.mxu0
    %v7833 = vadd.f32 %v7392, %v7832
    %7834 = vmatprep.mubr.bf16.mxu0 %v4303
    %7835 = vmatmul.mubr.bf16.gmra.mxu0 %v4302
    %v7836 = vpop.f32.mrf.mxu0
    %v7837 = vadd.f32 %v7396, %v7836
    %v7838 = vpop.f32.mrf.mxu0
    %v7839 = vadd.f32 %v7398, %v7838
    %v7840 = vpop.f32.mrf.mxu0
    %v7841 = vadd.f32 %v7400, %v7840
    %v7842 = vpop.f32.mrf.mxu0
    %v7843 = vadd.f32 %v7402, %v7842
    %7844 = vmatprep.mubr.bf16.mxu0 %v4306
    %7845 = vmatmul.mubr.bf16.gmra.mxu0 %v4305
    %v7846 = vpop.f32.mrf.mxu0
    %v7847 = vadd.f32 %v7406, %v7846
    %v7848 = vpop.f32.mrf.mxu0
    %v7849 = vadd.f32 %v7408, %v7848
    %v7850 = vpop.f32.mrf.mxu0
    %v7851 = vadd.f32 %v7410, %v7850
    %v7852 = vpop.f32.mrf.mxu0
    %v7853 = vadd.f32 %v7412, %v7852
    %7854 = vmatprep.mubr.bf16.mxu0 %v4309
    %7855 = vmatmul.mubr.bf16.gmra.mxu0 %v4308
    %v7856 = vpop.f32.mrf.mxu0
    %v7857 = vadd.f32 %v7416, %v7856
    %v7858 = vpop.f32.mrf.mxu0
    %v7859 = vadd.f32 %v7418, %v7858
    %v7860 = vpop.f32.mrf.mxu0
    %v7861 = vadd.f32 %v7420, %v7860
    %v7862 = vpop.f32.mrf.mxu0
    %v7863 = vadd.f32 %v7422, %v7862
    %7864 = vmatprep.mubr.bf16.mxu0 %v4312
    %7865 = vmatmul.mubr.bf16.gmra.mxu0 %v4311
    %v7866 = vpop.f32.mrf.mxu0
    %v7867 = vadd.f32 %v7426, %v7866
    %v7868 = vpop.f32.mrf.mxu0
    %v7869 = vadd.f32 %v7428, %v7868
    %v7870 = vpop.f32.mrf.mxu0
    %v7871 = vadd.f32 %v7430, %v7870
    %v7872 = vpop.f32.mrf.mxu0
    %v7873 = vadd.f32 %v7432, %v7872
    %7874 = vmatprep.mubr.bf16.mxu0 %v4315
    %7875 = vmatmul.mubr.bf16.gmra.mxu0 %v4314
    %v7876 = vpop.f32.mrf.mxu0
    %v7877 = vadd.f32 %v7436, %v7876
    %v7878 = vpop.f32.mrf.mxu0
    %v7879 = vadd.f32 %v7438, %v7878
    %v7880 = vpop.f32.mrf.mxu0
    %v7881 = vadd.f32 %v7440, %v7880
    %v7882 = vpop.f32.mrf.mxu0
    %v7883 = vadd.f32 %v7442, %v7882
    %7884 = vmatprep.mubr.bf16.mxu0 %v4318
    %7885 = vmatmul.mubr.bf16.gmra.mxu0 %v4317
    %v7886 = vpop.f32.mrf.mxu0
    %v7887 = vadd.f32 %v7446, %v7886
    %v7888 = vpop.f32.mrf.mxu0
    %v7889 = vadd.f32 %v7448, %v7888
    %v7890 = vpop.f32.mrf.mxu0
    %v7891 = vadd.f32 %v7450, %v7890
    %v7892 = vpop.f32.mrf.mxu0
    %v7893 = vadd.f32 %v7452, %v7892
    %7894 = vmatprep.mubr.bf16.mxu0 %v4321
    %7895 = vmatmul.mubr.bf16.gmra.mxu0 %v4320
    %v7896 = vpop.f32.mrf.mxu0
    %v7897 = vadd.f32 %v7456, %v7896
    %v7898 = vpop.f32.mrf.mxu0
    %v7899 = vadd.f32 %v7458, %v7898
    %v7900 = vpop.f32.mrf.mxu0
    %v7901 = vadd.f32 %v7460, %v7900
    %v7902 = vpop.f32.mrf.mxu0
    %v7903 = vadd.f32 %v7462, %v7902
    %7904 = vmatprep.mubr.bf16.mxu0 %v4324
    %7905 = vmatmul.mubr.bf16.gmra.mxu0 %v4323
    %v7906 = vpop.f32.mrf.mxu0
    %v7907 = vadd.f32 %v7466, %v7906
    %v7908 = vpop.f32.mrf.mxu0
    %v7909 = vadd.f32 %v7468, %v7908
    %v7910 = vpop.f32.mrf.mxu0
    %v7911 = vadd.f32 %v7470, %v7910
    %v7912 = vpop.f32.mrf.mxu0
    %v7913 = vadd.f32 %v7472, %v7912
    %7914 = vmatprep.mubr.bf16.mxu0 %v4327
    %7915 = vmatmul.mubr.bf16.gmra.mxu0 %v4326
    %v7916 = vpop.f32.mrf.mxu0
    %v7917 = vadd.f32 %v7476, %v7916
    %v7918 = vpop.f32.mrf.mxu0
    %v7919 = vadd.f32 %v7478, %v7918
    %v7920 = vpop.f32.mrf.mxu0
    %v7921 = vadd.f32 %v7480, %v7920
    %v7922 = vpop.f32.mrf.mxu0
    %v7923 = vadd.f32 %v7482, %v7922
    %7924 = vmatprep.mubr.bf16.mxu0 %v4330
    %7925 = vmatmul.mubr.bf16.gmra.mxu0 %v4329
    %v7926 = vpop.f32.mrf.mxu0
    %v7927 = vadd.f32 %v7486, %v7926
    %v7928 = vpop.f32.mrf.mxu0
    %v7929 = vadd.f32 %v7488, %v7928
    %v7930 = vpop.f32.mrf.mxu0
    %v7931 = vadd.f32 %v7490, %v7930
    %v7932 = vpop.f32.mrf.mxu0
    %v7933 = vadd.f32 %v7492, %v7932
    %7934 = vmatprep.mubr.bf16.mxu0 %v4333
    %7935 = vmatmul.mubr.bf16.gmra.mxu0 %v4332
    %v7936 = vpop.f32.mrf.mxu0
    %v7937 = vadd.f32 %v7496, %v7936
    %v7938 = vpop.f32.mrf.mxu0
    %v7939 = vadd.f32 %v7498, %v7938
    %v7940 = vpop.f32.mrf.mxu0
    %v7941 = vadd.f32 %v7500, %v7940
    %v7942 = vpop.f32.mrf.mxu0
    %v7943 = vadd.f32 %v7502, %v7942
    %7944 = vmatprep.mubr.bf16.mxu0 %v4336
    %7945 = vmatmul.mubr.bf16.gmra.mxu0 %v4335
    %v7946 = vpop.f32.mrf.mxu0
    %v7947 = vadd.f32 %v7506, %v7946
    %v7948 = vpop.f32.mrf.mxu0
    %v7949 = vadd.f32 %v7508, %v7948
    %v7950 = vpop.f32.mrf.mxu0
    %v7951 = vadd.f32 %v7510, %v7950
    %v7952 = vpop.f32.mrf.mxu0
    %v7953 = vadd.f32 %v7512, %v7952
    %7954 = vmatprep.mubr.bf16.mxu0 %v4339
    %7955 = vmatmul.mubr.bf16.gmra.mxu0 %v4338
    %v7956 = vpop.f32.mrf.mxu0
    %v7957 = vadd.f32 %v7516, %v7956
    %v7958 = vpop.f32.mrf.mxu0
    %v7959 = vadd.f32 %v7518, %v7958
    %v7960 = vpop.f32.mrf.mxu0
    %v7961 = vadd.f32 %v7520, %v7960
    %v7962 = vpop.f32.mrf.mxu0
    %v7963 = vadd.f32 %v7522, %v7962
    %7964 = vmatprep.mubr.bf16.mxu0 %v4342
    %7965 = vmatmul.mubr.bf16.gmra.mxu0 %v4341
    %v7966 = vpop.f32.mrf.mxu0
    %v7967 = vadd.f32 %v7526, %v7966
    %v7968 = vpop.f32.mrf.mxu0
    %v7969 = vadd.f32 %v7528, %v7968
    %v7970 = vpop.f32.mrf.mxu0
    %v7971 = vadd.f32 %v7530, %v7970
    %v7972 = vpop.f32.mrf.mxu0
    %v7973 = vadd.f32 %v7532, %v7972
    %7974 = vmatprep.mubr.bf16.mxu0 %v4345
    %7975 = vmatmul.mubr.bf16.gmra.mxu0 %v4344
    %v7976 = vpop.f32.mrf.mxu0
    %v7977 = vadd.f32 %v7536, %v7976
    %v7978 = vpop.f32.mrf.mxu0
    %v7979 = vadd.f32 %v7538, %v7978
    %v7980 = vpop.f32.mrf.mxu0
    %v7981 = vadd.f32 %v7540, %v7980
    %v7982 = vpop.f32.mrf.mxu0
    %v7983 = vadd.f32 %v7542, %v7982
    %7984 = vmatprep.mubr.bf16.mxu0 %v4348
    %7985 = vmatmul.mubr.bf16.gmra.mxu0 %v4347
    %v7986 = vpop.f32.mrf.mxu0
    %v7987 = vadd.f32 %v7546, %v7986
    %v7988 = vpop.f32.mrf.mxu0
    %v7989 = vadd.f32 %v7548, %v7988
    %v7990 = vpop.f32.mrf.mxu0
    %v7991 = vadd.f32 %v7550, %v7990
    %v7992 = vpop.f32.mrf.mxu0
    %v7993 = vadd.f32 %v7552, %v7992
    %7994 = vmatprep.mubr.bf16.mxu0 %v4351
    %7995 = vmatmul.mubr.bf16.gmra.mxu0 %v4350
    %v7996 = vpop.f32.mrf.mxu0
    %v7997 = vadd.f32 %v7556, %v7996
    %v7998 = vpop.f32.mrf.mxu0
    %v7999 = vadd.f32 %v7558, %v7998
    %v8000 = vpop.f32.mrf.mxu0
    %v8001 = vadd.f32 %v7560, %v8000
    %v8002 = vpop.f32.mrf.mxu0
    %v8003 = vadd.f32 %v7562, %v8002
    %8004 = vmatprep.mubr.bf16.mxu0 %v4354
    %8005 = vmatmul.mubr.bf16.gmra.mxu0 %v4353
    %v8006 = vpop.f32.mrf.mxu0
    %v8007 = vadd.f32 %v7566, %v8006
    %v8008 = vpop.f32.mrf.mxu0
    %v8009 = vadd.f32 %v7568, %v8008
    %v8010 = vpop.f32.mrf.mxu0
    %v8011 = vadd.f32 %v7570, %v8010
    %v8012 = vpop.f32.mrf.mxu0
    %v8013 = vadd.f32 %v7572, %v8012
    %8014 = vmatprep.mubr.bf16.mxu0 %v4357
    %8015 = vmatmul.mubr.bf16.gmra.mxu0 %v4356
    %v8016 = vpop.f32.mrf.mxu0
    %v8017 = vadd.f32 %v7576, %v8016
    %v8018 = vpop.f32.mrf.mxu0
    %v8019 = vadd.f32 %v7578, %v8018
    %v8020 = vpop.f32.mrf.mxu0
    %v8021 = vadd.f32 %v7580, %v8020
    %v8022 = vpop.f32.mrf.mxu0
    %v8023 = vadd.f32 %v7582, %v8022
    %8024 = vmatprep.mubr.bf16.mxu0 %v4360
    %8025 = vmatmul.mubr.bf16.gmra.mxu0 %v4359
    %v8026 = vpop.f32.mrf.mxu0
    %v8027 = vadd.f32 %v7586, %v8026
    %v8028 = vpop.f32.mrf.mxu0
    %v8029 = vadd.f32 %v7588, %v8028
    %v8030 = vpop.f32.mrf.mxu0
    %v8031 = vadd.f32 %v7590, %v8030
    %v8032 = vpop.f32.mrf.mxu0
    %v8033 = vadd.f32 %v7592, %v8032
    %8034 = vmatprep.mubr.bf16.mxu0 %v4363
    %8035 = vmatmul.mubr.bf16.gmra.mxu0 %v4362
    %v8036 = vpop.f32.mrf.mxu0
    %v8037 = vadd.f32 %v7596, %v8036
    %v8038 = vpop.f32.mrf.mxu0
    %v8039 = vadd.f32 %v7598, %v8038
    %v8040 = vpop.f32.mrf.mxu0
    %v8041 = vadd.f32 %v7600, %v8040
    %v8042 = vpop.f32.mrf.mxu0
    %v8043 = vadd.f32 %v7602, %v8042
    %8044 = vmatprep.mubr.bf16.mxu0 %v4366
    %8045 = vmatmul.mubr.bf16.gmra.mxu0 %v4365
    %v8046 = vpop.f32.mrf.mxu0
    %v8047 = vadd.f32 %v7606, %v8046
    %v8048 = vpop.f32.mrf.mxu0
    %v8049 = vadd.f32 %v7608, %v8048
    %v8050 = vpop.f32.mrf.mxu0
    %v8051 = vadd.f32 %v7610, %v8050
    %v8052 = vpop.f32.mrf.mxu0
    %v8053 = vadd.f32 %v7612, %v8052
    %8054 = vmatprep.mubr.bf16.mxu0 %v4369
    %8055 = vmatmul.mubr.bf16.gmra.mxu0 %v4368
    %v8056 = vpop.f32.mrf.mxu0
    %v8057 = vadd.f32 %v7616, %v8056
    %v8058 = vpop.f32.mrf.mxu0
    %v8059 = vadd.f32 %v7618, %v8058
    %v8060 = vpop.f32.mrf.mxu0
    %v8061 = vadd.f32 %v7620, %v8060
    %v8062 = vpop.f32.mrf.mxu0
    %v8063 = vadd.f32 %v7622, %v8062
    %8064 = vmatprep.mubr.bf16.mxu0 %v4372
    %8065 = vmatmul.mubr.bf16.gmra.mxu0 %v4371
    %v8066 = vpop.f32.mrf.mxu0
    %v8067 = vadd.f32 %v7626, %v8066
    %v8068 = vpop.f32.mrf.mxu0
    %v8069 = vadd.f32 %v7628, %v8068
    %v8070 = vpop.f32.mrf.mxu0
    %v8071 = vadd.f32 %v7630, %v8070
    %v8072 = vpop.f32.mrf.mxu0
    %v8073 = vadd.f32 %v7632, %v8072
    %8074 = vmatprep.mubr.bf16.mxu0 %v4375
    %8075 = vmatmul.mubr.bf16.gmra.mxu0 %v4374
    %v8076 = vpop.f32.mrf.mxu0
    %v8077 = vadd.f32 %v7636, %v8076
    %v8078 = vpop.f32.mrf.mxu0
    %v8079 = vadd.f32 %v7638, %v8078
    %v8080 = vpop.f32.mrf.mxu0
    %v8081 = vadd.f32 %v7640, %v8080
    %v8082 = vpop.f32.mrf.mxu0
    %v8083 = vadd.f32 %v7642, %v8082
    %8084 = vmatprep.mubr.bf16.mxu0 %v4378
    %8085 = vmatmul.mubr.bf16.gmra.mxu0 %v4377
    %v8086 = vpop.f32.mrf.mxu0
    %v8087 = vadd.f32 %v7646, %v8086
    %v8088 = vpop.f32.mrf.mxu0
    %v8089 = vadd.f32 %v7648, %v8088
    %v8090 = vpop.f32.mrf.mxu0
    %v8091 = vadd.f32 %v7650, %v8090
    %v8092 = vpop.f32.mrf.mxu0
    %v8093 = vadd.f32 %v7652, %v8092
    %8094 = vmatprep.mubr.bf16.mxu0 %v4381
    %8095 = vmatmul.mubr.bf16.gmra.mxu0 %v4380
    %v8096 = vpop.f32.mrf.mxu0
    %v8097 = vadd.f32 %v7656, %v8096
    %v8098 = vpop.f32.mrf.mxu0
    %v8099 = vadd.f32 %v7658, %v8098
    %v8100 = vpop.f32.mrf.mxu0
    %v8101 = vadd.f32 %v7660, %v8100
    %v8102 = vpop.f32.mrf.mxu0
    %v8103 = vadd.f32 %v7662, %v8102
    %8104 = vmatprep.mubr.bf16.mxu0 %v4384
    %8105 = vmatmul.mubr.bf16.gmra.mxu0 %v4383
    %v8106 = vpop.f32.mrf.mxu0
    %v8107 = vadd.f32 %v7666, %v8106
    %v8108 = vpop.f32.mrf.mxu0
    %v8109 = vadd.f32 %v7668, %v8108
    %v8110 = vpop.f32.mrf.mxu0
    %v8111 = vadd.f32 %v7670, %v8110
    %v8112 = vpop.f32.mrf.mxu0
    %v8113 = vadd.f32 %v7672, %v8112
    %8114 = vmatprep.mubr.bf16.mxu0 %v4387
    %8115 = vmatmul.mubr.bf16.gmra.mxu0 %v4386
    %v8116 = vpop.f32.mrf.mxu0
    %v8117 = vadd.f32 %v7676, %v8116
    %v8118 = vpop.f32.mrf.mxu0
    %v8119 = vadd.f32 %v7678, %v8118
    %v8120 = vpop.f32.mrf.mxu0
    %v8121 = vadd.f32 %v7680, %v8120
    %v8122 = vpop.f32.mrf.mxu0
    %v8123 = vadd.f32 %v7682, %v8122
    %8124 = vmatprep.mubr.bf16.mxu0 %v4390
    %8125 = vmatmul.mubr.bf16.gmra.mxu0 %v4389
    %v8126 = vpop.f32.mrf.mxu0
    %v8127 = vadd.f32 %v7686, %v8126
    %v8128 = vpop.f32.mrf.mxu0
    %v8129 = vadd.f32 %v7688, %v8128
    %v8130 = vpop.f32.mrf.mxu0
    %v8131 = vadd.f32 %v7690, %v8130
    %v8132 = vpop.f32.mrf.mxu0
    %v8133 = vadd.f32 %v7692, %v8132
    %8134 = vmatprep.mubr.bf16.mxu0 %v4393
    %8135 = vmatmul.mubr.bf16.gmra.mxu0 %v4392
    %v8136 = vpop.f32.mrf.mxu0
    %v8137 = vadd.f32 %v7696, %v8136
    %v8138 = vpop.f32.mrf.mxu0
    %v8139 = vadd.f32 %v7698, %v8138
    %v8140 = vpop.f32.mrf.mxu0
    %v8141 = vadd.f32 %v7700, %v8140
    %v8142 = vpop.f32.mrf.mxu0
    %v8143 = vadd.f32 %v7702, %v8142
    %8144 = vmatprep.mubr.bf16.mxu0 %v4396
    %8145 = vmatmul.mubr.bf16.gmra.mxu0 %v4395
    %v8146 = vpop.f32.mrf.mxu0
    %v8147 = vadd.f32 %v7706, %v8146
    %v8148 = vpop.f32.mrf.mxu0
    %v8149 = vadd.f32 %v7708, %v8148
    %v8150 = vpop.f32.mrf.mxu0
    %v8151 = vadd.f32 %v7710, %v8150
    %v8152 = vpop.f32.mrf.mxu0
    %v8153 = vadd.f32 %v7712, %v8152
    %8154 = vmatprep.mubr.bf16.mxu0 %v4399
    %8155 = vmatmul.mubr.bf16.gmra.mxu0 %v4398
    %v8156 = vpop.f32.mrf.mxu0
    %v8157 = vadd.f32 %v7716, %v8156
    %v8158 = vpop.f32.mrf.mxu0
    %v8159 = vadd.f32 %v7718, %v8158
    %v8160 = vpop.f32.mrf.mxu0
    %v8161 = vadd.f32 %v7720, %v8160
    %v8162 = vpop.f32.mrf.mxu0
    %v8163 = vadd.f32 %v7722, %v8162
    %8164 = vmatprep.mubr.bf16.mxu0 %v4402
    %8165 = vmatmul.mubr.bf16.gmra.mxu0 %v4401
    %v8166 = vpop.f32.mrf.mxu0
    %v8167 = vadd.f32 %v7726, %v8166
    %v8168 = vpop.f32.mrf.mxu0
    %v8169 = vadd.f32 %v7728, %v8168
    %v8170 = vpop.f32.mrf.mxu0
    %v8171 = vadd.f32 %v7730, %v8170
    %v8172 = vpop.f32.mrf.mxu0
    %v8173 = vadd.f32 %v7732, %v8172
    %8174 = vmatprep.mubr.bf16.mxu0 %v4405
    %8175 = vmatmul.mubr.bf16.gmra.mxu0 %v4404
    %v8176 = vpop.f32.mrf.mxu0
    %v8177 = vadd.f32 %v7736, %v8176
    %v8178 = vpop.f32.mrf.mxu0
    %v8179 = vadd.f32 %v7738, %v8178
    %v8180 = vpop.f32.mrf.mxu0
    %v8181 = vadd.f32 %v7740, %v8180
    %v8182 = vpop.f32.mrf.mxu0
    %v8183 = vadd.f32 %v7742, %v8182
    %8184 = vmatprep.mubr.bf16.mxu0 %v4408
    %8185 = vmatmul.mubr.bf16.gmra.mxu0 %v4407
    %v8186 = vpop.f32.mrf.mxu0
    %v8187 = vadd.f32 %v7746, %v8186
    %v8188 = vpop.f32.mrf.mxu0
    %v8189 = vadd.f32 %v7748, %v8188
    %v8190 = vpop.f32.mrf.mxu0
    %v8191 = vadd.f32 %v7750, %v8190
    %v8192 = vpop.f32.mrf.mxu0
    %v8193 = vadd.f32 %v7752, %v8192
    %8194 = vmatprep.mubr.bf16.mxu0 %v4411
    %8195 = vmatmul.mubr.bf16.gmra.mxu0 %v4410
    %v8196 = vpop.f32.mrf.mxu0
    %v8197 = vadd.f32 %v7756, %v8196
    %v8198 = vpop.f32.mrf.mxu0
    %v8199 = vadd.f32 %v7758, %v8198
    %v8200 = vpop.f32.mrf.mxu0
    %v8201 = vadd.f32 %v7760, %v8200
    %v8202 = vpop.f32.mrf.mxu0
    %v8203 = vadd.f32 %v7762, %v8202
    %8204 = vmatprep.mubr.bf16.mxu0 %v4414
    %8205 = vmatmul.mubr.bf16.gmra.mxu0 %v4413
    %v8206 = vpop.f32.mrf.mxu0
    %v8207 = vadd.f32 %v7766, %v8206
    %v8208 = vpop.f32.mrf.mxu0
    %v8209 = vadd.f32 %v7768, %v8208
    %v8210 = vpop.f32.mrf.mxu0
    %v8211 = vpop.f32.mrf.mxu0
    %8212 = vdwg.mxu0
    %v8213 = vadd.f32 %v6484, %v7807
    %v8214 = vadd.f32 %v6486, %v7809
    %v8215 = vadd.f32 %v6488, %v7811
    %v8216 = vadd.f32 %v6490, %v7813
    %v8217 = vadd.f32 %v6494, %v7817
    %v8218 = vadd.f32 %v6496, %v7819
    %v8219 = vadd.f32 %v6498, %v7821
    %v8220 = vadd.f32 %v6500, %v7823
    %v8221 = vadd.f32 %v6504, %v7827
    %v8222 = vadd.f32 %v6506, %v7829
    %v8223 = vadd.f32 %v6508, %v7831
    %v8224 = vadd.f32 %v6510, %v7833
    %v8225 = vadd.f32 %v6514, %v7837
    %v8226 = vadd.f32 %v6516, %v7839
    %v8227 = vadd.f32 %v6518, %v7841
    %v8228 = vadd.f32 %v6520, %v7843
    %v8229 = vadd.f32 %v6524, %v7847
    %v8230 = vadd.f32 %v6526, %v7849
    %v8231 = vadd.f32 %v6528, %v7851
    %v8232 = vadd.f32 %v6530, %v7853
    %v8233 = vadd.f32 %v6534, %v7857
    %v8234 = vadd.f32 %v6536, %v7859
    %v8235 = vadd.f32 %v6538, %v7861
    %v8236 = vadd.f32 %v6540, %v7863
    %v8237 = vadd.f32 %v6544, %v7867
    %v8238 = vadd.f32 %v6546, %v7869
    %v8239 = vadd.f32 %v6548, %v7871
    %v8240 = vadd.f32 %v6550, %v7873
    %v8241 = vadd.f32 %v6554, %v7877
    %v8242 = vadd.f32 %v6556, %v7879
    %v8243 = vadd.f32 %v6558, %v7881
    %v8244 = vadd.f32 %v6560, %v7883
    %v8245 = vadd.f32 %v6564, %v7887
    %v8246 = vadd.f32 %v6566, %v7889
    %v8247 = vadd.f32 %v6568, %v7891
    %v8248 = vadd.f32 %v6570, %v7893
    %v8249 = vadd.f32 %v6574, %v7897
    %v8250 = vadd.f32 %v6576, %v7899
    %v8251 = vadd.f32 %v6578, %v7901
    %v8252 = vadd.f32 %v6580, %v7903
    %v8253 = vadd.f32 %v6584, %v7907
    %v8254 = vadd.f32 %v6586, %v7909
    %v8255 = vadd.f32 %v6588, %v7911
    %v8256 = vadd.f32 %v6590, %v7913
    %v8257 = vadd.f32 %v6594, %v7917
    %v8258 = vadd.f32 %v6596, %v7919
    %v8259 = vadd.f32 %v6598, %v7921
    %v8260 = vadd.f32 %v6600, %v7923
    %v8261 = vadd.f32 %v6604, %v7927
    %v8262 = vadd.f32 %v6606, %v7929
    %v8263 = vadd.f32 %v6608, %v7931
    %v8264 = vadd.f32 %v6610, %v7933
    %v8265 = vadd.f32 %v6614, %v7937
    %v8266 = vadd.f32 %v6616, %v7939
    %v8267 = vadd.f32 %v6618, %v7941
    %v8268 = vadd.f32 %v6620, %v7943
    %v8269 = vadd.f32 %v6624, %v7947
    %v8270 = vadd.f32 %v6626, %v7949
    %v8271 = vadd.f32 %v6628, %v7951
    %v8272 = vadd.f32 %v6630, %v7953
    %v8273 = vadd.f32 %v6634, %v7957
    %v8274 = vadd.f32 %v6636, %v7959
    %v8275 = vadd.f32 %v6638, %v7961
    %v8276 = vadd.f32 %v6640, %v7963
    %v8277 = vadd.f32 %v6644, %v7967
    %v8278 = vadd.f32 %v6646, %v7969
    %v8279 = vadd.f32 %v6648, %v7971
    %v8280 = vadd.f32 %v6650, %v7973
    %v8281 = vadd.f32 %v6654, %v7977
    %v8282 = vadd.f32 %v6656, %v7979
    %v8283 = vadd.f32 %v6658, %v7981
    %v8284 = vadd.f32 %v6660, %v7983
    %v8285 = vadd.f32 %v6664, %v7987
    %v8286 = vadd.f32 %v6666, %v7989
    %v8287 = vadd.f32 %v6668, %v7991
    %v8288 = vadd.f32 %v6670, %v7993
    %v8289 = vadd.f32 %v6674, %v7997
    %v8290 = vadd.f32 %v6676, %v7999
    %v8291 = vadd.f32 %v6678, %v8001
    %v8292 = vadd.f32 %v6680, %v8003
    %v8293 = vadd.f32 %v6684, %v8007
    %v8294 = vadd.f32 %v6686, %v8009
    %v8295 = vadd.f32 %v6688, %v8011
    %v8296 = vadd.f32 %v6690, %v8013
    %v8297 = vadd.f32 %v6694, %v8017
    %v8298 = vadd.f32 %v6696, %v8019
    %v8299 = vadd.f32 %v6698, %v8021
    %v8300 = vadd.f32 %v6700, %v8023
    %v8301 = vadd.f32 %v6704, %v8027
    %v8302 = vadd.f32 %v6706, %v8029
    %v8303 = vadd.f32 %v6708, %v8031
    %v8304 = vadd.f32 %v6710, %v8033
    %v8305 = vadd.f32 %v6714, %v8037
    %v8306 = vadd.f32 %v6716, %v8039
    %v8307 = vadd.f32 %v6718, %v8041
    %v8308 = vadd.f32 %v6720, %v8043
    %v8309 = vadd.f32 %v6724, %v8047
    %v8310 = vadd.f32 %v6726, %v8049
    %v8311 = vadd.f32 %v6728, %v8051
    %v8312 = vadd.f32 %v6730, %v8053
    %v8313 = vadd.f32 %v6734, %v8057
    %v8314 = vadd.f32 %v6736, %v8059
    %v8315 = vadd.f32 %v6738, %v8061
    %v8316 = vadd.f32 %v6740, %v8063
    %v8317 = vadd.f32 %v6744, %v8067
    %v8318 = vadd.f32 %v6746, %v8069
    %v8319 = vadd.f32 %v6748, %v8071
    %v8320 = vadd.f32 %v6750, %v8073
    %v8321 = vadd.f32 %v6754, %v8077
    %v8322 = vadd.f32 %v6756, %v8079
    %v8323 = vadd.f32 %v6758, %v8081
    %v8324 = vadd.f32 %v6760, %v8083
    %v8325 = vadd.f32 %v6764, %v8087
    %v8326 = vadd.f32 %v6766, %v8089
    %v8327 = vadd.f32 %v6768, %v8091
    %v8328 = vadd.f32 %v6770, %v8093
    %v8329 = vadd.f32 %v6774, %v8097
    %v8330 = vadd.f32 %v6776, %v8099
    %v8331 = vadd.f32 %v6778, %v8101
    %v8332 = vadd.f32 %v6780, %v8103
    %v8333 = vadd.f32 %v6784, %v8107
    %v8334 = vadd.f32 %v6786, %v8109
    %v8335 = vadd.f32 %v6788, %v8111
    %v8336 = vadd.f32 %v6790, %v8113
    %v8337 = vadd.f32 %v6794, %v8117
    %v8338 = vadd.f32 %v6796, %v8119
    %v8339 = vadd.f32 %v6798, %v8121
    %v8340 = vadd.f32 %v6800, %v8123
    %v8341 = vadd.f32 %v6804, %v8127
    %v8342 = vadd.f32 %v6806, %v8129
    %v8343 = vadd.f32 %v6808, %v8131
    %v8344 = vadd.f32 %v6810, %v8133
    %v8345 = vadd.f32 %v6814, %v8137
    %v8346 = vadd.f32 %v6816, %v8139
    %v8347 = vadd.f32 %v6818, %v8141
    %v8348 = vadd.f32 %v6820, %v8143
    %v8349 = vadd.f32 %v6824, %v8147
    %v8350 = vadd.f32 %v6826, %v8149
    %v8351 = vadd.f32 %v6828, %v8151
    %v8352 = vadd.f32 %v6830, %v8153
    %v8353 = vadd.f32 %v6834, %v8157
    %v8354 = vadd.f32 %v6836, %v8159
    %v8355 = vadd.f32 %v6838, %v8161
    %v8356 = vadd.f32 %v6840, %v8163
    %v8357 = vadd.f32 %v6844, %v8167
    %v8358 = vadd.f32 %v6846, %v8169
    %v8359 = vadd.f32 %v6848, %v8171
    %v8360 = vadd.f32 %v6850, %v8173
    %v8361 = vadd.f32 %v6854, %v8177
    %v8362 = vadd.f32 %v6856, %v8179
    %v8363 = vadd.f32 %v6858, %v8181
    %v8364 = vadd.f32 %v6860, %v8183
    %v8365 = vadd.f32 %v6864, %v8187
    %v8366 = vadd.f32 %v6866, %v8189
    %v8367 = vadd.f32 %v6868, %v8191
    %v8368 = vadd.f32 %v6870, %v8193
    %v8369 = vadd.f32 %v6874, %v8197
    %v8370 = vadd.f32 %v6876, %v8199
    %v8371 = vadd.f32 %v6878, %v8201
    %v8372 = vadd.f32 %v6880, %v8203
    %v8373 = vadd.f32 %v6884, %v8207
    %v8374 = vadd.f32 %v6886, %v8209
    %v8375 = vld [vmem:[#allocation3] sm:$0xff]
    %v8376 = vld [vmem:[#allocation3 + $0x8] sm:$0xff]
    %v8377 = vld [vmem:[#allocation3 + $0x10] sm:$0xff]
    %v8378 = vld [vmem:[#allocation3 + $0x18] sm:$0xff]
    %v8379 = vld [vmem:[#allocation3 + $0x20] sm:$0xff]
    %v8380 = vld [vmem:[#allocation3 + $0x28] sm:$0xff]
    %v8381 = vld [vmem:[#allocation3 + $0x30] sm:$0xff]
    %v8382 = vld [vmem:[#allocation3 + $0x38] sm:$0xff]
    %v8383 = vld [vmem:[#allocation3 + $0x40] sm:$0xff]
    %v8384 = vld [vmem:[#allocation3 + $0x48] sm:$0xff]
    %v8385 = vld [vmem:[#allocation3 + $0x50] sm:$0xff]
    %v8386 = vld [vmem:[#allocation3 + $0x58] sm:$0xff]
    %v8387 = vld [vmem:[#allocation3 + $0x60] sm:$0xff]
    %v8388 = vld [vmem:[#allocation3 + $0x68] sm:$0xff]
    %v8389 = vld [vmem:[#allocation3 + $0x70] sm:$0xff]
    %v8390 = vld [vmem:[#allocation3 + $0x78] sm:$0xff]
    %v8391 = vld [vmem:[#allocation3 + $0x80] sm:$0xff]
    %v8392 = vld [vmem:[#allocation3 + $0x88] sm:$0xff]
    %v8393 = vld [vmem:[#allocation3 + $0x90] sm:$0xff]
    %v8394 = vld [vmem:[#allocation3 + $0x98] sm:$0xff]
    %v8395 = vld [vmem:[#allocation3 + $0xa0] sm:$0xff]
    %v8396 = vld [vmem:[#allocation3 + $0xa8] sm:$0xff]
    %v8397 = vld [vmem:[#allocation3 + $0xb0] sm:$0xff]
    %v8398 = vld [vmem:[#allocation3 + $0xb8] sm:$0xff]
    %v8399 = vld [vmem:[#allocation3 + $0xc0] sm:$0xff]
    %v8400 = vld [vmem:[#allocation3 + $0xc8] sm:$0xff]
    %v8401 = vld [vmem:[#allocation3 + $0xd0] sm:$0xff]
    %v8402 = vpack.c.bf16 %v8378, %v8375
    %v8403 = vpack.c.bf16 %v8379, %v8376
    %v8404 = vpack.c.bf16 %v8380, %v8377
    %v8405 = vpack.c.bf16 %v8384, %v8381
    %v8406 = vpack.c.bf16 %v8385, %v8382
    %v8407 = vpack.c.bf16 %v8386, %v8383
    %v8408 = vpack.c.bf16 %v8390, %v8387
    %v8409 = vpack.c.bf16 %v8391, %v8388
    %v8410 = vpack.c.bf16 %v8392, %v8389
    %v8411 = vpack.c.bf16 %v8396, %v8393
    %v8412 = vpack.c.bf16 %v8397, %v8394
    %v8413 = vpack.c.bf16 %v8398, %v8395
    %v8414 = vpack.c.bf16 %v8399, %v8399
    %v8415 = vpack.c.bf16 %v8400, %v8400
    %v8416 = vpack.c.bf16 %v8401, %v8401
    %v8417 = vunpack.c.l.bf16 %v8402
    %v8418 = vunpack.c.l.bf16 %v8403
    %v8419 = vunpack.c.l.bf16 %v8404
    %v8420 = vunpack.c.h.bf16 %v8402
    %v8421 = vunpack.c.h.bf16 %v8403
    %v8422 = vunpack.c.h.bf16 %v8404
    %v8423 = vunpack.c.l.bf16 %v8405
    %v8424 = vunpack.c.l.bf16 %v8406
    %v8425 = vunpack.c.l.bf16 %v8407
    %v8426 = vunpack.c.h.bf16 %v8405
    %v8427 = vunpack.c.h.bf16 %v8406
    %v8428 = vunpack.c.h.bf16 %v8407
    %v8429 = vunpack.c.l.bf16 %v8408
    %v8430 = vunpack.c.l.bf16 %v8409
    %v8431 = vunpack.c.l.bf16 %v8410
    %v8432 = vunpack.c.h.bf16 %v8408
    %v8433 = vunpack.c.h.bf16 %v8409
    %v8434 = vunpack.c.h.bf16 %v8410
    %v8435 = vunpack.c.l.bf16 %v8411
    %v8436 = vunpack.c.l.bf16 %v8412
    %v8437 = vunpack.c.l.bf16 %v8413
    %v8438 = vunpack.c.h.bf16 %v8411
    %v8439 = vunpack.c.h.bf16 %v8412
    %v8440 = vunpack.c.h.bf16 %v8413
    %v8441 = vunpack.c.l.bf16 %v8414
    %v8442 = vunpack.c.l.bf16 %v8415
    %v8443 = vunpack.c.l.bf16 %v8416
    %v8444 = vsub.f32 %v8375, %v8417
    %v8445 = vsub.f32 %v8376, %v8418
    %v8446 = vsub.f32 %v8377, %v8419
    %v8447 = vsub.f32 %v8378, %v8420
    %v8448 = vsub.f32 %v8379, %v8421
    %v8449 = vsub.f32 %v8380, %v8422
    %v8450 = vsub.f32 %v8381, %v8423
    %v8451 = vsub.f32 %v8382, %v8424
    %v8452 = vsub.f32 %v8383, %v8425
    %v8453 = vsub.f32 %v8384, %v8426
    %v8454 = vsub.f32 %v8385, %v8427
    %v8455 = vsub.f32 %v8386, %v8428
    %v8456 = vsub.f32 %v8387, %v8429
    %v8457 = vsub.f32 %v8388, %v8430
    %v8458 = vsub.f32 %v8389, %v8431
    %v8459 = vsub.f32 %v8390, %v8432
    %v8460 = vsub.f32 %v8391, %v8433
    %v8461 = vsub.f32 %v8392, %v8434
    %v8462 = vsub.f32 %v8393, %v8435
    %v8463 = vsub.f32 %v8394, %v8436
    %v8464 = vsub.f32 %v8395, %v8437
    %v8465 = vsub.f32 %v8396, %v8438
    %v8466 = vsub.f32 %v8397, %v8439
    %v8467 = vsub.f32 %v8398, %v8440
    %v8468 = vsub.f32 %v8399, %v8441
    %v8469 = vsub.f32 %v8400, %v8442
    %v8470 = vsub.f32 %v8401, %v8443
    %v8471 = vpack.c.bf16 %v8447, %v8444
    %v8472 = vpack.c.bf16 %v8448, %v8445
    %v8473 = vpack.c.bf16 %v8449, %v8446
    %v8474 = vpack.c.bf16 %v8453, %v8450
    %v8475 = vpack.c.bf16 %v8454, %v8451
    %v8476 = vpack.c.bf16 %v8455, %v8452
    %v8477 = vpack.c.bf16 %v8459, %v8456
    %v8478 = vpack.c.bf16 %v8460, %v8457
    %v8479 = vpack.c.bf16 %v8461, %v8458
    %v8480 = vpack.c.bf16 %v8465, %v8462
    %v8481 = vpack.c.bf16 %v8466, %v8463
    %v8482 = vpack.c.bf16 %v8467, %v8464
    %v8483 = vpack.c.bf16 %v8468, %v8468
    %v8484 = vpack.c.bf16 %v8469, %v8469
    %v8485 = vpack.c.bf16 %v8470, %v8470
    %v8486 = vld [vmem:[#allocation7] sm:$0xff]
    %v8487 = vld [vmem:[#allocation7 + $0x8] sm:$0xff]
    %v8488 = vld [vmem:[#allocation7 + $0x10] sm:$0xff]
    %v8489 = vld [vmem:[#allocation7 + $0x18] sm:$0xff]
    %v8490 = vld [vmem:[#allocation7 + $0x20] sm:$0xff]
    %v8491 = vld [vmem:[#allocation7 + $0x28] sm:$0xff]
    %v8492 = vld [vmem:[#allocation7 + $0x30] sm:$0xff]
    %v8493 = vld [vmem:[#allocation7 + $0x38] sm:$0xff]
    %v8494 = vld [vmem:[#allocation7 + $0x40] sm:$0xff]
    %v8495 = vld [vmem:[#allocation7 + $0x48] sm:$0xff]
    %v8496 = vld [vmem:[#allocation7 + $0x50] sm:$0xff]
    %v8497 = vld [vmem:[#allocation7 + $0x58] sm:$0xff]
    %v8498 = vld [vmem:[#allocation7 + $0x60] sm:$0xff]
    %v8499 = vld [vmem:[#allocation7 + $0x68] sm:$0xff]
    %v8500 = vld [vmem:[#allocation7 + $0x70] sm:$0xff]
    %v8501 = vld [vmem:[#allocation7 + $0x78] sm:$0xff]
    %v8502 = vld [vmem:[#allocation7 + $0x80] sm:$0xff]
    %v8503 = vld [vmem:[#allocation7 + $0x88] sm:$0xff]
    %v8504 = vld [vmem:[#allocation7 + $0x90] sm:$0xff]
    %v8505 = vld [vmem:[#allocation7 + $0x98] sm:$0xff]
    %v8506 = vld [vmem:[#allocation7 + $0xa0] sm:$0xff]
    %v8507 = vld [vmem:[#allocation7 + $0xa8] sm:$0xff]
    %v8508 = vld [vmem:[#allocation7 + $0xb0] sm:$0xff]
    %v8509 = vld [vmem:[#allocation7 + $0xb8] sm:$0xff]
    %v8510 = vld [vmem:[#allocation7 + $0xc0] sm:$0xff]
    %v8511 = vld [vmem:[#allocation7 + $0xc8] sm:$0xff]
    %v8512 = vld [vmem:[#allocation7 + $0xd0] sm:$0xff]
    %v8513 = vld [vmem:[#allocation7 + $0xd8] sm:$0xff]
    %v8514 = vld [vmem:[#allocation7 + $0xe0] sm:$0xff]
    %v8515 = vld [vmem:[#allocation7 + $0xe8] sm:$0xff]
    %v8516 = vld [vmem:[#allocation7 + $0xf0] sm:$0xff]
    %v8517 = vld [vmem:[#allocation7 + $0xf8] sm:$0xff]
    %v8518 = vld [vmem:[#allocation7 + $0x100] sm:$0xff]
    %v8519 = vld [vmem:[#allocation7 + $0x108] sm:$0xff]
    %v8520 = vld [vmem:[#allocation7 + $0x110] sm:$0xff]
    %v8521 = vld [vmem:[#allocation7 + $0x118] sm:$0xff]
    %v8522 = vld [vmem:[#allocation7 + $0x120] sm:$0xff]
    %v8523 = vld [vmem:[#allocation7 + $0x128] sm:$0xff]
    %v8524 = vld [vmem:[#allocation7 + $0x130] sm:$0xff]
    %v8525 = vld [vmem:[#allocation7 + $0x138] sm:$0xff]
    %v8526 = vld [vmem:[#allocation7 + $0x140] sm:$0xff]
    %v8527 = vld [vmem:[#allocation7 + $0x148] sm:$0xff]
    %v8528 = vld [vmem:[#allocation7 + $0x150] sm:$0xff]
    %v8529 = vld [vmem:[#allocation7 + $0x158] sm:$0xff]
    %v8530 = vld [vmem:[#allocation7 + $0x160] sm:$0xff]
    %v8531 = vld [vmem:[#allocation7 + $0x168] sm:$0xff]
    %v8532 = vld [vmem:[#allocation7 + $0x170] sm:$0xff]
    %v8533 = vld [vmem:[#allocation7 + $0x178] sm:$0xff]
    %v8534 = vld [vmem:[#allocation7 + $0x180] sm:$0xff]
    %v8535 = vld [vmem:[#allocation7 + $0x188] sm:$0xff]
    %v8536 = vld [vmem:[#allocation7 + $0x190] sm:$0xff]
    %v8537 = vld [vmem:[#allocation7 + $0x198] sm:$0xff]
    %v8538 = vld [vmem:[#allocation7 + $0x1a0] sm:$0xff]
    %v8539 = vld [vmem:[#allocation7 + $0x1a8] sm:$0xff]
    %v8540 = vld [vmem:[#allocation7 + $0x1b0] sm:$0xff]
    %v8541 = vld [vmem:[#allocation7 + $0x1b8] sm:$0xff]
    %v8542 = vld [vmem:[#allocation7 + $0x1c0] sm:$0xff]
    %v8543 = vld [vmem:[#allocation7 + $0x1c8] sm:$0xff]
    %v8544 = vld [vmem:[#allocation7 + $0x1d0] sm:$0xff]
    %v8545 = vld [vmem:[#allocation7 + $0x1d8] sm:$0xff]
    %v8546 = vld [vmem:[#allocation7 + $0x1e0] sm:$0xff]
    %v8547 = vld [vmem:[#allocation7 + $0x1e8] sm:$0xff]
    %v8548 = vld [vmem:[#allocation7 + $0x1f0] sm:$0xff]
    %v8549 = vld [vmem:[#allocation7 + $0x1f8] sm:$0xff]
    %v8550 = vld [vmem:[#allocation7 + $0x200] sm:$0xff]
    %v8551 = vld [vmem:[#allocation7 + $0x208] sm:$0xff]
    %v8552 = vld [vmem:[#allocation7 + $0x210] sm:$0xff]
    %v8553 = vld [vmem:[#allocation7 + $0x218] sm:$0xff]
    %v8554 = vld [vmem:[#allocation7 + $0x220] sm:$0xff]
    %v8555 = vld [vmem:[#allocation7 + $0x228] sm:$0xff]
    %v8556 = vld [vmem:[#allocation7 + $0x230] sm:$0xff]
    %v8557 = vld [vmem:[#allocation7 + $0x238] sm:$0xff]
    %v8558 = vld [vmem:[#allocation7 + $0x240] sm:$0xff]
    %v8559 = vld [vmem:[#allocation7 + $0x248] sm:$0xff]
    %v8560 = vld [vmem:[#allocation7 + $0x250] sm:$0xff]
    %v8561 = vld [vmem:[#allocation7 + $0x258] sm:$0xff]
    %v8562 = vld [vmem:[#allocation7 + $0x260] sm:$0xff]
    %v8563 = vld [vmem:[#allocation7 + $0x268] sm:$0xff]
    %v8564 = vld [vmem:[#allocation7 + $0x270] sm:$0xff]
    %v8565 = vld [vmem:[#allocation7 + $0x278] sm:$0xff]
    %v8566 = vld [vmem:[#allocation7 + $0x280] sm:$0xff]
    %v8567 = vld [vmem:[#allocation7 + $0x288] sm:$0xff]
    %v8568 = vld [vmem:[#allocation7 + $0x290] sm:$0xff]
    %v8569 = vld [vmem:[#allocation7 + $0x298] sm:$0xff]
    %v8570 = vld [vmem:[#allocation7 + $0x2a0] sm:$0xff]
    %v8571 = vld [vmem:[#allocation7 + $0x2a8] sm:$0xff]
    %v8572 = vld [vmem:[#allocation7 + $0x2b0] sm:$0xff]
    %v8573 = vld [vmem:[#allocation7 + $0x2b8] sm:$0xff]
    %v8574 = vld [vmem:[#allocation7 + $0x2c0] sm:$0xff]
    %v8575 = vld [vmem:[#allocation7 + $0x2c8] sm:$0xff]
    %v8576 = vld [vmem:[#allocation7 + $0x2d0] sm:$0xff]
    %v8577 = vld [vmem:[#allocation7 + $0x2d8] sm:$0xff]
    %v8578 = vld [vmem:[#allocation7 + $0x2e0] sm:$0xff]
    %v8579 = vld [vmem:[#allocation7 + $0x2e8] sm:$0xff]
    %v8580 = vld [vmem:[#allocation7 + $0x2f0] sm:$0xff]
    %v8581 = vld [vmem:[#allocation7 + $0x2f8] sm:$0xff]
    %v8678 = vunpack.c.l.b16 %v8486
    %v8679 = vunpack.c.h.b16 %v8486
    %v8680 = vunpack.c.l.b16 %v8487
    %v8681 = vunpack.c.h.b16 %v8487
    %v8682 = vunpack.c.l.b16 %v8488
    %v8683 = vunpack.c.h.b16 %v8488
    %v8684 = vunpack.c.l.b16 %v8489
    %v8685 = vunpack.c.h.b16 %v8489
    %v8686 = vunpack.c.l.b16 %v8490
    %v8687 = vunpack.c.h.b16 %v8490
    %v8688 = vunpack.c.l.b16 %v8491
    %v8689 = vunpack.c.h.b16 %v8491
    %v8690 = vunpack.c.l.b16 %v8492
    %v8691 = vunpack.c.h.b16 %v8492
    %v8692 = vunpack.c.l.b16 %v8493
    %v8693 = vunpack.c.h.b16 %v8493
    %v8694 = vunpack.c.l.b16 %v8494
    %v8695 = vunpack.c.h.b16 %v8494
    %v8696 = vunpack.c.l.b16 %v8495
    %v8697 = vunpack.c.h.b16 %v8495
    %v8698 = vunpack.c.l.b16 %v8496
    %v8699 = vunpack.c.h.b16 %v8496
    %v8700 = vunpack.c.l.b16 %v8497
    %v8701 = vunpack.c.h.b16 %v8497
    %v8702 = vunpack.c.l.b16 %v8498
    %v8703 = vunpack.c.h.b16 %v8498
    %v8704 = vunpack.c.l.b16 %v8499
    %v8705 = vunpack.c.h.b16 %v8499
    %v8706 = vunpack.c.l.b16 %v8500
    %v8707 = vunpack.c.h.b16 %v8500
    %v8708 = vunpack.c.l.b16 %v8501
    %v8709 = vunpack.c.h.b16 %v8501
    %v8710 = vunpack.c.l.b16 %v8502
    %v8711 = vunpack.c.h.b16 %v8502
    %v8712 = vunpack.c.l.b16 %v8503
    %v8713 = vunpack.c.h.b16 %v8503
    %v8714 = vunpack.c.l.b16 %v8504
    %v8715 = vunpack.c.h.b16 %v8504
    %v8716 = vunpack.c.l.b16 %v8505
    %v8717 = vunpack.c.h.b16 %v8505
    %v8718 = vunpack.c.l.b16 %v8506
    %v8719 = vunpack.c.h.b16 %v8506
    %v8720 = vunpack.c.l.b16 %v8507
    %v8721 = vunpack.c.h.b16 %v8507
    %v8722 = vunpack.c.l.b16 %v8508
    %v8723 = vunpack.c.h.b16 %v8508
    %v8724 = vunpack.c.l.b16 %v8509
    %v8725 = vunpack.c.h.b16 %v8509
    %v8726 = vunpack.c.l.b16 %v8510
    %v8727 = vunpack.c.h.b16 %v8510
    %v8728 = vunpack.c.l.b16 %v8511
    %v8729 = vunpack.c.h.b16 %v8511
    %v8730 = vunpack.c.l.b16 %v8512
    %v8731 = vunpack.c.h.b16 %v8512
    %v8732 = vunpack.c.l.b16 %v8513
    %v8733 = vunpack.c.h.b16 %v8513
    %v8734 = vunpack.c.l.b16 %v8514
    %v8735 = vunpack.c.h.b16 %v8514
    %v8736 = vunpack.c.l.b16 %v8515
    %v8737 = vunpack.c.h.b16 %v8515
    %v8738 = vunpack.c.l.b16 %v8516
    %v8739 = vunpack.c.h.b16 %v8516
    %v8740 = vunpack.c.l.b16 %v8517
    %v8741 = vunpack.c.h.b16 %v8517
    %v8742 = vunpack.c.l.b16 %v8518
    %v8743 = vunpack.c.h.b16 %v8518
    %v8744 = vunpack.c.l.b16 %v8519
    %v8745 = vunpack.c.h.b16 %v8519
    %v8746 = vunpack.c.l.b16 %v8520
    %v8747 = vunpack.c.h.b16 %v8520
    %v8748 = vunpack.c.l.b16 %v8521
    %v8749 = vunpack.c.h.b16 %v8521
    %v8750 = vunpack.c.l.b16 %v8522
    %v8751 = vunpack.c.h.b16 %v8522
    %v8752 = vunpack.c.l.b16 %v8523
    %v8753 = vunpack.c.h.b16 %v8523
    %v8754 = vunpack.c.l.b16 %v8524
    %v8755 = vunpack.c.h.b16 %v8524
    %v8756 = vunpack.c.l.b16 %v8525
    %v8757 = vunpack.c.h.b16 %v8525
    %v8758 = vunpack.c.l.b16 %v8526
    %v8759 = vunpack.c.h.b16 %v8526
    %v8760 = vunpack.c.l.b16 %v8527
    %v8761 = vunpack.c.h.b16 %v8527
    %v8762 = vunpack.c.l.b16 %v8528
    %v8763 = vunpack.c.h.b16 %v8528
    %v8764 = vunpack.c.l.b16 %v8529
    %v8765 = vunpack.c.h.b16 %v8529
    %v8766 = vunpack.c.l.b16 %v8530
    %v8767 = vunpack.c.h.b16 %v8530
    %v8768 = vunpack.c.l.b16 %v8531
    %v8769 = vunpack.c.h.b16 %v8531
    %v8770 = vunpack.c.l.b16 %v8532
    %v8771 = vunpack.c.h.b16 %v8532
    %v8772 = vunpack.c.l.b16 %v8533
    %v8773 = vunpack.c.h.b16 %v8533
    %v8774 = vunpack.c.l.b16 %v8534
    %v8775 = vunpack.c.h.b16 %v8534
    %v8776 = vunpack.c.l.b16 %v8535
    %v8777 = vunpack.c.h.b16 %v8535
    %v8778 = vunpack.c.l.b16 %v8536
    %v8779 = vunpack.c.h.b16 %v8536
    %v8780 = vunpack.c.l.b16 %v8537
    %v8781 = vunpack.c.h.b16 %v8537
    %v8782 = vunpack.c.l.b16 %v8538
    %v8783 = vunpack.c.h.b16 %v8538
    %v8784 = vunpack.c.l.b16 %v8539
    %v8785 = vunpack.c.h.b16 %v8539
    %v8786 = vunpack.c.l.b16 %v8540
    %v8787 = vunpack.c.h.b16 %v8540
    %v8788 = vunpack.c.l.b16 %v8541
    %v8789 = vunpack.c.h.b16 %v8541
    %v8790 = vunpack.c.l.b16 %v8542
    %v8791 = vunpack.c.h.b16 %v8542
    %v8792 = vunpack.c.l.b16 %v8543
    %v8793 = vunpack.c.h.b16 %v8543
    %v8794 = vunpack.c.l.b16 %v8544
    %v8795 = vunpack.c.h.b16 %v8544
    %v8796 = vunpack.c.l.b16 %v8545
    %v8797 = vunpack.c.h.b16 %v8545
    %v8798 = vunpack.c.l.b16 %v8546
    %v8799 = vunpack.c.h.b16 %v8546
    %v8800 = vunpack.c.l.b16 %v8547
    %v8801 = vunpack.c.h.b16 %v8547
    %v8802 = vunpack.c.l.b16 %v8548
    %v8803 = vunpack.c.h.b16 %v8548
    %v8804 = vunpack.c.l.b16 %v8549
    %v8805 = vunpack.c.h.b16 %v8549
    %v8806 = vunpack.c.l.b16 %v8550
    %v8807 = vunpack.c.h.b16 %v8550
    %v8808 = vunpack.c.l.b16 %v8551
    %v8809 = vunpack.c.h.b16 %v8551
    %v8810 = vunpack.c.l.b16 %v8552
    %v8811 = vunpack.c.h.b16 %v8552
    %v8812 = vunpack.c.l.b16 %v8553
    %v8813 = vunpack.c.h.b16 %v8553
    %v8814 = vunpack.c.l.b16 %v8554
    %v8815 = vunpack.c.h.b16 %v8554
    %v8816 = vunpack.c.l.b16 %v8555
    %v8817 = vunpack.c.h.b16 %v8555
    %v8818 = vunpack.c.l.b16 %v8556
    %v8819 = vunpack.c.h.b16 %v8556
    %v8820 = vunpack.c.l.b16 %v8557
    %v8821 = vunpack.c.h.b16 %v8557
    %v8822 = vunpack.c.l.b16 %v8558
    %v8823 = vunpack.c.h.b16 %v8558
    %v8824 = vunpack.c.l.b16 %v8559
    %v8825 = vunpack.c.h.b16 %v8559
    %v8826 = vunpack.c.l.b16 %v8560
    %v8827 = vunpack.c.h.b16 %v8560
    %v8828 = vunpack.c.l.b16 %v8561
    %v8829 = vunpack.c.h.b16 %v8561
    %v8830 = vunpack.c.l.b16 %v8562
    %v8831 = vunpack.c.h.b16 %v8562
    %v8832 = vunpack.c.l.b16 %v8563
    %v8833 = vunpack.c.h.b16 %v8563
    %v8834 = vunpack.c.l.b16 %v8564
    %v8835 = vunpack.c.h.b16 %v8564
    %v8836 = vunpack.c.l.b16 %v8565
    %v8837 = vunpack.c.h.b16 %v8565
    %v8838 = vunpack.c.l.b16 %v8566
    %v8839 = vunpack.c.h.b16 %v8566
    %v8840 = vunpack.c.l.b16 %v8567
    %v8841 = vunpack.c.h.b16 %v8567
    %v8842 = vunpack.c.l.b16 %v8568
    %v8843 = vunpack.c.h.b16 %v8568
    %v8844 = vunpack.c.l.b16 %v8569
    %v8845 = vunpack.c.h.b16 %v8569
    %v8846 = vunpack.c.l.b16 %v8570
    %v8847 = vunpack.c.h.b16 %v8570
    %v8848 = vunpack.c.l.b16 %v8571
    %v8849 = vunpack.c.h.b16 %v8571
    %v8850 = vunpack.c.l.b16 %v8572
    %v8851 = vunpack.c.h.b16 %v8572
    %v8852 = vunpack.c.l.b16 %v8573
    %v8853 = vunpack.c.h.b16 %v8573
    %v8854 = vunpack.c.l.b16 %v8574
    %v8855 = vunpack.c.h.b16 %v8574
    %v8856 = vunpack.c.l.b16 %v8575
    %v8857 = vunpack.c.h.b16 %v8575
    %v8858 = vunpack.c.l.b16 %v8576
    %v8859 = vunpack.c.h.b16 %v8576
    %v8860 = vunpack.c.l.b16 %v8577
    %v8861 = vunpack.c.h.b16 %v8577
    %v8862 = vunpack.c.l.b16 %v8578
    %v8863 = vunpack.c.h.b16 %v8578
    %v8864 = vunpack.c.l.b16 %v8579
    %v8865 = vunpack.c.h.b16 %v8579
    %v8866 = vunpack.c.l.b16 %v8580
    %v8867 = vunpack.c.h.b16 %v8580
    %v8868 = vunpack.c.l.b16 %v8581
    %v8869 = vunpack.c.h.b16 %v8581
    %v8870 = vpack.c.b16 %v8680, %v8678
    %v8871 = vpack.c.b16 %v8681, %v8679
    %v8872 = vpack.c.b16 %v8684, %v8682
    %v8873 = vpack.c.b16 %v8685, %v8683
    %v8874 = vpack.c.b16 %v8688, %v8686
    %v8875 = vpack.c.b16 %v8689, %v8687
    %v8876 = vpack.c.b16 %v8692, %v8690
    %v8877 = vpack.c.b16 %v8693, %v8691
    %v8878 = vpack.c.b16 %v8696, %v8694
    %v8879 = vpack.c.b16 %v8697, %v8695
    %v8880 = vpack.c.b16 %v8700, %v8698
    %v8881 = vpack.c.b16 %v8701, %v8699
    %v8882 = vpack.c.b16 %v8704, %v8702
    %v8883 = vpack.c.b16 %v8705, %v8703
    %v8884 = vpack.c.b16 %v8708, %v8706
    %v8885 = vpack.c.b16 %v8709, %v8707
    %v8886 = vpack.c.b16 %v8712, %v8710
    %v8887 = vpack.c.b16 %v8713, %v8711
    %v8888 = vpack.c.b16 %v8716, %v8714
    %v8889 = vpack.c.b16 %v8717, %v8715
    %v8890 = vpack.c.b16 %v8720, %v8718
    %v8891 = vpack.c.b16 %v8721, %v8719
    %v8892 = vpack.c.b16 %v8724, %v8722
    %v8893 = vpack.c.b16 %v8725, %v8723
    %v8894 = vpack.c.b16 %v8728, %v8726
    %v8895 = vpack.c.b16 %v8729, %v8727
    %v8896 = vpack.c.b16 %v8732, %v8730
    %v8897 = vpack.c.b16 %v8733, %v8731
    %v8898 = vpack.c.b16 %v8736, %v8734
    %v8899 = vpack.c.b16 %v8737, %v8735
    %v8900 = vpack.c.b16 %v8740, %v8738
    %v8901 = vpack.c.b16 %v8741, %v8739
    %v8902 = vpack.c.b16 %v8744, %v8742
    %v8903 = vpack.c.b16 %v8745, %v8743
    %v8904 = vpack.c.b16 %v8748, %v8746
    %v8905 = vpack.c.b16 %v8749, %v8747
    %v8906 = vpack.c.b16 %v8752, %v8750
    %v8907 = vpack.c.b16 %v8753, %v8751
    %v8908 = vpack.c.b16 %v8756, %v8754
    %v8909 = vpack.c.b16 %v8757, %v8755
    %v8910 = vpack.c.b16 %v8760, %v8758
    %v8911 = vpack.c.b16 %v8761, %v8759
    %v8912 = vpack.c.b16 %v8764, %v8762
    %v8913 = vpack.c.b16 %v8765, %v8763
    %v8914 = vpack.c.b16 %v8768, %v8766
    %v8915 = vpack.c.b16 %v8769, %v8767
    %v8916 = vpack.c.b16 %v8772, %v8770
    %v8917 = vpack.c.b16 %v8773, %v8771
    %v8918 = vpack.c.b16 %v8776, %v8774
    %v8919 = vpack.c.b16 %v8777, %v8775
    %v8920 = vpack.c.b16 %v8780, %v8778
    %v8921 = vpack.c.b16 %v8781, %v8779
    %v8922 = vpack.c.b16 %v8784, %v8782
    %v8923 = vpack.c.b16 %v8785, %v8783
    %v8924 = vpack.c.b16 %v8788, %v8786
    %v8925 = vpack.c.b16 %v8789, %v8787
    %v8926 = vpack.c.b16 %v8792, %v8790
    %v8927 = vpack.c.b16 %v8793, %v8791
    %v8928 = vpack.c.b16 %v8796, %v8794
    %v8929 = vpack.c.b16 %v8797, %v8795
    %v8930 = vpack.c.b16 %v8800, %v8798
    %v8931 = vpack.c.b16 %v8801, %v8799
    %v8932 = vpack.c.b16 %v8804, %v8802
    %v8933 = vpack.c.b16 %v8805, %v8803
    %v8934 = vpack.c.b16 %v8808, %v8806
    %v8935 = vpack.c.b16 %v8809, %v8807
    %v8936 = vpack.c.b16 %v8812, %v8810
    %v8937 = vpack.c.b16 %v8813, %v8811
    %v8938 = vpack.c.b16 %v8816, %v8814
    %v8939 = vpack.c.b16 %v8817, %v8815
    %v8940 = vpack.c.b16 %v8820, %v8818
    %v8941 = vpack.c.b16 %v8821, %v8819
    %v8942 = vpack.c.b16 %v8824, %v8822
    %v8943 = vpack.c.b16 %v8825, %v8823
    %v8944 = vpack.c.b16 %v8828, %v8826
    %v8945 = vpack.c.b16 %v8829, %v8827
    %v8946 = vpack.c.b16 %v8832, %v8830
    %v8947 = vpack.c.b16 %v8833, %v8831
    %v8948 = vpack.c.b16 %v8836, %v8834
    %v8949 = vpack.c.b16 %v8837, %v8835
    %v8950 = vpack.c.b16 %v8840, %v8838
    %v8951 = vpack.c.b16 %v8841, %v8839
    %v8952 = vpack.c.b16 %v8844, %v8842
    %v8953 = vpack.c.b16 %v8845, %v8843
    %v8954 = vpack.c.b16 %v8848, %v8846
    %v8955 = vpack.c.b16 %v8849, %v8847
    %v8956 = vpack.c.b16 %v8852, %v8850
    %v8957 = vpack.c.b16 %v8853, %v8851
    %v8958 = vpack.c.b16 %v8856, %v8854
    %v8959 = vpack.c.b16 %v8857, %v8855
    %v8960 = vpack.c.b16 %v8860, %v8858
    %v8961 = vpack.c.b16 %v8861, %v8859
    %v8962 = vpack.c.b16 %v8864, %v8862
    %v8963 = vpack.c.b16 %v8865, %v8863
    %v8964 = vpack.c.b16 %v8868, %v8866
    %v8965 = vpack.c.b16 %v8869, %v8867
    %9062 = vmatprep.subr.bf16.mxu0 %v8885
    %9063 = vmatpush1.bf16.msra.mxu0 %v8884
    %9064 = vmatprep.subr.bf16.mxu0 %v8883
    %9065 = vmatpush1.bf16.msra.mxu0 %v8882
    %9066 = vmatprep.subr.bf16.mxu0 %v8881
    %9067 = vmatpush1.bf16.msra.mxu0 %v8880
    %9068 = vmatprep.subr.bf16.mxu0 %v8879
    %9069 = vmatpush1.bf16.msra.mxu0 %v8878
    %9070 = vmatprep.subr.bf16.mxu0 %v8877
    %9071 = vmatpush1.bf16.msra.mxu0 %v8876
    %9072 = vmatprep.subr.bf16.mxu0 %v8875
    %9073 = vmatpush1.bf16.msra.mxu0 %v8874
    %9074 = vmatprep.subr.bf16.mxu0 %v8873
    %9075 = vmatpush1.bf16.msra.mxu0 %v8872
    %9076 = vmatprep.subr.bf16.mxu0 %v8871
    %9077 = vmatpush1.bf16.msra.mxu0 %v8870
    %9078 = vmatprep.subr.bf16.mxu0 %v8901
    %9079 = vmatpush2.bf16.msra.mxu0 %v8900
    %9080 = vmatprep.subr.bf16.mxu0 %v8899
    %9081 = vmatpush2.bf16.msra.mxu0 %v8898
    %9082 = vmatprep.subr.bf16.mxu0 %v8897
    %9083 = vmatpush2.bf16.msra.mxu0 %v8896
    %9084 = vmatprep.subr.bf16.mxu0 %v8895
    %9085 = vmatpush2.bf16.msra.mxu0 %v8894
    %9086 = vmatprep.subr.bf16.mxu0 %v8893
    %9087 = vmatpush2.bf16.msra.mxu0 %v8892
    %9088 = vmatprep.subr.bf16.mxu0 %v8891
    %9089 = vmatpush2.bf16.msra.mxu0 %v8890
    %9090 = vmatprep.subr.bf16.mxu0 %v8889
    %9091 = vmatpush2.bf16.msra.mxu0 %v8888
    %9092 = vmatprep.subr.bf16.mxu0 %v8887
    %9093 = vmatpush2.bf16.msra.mxu0 %v8886
    %9094 = vmatprep.mubr.bf16.mxu0 %v8403
    %9095 = vmatmul.mubr.bf16.gmra.mxu0 %v8402
    %v9096 = vpop.f32.mrf.mxu0
    %v9097 = vadd.f32 0.0, %v9096
    %v9098 = vpop.f32.mrf.mxu0
    %v9099 = vadd.f32 0.0, %v9098
    %v9100 = vpop.f32.mrf.mxu0
    %v9101 = vadd.f32 0.0, %v9100
    %v9102 = vpop.f32.mrf.mxu0
    %v9103 = vadd.f32 0.0, %v9102
    %9104 = vmatprep.mubr.bf16.mxu0 %v8406
    %9105 = vmatmul.mubr.bf16.gmra.mxu0 %v8405
    %v9106 = vpop.f32.mrf.mxu0
    %v9107 = vadd.f32 0.0, %v9106
    %v9108 = vpop.f32.mrf.mxu0
    %v9109 = vadd.f32 0.0, %v9108
    %v9110 = vpop.f32.mrf.mxu0
    %v9111 = vadd.f32 0.0, %v9110
    %v9112 = vpop.f32.mrf.mxu0
    %v9113 = vadd.f32 0.0, %v9112
    %9114 = vmatprep.mubr.bf16.mxu0 %v8409
    %9115 = vmatmul.mubr.bf16.gmra.mxu0 %v8408
    %v9116 = vpop.f32.mrf.mxu0
    %v9117 = vadd.f32 0.0, %v9116
    %v9118 = vpop.f32.mrf.mxu0
    %v9119 = vadd.f32 0.0, %v9118
    %v9120 = vpop.f32.mrf.mxu0
    %v9121 = vadd.f32 0.0, %v9120
    %v9122 = vpop.f32.mrf.mxu0
    %v9123 = vadd.f32 0.0, %v9122
    %9124 = vmatprep.mubr.bf16.mxu0 %v8412
    %9125 = vmatmul.mubr.bf16.gmra.mxu0 %v8411
    %v9126 = vpop.f32.mrf.mxu0
    %v9127 = vadd.f32 0.0, %v9126
    %v9128 = vpop.f32.mrf.mxu0
    %v9129 = vadd.f32 0.0, %v9128
    %v9130 = vpop.f32.mrf.mxu0
    %v9131 = vadd.f32 0.0, %v9130
    %v9132 = vpop.f32.mrf.mxu0
    %v9133 = vadd.f32 0.0, %v9132
    %9134 = vmatprep.mubr.bf16.mxu0 %v8415
    %9135 = vmatmul.mubr.bf16.gmra.mxu0 %v8414
    %v9136 = vpop.f32.mrf.mxu0
    %v9137 = vadd.f32 0.0, %v9136
    %v9138 = vpop.f32.mrf.mxu0
    %v9139 = vadd.f32 0.0, %v9138
    %v9140 = vpop.f32.mrf.mxu0
    %v9141 = vpop.f32.mrf.mxu0
    %9142 = vdwg.mxu0
    %9143 = vmatprep.subr.bf16.mxu0 %v8917
    %9144 = vmatpush1.bf16.msra.mxu0 %v8916
    %9145 = vmatprep.subr.bf16.mxu0 %v8915
    %9146 = vmatpush1.bf16.msra.mxu0 %v8914
    %9147 = vmatprep.subr.bf16.mxu0 %v8913
    %9148 = vmatpush1.bf16.msra.mxu0 %v8912
    %9149 = vmatprep.subr.bf16.mxu0 %v8911
    %9150 = vmatpush1.bf16.msra.mxu0 %v8910
    %9151 = vmatprep.subr.bf16.mxu0 %v8909
    %9152 = vmatpush1.bf16.msra.mxu0 %v8908
    %9153 = vmatprep.subr.bf16.mxu0 %v8907
    %9154 = vmatpush1.bf16.msra.mxu0 %v8906
    %9155 = vmatprep.subr.bf16.mxu0 %v8905
    %9156 = vmatpush1.bf16.msra.mxu0 %v8904
    %9157 = vmatprep.subr.bf16.mxu0 %v8903
    %9158 = vmatpush1.bf16.msra.mxu0 %v8902
    %9159 = vmatprep.subr.bf16.mxu0 %v8933
    %9160 = vmatpush2.bf16.msra.mxu0 %v8932
    %9161 = vmatprep.subr.bf16.mxu0 %v8931
    %9162 = vmatpush2.bf16.msra.mxu0 %v8930
    %9163 = vmatprep.subr.bf16.mxu0 %v8929
    %9164 = vmatpush2.bf16.msra.mxu0 %v8928
    %9165 = vmatprep.subr.bf16.mxu0 %v8927
    %9166 = vmatpush2.bf16.msra.mxu0 %v8926
    %9167 = vmatprep.subr.bf16.mxu0 %v8925
    %9168 = vmatpush2.bf16.msra.mxu0 %v8924
    %9169 = vmatprep.subr.bf16.mxu0 %v8923
    %9170 = vmatpush2.bf16.msra.mxu0 %v8922
    %9171 = vmatprep.subr.bf16.mxu0 %v8921
    %9172 = vmatpush2.bf16.msra.mxu0 %v8920
    %9173 = vmatprep.subr.bf16.mxu0 %v8919
    %9174 = vmatpush2.bf16.msra.mxu0 %v8918
    %9175 = vmatprep.mubr.bf16.mxu0 %v8471
    %9176 = vmatmul.mubr.bf16.gmra.mxu0 %v8404
    %v9177 = vpop.f32.mrf.mxu0
    %v9178 = vadd.f32 %v9097, %v9177
    %v9179 = vpop.f32.mrf.mxu0
    %v9180 = vadd.f32 %v9099, %v9179
    %v9181 = vpop.f32.mrf.mxu0
    %v9182 = vadd.f32 %v9101, %v9181
    %v9183 = vpop.f32.mrf.mxu0
    %v9184 = vadd.f32 %v9103, %v9183
    %9185 = vmatprep.mubr.bf16.mxu0 %v8474
    %9186 = vmatmul.mubr.bf16.gmra.mxu0 %v8407
    %v9187 = vpop.f32.mrf.mxu0
    %v9188 = vadd.f32 %v9107, %v9187
    %v9189 = vpop.f32.mrf.mxu0
    %v9190 = vadd.f32 %v9109, %v9189
    %v9191 = vpop.f32.mrf.mxu0
    %v9192 = vadd.f32 %v9111, %v9191
    %v9193 = vpop.f32.mrf.mxu0
    %v9194 = vadd.f32 %v9113, %v9193
    %9195 = vmatprep.mubr.bf16.mxu0 %v8477
    %9196 = vmatmul.mubr.bf16.gmra.mxu0 %v8410
    %v9197 = vpop.f32.mrf.mxu0
    %v9198 = vadd.f32 %v9117, %v9197
    %v9199 = vpop.f32.mrf.mxu0
    %v9200 = vadd.f32 %v9119, %v9199
    %v9201 = vpop.f32.mrf.mxu0
    %v9202 = vadd.f32 %v9121, %v9201
    %v9203 = vpop.f32.mrf.mxu0
    %v9204 = vadd.f32 %v9123, %v9203
    %9205 = vmatprep.mubr.bf16.mxu0 %v8480
    %9206 = vmatmul.mubr.bf16.gmra.mxu0 %v8413
    %v9207 = vpop.f32.mrf.mxu0
    %v9208 = vadd.f32 %v9127, %v9207
    %v9209 = vpop.f32.mrf.mxu0
    %v9210 = vadd.f32 %v9129, %v9209
    %v9211 = vpop.f32.mrf.mxu0
    %v9212 = vadd.f32 %v9131, %v9211
    %v9213 = vpop.f32.mrf.mxu0
    %v9214 = vadd.f32 %v9133, %v9213
    %9215 = vmatprep.mubr.bf16.mxu0 %v8483
    %9216 = vmatmul.mubr.bf16.gmra.mxu0 %v8416
    %v9217 = vpop.f32.mrf.mxu0
    %v9218 = vadd.f32 %v9137, %v9217
    %v9219 = vpop.f32.mrf.mxu0
    %v9220 = vadd.f32 %v9139, %v9219
    %v9221 = vpop.f32.mrf.mxu0
    %v9222 = vpop.f32.mrf.mxu0
    %9223 = vdwg.mxu0
    %9224 = vmatprep.subr.bf16.mxu0 %v8949
    %9225 = vmatpush1.bf16.msra.mxu0 %v8948
    %9226 = vmatprep.subr.bf16.mxu0 %v8947
    %9227 = vmatpush1.bf16.msra.mxu0 %v8946
    %9228 = vmatprep.subr.bf16.mxu0 %v8945
    %9229 = vmatpush1.bf16.msra.mxu0 %v8944
    %9230 = vmatprep.subr.bf16.mxu0 %v8943
    %9231 = vmatpush1.bf16.msra.mxu0 %v8942
    %9232 = vmatprep.subr.bf16.mxu0 %v8941
    %9233 = vmatpush1.bf16.msra.mxu0 %v8940
    %9234 = vmatprep.subr.bf16.mxu0 %v8939
    %9235 = vmatpush1.bf16.msra.mxu0 %v8938
    %9236 = vmatprep.subr.bf16.mxu0 %v8937
    %9237 = vmatpush1.bf16.msra.mxu0 %v8936
    %9238 = vmatprep.subr.bf16.mxu0 %v8935
    %9239 = vmatpush1.bf16.msra.mxu0 %v8934
    %9240 = vmatprep.subr.bf16.mxu0 %v8965
    %9241 = vmatpush2.bf16.msra.mxu0 %v8964
    %9242 = vmatprep.subr.bf16.mxu0 %v8963
    %9243 = vmatpush2.bf16.msra.mxu0 %v8962
    %9244 = vmatprep.subr.bf16.mxu0 %v8961
    %9245 = vmatpush2.bf16.msra.mxu0 %v8960
    %9246 = vmatprep.subr.bf16.mxu0 %v8959
    %9247 = vmatpush2.bf16.msra.mxu0 %v8958
    %9248 = vmatprep.subr.bf16.mxu0 %v8957
    %9249 = vmatpush2.bf16.msra.mxu0 %v8956
    %9250 = vmatprep.subr.bf16.mxu0 %v8955
    %9251 = vmatpush2.bf16.msra.mxu0 %v8954
    %9252 = vmatprep.subr.bf16.mxu0 %v8953
    %9253 = vmatpush2.bf16.msra.mxu0 %v8952
    %9254 = vmatprep.subr.bf16.mxu0 %v8951
    %9255 = vmatpush2.bf16.msra.mxu0 %v8950
    %9256 = vmatprep.mubr.bf16.mxu0 %v8473
    %9257 = vmatmul.mubr.bf16.gmra.mxu0 %v8472
    %v9258 = vpop.f32.mrf.mxu0
    %v9259 = vadd.f32 %v9178, %v9258
    %v9260 = vpop.f32.mrf.mxu0
    %v9261 = vadd.f32 %v9180, %v9260
    %v9262 = vpop.f32.mrf.mxu0
    %v9263 = vadd.f32 %v9182, %v9262
    %v9264 = vpop.f32.mrf.mxu0
    %v9265 = vadd.f32 %v9184, %v9264
    %9266 = vmatprep.mubr.bf16.mxu0 %v8476
    %9267 = vmatmul.mubr.bf16.gmra.mxu0 %v8475
    %v9268 = vpop.f32.mrf.mxu0
    %v9269 = vadd.f32 %v9188, %v9268
    %v9270 = vpop.f32.mrf.mxu0
    %v9271 = vadd.f32 %v9190, %v9270
    %v9272 = vpop.f32.mrf.mxu0
    %v9273 = vadd.f32 %v9192, %v9272
    %v9274 = vpop.f32.mrf.mxu0
    %v9275 = vadd.f32 %v9194, %v9274
    %9276 = vmatprep.mubr.bf16.mxu0 %v8479
    %9277 = vmatmul.mubr.bf16.gmra.mxu0 %v8478
    %v9278 = vpop.f32.mrf.mxu0
    %v9279 = vadd.f32 %v9198, %v9278
    %v9280 = vpop.f32.mrf.mxu0
    %v9281 = vadd.f32 %v9200, %v9280
    %v9282 = vpop.f32.mrf.mxu0
    %v9283 = vadd.f32 %v9202, %v9282
    %v9284 = vpop.f32.mrf.mxu0
    %v9285 = vadd.f32 %v9204, %v9284
    %9286 = vmatprep.mubr.bf16.mxu0 %v8482
    %9287 = vmatmul.mubr.bf16.gmra.mxu0 %v8481
    %v9288 = vpop.f32.mrf.mxu0
    %v9289 = vadd.f32 %v9208, %v9288
    %v9290 = vpop.f32.mrf.mxu0
    %v9291 = vadd.f32 %v9210, %v9290
    %v9292 = vpop.f32.mrf.mxu0
    %v9293 = vadd.f32 %v9212, %v9292
    %v9294 = vpop.f32.mrf.mxu0
    %v9295 = vadd.f32 %v9214, %v9294
    %9296 = vmatprep.mubr.bf16.mxu0 %v8485
    %9297 = vmatmul.mubr.bf16.gmra.mxu0 %v8484
    %v9298 = vpop.f32.mrf.mxu0
    %v9299 = vadd.f32 %v9218, %v9298
    %v9300 = vpop.f32.mrf.mxu0
    %v9301 = vadd.f32 %v9220, %v9300
    %v9302 = vpop.f32.mrf.mxu0
    %v9303 = vpop.f32.mrf.mxu0
    %9304 = vdwg.mxu0
    %v9305 = vadd.f32 %v9259, %v9263
    %v9306 = vadd.f32 %v9305, %v9269
    %v9307 = vadd.f32 %v9306, %v9273
    %v9308 = vadd.f32 %v9307, %v9279
    %v9309 = vadd.f32 %v9308, %v9283
    %v9310 = vadd.f32 %v9309, %v9289
    %v9311 = vadd.f32 %v9310, %v9293
    %v9312 = vadd.f32 %v9311, %v9299
    %v9313 = vadd.f32 %v9261, %v9265
    %v9314 = vadd.f32 %v9313, %v9271
    %v9315 = vadd.f32 %v9314, %v9275
    %v9316 = vadd.f32 %v9315, %v9281
    %v9317 = vadd.f32 %v9316, %v9285
    %v9318 = vadd.f32 %v9317, %v9291
    %v9319 = vadd.f32 %v9318, %v9295
    %v9320 = vadd.f32 %v9319, %v9301
    %v9321 = vrcp.pop 9.0
    %v9322 = vmul.f32 %v9312, %v9321
    %v9323 = vmul.f32 %v9320, %v9321
    %v9324 = vsub.f32 %v9259, %v9322
    %v9325 = vsub.f32 %v9261, %v9323
    %v9326 = vsub.f32 %v9263, %v9322
    %v9327 = vsub.f32 %v9265, %v9323
    %v9328 = vsub.f32 %v9269, %v9322
    %v9329 = vsub.f32 %v9271, %v9323
    %v9330 = vsub.f32 %v9273, %v9322
    %v9331 = vsub.f32 %v9275, %v9323
    %v9332 = vsub.f32 %v9279, %v9322
    %v9333 = vsub.f32 %v9281, %v9323
    %v9334 = vsub.f32 %v9283, %v9322
    %v9335 = vsub.f32 %v9285, %v9323
    %v9336 = vsub.f32 %v9289, %v9322
    %v9337 = vsub.f32 %v9291, %v9323
    %v9338 = vsub.f32 %v9293, %v9322
    %v9339 = vsub.f32 %v9295, %v9323
    %v9340 = vsub.f32 %v9299, %v9322
    %v9341 = vsub.f32 %v9301, %v9323
    %v9342 = vmul.f32 %v9324, %v9324
    %v9343 = vmul.f32 %v9325, %v9325
    %v9344 = vmul.f32 %v9326, %v9326
    %v9345 = vmul.f32 %v9327, %v9327
    %v9346 = vmul.f32 %v9328, %v9328
    %v9347 = vmul.f32 %v9329, %v9329
    %v9348 = vmul.f32 %v9330, %v9330
    %v9349 = vmul.f32 %v9331, %v9331
    %v9350 = vmul.f32 %v9332, %v9332
    %v9351 = vmul.f32 %v9333, %v9333
    %v9352 = vmul.f32 %v9334, %v9334
    %v9353 = vmul.f32 %v9335, %v9335
    %v9354 = vmul.f32 %v9336, %v9336
    %v9355 = vmul.f32 %v9337, %v9337
    %v9356 = vmul.f32 %v9338, %v9338
    %v9357 = vmul.f32 %v9339, %v9339
    %v9358 = vmul.f32 %v9340, %v9340
    %v9359 = vmul.f32 %v9341, %v9341
    %v9360 = vadd.f32 %v9342, %v9344
    %v9361 = vadd.f32 %v9360, %v9346
    %v9362 = vadd.f32 %v9361, %v9348
    %v9363 = vadd.f32 %v9362, %v9350
    %v9364 = vadd.f32 %v9363, %v9352
    %v9365 = vadd.f32 %v9364, %v9354
    %v9366 = vadd.f32 %v9365, %v9356
    %v9367 = vadd.f32 %v9366, %v9358
    %v9368 = vadd.f32 %v9343, %v9345
    %v9369 = vadd.f32 %v9368, %v9347
    %v9370 = vadd.f32 %v9369, %v9349
    %v9371 = vadd.f32 %v9370, %v9351
    %v9372 = vadd.f32 %v9371, %v9353
    %v9373 = vadd.f32 %v9372, %v9355
    %v9374 = vadd.f32 %v9373, %v9357
    %v9375 = vadd.f32 %v9374, %v9359
    %v9376 = vrcp.pop 8.0
    %v9377 = vmul.f32 %v9367, %v9376
    %v9378 = vmul.f32 %v9375, %v9376
    %v9379 = vadd.f32 %v9377, 1e-08
    %v9380 = vadd.f32 %v9378, 1e-08
    %v9381 = vrcp.pop %v9379
    %v9382 = vmul.f32 1.0, %v9381
    %v9383 = vrcp.pop %v9380
    %v9384 = vmul.f32 1.0, %v9383
    %v9385 = vsub.f32 0.0, %v8213
    %v9386 = vsub.f32 0.0, %v8214
    %v9387 = vsub.f32 0.0, %v8215
    %v9388 = vsub.f32 0.0, %v8216
    %v9389 = vsub.f32 0.0, %v8217
    %v9390 = vsub.f32 0.0, %v8218
    %v9391 = vsub.f32 0.0, %v8219
    %v9392 = vsub.f32 0.0, %v8220
    %v9393 = vsub.f32 0.0, %v8221
    %v9394 = vsub.f32 0.0, %v8222
    %v9395 = vsub.f32 0.0, %v8223
    %v9396 = vsub.f32 0.0, %v8224
    %v9397 = vsub.f32 0.0, %v8225
    %v9398 = vsub.f32 0.0, %v8226
    %v9399 = vsub.f32 0.0, %v8227
    %v9400 = vsub.f32 0.0, %v8228
    %v9401 = vsub.f32 0.0, %v8229
    %v9402 = vsub.f32 0.0, %v8230
    %v9403 = vsub.f32 0.0, %v8231
    %v9404 = vsub.f32 0.0, %v8232
    %v9405 = vsub.f32 0.0, %v8233
    %v9406 = vsub.f32 0.0, %v8234
    %v9407 = vsub.f32 0.0, %v8235
    %v9408 = vsub.f32 0.0, %v8236
    %v9409 = vsub.f32 0.0, %v8237
    %v9410 = vsub.f32 0.0, %v8238
    %v9411 = vsub.f32 0.0, %v8239
    %v9412 = vsub.f32 0.0, %v8240
    %v9413 = vsub.f32 0.0, %v8241
    %v9414 = vsub.f32 0.0, %v8242
    %v9415 = vsub.f32 0.0, %v8243
    %v9416 = vsub.f32 0.0, %v8244
    %v9417 = vsub.f32 0.0, %v8245
    %v9418 = vsub.f32 0.0, %v8246
    %v9419 = vsub.f32 0.0, %v8247
    %v9420 = vsub.f32 0.0, %v8248
    %v9421 = vsub.f32 0.0, %v8249
    %v9422 = vsub.f32 0.0, %v8250
    %v9423 = vsub.f32 0.0, %v8251
    %v9424 = vsub.f32 0.0, %v8252
    %v9425 = vsub.f32 0.0, %v8253
    %v9426 = vsub.f32 0.0, %v8254
    %v9427 = vsub.f32 0.0, %v8255
    %v9428 = vsub.f32 0.0, %v8256
    %v9429 = vsub.f32 0.0, %v8257
    %v9430 = vsub.f32 0.0, %v8258
    %v9431 = vsub.f32 0.0, %v8259
    %v9432 = vsub.f32 0.0, %v8260
    %v9433 = vsub.f32 0.0, %v8261
    %v9434 = vsub.f32 0.0, %v8262
    %v9435 = vsub.f32 0.0, %v8263
    %v9436 = vsub.f32 0.0, %v8264
    %v9437 = vsub.f32 0.0, %v8265
    %v9438 = vsub.f32 0.0, %v8266
    %v9439 = vsub.f32 0.0, %v8267
    %v9440 = vsub.f32 0.0, %v8268
    %v9441 = vsub.f32 0.0, %v8269
    %v9442 = vsub.f32 0.0, %v8270
    %v9443 = vsub.f32 0.0, %v8271
    %v9444 = vsub.f32 0.0, %v8272
    %v9445 = vsub.f32 0.0, %v8273
    %v9446 = vsub.f32 0.0, %v8274
    %v9447 = vsub.f32 0.0, %v8275
    %v9448 = vsub.f32 0.0, %v8276
    %v9449 = vsub.f32 0.0, %v8277
    %v9450 = vsub.f32 0.0, %v8278
    %v9451 = vsub.f32 0.0, %v8279
    %v9452 = vsub.f32 0.0, %v8280
    %v9453 = vsub.f32 0.0, %v8281
    %v9454 = vsub.f32 0.0, %v8282
    %v9455 = vsub.f32 0.0, %v8283
    %v9456 = vsub.f32 0.0, %v8284
    %v9457 = vsub.f32 0.0, %v8285
    %v9458 = vsub.f32 0.0, %v8286
    %v9459 = vsub.f32 0.0, %v8287
    %v9460 = vsub.f32 0.0, %v8288
    %v9461 = vsub.f32 0.0, %v8289
    %v9462 = vsub.f32 0.0, %v8290
    %v9463 = vsub.f32 0.0, %v8291
    %v9464 = vsub.f32 0.0, %v8292
    %v9465 = vsub.f32 0.0, %v8293
    %v9466 = vsub.f32 0.0, %v8294
    %v9467 = vsub.f32 0.0, %v8295
    %v9468 = vsub.f32 0.0, %v8296
    %v9469 = vsub.f32 0.0, %v8297
    %v9470 = vsub.f32 0.0, %v8298
    %v9471 = vsub.f32 0.0, %v8299
    %v9472 = vsub.f32 0.0, %v8300
    %v9473 = vsub.f32 0.0, %v8301
    %v9474 = vsub.f32 0.0, %v8302
    %v9475 = vsub.f32 0.0, %v8303
    %v9476 = vsub.f32 0.0, %v8304
    %v9477 = vsub.f32 0.0, %v8305
    %v9478 = vsub.f32 0.0, %v8306
    %v9479 = vsub.f32 0.0, %v8307
    %v9480 = vsub.f32 0.0, %v8308
    %v9481 = vsub.f32 0.0, %v8309
    %v9482 = vsub.f32 0.0, %v8310
    %v9483 = vsub.f32 0.0, %v8311
    %v9484 = vsub.f32 0.0, %v8312
    %v9485 = vsub.f32 0.0, %v8313
    %v9486 = vsub.f32 0.0, %v8314
    %v9487 = vsub.f32 0.0, %v8315
    %v9488 = vsub.f32 0.0, %v8316
    %v9489 = vsub.f32 0.0, %v8317
    %v9490 = vsub.f32 0.0, %v8318
    %v9491 = vsub.f32 0.0, %v8319
    %v9492 = vsub.f32 0.0, %v8320
    %v9493 = vsub.f32 0.0, %v8321
    %v9494 = vsub.f32 0.0, %v8322
    %v9495 = vsub.f32 0.0, %v8323
    %v9496 = vsub.f32 0.0, %v8324
    %v9497 = vsub.f32 0.0, %v8325
    %v9498 = vsub.f32 0.0, %v8326
    %v9499 = vsub.f32 0.0, %v8327
    %v9500 = vsub.f32 0.0, %v8328
    %v9501 = vsub.f32 0.0, %v8329
    %v9502 = vsub.f32 0.0, %v8330
    %v9503 = vsub.f32 0.0, %v8331
    %v9504 = vsub.f32 0.0, %v8332
    %v9505 = vsub.f32 0.0, %v8333
    %v9506 = vsub.f32 0.0, %v8334
    %v9507 = vsub.f32 0.0, %v8335
    %v9508 = vsub.f32 0.0, %v8336
    %v9509 = vsub.f32 0.0, %v8337
    %v9510 = vsub.f32 0.0, %v8338
    %v9511 = vsub.f32 0.0, %v8339
    %v9512 = vsub.f32 0.0, %v8340
    %v9513 = vsub.f32 0.0, %v8341
    %v9514 = vsub.f32 0.0, %v8342
    %v9515 = vsub.f32 0.0, %v8343
    %v9516 = vsub.f32 0.0, %v8344
    %v9517 = vsub.f32 0.0, %v8345
    %v9518 = vsub.f32 0.0, %v8346
    %v9519 = vsub.f32 0.0, %v8347
    %v9520 = vsub.f32 0.0, %v8348
    %v9521 = vsub.f32 0.0, %v8349
    %v9522 = vsub.f32 0.0, %v8350
    %v9523 = vsub.f32 0.0, %v8351
    %v9524 = vsub.f32 0.0, %v8352
    %v9525 = vsub.f32 0.0, %v8353
    %v9526 = vsub.f32 0.0, %v8354
    %v9527 = vsub.f32 0.0, %v8355
    %v9528 = vsub.f32 0.0, %v8356
    %v9529 = vsub.f32 0.0, %v8357
    %v9530 = vsub.f32 0.0, %v8358
    %v9531 = vsub.f32 0.0, %v8359
    %v9532 = vsub.f32 0.0, %v8360
    %v9533 = vsub.f32 0.0, %v8361
    %v9534 = vsub.f32 0.0, %v8362
    %v9535 = vsub.f32 0.0, %v8363
    %v9536 = vsub.f32 0.0, %v8364
    %v9537 = vsub.f32 0.0, %v8365
    %v9538 = vsub.f32 0.0, %v8366
    %v9539 = vsub.f32 0.0, %v8367
    %v9540 = vsub.f32 0.0, %v8368
    %v9541 = vsub.f32 0.0, %v8369
    %v9542 = vsub.f32 0.0, %v8370
    %v9543 = vsub.f32 0.0, %v8371
    %v9544 = vsub.f32 0.0, %v8372
    %v9545 = vsub.f32 0.0, %v8373
    %v9546 = vsub.f32 0.0, %v8374
    %v9547 = vmul.f32 %v9385, %v9382
    %v9548 = vmul.f32 %v9386, %v9384
    %v9549 = vmul.f32 %v9387, %v9382
    %v9550 = vmul.f32 %v9388, %v9384
    %v9551 = vmul.f32 %v9389, %v9382
    %v9552 = vmul.f32 %v9390, %v9384
    %v9553 = vmul.f32 %v9391, %v9382
    %v9554 = vmul.f32 %v9392, %v9384
    %v9555 = vmul.f32 %v9393, %v9382
    %v9556 = vmul.f32 %v9394, %v9384
    %v9557 = vmul.f32 %v9395, %v9382
    %v9558 = vmul.f32 %v9396, %v9384
    %v9559 = vmul.f32 %v9397, %v9382
    %v9560 = vmul.f32 %v9398, %v9384
    %v9561 = vmul.f32 %v9399, %v9382
    %v9562 = vmul.f32 %v9400, %v9384
    %v9563 = vmul.f32 %v9401, %v9382
    %v9564 = vmul.f32 %v9402, %v9384
    %v9565 = vmul.f32 %v9403, %v9382
    %v9566 = vmul.f32 %v9404, %v9384
    %v9567 = vmul.f32 %v9405, %v9382
    %v9568 = vmul.f32 %v9406, %v9384
    %v9569 = vmul.f32 %v9407, %v9382
    %v9570 = vmul.f32 %v9408, %v9384
    %v9571 = vmul.f32 %v9409, %v9382
    %v9572 = vmul.f32 %v9410, %v9384
    %v9573 = vmul.f32 %v9411, %v9382
    %v9574 = vmul.f32 %v9412, %v9384
    %v9575 = vmul.f32 %v9413, %v9382
    %v9576 = vmul.f32 %v9414, %v9384
    %v9577 = vmul.f32 %v9415, %v9382
    %v9578 = vmul.f32 %v9416, %v9384
    %v9579 = vmul.f32 %v9417, %v9382
    %v9580 = vmul.f32 %v9418, %v9384
    %v9581 = vmul.f32 %v9419, %v9382
    %v9582 = vmul.f32 %v9420, %v9384
    %v9583 = vmul.f32 %v9421, %v9382
    %v9584 = vmul.f32 %v9422, %v9384
    %v9585 = vmul.f32 %v9423, %v9382
    %v9586 = vmul.f32 %v9424, %v9384
    %v9587 = vmul.f32 %v9425, %v9382
    %v9588 = vmul.f32 %v9426, %v9384
    %v9589 = vmul.f32 %v9427, %v9382
    %v9590 = vmul.f32 %v9428, %v9384
    %v9591 = vmul.f32 %v9429, %v9382
    %v9592 = vmul.f32 %v9430, %v9384
    %v9593 = vmul.f32 %v9431, %v9382
    %v9594 = vmul.f32 %v9432, %v9384
    %v9595 = vmul.f32 %v9433, %v9382
    %v9596 = vmul.f32 %v9434, %v9384
    %v9597 = vmul.f32 %v9435, %v9382
    %v9598 = vmul.f32 %v9436, %v9384
    %v9599 = vmul.f32 %v9437, %v9382
    %v9600 = vmul.f32 %v9438, %v9384
    %v9601 = vmul.f32 %v9439, %v9382
    %v9602 = vmul.f32 %v9440, %v9384
    %v9603 = vmul.f32 %v9441, %v9382
    %v9604 = vmul.f32 %v9442, %v9384
    %v9605 = vmul.f32 %v9443, %v9382
    %v9606 = vmul.f32 %v9444, %v9384
    %v9607 = vmul.f32 %v9445, %v9382
    %v9608 = vmul.f32 %v9446, %v9384
    %v9609 = vmul.f32 %v9447, %v9382
    %v9610 = vmul.f32 %v9448, %v9384
    %v9611 = vmul.f32 %v9449, %v9382
    %v9612 = vmul.f32 %v9450, %v9384
    %v9613 = vmul.f32 %v9451, %v9382
    %v9614 = vmul.f32 %v9452, %v9384
    %v9615 = vmul.f32 %v9453, %v9382
    %v9616 = vmul.f32 %v9454, %v9384
    %v9617 = vmul.f32 %v9455, %v9382
    %v9618 = vmul.f32 %v9456, %v9384
    %v9619 = vmul.f32 %v9457, %v9382
    %v9620 = vmul.f32 %v9458, %v9384
    %v9621 = vmul.f32 %v9459, %v9382
    %v9622 = vmul.f32 %v9460, %v9384
    %v9623 = vmul.f32 %v9461, %v9382
    %v9624 = vmul.f32 %v9462, %v9384
    %v9625 = vmul.f32 %v9463, %v9382
    %v9626 = vmul.f32 %v9464, %v9384
    %v9627 = vmul.f32 %v9465, %v9382
    %v9628 = vmul.f32 %v9466, %v9384
    %v9629 = vmul.f32 %v9467, %v9382
    %v9630 = vmul.f32 %v9468, %v9384
    %v9631 = vmul.f32 %v9469, %v9382
    %v9632 = vmul.f32 %v9470, %v9384
    %v9633 = vmul.f32 %v9471, %v9382
    %v9634 = vmul.f32 %v9472, %v9384
    %v9635 = vmul.f32 %v9473, %v9382
    %v9636 = vmul.f32 %v9474, %v9384
    %v9637 = vmul.f32 %v9475, %v9382
    %v9638 = vmul.f32 %v9476, %v9384
    %v9639 = vmul.f32 %v9477, %v9382
    %v9640 = vmul.f32 %v9478, %v9384
    %v9641 = vmul.f32 %v9479, %v9382
    %v9642 = vmul.f32 %v9480, %v9384
    %v9643 = vmul.f32 %v9481, %v9382
    %v9644 = vmul.f32 %v9482, %v9384
    %v9645 = vmul.f32 %v9483, %v9382
    %v9646 = vmul.f32 %v9484, %v9384
    %v9647 = vmul.f32 %v9485, %v9382
    %v9648 = vmul.f32 %v9486, %v9384
    %v9649 = vmul.f32 %v9487, %v9382
    %v9650 = vmul.f32 %v9488, %v9384
    %v9651 = vmul.f32 %v9489, %v9382
    %v9652 = vmul.f32 %v9490, %v9384
    %v9653 = vmul.f32 %v9491, %v9382
    %v9654 = vmul.f32 %v9492, %v9384
    %v9655 = vmul.f32 %v9493, %v9382
    %v9656 = vmul.f32 %v9494, %v9384
    %v9657 = vmul.f32 %v9495, %v9382
    %v9658 = vmul.f32 %v9496, %v9384
    %v9659 = vmul.f32 %v9497, %v9382
    %v9660 = vmul.f32 %v9498, %v9384
    %v9661 = vmul.f32 %v9499, %v9382
    %v9662 = vmul.f32 %v9500, %v9384
    %v9663 = vmul.f32 %v9501, %v9382
    %v9664 = vmul.f32 %v9502, %v9384
    %v9665 = vmul.f32 %v9503, %v9382
    %v9666 = vmul.f32 %v9504, %v9384
    %v9667 = vmul.f32 %v9505, %v9382
    %v9668 = vmul.f32 %v9506, %v9384
    %v9669 = vmul.f32 %v9507, %v9382
    %v9670 = vmul.f32 %v9508, %v9384
    %v9671 = vmul.f32 %v9509, %v9382
    %v9672 = vmul.f32 %v9510, %v9384
    %v9673 = vmul.f32 %v9511, %v9382
    %v9674 = vmul.f32 %v9512, %v9384
    %v9675 = vmul.f32 %v9513, %v9382
    %v9676 = vmul.f32 %v9514, %v9384
    %v9677 = vmul.f32 %v9515, %v9382
    %v9678 = vmul.f32 %v9516, %v9384
    %v9679 = vmul.f32 %v9517, %v9382
    %v9680 = vmul.f32 %v9518, %v9384
    %v9681 = vmul.f32 %v9519, %v9382
    %v9682 = vmul.f32 %v9520, %v9384
    %v9683 = vmul.f32 %v9521, %v9382
    %v9684 = vmul.f32 %v9522, %v9384
    %v9685 = vmul.f32 %v9523, %v9382
    %v9686 = vmul.f32 %v9524, %v9384
    %v9687 = vmul.f32 %v9525, %v9382
    %v9688 = vmul.f32 %v9526, %v9384
    %v9689 = vmul.f32 %v9527, %v9382
    %v9690 = vmul.f32 %v9528, %v9384
    %v9691 = vmul.f32 %v9529, %v9382
    %v9692 = vmul.f32 %v9530, %v9384
    %v9693 = vmul.f32 %v9531, %v9382
    %v9694 = vmul.f32 %v9532, %v9384
    %v9695 = vmul.f32 %v9533, %v9382
    %v9696 = vmul.f32 %v9534, %v9384
    %v9697 = vmul.f32 %v9535, %v9382
    %v9698 = vmul.f32 %v9536, %v9384
    %v9699 = vmul.f32 %v9537, %v9382
    %v9700 = vmul.f32 %v9538, %v9384
    %v9701 = vmul.f32 %v9539, %v9382
    %v9702 = vmul.f32 %v9540, %v9384
    %v9703 = vmul.f32 %v9541, %v9382
    %v9704 = vmul.f32 %v9542, %v9384
    %v9705 = vmul.f32 %v9543, %v9382
    %v9706 = vmul.f32 %v9544, %v9384
    %v9707 = vmul.f32 %v9545, %v9382
    %v9708 = vmul.f32 %v9546, %v9384
    %v9709 = vmul.f32 %v9547, 1.442695
    %v9710 = vpow.pop %v9709
    %v9711 = vmul.f32 %v9548, 1.442695
    %v9712 = vpow.pop %v9711
    %v9713 = vmul.f32 %v9549, 1.442695
    %v9714 = vpow.pop %v9713
    %v9715 = vmul.f32 %v9550, 1.442695
    %v9716 = vpow.pop %v9715
    %v9717 = vmul.f32 %v9551, 1.442695
    %v9718 = vpow.pop %v9717
    %v9719 = vmul.f32 %v9552, 1.442695
    %v9720 = vpow.pop %v9719
    %v9721 = vmul.f32 %v9553, 1.442695
    %v9722 = vpow.pop %v9721
    %v9723 = vmul.f32 %v9554, 1.442695
    %v9724 = vpow.pop %v9723
    %v9725 = vmul.f32 %v9555, 1.442695
    %v9726 = vpow.pop %v9725
    %v9727 = vmul.f32 %v9556, 1.442695
    %v9728 = vpow.pop %v9727
    %v9729 = vmul.f32 %v9557, 1.442695
    %v9730 = vpow.pop %v9729
    %v9731 = vmul.f32 %v9558, 1.442695
    %v9732 = vpow.pop %v9731
    %v9733 = vmul.f32 %v9559, 1.442695
    %v9734 = vpow.pop %v9733
    %v9735 = vmul.f32 %v9560, 1.442695
    %v9736 = vpow.pop %v9735
    %v9737 = vmul.f32 %v9561, 1.442695
    %v9738 = vpow.pop %v9737
    %v9739 = vmul.f32 %v9562, 1.442695
    %v9740 = vpow.pop %v9739
    %v9741 = vmul.f32 %v9563, 1.442695
    %v9742 = vpow.pop %v9741
    %v9743 = vmul.f32 %v9564, 1.442695
    %v9744 = vpow.pop %v9743
    %v9745 = vmul.f32 %v9565, 1.442695
    %v9746 = vpow.pop %v9745
    %v9747 = vmul.f32 %v9566, 1.442695
    %v9748 = vpow.pop %v9747
    %v9749 = vmul.f32 %v9567, 1.442695
    %v9750 = vpow.pop %v9749
    %v9751 = vmul.f32 %v9568, 1.442695
    %v9752 = vpow.pop %v9751
    %v9753 = vmul.f32 %v9569, 1.442695
    %v9754 = vpow.pop %v9753
    %v9755 = vmul.f32 %v9570, 1.442695
    %v9756 = vpow.pop %v9755
    %v9757 = vmul.f32 %v9571, 1.442695
    %v9758 = vpow.pop %v9757
    %v9759 = vmul.f32 %v9572, 1.442695
    %v9760 = vpow.pop %v9759
    %v9761 = vmul.f32 %v9573, 1.442695
    %v9762 = vpow.pop %v9761
    %v9763 = vmul.f32 %v9574, 1.442695
    %v9764 = vpow.pop %v9763
    %v9765 = vmul.f32 %v9575, 1.442695
    %v9766 = vpow.pop %v9765
    %v9767 = vmul.f32 %v9576, 1.442695
    %v9768 = vpow.pop %v9767
    %v9769 = vmul.f32 %v9577, 1.442695
    %v9770 = vpow.pop %v9769
    %v9771 = vmul.f32 %v9578, 1.442695
    %v9772 = vpow.pop %v9771
    %v9773 = vmul.f32 %v9579, 1.442695
    %v9774 = vpow.pop %v9773
    %v9775 = vmul.f32 %v9580, 1.442695
    %v9776 = vpow.pop %v9775
    %v9777 = vmul.f32 %v9581, 1.442695
    %v9778 = vpow.pop %v9777
    %v9779 = vmul.f32 %v9582, 1.442695
    %v9780 = vpow.pop %v9779
    %v9781 = vmul.f32 %v9583, 1.442695
    %v9782 = vpow.pop %v9781
    %v9783 = vmul.f32 %v9584, 1.442695
    %v9784 = vpow.pop %v9783
    %v9785 = vmul.f32 %v9585, 1.442695
    %v9786 = vpow.pop %v9785
    %v9787 = vmul.f32 %v9586, 1.442695
    %v9788 = vpow.pop %v9787
    %v9789 = vmul.f32 %v9587, 1.442695
    %v9790 = vpow.pop %v9789
    %v9791 = vmul.f32 %v9588, 1.442695
    %v9792 = vpow.pop %v9791
    %v9793 = vmul.f32 %v9589, 1.442695
    %v9794 = vpow.pop %v9793
    %v9795 = vmul.f32 %v9590, 1.442695
    %v9796 = vpow.pop %v9795
    %v9797 = vmul.f32 %v9591, 1.442695
    %v9798 = vpow.pop %v9797
    %v9799 = vmul.f32 %v9592, 1.442695
    %v9800 = vpow.pop %v9799
    %v9801 = vmul.f32 %v9593, 1.442695
    %v9802 = vpow.pop %v9801
    %v9803 = vmul.f32 %v9594, 1.442695
    %v9804 = vpow.pop %v9803
    %v9805 = vmul.f32 %v9595, 1.442695
    %v9806 = vpow.pop %v9805
    %v9807 = vmul.f32 %v9596, 1.442695
    %v9808 = vpow.pop %v9807
    %v9809 = vmul.f32 %v9597, 1.442695
    %v9810 = vpow.pop %v9809
    %v9811 = vmul.f32 %v9598, 1.442695
    %v9812 = vpow.pop %v9811
    %v9813 = vmul.f32 %v9599, 1.442695
    %v9814 = vpow.pop %v9813
    %v9815 = vmul.f32 %v9600, 1.442695
    %v9816 = vpow.pop %v9815
    %v9817 = vmul.f32 %v9601, 1.442695
    %v9818 = vpow.pop %v9817
    %v9819 = vmul.f32 %v9602, 1.442695
    %v9820 = vpow.pop %v9819
    %v9821 = vmul.f32 %v9603, 1.442695
    %v9822 = vpow.pop %v9821
    %v9823 = vmul.f32 %v9604, 1.442695
    %v9824 = vpow.pop %v9823
    %v9825 = vmul.f32 %v9605, 1.442695
    %v9826 = vpow.pop %v9825
    %v9827 = vmul.f32 %v9606, 1.442695
    %v9828 = vpow.pop %v9827
    %v9829 = vmul.f32 %v9607, 1.442695
    %v9830 = vpow.pop %v9829
    %v9831 = vmul.f32 %v9608, 1.442695
    %v9832 = vpow.pop %v9831
    %v9833 = vmul.f32 %v9609, 1.442695
    %v9834 = vpow.pop %v9833
    %v9835 = vmul.f32 %v9610, 1.442695
    %v9836 = vpow.pop %v9835
    %v9837 = vmul.f32 %v9611, 1.442695
    %v9838 = vpow.pop %v9837
    %v9839 = vmul.f32 %v9612, 1.442695
    %v9840 = vpow.pop %v9839
    %v9841 = vmul.f32 %v9613, 1.442695
    %v9842 = vpow.pop %v9841
    %v9843 = vmul.f32 %v9614, 1.442695
    %v9844 = vpow.pop %v9843
    %v9845 = vmul.f32 %v9615, 1.442695
    %v9846 = vpow.pop %v9845
    %v9847 = vmul.f32 %v9616, 1.442695
    %v9848 = vpow.pop %v9847
    %v9849 = vmul.f32 %v9617, 1.442695
    %v9850 = vpow.pop %v9849
    %v9851 = vmul.f32 %v9618, 1.442695
    %v9852 = vpow.pop %v9851
    %v9853 = vmul.f32 %v9619, 1.442695
    %v9854 = vpow.pop %v9853
    %v9855 = vmul.f32 %v9620, 1.442695
    %v9856 = vpow.pop %v9855
    %v9857 = vmul.f32 %v9621, 1.442695
    %v9858 = vpow.pop %v9857
    %v9859 = vmul.f32 %v9622, 1.442695
    %v9860 = vpow.pop %v9859
    %v9861 = vmul.f32 %v9623, 1.442695
    %v9862 = vpow.pop %v9861
    %v9863 = vmul.f32 %v9624, 1.442695
    %v9864 = vpow.pop %v9863
    %v9865 = vmul.f32 %v9625, 1.442695
    %v9866 = vpow.pop %v9865
    %v9867 = vmul.f32 %v9626, 1.442695
    %v9868 = vpow.pop %v9867
    %v9869 = vmul.f32 %v9627, 1.442695
    %v9870 = vpow.pop %v9869
    %v9871 = vmul.f32 %v9628, 1.442695
    %v9872 = vpow.pop %v9871
    %v9873 = vmul.f32 %v9629, 1.442695
    %v9874 = vpow.pop %v9873
    %v9875 = vmul.f32 %v9630, 1.442695
    %v9876 = vpow.pop %v9875
    %v9877 = vmul.f32 %v9631, 1.442695
    %v9878 = vpow.pop %v9877
    %v9879 = vmul.f32 %v9632, 1.442695
    %v9880 = vpow.pop %v9879
    %v9881 = vmul.f32 %v9633, 1.442695
    %v9882 = vpow.pop %v9881
    %v9883 = vmul.f32 %v9634, 1.442695
    %v9884 = vpow.pop %v9883
    %v9885 = vmul.f32 %v9635, 1.442695
    %v9886 = vpow.pop %v9885
    %v9887 = vmul.f32 %v9636, 1.442695
    %v9888 = vpow.pop %v9887
    %v9889 = vmul.f32 %v9637, 1.442695
    %v9890 = vpow.pop %v9889
    %v9891 = vmul.f32 %v9638, 1.442695
    %v9892 = vpow.pop %v9891
    %v9893 = vmul.f32 %v9639, 1.442695
    %v9894 = vpow.pop %v9893
    %v9895 = vmul.f32 %v9640, 1.442695
    %v9896 = vpow.pop %v9895
    %v9897 = vmul.f32 %v9641, 1.442695
    %v9898 = vpow.pop %v9897
    %v9899 = vmul.f32 %v9642, 1.442695
    %v9900 = vpow.pop %v9899
    %v9901 = vmul.f32 %v9643, 1.442695
    %v9902 = vpow.pop %v9901
    %v9903 = vmul.f32 %v9644, 1.442695
    %v9904 = vpow.pop %v9903
    %v9905 = vmul.f32 %v9645, 1.442695
    %v9906 = vpow.pop %v9905
    %v9907 = vmul.f32 %v9646, 1.442695
    %v9908 = vpow.pop %v9907
    %v9909 = vmul.f32 %v9647, 1.442695
    %v9910 = vpow.pop %v9909
    %v9911 = vmul.f32 %v9648, 1.442695
    %v9912 = vpow.pop %v9911
    %v9913 = vmul.f32 %v9649, 1.442695
    %v9914 = vpow.pop %v9913
    %v9915 = vmul.f32 %v9650, 1.442695
    %v9916 = vpow.pop %v9915
    %v9917 = vmul.f32 %v9651, 1.442695
    %v9918 = vpow.pop %v9917
    %v9919 = vmul.f32 %v9652, 1.442695
    %v9920 = vpow.pop %v9919
    %v9921 = vmul.f32 %v9653, 1.442695
    %v9922 = vpow.pop %v9921
    %v9923 = vmul.f32 %v9654, 1.442695
    %v9924 = vpow.pop %v9923
    %v9925 = vmul.f32 %v9655, 1.442695
    %v9926 = vpow.pop %v9925
    %v9927 = vmul.f32 %v9656, 1.442695
    %v9928 = vpow.pop %v9927
    %v9929 = vmul.f32 %v9657, 1.442695
    %v9930 = vpow.pop %v9929
    %v9931 = vmul.f32 %v9658, 1.442695
    %v9932 = vpow.pop %v9931
    %v9933 = vmul.f32 %v9659, 1.442695
    %v9934 = vpow.pop %v9933
    %v9935 = vmul.f32 %v9660, 1.442695
    %v9936 = vpow.pop %v9935
    %v9937 = vmul.f32 %v9661, 1.442695
    %v9938 = vpow.pop %v9937
    %v9939 = vmul.f32 %v9662, 1.442695
    %v9940 = vpow.pop %v9939
    %v9941 = vmul.f32 %v9663, 1.442695
    %v9942 = vpow.pop %v9941
    %v9943 = vmul.f32 %v9664, 1.442695
    %v9944 = vpow.pop %v9943
    %v9945 = vmul.f32 %v9665, 1.442695
    %v9946 = vpow.pop %v9945
    %v9947 = vmul.f32 %v9666, 1.442695
    %v9948 = vpow.pop %v9947
    %v9949 = vmul.f32 %v9667, 1.442695
    %v9950 = vpow.pop %v9949
    %v9951 = vmul.f32 %v9668, 1.442695
    %v9952 = vpow.pop %v9951
    %v9953 = vmul.f32 %v9669, 1.442695
    %v9954 = vpow.pop %v9953
    %v9955 = vmul.f32 %v9670, 1.442695
    %v9956 = vpow.pop %v9955
    %v9957 = vmul.f32 %v9671, 1.442695
    %v9958 = vpow.pop %v9957
    %v9959 = vmul.f32 %v9672, 1.442695
    %v9960 = vpow.pop %v9959
    %v9961 = vmul.f32 %v9673, 1.442695
    %v9962 = vpow.pop %v9961
    %v9963 = vmul.f32 %v9674, 1.442695
    %v9964 = vpow.pop %v9963
    %v9965 = vmul.f32 %v9675, 1.442695
    %v9966 = vpow.pop %v9965
    %v9967 = vmul.f32 %v9676, 1.442695
    %v9968 = vpow.pop %v9967
    %v9969 = vmul.f32 %v9677, 1.442695
    %v9970 = vpow.pop %v9969
    %v9971 = vmul.f32 %v9678, 1.442695
    %v9972 = vpow.pop %v9971
    %v9973 = vmul.f32 %v9679, 1.442695
    %v9974 = vpow.pop %v9973
    %v9975 = vmul.f32 %v9680, 1.442695
    %v9976 = vpow.pop %v9975
    %v9977 = vmul.f32 %v9681, 1.442695
    %v9978 = vpow.pop %v9977
    %v9979 = vmul.f32 %v9682, 1.442695
    %v9980 = vpow.pop %v9979
    %v9981 = vmul.f32 %v9683, 1.442695
    %v9982 = vpow.pop %v9981
    %v9983 = vmul.f32 %v9684, 1.442695
    %v9984 = vpow.pop %v9983
    %v9985 = vmul.f32 %v9685, 1.442695
    %v9986 = vpow.pop %v9985
    %v9987 = vmul.f32 %v9686, 1.442695
    %v9988 = vpow.pop %v9987
    %v9989 = vmul.f32 %v9687, 1.442695
    %v9990 = vpow.pop %v9989
    %v9991 = vmul.f32 %v9688, 1.442695
    %v9992 = vpow.pop %v9991
    %v9993 = vmul.f32 %v9689, 1.442695
    %v9994 = vpow.pop %v9993
    %v9995 = vmul.f32 %v9690, 1.442695
    %v9996 = vpow.pop %v9995
    %v9997 = vmul.f32 %v9691, 1.442695
    %v9998 = vpow.pop %v9997
    %v9999 = vmul.f32 %v9692, 1.442695
    %v10000 = vpow.pop %v9999
    %v10001 = vmul.f32 %v9693, 1.442695
    %v10002 = vpow.pop %v10001
    %v10003 = vmul.f32 %v9694, 1.442695
    %v10004 = vpow.pop %v10003
    %v10005 = vmul.f32 %v9695, 1.442695
    %v10006 = vpow.pop %v10005
    %v10007 = vmul.f32 %v9696, 1.442695
    %v10008 = vpow.pop %v10007
    %v10009 = vmul.f32 %v9697, 1.442695
    %v10010 = vpow.pop %v10009
    %v10011 = vmul.f32 %v9698, 1.442695
    %v10012 = vpow.pop %v10011
    %v10013 = vmul.f32 %v9699, 1.442695
    %v10014 = vpow.pop %v10013
    %v10015 = vmul.f32 %v9700, 1.442695
    %v10016 = vpow.pop %v10015
    %v10017 = vmul.f32 %v9701, 1.442695
    %v10018 = vpow.pop %v10017
    %v10019 = vmul.f32 %v9702, 1.442695
    %v10020 = vpow.pop %v10019
    %v10021 = vmul.f32 %v9703, 1.442695
    %v10022 = vpow.pop %v10021
    %v10023 = vmul.f32 %v9704, 1.442695
    %v10024 = vpow.pop %v10023
    %v10025 = vmul.f32 %v9705, 1.442695
    %v10026 = vpow.pop %v10025
    %v10027 = vmul.f32 %v9706, 1.442695
    %v10028 = vpow.pop %v10027
    %v10029 = vmul.f32 %v9707, 1.442695
    %v10030 = vpow.pop %v10029
    %v10031 = vmul.f32 %v9708, 1.442695
    %v10032 = vpow.pop %v10031
    %v10033 = vadd.f32 %v9710, %v9714
    %v10034 = vadd.f32 %v10033, %v9718
    %v10035 = vadd.f32 %v10034, %v9722
    %v10036 = vadd.f32 %v10035, %v9726
    %v10037 = vadd.f32 %v10036, %v9730
    %v10038 = vadd.f32 %v10037, %v9734
    %v10039 = vadd.f32 %v10038, %v9738
    %v10040 = vadd.f32 %v10039, %v9742
    %v10041 = vadd.f32 %v10040, %v9746
    %v10042 = vadd.f32 %v10041, %v9750
    %v10043 = vadd.f32 %v10042, %v9754
    %v10044 = vadd.f32 %v10043, %v9758
    %v10045 = vadd.f32 %v10044, %v9762
    %v10046 = vadd.f32 %v10045, %v9766
    %v10047 = vadd.f32 %v10046, %v9770
    %v10048 = vadd.f32 %v10047, %v9774
    %v10049 = vadd.f32 %v10048, %v9778
    %v10050 = vadd.f32 %v10049, %v9782
    %v10051 = vadd.f32 %v10050, %v9786
    %v10052 = vadd.f32 %v10051, %v9790
    %v10053 = vadd.f32 %v10052, %v9794
    %v10054 = vadd.f32 %v10053, %v9798
    %v10055 = vadd.f32 %v10054, %v9802
    %v10056 = vadd.f32 %v10055, %v9806
    %v10057 = vadd.f32 %v10056, %v9810
    %v10058 = vadd.f32 %v10057, %v9814
    %v10059 = vadd.f32 %v10058, %v9818
    %v10060 = vadd.f32 %v10059, %v9822
    %v10061 = vadd.f32 %v10060, %v9826
    %v10062 = vadd.f32 %v10061, %v9830
    %v10063 = vadd.f32 %v10062, %v9834
    %v10064 = vadd.f32 %v10063, %v9838
    %v10065 = vadd.f32 %v10064, %v9842
    %v10066 = vadd.f32 %v10065, %v9846
    %v10067 = vadd.f32 %v10066, %v9850
    %v10068 = vadd.f32 %v10067, %v9854
    %v10069 = vadd.f32 %v10068, %v9858
    %v10070 = vadd.f32 %v10069, %v9862
    %v10071 = vadd.f32 %v10070, %v9866
    %v10072 = vadd.f32 %v10071, %v9870
    %v10073 = vadd.f32 %v10072, %v9874
    %v10074 = vadd.f32 %v10073, %v9878
    %v10075 = vadd.f32 %v10074, %v9882
    %v10076 = vadd.f32 %v10075, %v9886
    %v10077 = vadd.f32 %v10076, %v9890
    %v10078 = vadd.f32 %v10077, %v9894
    %v10079 = vadd.f32 %v10078, %v9898
    %v10080 = vadd.f32 %v10079, %v9902
    %v10081 = vadd.f32 %v10080, %v9906
    %v10082 = vadd.f32 %v10081, %v9910
    %v10083 = vadd.f32 %v10082, %v9914
    %v10084 = vadd.f32 %v10083, %v9918
    %v10085 = vadd.f32 %v10084, %v9922
    %v10086 = vadd.f32 %v10085, %v9926
    %v10087 = vadd.f32 %v10086, %v9930
    %v10088 = vadd.f32 %v10087, %v9934
    %v10089 = vadd.f32 %v10088, %v9938
    %v10090 = vadd.f32 %v10089, %v9942
    %v10091 = vadd.f32 %v10090, %v9946
    %v10092 = vadd.f32 %v10091, %v9950
    %v10093 = vadd.f32 %v10092, %v9954
    %v10094 = vadd.f32 %v10093, %v9958
    %v10095 = vadd.f32 %v10094, %v9962
    %v10096 = vadd.f32 %v10095, %v9966
    %v10097 = vadd.f32 %v10096, %v9970
    %v10098 = vadd.f32 %v10097, %v9974
    %v10099 = vadd.f32 %v10098, %v9978
    %v10100 = vadd.f32 %v10099, %v9982
    %v10101 = vadd.f32 %v10100, %v9986
    %v10102 = vadd.f32 %v10101, %v9990
    %v10103 = vadd.f32 %v10102, %v9994
    %v10104 = vadd.f32 %v10103, %v9998
    %v10105 = vadd.f32 %v10104, %v10002
    %v10106 = vadd.f32 %v10105, %v10006
    %v10107 = vadd.f32 %v10106, %v10010
    %v10108 = vadd.f32 %v10107, %v10014
    %v10109 = vadd.f32 %v10108, %v10018
    %v10110 = vadd.f32 %v10109, %v10022
    %v10111 = vadd.f32 %v10110, %v10026
    %v10112 = vadd.f32 %v10111, %v10030
    %v10113 = vadd.f32 %v9712, %v9716
    %v10114 = vadd.f32 %v10113, %v9720
    %v10115 = vadd.f32 %v10114, %v9724
    %v10116 = vadd.f32 %v10115, %v9728
    %v10117 = vadd.f32 %v10116, %v9732
    %v10118 = vadd.f32 %v10117, %v9736
    %v10119 = vadd.f32 %v10118, %v9740
    %v10120 = vadd.f32 %v10119, %v9744
    %v10121 = vadd.f32 %v10120, %v9748
    %v10122 = vadd.f32 %v10121, %v9752
    %v10123 = vadd.f32 %v10122, %v9756
    %v10124 = vadd.f32 %v10123, %v9760
    %v10125 = vadd.f32 %v10124, %v9764
    %v10126 = vadd.f32 %v10125, %v9768
    %v10127 = vadd.f32 %v10126, %v9772
    %v10128 = vadd.f32 %v10127, %v9776
    %v10129 = vadd.f32 %v10128, %v9780
    %v10130 = vadd.f32 %v10129, %v9784
    %v10131 = vadd.f32 %v10130, %v9788
    %v10132 = vadd.f32 %v10131, %v9792
    %v10133 = vadd.f32 %v10132, %v9796
    %v10134 = vadd.f32 %v10133, %v9800
    %v10135 = vadd.f32 %v10134, %v9804
    %v10136 = vadd.f32 %v10135, %v9808
    %v10137 = vadd.f32 %v10136, %v9812
    %v10138 = vadd.f32 %v10137, %v9816
    %v10139 = vadd.f32 %v10138, %v9820
    %v10140 = vadd.f32 %v10139, %v9824
    %v10141 = vadd.f32 %v10140, %v9828
    %v10142 = vadd.f32 %v10141, %v9832
    %v10143 = vadd.f32 %v10142, %v9836
    %v10144 = vadd.f32 %v10143, %v9840
    %v10145 = vadd.f32 %v10144, %v9844
    %v10146 = vadd.f32 %v10145, %v9848
    %v10147 = vadd.f32 %v10146, %v9852
    %v10148 = vadd.f32 %v10147, %v9856
    %v10149 = vadd.f32 %v10148, %v9860
    %v10150 = vadd.f32 %v10149, %v9864
    %v10151 = vadd.f32 %v10150, %v9868
    %v10152 = vadd.f32 %v10151, %v9872
    %v10153 = vadd.f32 %v10152, %v9876
    %v10154 = vadd.f32 %v10153, %v9880
    %v10155 = vadd.f32 %v10154, %v9884
    %v10156 = vadd.f32 %v10155, %v9888
    %v10157 = vadd.f32 %v10156, %v9892
    %v10158 = vadd.f32 %v10157, %v9896
    %v10159 = vadd.f32 %v10158, %v9900
    %v10160 = vadd.f32 %v10159, %v9904
    %v10161 = vadd.f32 %v10160, %v9908
    %v10162 = vadd.f32 %v10161, %v9912
    %v10163 = vadd.f32 %v10162, %v9916
    %v10164 = vadd.f32 %v10163, %v9920
    %v10165 = vadd.f32 %v10164, %v9924
    %v10166 = vadd.f32 %v10165, %v9928
    %v10167 = vadd.f32 %v10166, %v9932
    %v10168 = vadd.f32 %v10167, %v9936
    %v10169 = vadd.f32 %v10168, %v9940
    %v10170 = vadd.f32 %v10169, %v9944
    %v10171 = vadd.f32 %v10170, %v9948
    %v10172 = vadd.f32 %v10171, %v9952
    %v10173 = vadd.f32 %v10172, %v9956
    %v10174 = vadd.f32 %v10173, %v9960
    %v10175 = vadd.f32 %v10174, %v9964
    %v10176 = vadd.f32 %v10175, %v9968
    %v10177 = vadd.f32 %v10176, %v9972
    %v10178 = vadd.f32 %v10177, %v9976
    %v10179 = vadd.f32 %v10178, %v9980
    %v10180 = vadd.f32 %v10179, %v9984
    %v10181 = vadd.f32 %v10180, %v9988
    %v10182 = vadd.f32 %v10181, %v9992
    %v10183 = vadd.f32 %v10182, %v9996
    %v10184 = vadd.f32 %v10183, %v10000
    %v10185 = vadd.f32 %v10184, %v10004
    %v10186 = vadd.f32 %v10185, %v10008
    %v10187 = vadd.f32 %v10186, %v10012
    %v10188 = vadd.f32 %v10187, %v10016
    %v10189 = vadd.f32 %v10188, %v10020
    %v10190 = vadd.f32 %v10189, %v10024
    %v10191 = vadd.f32 %v10190, %v10028
    %v10192 = vadd.f32 %v10191, %v10032
    %v10193 = vrcp.pop %v10112
    %v10194 = vmul.f32 1.0, %v10193
    %v10195 = vrcp.pop %v10192
    %v10196 = vmul.f32 1.0, %v10195
    %v10197 = vmul.f32 %v9710, %v10194
    %v10198 = vmul.f32 %v9712, %v10196
    %v10199 = vmul.f32 %v9714, %v10194
    %v10200 = vmul.f32 %v9716, %v10196
    %v10201 = vmul.f32 %v9718, %v10194
    %v10202 = vmul.f32 %v9720, %v10196
    %v10203 = vmul.f32 %v9722, %v10194
    %v10204 = vmul.f32 %v9724, %v10196
    %v10205 = vmul.f32 %v9726, %v10194
    %v10206 = vmul.f32 %v9728, %v10196
    %v10207 = vmul.f32 %v9730, %v10194
    %v10208 = vmul.f32 %v9732, %v10196
    %v10209 = vmul.f32 %v9734, %v10194
    %v10210 = vmul.f32 %v9736, %v10196
    %v10211 = vmul.f32 %v9738, %v10194
    %v10212 = vmul.f32 %v9740, %v10196
    %v10213 = vmul.f32 %v9742, %v10194
    %v10214 = vmul.f32 %v9744, %v10196
    %v10215 = vmul.f32 %v9746, %v10194
    %v10216 = vmul.f32 %v9748, %v10196
    %v10217 = vmul.f32 %v9750, %v10194
    %v10218 = vmul.f32 %v9752, %v10196
    %v10219 = vmul.f32 %v9754, %v10194
    %v10220 = vmul.f32 %v9756, %v10196
    %v10221 = vmul.f32 %v9758, %v10194
    %v10222 = vmul.f32 %v9760, %v10196
    %v10223 = vmul.f32 %v9762, %v10194
    %v10224 = vmul.f32 %v9764, %v10196
    %v10225 = vmul.f32 %v9766, %v10194
    %v10226 = vmul.f32 %v9768, %v10196
    %v10227 = vmul.f32 %v9770, %v10194
    %v10228 = vmul.f32 %v9772, %v10196
    %v10229 = vmul.f32 %v9774, %v10194
    %v10230 = vmul.f32 %v9776, %v10196
    %v10231 = vmul.f32 %v9778, %v10194
    %v10232 = vmul.f32 %v9780, %v10196
    %v10233 = vmul.f32 %v9782, %v10194
    %v10234 = vmul.f32 %v9784, %v10196
    %v10235 = vmul.f32 %v9786, %v10194
    %v10236 = vmul.f32 %v9788, %v10196
    %v10237 = vmul.f32 %v9790, %v10194
    %v10238 = vmul.f32 %v9792, %v10196
    %v10239 = vmul.f32 %v9794, %v10194
    %v10240 = vmul.f32 %v9796, %v10196
    %v10241 = vmul.f32 %v9798, %v10194
    %v10242 = vmul.f32 %v9800, %v10196
    %v10243 = vmul.f32 %v9802, %v10194
    %v10244 = vmul.f32 %v9804, %v10196
    %v10245 = vmul.f32 %v9806, %v10194
    %v10246 = vmul.f32 %v9808, %v10196
    %v10247 = vmul.f32 %v9810, %v10194
    %v10248 = vmul.f32 %v9812, %v10196
    %v10249 = vmul.f32 %v9814, %v10194
    %v10250 = vmul.f32 %v9816, %v10196
    %v10251 = vmul.f32 %v9818, %v10194
    %v10252 = vmul.f32 %v9820, %v10196
    %v10253 = vmul.f32 %v9822, %v10194
    %v10254 = vmul.f32 %v9824, %v10196
    %v10255 = vmul.f32 %v9826, %v10194
    %v10256 = vmul.f32 %v9828, %v10196
    %v10257 = vmul.f32 %v9830, %v10194
    %v10258 = vmul.f32 %v9832, %v10196
    %v10259 = vmul.f32 %v9834, %v10194
    %v10260 = vmul.f32 %v9836, %v10196
    %v10261 = vmul.f32 %v9838, %v10194
    %v10262 = vmul.f32 %v9840, %v10196
    %v10263 = vmul.f32 %v9842, %v10194
    %v10264 = vmul.f32 %v9844, %v10196
    %v10265 = vmul.f32 %v9846, %v10194
    %v10266 = vmul.f32 %v9848, %v10196
    %v10267 = vmul.f32 %v9850, %v10194
    %v10268 = vmul.f32 %v9852, %v10196
    %v10269 = vmul.f32 %v9854, %v10194
    %v10270 = vmul.f32 %v9856, %v10196
    %v10271 = vmul.f32 %v9858, %v10194
    %v10272 = vmul.f32 %v9860, %v10196
    %v10273 = vmul.f32 %v9862, %v10194
    %v10274 = vmul.f32 %v9864, %v10196
    %v10275 = vmul.f32 %v9866, %v10194
    %v10276 = vmul.f32 %v9868, %v10196
    %v10277 = vmul.f32 %v9870, %v10194
    %v10278 = vmul.f32 %v9872, %v10196
    %v10279 = vmul.f32 %v9874, %v10194
    %v10280 = vmul.f32 %v9876, %v10196
    %v10281 = vmul.f32 %v9878, %v10194
    %v10282 = vmul.f32 %v9880, %v10196
    %v10283 = vmul.f32 %v9882, %v10194
    %v10284 = vmul.f32 %v9884, %v10196
    %v10285 = vmul.f32 %v9886, %v10194
    %v10286 = vmul.f32 %v9888, %v10196
    %v10287 = vmul.f32 %v9890, %v10194
    %v10288 = vmul.f32 %v9892, %v10196
    %v10289 = vmul.f32 %v9894, %v10194
    %v10290 = vmul.f32 %v9896, %v10196
    %v10291 = vmul.f32 %v9898, %v10194
    %v10292 = vmul.f32 %v9900, %v10196
    %v10293 = vmul.f32 %v9902, %v10194
    %v10294 = vmul.f32 %v9904, %v10196
    %v10295 = vmul.f32 %v9906, %v10194
    %v10296 = vmul.f32 %v9908, %v10196
    %v10297 = vmul.f32 %v9910, %v10194
    %v10298 = vmul.f32 %v9912, %v10196
    %v10299 = vmul.f32 %v9914, %v10194
    %v10300 = vmul.f32 %v9916, %v10196
    %v10301 = vmul.f32 %v9918, %v10194
    %v10302 = vmul.f32 %v9920, %v10196
    %v10303 = vmul.f32 %v9922, %v10194
    %v10304 = vmul.f32 %v9924, %v10196
    %v10305 = vmul.f32 %v9926, %v10194
    %v10306 = vmul.f32 %v9928, %v10196
    %v10307 = vmul.f32 %v9930, %v10194
    %v10308 = vmul.f32 %v9932, %v10196
    %v10309 = vmul.f32 %v9934, %v10194
    %v10310 = vmul.f32 %v9936, %v10196
    %v10311 = vmul.f32 %v9938, %v10194
    %v10312 = vmul.f32 %v9940, %v10196
    %v10313 = vmul.f32 %v9942, %v10194
    %v10314 = vmul.f32 %v9944, %v10196
    %v10315 = vmul.f32 %v9946, %v10194
    %v10316 = vmul.f32 %v9948, %v10196
    %v10317 = vmul.f32 %v9950, %v10194
    %v10318 = vmul.f32 %v9952, %v10196
    %v10319 = vmul.f32 %v9954, %v10194
    %v10320 = vmul.f32 %v9956, %v10196
    %v10321 = vmul.f32 %v9958, %v10194
    %v10322 = vmul.f32 %v9960, %v10196
    %v10323 = vmul.f32 %v9962, %v10194
    %v10324 = vmul.f32 %v9964, %v10196
    %v10325 = vmul.f32 %v9966, %v10194
    %v10326 = vmul.f32 %v9968, %v10196
    %v10327 = vmul.f32 %v9970, %v10194
    %v10328 = vmul.f32 %v9972, %v10196
    %v10329 = vmul.f32 %v9974, %v10194
    %v10330 = vmul.f32 %v9976, %v10196
    %v10331 = vmul.f32 %v9978, %v10194
    %v10332 = vmul.f32 %v9980, %v10196
    %v10333 = vmul.f32 %v9982, %v10194
    %v10334 = vmul.f32 %v9984, %v10196
    %v10335 = vmul.f32 %v9986, %v10194
    %v10336 = vmul.f32 %v9988, %v10196
    %v10337 = vmul.f32 %v9990, %v10194
    %v10338 = vmul.f32 %v9992, %v10196
    %v10339 = vmul.f32 %v9994, %v10194
    %v10340 = vmul.f32 %v9996, %v10196
    %v10341 = vmul.f32 %v9998, %v10194
    %v10342 = vmul.f32 %v10000, %v10196
    %v10343 = vmul.f32 %v10002, %v10194
    %v10344 = vmul.f32 %v10004, %v10196
    %v10345 = vmul.f32 %v10006, %v10194
    %v10346 = vmul.f32 %v10008, %v10196
    %v10347 = vmul.f32 %v10010, %v10194
    %v10348 = vmul.f32 %v10012, %v10196
    %v10349 = vmul.f32 %v10014, %v10194
    %v10350 = vmul.f32 %v10016, %v10196
    %v10351 = vmul.f32 %v10018, %v10194
    %v10352 = vmul.f32 %v10020, %v10196
    %v10353 = vmul.f32 %v10022, %v10194
    %v10354 = vmul.f32 %v10024, %v10196
    %v10355 = vmul.f32 %v10026, %v10194
    %v10356 = vmul.f32 %v10028, %v10196
    %v10357 = vmul.f32 %v10030, %v10194
    %v10358 = vmul.f32 %v10032, %v10196
    %v10521 = vrot.slane %v10197, 4
    %v10522 = vrot.slane %v10198, 4
    %v10523 = vrot.slane %v10199, 4
    %v10524 = vrot.slane %v10200, 4
    %v10525 = vrot.slane %v10201, 4
    %v10526 = vrot.slane %v10202, 4
    %v10527 = vrot.slane %v10203, 4
    %v10528 = vrot.slane %v10204, 4
    %v10529 = vrot.slane %v10205, 4
    %v10530 = vrot.slane %v10206, 4
    %v10531 = vrot.slane %v10207, 4
    %v10532 = vrot.slane %v10208, 4
    %v10533 = vrot.slane %v10209, 4
    %v10534 = vrot.slane %v10210, 4
    %v10535 = vrot.slane %v10211, 4
    %v10536 = vrot.slane %v10212, 4
    %v10537 = vrot.slane %v10213, 4
    %v10538 = vrot.slane %v10214, 4
    %v10539 = vrot.slane %v10215, 4
    %v10540 = vrot.slane %v10216, 4
    %v10541 = vrot.slane %v10217, 4
    %v10542 = vrot.slane %v10218, 4
    %v10543 = vrot.slane %v10219, 4
    %v10544 = vrot.slane %v10220, 4
    %v10545 = vrot.slane %v10221, 4
    %v10546 = vrot.slane %v10222, 4
    %v10547 = vrot.slane %v10223, 4
    %v10548 = vrot.slane %v10224, 4
    %v10549 = vrot.slane %v10225, 4
    %v10550 = vrot.slane %v10226, 4
    %v10551 = vrot.slane %v10227, 4
    %v10552 = vrot.slane %v10228, 4
    %v10553 = vrot.slane %v10229, 4
    %v10554 = vrot.slane %v10230, 4
    %v10555 = vrot.slane %v10231, 4
    %v10556 = vrot.slane %v10232, 4
    %v10557 = vrot.slane %v10233, 4
    %v10558 = vrot.slane %v10234, 4
    %v10559 = vrot.slane %v10235, 4
    %v10560 = vrot.slane %v10236, 4
    %v10561 = vrot.slane %v10237, 4
    %v10562 = vrot.slane %v10238, 4
    %v10563 = vrot.slane %v10239, 4
    %v10564 = vrot.slane %v10240, 4
    %v10565 = vrot.slane %v10241, 4
    %v10566 = vrot.slane %v10242, 4
    %v10567 = vrot.slane %v10243, 4
    %v10568 = vrot.slane %v10244, 4
    %v10569 = vrot.slane %v10245, 4
    %v10570 = vrot.slane %v10246, 4
    %v10571 = vrot.slane %v10247, 4
    %v10572 = vrot.slane %v10248, 4
    %v10573 = vrot.slane %v10249, 4
    %v10574 = vrot.slane %v10250, 4
    %v10575 = vrot.slane %v10251, 4
    %v10576 = vrot.slane %v10252, 4
    %v10577 = vrot.slane %v10253, 4
    %v10578 = vrot.slane %v10254, 4
    %v10579 = vrot.slane %v10255, 4
    %v10580 = vrot.slane %v10256, 4
    %v10581 = vrot.slane %v10257, 4
    %v10582 = vrot.slane %v10258, 4
    %v10583 = vrot.slane %v10259, 4
    %v10584 = vrot.slane %v10260, 4
    %v10585 = vrot.slane %v10261, 4
    %v10586 = vrot.slane %v10262, 4
    %v10587 = vrot.slane %v10263, 4
    %v10588 = vrot.slane %v10264, 4
    %v10589 = vrot.slane %v10265, 4
    %v10590 = vrot.slane %v10266, 4
    %v10591 = vrot.slane %v10267, 4
    %v10592 = vrot.slane %v10268, 4
    %v10593 = vrot.slane %v10269, 4
    %v10594 = vrot.slane %v10270, 4
    %v10595 = vrot.slane %v10271, 4
    %v10596 = vrot.slane %v10272, 4
    %v10597 = vrot.slane %v10273, 4
    %v10598 = vrot.slane %v10274, 4
    %v10599 = vrot.slane %v10275, 4
    %v10600 = vrot.slane %v10276, 4
    %v10601 = vrot.slane %v10277, 4
    %v10602 = vrot.slane %v10278, 4
    %v10603 = vrot.slane %v10279, 4
    %v10604 = vrot.slane %v10280, 4
    %v10605 = vrot.slane %v10281, 4
    %v10606 = vrot.slane %v10282, 4
    %v10607 = vrot.slane %v10283, 4
    %v10608 = vrot.slane %v10284, 4
    %v10609 = vrot.slane %v10285, 4
    %v10610 = vrot.slane %v10286, 4
    %v10611 = vrot.slane %v10287, 4
    %v10612 = vrot.slane %v10288, 4
    %v10613 = vrot.slane %v10289, 4
    %v10614 = vrot.slane %v10290, 4
    %v10615 = vrot.slane %v10291, 4
    %v10616 = vrot.slane %v10292, 4
    %v10617 = vrot.slane %v10293, 4
    %v10618 = vrot.slane %v10294, 4
    %v10619 = vrot.slane %v10295, 4
    %v10620 = vrot.slane %v10296, 4
    %v10621 = vrot.slane %v10297, 4
    %v10622 = vrot.slane %v10298, 4
    %v10623 = vrot.slane %v10299, 4
    %v10624 = vrot.slane %v10300, 4
    %v10625 = vrot.slane %v10301, 4
    %v10626 = vrot.slane %v10302, 4
    %v10627 = vrot.slane %v10303, 4
    %v10628 = vrot.slane %v10304, 4
    %v10629 = vrot.slane %v10305, 4
    %v10630 = vrot.slane %v10306, 4
    %v10631 = vrot.slane %v10307, 4
    %v10632 = vrot.slane %v10308, 4
    %v10633 = vrot.slane %v10309, 4
    %v10634 = vrot.slane %v10310, 4
    %v10635 = vrot.slane %v10311, 4
    %v10636 = vrot.slane %v10312, 4
    %v10637 = vrot.slane %v10313, 4
    %v10638 = vrot.slane %v10314, 4
    %v10639 = vrot.slane %v10315, 4
    %v10640 = vrot.slane %v10316, 4
    %v10641 = vrot.slane %v10317, 4
    %v10642 = vrot.slane %v10318, 4
    %v10643 = vrot.slane %v10319, 4
    %v10644 = vrot.slane %v10320, 4
    %v10645 = vrot.slane %v10321, 4
    %v10646 = vrot.slane %v10322, 4
    %v10647 = vrot.slane %v10323, 4
    %v10648 = vrot.slane %v10324, 4
    %v10649 = vrot.slane %v10325, 4
    %v10650 = vrot.slane %v10326, 4
    %v10651 = vrot.slane %v10327, 4
    %v10652 = vrot.slane %v10328, 4
    %v10653 = vrot.slane %v10329, 4
    %v10654 = vrot.slane %v10330, 4
    %v10655 = vrot.slane %v10331, 4
    %v10656 = vrot.slane %v10332, 4
    %v10657 = vrot.slane %v10333, 4
    %v10658 = vrot.slane %v10334, 4
    %v10659 = vrot.slane %v10335, 4
    %v10660 = vrot.slane %v10336, 4
    %v10661 = vrot.slane %v10337, 4
    %v10662 = vrot.slane %v10338, 4
    %v10663 = vrot.slane %v10339, 4
    %v10664 = vrot.slane %v10340, 4
    %v10665 = vrot.slane %v10341, 4
    %v10666 = vrot.slane %v10342, 4
    %v10667 = vrot.slane %v10343, 4
    %v10668 = vrot.slane %v10344, 4
    %v10669 = vrot.slane %v10345, 4
    %v10670 = vrot.slane %v10346, 4
    %v10671 = vrot.slane %v10347, 4
    %v10672 = vrot.slane %v10348, 4
    %v10673 = vrot.slane %v10349, 4
    %v10674 = vrot.slane %v10350, 4
    %v10675 = vrot.slane %v10351, 4
    %v10676 = vrot.slane %v10352, 4
    %v10677 = vrot.slane %v10353, 4
    %v10678 = vrot.slane %v10354, 4
    %v10679 = vrot.slane %v10355, 4
    %v10680 = vrot.slane %v10356, 4
    %v10681 = vrot.slane %v10357, 4
    %v10682 = vrot.slane %v10358, 4
    %v10845 = vsub.f32 %v10197, %v10521
    %v10846 = vsub.f32 %v10198, %v10522
    %v10847 = vsub.f32 %v10199, %v10523
    %v10848 = vsub.f32 %v10200, %v10524
    %v10849 = vsub.f32 %v10201, %v10525
    %v10850 = vsub.f32 %v10202, %v10526
    %v10851 = vsub.f32 %v10203, %v10527
    %v10852 = vsub.f32 %v10204, %v10528
    %v10853 = vsub.f32 %v10205, %v10529
    %v10854 = vsub.f32 %v10206, %v10530
    %v10855 = vsub.f32 %v10207, %v10531
    %v10856 = vsub.f32 %v10208, %v10532
    %v10857 = vsub.f32 %v10209, %v10533
    %v10858 = vsub.f32 %v10210, %v10534
    %v10859 = vsub.f32 %v10211, %v10535
    %v10860 = vsub.f32 %v10212, %v10536
    %v10861 = vsub.f32 %v10213, %v10537
    %v10862 = vsub.f32 %v10214, %v10538
    %v10863 = vsub.f32 %v10215, %v10539
    %v10864 = vsub.f32 %v10216, %v10540
    %v10865 = vsub.f32 %v10217, %v10541
    %v10866 = vsub.f32 %v10218, %v10542
    %v10867 = vsub.f32 %v10219, %v10543
    %v10868 = vsub.f32 %v10220, %v10544
    %v10869 = vsub.f32 %v10221, %v10545
    %v10870 = vsub.f32 %v10222, %v10546
    %v10871 = vsub.f32 %v10223, %v10547
    %v10872 = vsub.f32 %v10224, %v10548
    %v10873 = vsub.f32 %v10225, %v10549
    %v10874 = vsub.f32 %v10226, %v10550
    %v10875 = vsub.f32 %v10227, %v10551
    %v10876 = vsub.f32 %v10228, %v10552
    %v10877 = vsub.f32 %v10229, %v10553
    %v10878 = vsub.f32 %v10230, %v10554
    %v10879 = vsub.f32 %v10231, %v10555
    %v10880 = vsub.f32 %v10232, %v10556
    %v10881 = vsub.f32 %v10233, %v10557
    %v10882 = vsub.f32 %v10234, %v10558
    %v10883 = vsub.f32 %v10235, %v10559
    %v10884 = vsub.f32 %v10236, %v10560
    %v10885 = vsub.f32 %v10237, %v10561
    %v10886 = vsub.f32 %v10238, %v10562
    %v10887 = vsub.f32 %v10239, %v10563
    %v10888 = vsub.f32 %v10240, %v10564
    %v10889 = vsub.f32 %v10241, %v10565
    %v10890 = vsub.f32 %v10242, %v10566
    %v10891 = vsub.f32 %v10243, %v10567
    %v10892 = vsub.f32 %v10244, %v10568
    %v10893 = vsub.f32 %v10245, %v10569
    %v10894 = vsub.f32 %v10246, %v10570
    %v10895 = vsub.f32 %v10247, %v10571
    %v10896 = vsub.f32 %v10248, %v10572
    %v10897 = vsub.f32 %v10249, %v10573
    %v10898 = vsub.f32 %v10250, %v10574
    %v10899 = vsub.f32 %v10251, %v10575
    %v10900 = vsub.f32 %v10252, %v10576
    %v10901 = vsub.f32 %v10253, %v10577
    %v10902 = vsub.f32 %v10254, %v10578
    %v10903 = vsub.f32 %v10255, %v10579
    %v10904 = vsub.f32 %v10256, %v10580
    %v10905 = vsub.f32 %v10257, %v10581
    %v10906 = vsub.f32 %v10258, %v10582
    %v10907 = vsub.f32 %v10259, %v10583
    %v10908 = vsub.f32 %v10260, %v10584
    %v10909 = vsub.f32 %v10261, %v10585
    %v10910 = vsub.f32 %v10262, %v10586
    %v10911 = vsub.f32 %v10263, %v10587
    %v10912 = vsub.f32 %v10264, %v10588
    %v10913 = vsub.f32 %v10265, %v10589
    %v10914 = vsub.f32 %v10266, %v10590
    %v10915 = vsub.f32 %v10267, %v10591
    %v10916 = vsub.f32 %v10268, %v10592
    %v10917 = vsub.f32 %v10269, %v10593
    %v10918 = vsub.f32 %v10270, %v10594
    %v10919 = vsub.f32 %v10271, %v10595
    %v10920 = vsub.f32 %v10272, %v10596
    %v10921 = vsub.f32 %v10273, %v10597
    %v10922 = vsub.f32 %v10274, %v10598
    %v10923 = vsub.f32 %v10275, %v10599
    %v10924 = vsub.f32 %v10276, %v10600
    %v10925 = vsub.f32 %v10277, %v10601
    %v10926 = vsub.f32 %v10278, %v10602
    %v10927 = vsub.f32 %v10279, %v10603
    %v10928 = vsub.f32 %v10280, %v10604
    %v10929 = vsub.f32 %v10281, %v10605
    %v10930 = vsub.f32 %v10282, %v10606
    %v10931 = vsub.f32 %v10283, %v10607
    %v10932 = vsub.f32 %v10284, %v10608
    %v10933 = vsub.f32 %v10285, %v10609
    %v10934 = vsub.f32 %v10286, %v10610
    %v10935 = vsub.f32 %v10287, %v10611
    %v10936 = vsub.f32 %v10288, %v10612
    %v10937 = vsub.f32 %v10289, %v10613
    %v10938 = vsub.f32 %v10290, %v10614
    %v10939 = vsub.f32 %v10291, %v10615
    %v10940 = vsub.f32 %v10292, %v10616
    %v10941 = vsub.f32 %v10293, %v10617
    %v10942 = vsub.f32 %v10294, %v10618
    %v10943 = vsub.f32 %v10295, %v10619
    %v10944 = vsub.f32 %v10296, %v10620
    %v10945 = vsub.f32 %v10297, %v10621
    %v10946 = vsub.f32 %v10298, %v10622
    %v10947 = vsub.f32 %v10299, %v10623
    %v10948 = vsub.f32 %v10300, %v10624
    %v10949 = vsub.f32 %v10301, %v10625
    %v10950 = vsub.f32 %v10302, %v10626
    %v10951 = vsub.f32 %v10303, %v10627
    %v10952 = vsub.f32 %v10304, %v10628
    %v10953 = vsub.f32 %v10305, %v10629
    %v10954 = vsub.f32 %v10306, %v10630
    %v10955 = vsub.f32 %v10307, %v10631
    %v10956 = vsub.f32 %v10308, %v10632
    %v10957 = vsub.f32 %v10309, %v10633
    %v10958 = vsub.f32 %v10310, %v10634
    %v10959 = vsub.f32 %v10311, %v10635
    %v10960 = vsub.f32 %v10312, %v10636
    %v10961 = vsub.f32 %v10313, %v10637
    %v10962 = vsub.f32 %v10314, %v10638
    %v10963 = vsub.f32 %v10315, %v10639
    %v10964 = vsub.f32 %v10316, %v10640
    %v10965 = vsub.f32 %v10317, %v10641
    %v10966 = vsub.f32 %v10318, %v10642
    %v10967 = vsub.f32 %v10319, %v10643
    %v10968 = vsub.f32 %v10320, %v10644
    %v10969 = vsub.f32 %v10321, %v10645
    %v10970 = vsub.f32 %v10322, %v10646
    %v10971 = vsub.f32 %v10323, %v10647
    %v10972 = vsub.f32 %v10324, %v10648
    %v10973 = vsub.f32 %v10325, %v10649
    %v10974 = vsub.f32 %v10326, %v10650
    %v10975 = vsub.f32 %v10327, %v10651
    %v10976 = vsub.f32 %v10328, %v10652
    %v10977 = vsub.f32 %v10329, %v10653
    %v10978 = vsub.f32 %v10330, %v10654
    %v10979 = vsub.f32 %v10331, %v10655
    %v10980 = vsub.f32 %v10332, %v10656
    %v10981 = vsub.f32 %v10333, %v10657
    %v10982 = vsub.f32 %v10334, %v10658
    %v10983 = vsub.f32 %v10335, %v10659
    %v10984 = vsub.f32 %v10336, %v10660
    %v10985 = vsub.f32 %v10337, %v10661
    %v10986 = vsub.f32 %v10338, %v10662
    %v10987 = vsub.f32 %v10339, %v10663
    %v10988 = vsub.f32 %v10340, %v10664
    %v10989 = vsub.f32 %v10341, %v10665
    %v10990 = vsub.f32 %v10342, %v10666
    %v10991 = vsub.f32 %v10343, %v10667
    %v10992 = vsub.f32 %v10344, %v10668
    %v10993 = vsub.f32 %v10345, %v10669
    %v10994 = vsub.f32 %v10346, %v10670
    %v10995 = vsub.f32 %v10347, %v10671
    %v10996 = vsub.f32 %v10348, %v10672
    %v10997 = vsub.f32 %v10349, %v10673
    %v10998 = vsub.f32 %v10350, %v10674
    %v10999 = vsub.f32 %v10351, %v10675
    %v11000 = vsub.f32 %v10352, %v10676
    %v11001 = vsub.f32 %v10353, %v10677
    %v11002 = vsub.f32 %v10354, %v10678
    %v11003 = vsub.f32 %v10355, %v10679
    %v11004 = vsub.f32 %v10356, %v10680
    %v11005 = vsub.f32 %v10357, %v10681
    %v11006 = vsub.f32 %v10358, %v10682
    %v11007 = vand.u32 2147483647, %v10845
    %v11008 = vand.u32 2147483647, %v10846
    %v11009 = vand.u32 2147483647, %v10847
    %v11010 = vand.u32 2147483647, %v10848
    %v11011 = vand.u32 2147483647, %v10849
    %v11012 = vand.u32 2147483647, %v10850
    %v11013 = vand.u32 2147483647, %v10851
    %v11014 = vand.u32 2147483647, %v10852
    %v11015 = vand.u32 2147483647, %v10853
    %v11016 = vand.u32 2147483647, %v10854
    %v11017 = vand.u32 2147483647, %v10855
    %v11018 = vand.u32 2147483647, %v10856
    %v11019 = vand.u32 2147483647, %v10857
    %v11020 = vand.u32 2147483647, %v10858
    %v11021 = vand.u32 2147483647, %v10859
    %v11022 = vand.u32 2147483647, %v10860
    %v11023 = vand.u32 2147483647, %v10861
    %v11024 = vand.u32 2147483647, %v10862
    %v11025 = vand.u32 2147483647, %v10863
    %v11026 = vand.u32 2147483647, %v10864
    %v11027 = vand.u32 2147483647, %v10865
    %v11028 = vand.u32 2147483647, %v10866
    %v11029 = vand.u32 2147483647, %v10867
    %v11030 = vand.u32 2147483647, %v10868
    %v11031 = vand.u32 2147483647, %v10869
    %v11032 = vand.u32 2147483647, %v10870
    %v11033 = vand.u32 2147483647, %v10871
    %v11034 = vand.u32 2147483647, %v10872
    %v11035 = vand.u32 2147483647, %v10873
    %v11036 = vand.u32 2147483647, %v10874
    %v11037 = vand.u32 2147483647, %v10875
    %v11038 = vand.u32 2147483647, %v10876
    %v11039 = vand.u32 2147483647, %v10877
    %v11040 = vand.u32 2147483647, %v10878
    %v11041 = vand.u32 2147483647, %v10879
    %v11042 = vand.u32 2147483647, %v10880
    %v11043 = vand.u32 2147483647, %v10881
    %v11044 = vand.u32 2147483647, %v10882
    %v11045 = vand.u32 2147483647, %v10883
    %v11046 = vand.u32 2147483647, %v10884
    %v11047 = vand.u32 2147483647, %v10885
    %v11048 = vand.u32 2147483647, %v10886
    %v11049 = vand.u32 2147483647, %v10887
    %v11050 = vand.u32 2147483647, %v10888
    %v11051 = vand.u32 2147483647, %v10889
    %v11052 = vand.u32 2147483647, %v10890
    %v11053 = vand.u32 2147483647, %v10891
    %v11054 = vand.u32 2147483647, %v10892
    %v11055 = vand.u32 2147483647, %v10893
    %v11056 = vand.u32 2147483647, %v10894
    %v11057 = vand.u32 2147483647, %v10895
    %v11058 = vand.u32 2147483647, %v10896
    %v11059 = vand.u32 2147483647, %v10897
    %v11060 = vand.u32 2147483647, %v10898
    %v11061 = vand.u32 2147483647, %v10899
    %v11062 = vand.u32 2147483647, %v10900
    %v11063 = vand.u32 2147483647, %v10901
    %v11064 = vand.u32 2147483647, %v10902
    %v11065 = vand.u32 2147483647, %v10903
    %v11066 = vand.u32 2147483647, %v10904
    %v11067 = vand.u32 2147483647, %v10905
    %v11068 = vand.u32 2147483647, %v10906
    %v11069 = vand.u32 2147483647, %v10907
    %v11070 = vand.u32 2147483647, %v10908
    %v11071 = vand.u32 2147483647, %v10909
    %v11072 = vand.u32 2147483647, %v10910
    %v11073 = vand.u32 2147483647, %v10911
    %v11074 = vand.u32 2147483647, %v10912
    %v11075 = vand.u32 2147483647, %v10913
    %v11076 = vand.u32 2147483647, %v10914
    %v11077 = vand.u32 2147483647, %v10915
    %v11078 = vand.u32 2147483647, %v10916
    %v11079 = vand.u32 2147483647, %v10917
    %v11080 = vand.u32 2147483647, %v10918
    %v11081 = vand.u32 2147483647, %v10919
    %v11082 = vand.u32 2147483647, %v10920
    %v11083 = vand.u32 2147483647, %v10921
    %v11084 = vand.u32 2147483647, %v10922
    %v11085 = vand.u32 2147483647, %v10923
    %v11086 = vand.u32 2147483647, %v10924
    %v11087 = vand.u32 2147483647, %v10925
    %v11088 = vand.u32 2147483647, %v10926
    %v11089 = vand.u32 2147483647, %v10927
    %v11090 = vand.u32 2147483647, %v10928
    %v11091 = vand.u32 2147483647, %v10929
    %v11092 = vand.u32 2147483647, %v10930
    %v11093 = vand.u32 2147483647, %v10931
    %v11094 = vand.u32 2147483647, %v10932
    %v11095 = vand.u32 2147483647, %v10933
    %v11096 = vand.u32 2147483647, %v10934
    %v11097 = vand.u32 2147483647, %v10935
    %v11098 = vand.u32 2147483647, %v10936
    %v11099 = vand.u32 2147483647, %v10937
    %v11100 = vand.u32 2147483647, %v10938
    %v11101 = vand.u32 2147483647, %v10939
    %v11102 = vand.u32 2147483647, %v10940
    %v11103 = vand.u32 2147483647, %v10941
    %v11104 = vand.u32 2147483647, %v10942
    %v11105 = vand.u32 2147483647, %v10943
    %v11106 = vand.u32 2147483647, %v10944
    %v11107 = vand.u32 2147483647, %v10945
    %v11108 = vand.u32 2147483647, %v10946
    %v11109 = vand.u32 2147483647, %v10947
    %v11110 = vand.u32 2147483647, %v10948
    %v11111 = vand.u32 2147483647, %v10949
    %v11112 = vand.u32 2147483647, %v10950
    %v11113 = vand.u32 2147483647, %v10951
    %v11114 = vand.u32 2147483647, %v10952
    %v11115 = vand.u32 2147483647, %v10953
    %v11116 = vand.u32 2147483647, %v10954
    %v11117 = vand.u32 2147483647, %v10955
    %v11118 = vand.u32 2147483647, %v10956
    %v11119 = vand.u32 2147483647, %v10957
    %v11120 = vand.u32 2147483647, %v10958
    %v11121 = vand.u32 2147483647, %v10959
    %v11122 = vand.u32 2147483647, %v10960
    %v11123 = vand.u32 2147483647, %v10961
    %v11124 = vand.u32 2147483647, %v10962
    %v11125 = vand.u32 2147483647, %v10963
    %v11126 = vand.u32 2147483647, %v10964
    %v11127 = vand.u32 2147483647, %v10965
    %v11128 = vand.u32 2147483647, %v10966
    %v11129 = vand.u32 2147483647, %v10967
    %v11130 = vand.u32 2147483647, %v10968
    %v11131 = vand.u32 2147483647, %v10969
    %v11132 = vand.u32 2147483647, %v10970
    %v11133 = vand.u32 2147483647, %v10971
    %v11134 = vand.u32 2147483647, %v10972
    %v11135 = vand.u32 2147483647, %v10973
    %v11136 = vand.u32 2147483647, %v10974
    %v11137 = vand.u32 2147483647, %v10975
    %v11138 = vand.u32 2147483647, %v10976
    %v11139 = vand.u32 2147483647, %v10977
    %v11140 = vand.u32 2147483647, %v10978
    %v11141 = vand.u32 2147483647, %v10979
    %v11142 = vand.u32 2147483647, %v10980
    %v11143 = vand.u32 2147483647, %v10981
    %v11144 = vand.u32 2147483647, %v10982
    %v11145 = vand.u32 2147483647, %v10983
    %v11146 = vand.u32 2147483647, %v10984
    %v11147 = vand.u32 2147483647, %v10985
    %v11148 = vand.u32 2147483647, %v10986
    %v11149 = vand.u32 2147483647, %v10987
    %v11150 = vand.u32 2147483647, %v10988
    %v11151 = vand.u32 2147483647, %v10989
    %v11152 = vand.u32 2147483647, %v10990
    %v11153 = vand.u32 2147483647, %v10991
    %v11154 = vand.u32 2147483647, %v10992
    %v11155 = vand.u32 2147483647, %v10993
    %v11156 = vand.u32 2147483647, %v10994
    %v11157 = vand.u32 2147483647, %v10995
    %v11158 = vand.u32 2147483647, %v10996
    %v11159 = vand.u32 2147483647, %v10997
    %v11160 = vand.u32 2147483647, %v10998
    %v11161 = vand.u32 2147483647, %v10999
    %v11162 = vand.u32 2147483647, %v11000
    %v11163 = vand.u32 2147483647, %v11001
    %v11164 = vand.u32 2147483647, %v11002
    %v11165 = vand.u32 2147483647, %v11003
    %v11166 = vand.u32 2147483647, %v11004
    %v11167 = vand.u32 2147483647, %v11005
    %v11168 = vand.u32 2147483647, %v11006
    %vm11169 = vcmask 1043456
    %v11170 = vsel %vm11169, %v11007, 0.0
    %v11171 = vsel %vm11169, %v11008, 0.0
    %v11172 = vadd.f32 %v11170, %v11171
    %v11173 = vsel %vm11169, %v11009, 0.0
    %v11174 = vadd.f32 %v11172, %v11173
    %v11175 = vsel %vm11169, %v11010, 0.0
    %v11176 = vadd.f32 %v11174, %v11175
    %v11177 = vsel %vm11169, %v11011, 0.0
    %v11178 = vadd.f32 %v11176, %v11177
    %v11179 = vsel %vm11169, %v11012, 0.0
    %v11180 = vadd.f32 %v11178, %v11179
    %v11181 = vsel %vm11169, %v11013, 0.0
    %v11182 = vadd.f32 %v11180, %v11181
    %v11183 = vsel %vm11169, %v11014, 0.0
    %v11184 = vadd.f32 %v11182, %v11183
    %v11185 = vsel %vm11169, %v11015, 0.0
    %v11186 = vadd.f32 %v11184, %v11185
    %v11187 = vsel %vm11169, %v11016, 0.0
    %v11188 = vadd.f32 %v11186, %v11187
    %v11189 = vsel %vm11169, %v11017, 0.0
    %v11190 = vadd.f32 %v11188, %v11189
    %v11191 = vsel %vm11169, %v11018, 0.0
    %v11192 = vadd.f32 %v11190, %v11191
    %v11193 = vsel %vm11169, %v11019, 0.0
    %v11194 = vadd.f32 %v11192, %v11193
    %v11195 = vsel %vm11169, %v11020, 0.0
    %v11196 = vadd.f32 %v11194, %v11195
    %v11197 = vsel %vm11169, %v11021, 0.0
    %v11198 = vadd.f32 %v11196, %v11197
    %v11199 = vsel %vm11169, %v11022, 0.0
    %v11200 = vadd.f32 %v11198, %v11199
    %v11201 = vsel %vm11169, %v11023, 0.0
    %v11202 = vadd.f32 %v11200, %v11201
    %v11203 = vsel %vm11169, %v11024, 0.0
    %v11204 = vadd.f32 %v11202, %v11203
    %v11205 = vsel %vm11169, %v11025, 0.0
    %v11206 = vadd.f32 %v11204, %v11205
    %v11207 = vsel %vm11169, %v11026, 0.0
    %v11208 = vadd.f32 %v11206, %v11207
    %v11209 = vsel %vm11169, %v11027, 0.0
    %v11210 = vadd.f32 %v11208, %v11209
    %v11211 = vsel %vm11169, %v11028, 0.0
    %v11212 = vadd.f32 %v11210, %v11211
    %v11213 = vsel %vm11169, %v11029, 0.0
    %v11214 = vadd.f32 %v11212, %v11213
    %v11215 = vsel %vm11169, %v11030, 0.0
    %v11216 = vadd.f32 %v11214, %v11215
    %v11217 = vsel %vm11169, %v11031, 0.0
    %v11218 = vadd.f32 %v11216, %v11217
    %v11219 = vsel %vm11169, %v11032, 0.0
    %v11220 = vadd.f32 %v11218, %v11219
    %v11221 = vsel %vm11169, %v11033, 0.0
    %v11222 = vadd.f32 %v11220, %v11221
    %v11223 = vsel %vm11169, %v11034, 0.0
    %v11224 = vadd.f32 %v11222, %v11223
    %v11225 = vsel %vm11169, %v11035, 0.0
    %v11226 = vadd.f32 %v11224, %v11225
    %v11227 = vsel %vm11169, %v11036, 0.0
    %v11228 = vadd.f32 %v11226, %v11227
    %v11229 = vsel %vm11169, %v11037, 0.0
    %v11230 = vadd.f32 %v11228, %v11229
    %v11231 = vsel %vm11169, %v11038, 0.0
    %v11232 = vadd.f32 %v11230, %v11231
    %v11233 = vsel %vm11169, %v11039, 0.0
    %v11234 = vadd.f32 %v11232, %v11233
    %v11235 = vsel %vm11169, %v11040, 0.0
    %v11236 = vadd.f32 %v11234, %v11235
    %v11237 = vsel %vm11169, %v11041, 0.0
    %v11238 = vadd.f32 %v11236, %v11237
    %v11239 = vsel %vm11169, %v11042, 0.0
    %v11240 = vadd.f32 %v11238, %v11239
    %v11241 = vsel %vm11169, %v11043, 0.0
    %v11242 = vadd.f32 %v11240, %v11241
    %v11243 = vsel %vm11169, %v11044, 0.0
    %v11244 = vadd.f32 %v11242, %v11243
    %v11245 = vsel %vm11169, %v11045, 0.0
    %v11246 = vadd.f32 %v11244, %v11245
    %v11247 = vsel %vm11169, %v11046, 0.0
    %v11248 = vadd.f32 %v11246, %v11247
    %v11249 = vsel %vm11169, %v11047, 0.0
    %v11250 = vadd.f32 %v11248, %v11249
    %v11251 = vsel %vm11169, %v11048, 0.0
    %v11252 = vadd.f32 %v11250, %v11251
    %v11253 = vsel %vm11169, %v11049, 0.0
    %v11254 = vadd.f32 %v11252, %v11253
    %v11255 = vsel %vm11169, %v11050, 0.0
    %v11256 = vadd.f32 %v11254, %v11255
    %v11257 = vsel %vm11169, %v11051, 0.0
    %v11258 = vadd.f32 %v11256, %v11257
    %v11259 = vsel %vm11169, %v11052, 0.0
    %v11260 = vadd.f32 %v11258, %v11259
    %v11261 = vsel %vm11169, %v11053, 0.0
    %v11262 = vadd.f32 %v11260, %v11261
    %v11263 = vsel %vm11169, %v11054, 0.0
    %v11264 = vadd.f32 %v11262, %v11263
    %v11265 = vsel %vm11169, %v11055, 0.0
    %v11266 = vadd.f32 %v11264, %v11265
    %v11267 = vsel %vm11169, %v11056, 0.0
    %v11268 = vadd.f32 %v11266, %v11267
    %v11269 = vsel %vm11169, %v11057, 0.0
    %v11270 = vadd.f32 %v11268, %v11269
    %v11271 = vsel %vm11169, %v11058, 0.0
    %v11272 = vadd.f32 %v11270, %v11271
    %v11273 = vsel %vm11169, %v11059, 0.0
    %v11274 = vadd.f32 %v11272, %v11273
    %v11275 = vsel %vm11169, %v11060, 0.0
    %v11276 = vadd.f32 %v11274, %v11275
    %v11277 = vsel %vm11169, %v11061, 0.0
    %v11278 = vadd.f32 %v11276, %v11277
    %v11279 = vsel %vm11169, %v11062, 0.0
    %v11280 = vadd.f32 %v11278, %v11279
    %v11281 = vsel %vm11169, %v11063, 0.0
    %v11282 = vadd.f32 %v11280, %v11281
    %v11283 = vsel %vm11169, %v11064, 0.0
    %v11284 = vadd.f32 %v11282, %v11283
    %v11285 = vsel %vm11169, %v11065, 0.0
    %v11286 = vadd.f32 %v11284, %v11285
    %v11287 = vsel %vm11169, %v11066, 0.0
    %v11288 = vadd.f32 %v11286, %v11287
    %v11289 = vsel %vm11169, %v11067, 0.0
    %v11290 = vadd.f32 %v11288, %v11289
    %v11291 = vsel %vm11169, %v11068, 0.0
    %v11292 = vadd.f32 %v11290, %v11291
    %v11293 = vsel %vm11169, %v11069, 0.0
    %v11294 = vadd.f32 %v11292, %v11293
    %v11295 = vsel %vm11169, %v11070, 0.0
    %v11296 = vadd.f32 %v11294, %v11295
    %v11297 = vsel %vm11169, %v11071, 0.0
    %v11298 = vadd.f32 %v11296, %v11297
    %v11299 = vsel %vm11169, %v11072, 0.0
    %v11300 = vadd.f32 %v11298, %v11299
    %v11301 = vsel %vm11169, %v11073, 0.0
    %v11302 = vadd.f32 %v11300, %v11301
    %v11303 = vsel %vm11169, %v11074, 0.0
    %v11304 = vadd.f32 %v11302, %v11303
    %v11305 = vsel %vm11169, %v11075, 0.0
    %v11306 = vadd.f32 %v11304, %v11305
    %v11307 = vsel %vm11169, %v11076, 0.0
    %v11308 = vadd.f32 %v11306, %v11307
    %v11309 = vsel %vm11169, %v11077, 0.0
    %v11310 = vadd.f32 %v11308, %v11309
    %v11311 = vsel %vm11169, %v11078, 0.0
    %v11312 = vadd.f32 %v11310, %v11311
    %v11313 = vsel %vm11169, %v11079, 0.0
    %v11314 = vadd.f32 %v11312, %v11313
    %v11315 = vsel %vm11169, %v11080, 0.0
    %v11316 = vadd.f32 %v11314, %v11315
    %v11317 = vsel %vm11169, %v11081, 0.0
    %v11318 = vadd.f32 %v11316, %v11317
    %v11319 = vsel %vm11169, %v11082, 0.0
    %v11320 = vadd.f32 %v11318, %v11319
    %v11321 = vsel %vm11169, %v11083, 0.0
    %v11322 = vadd.f32 %v11320, %v11321
    %v11323 = vsel %vm11169, %v11084, 0.0
    %v11324 = vadd.f32 %v11322, %v11323
    %v11325 = vsel %vm11169, %v11085, 0.0
    %v11326 = vadd.f32 %v11324, %v11325
    %v11327 = vsel %vm11169, %v11086, 0.0
    %v11328 = vadd.f32 %v11326, %v11327
    %v11329 = vsel %vm11169, %v11087, 0.0
    %v11330 = vadd.f32 %v11328, %v11329
    %v11331 = vsel %vm11169, %v11088, 0.0
    %v11332 = vadd.f32 %v11330, %v11331
    %v11333 = vsel %vm11169, %v11089, 0.0
    %v11334 = vadd.f32 %v11332, %v11333
    %v11335 = vsel %vm11169, %v11090, 0.0
    %v11336 = vadd.f32 %v11334, %v11335
    %v11337 = vsel %vm11169, %v11091, 0.0
    %v11338 = vadd.f32 %v11336, %v11337
    %v11339 = vsel %vm11169, %v11092, 0.0
    %v11340 = vadd.f32 %v11338, %v11339
    %v11341 = vsel %vm11169, %v11093, 0.0
    %v11342 = vadd.f32 %v11340, %v11341
    %v11343 = vsel %vm11169, %v11094, 0.0
    %v11344 = vadd.f32 %v11342, %v11343
    %v11345 = vsel %vm11169, %v11095, 0.0
    %v11346 = vadd.f32 %v11344, %v11345
    %v11347 = vsel %vm11169, %v11096, 0.0
    %v11348 = vadd.f32 %v11346, %v11347
    %v11349 = vsel %vm11169, %v11097, 0.0
    %v11350 = vadd.f32 %v11348, %v11349
    %v11351 = vsel %vm11169, %v11098, 0.0
    %v11352 = vadd.f32 %v11350, %v11351
    %v11353 = vsel %vm11169, %v11099, 0.0
    %v11354 = vadd.f32 %v11352, %v11353
    %v11355 = vsel %vm11169, %v11100, 0.0
    %v11356 = vadd.f32 %v11354, %v11355
    %v11357 = vsel %vm11169, %v11101, 0.0
    %v11358 = vadd.f32 %v11356, %v11357
    %v11359 = vsel %vm11169, %v11102, 0.0
    %v11360 = vadd.f32 %v11358, %v11359
    %v11361 = vsel %vm11169, %v11103, 0.0
    %v11362 = vadd.f32 %v11360, %v11361
    %v11363 = vsel %vm11169, %v11104, 0.0
    %v11364 = vadd.f32 %v11362, %v11363
    %v11365 = vsel %vm11169, %v11105, 0.0
    %v11366 = vadd.f32 %v11364, %v11365
    %v11367 = vsel %vm11169, %v11106, 0.0
    %v11368 = vadd.f32 %v11366, %v11367
    %v11369 = vsel %vm11169, %v11107, 0.0
    %v11370 = vadd.f32 %v11368, %v11369
    %v11371 = vsel %vm11169, %v11108, 0.0
    %v11372 = vadd.f32 %v11370, %v11371
    %v11373 = vsel %vm11169, %v11109, 0.0
    %v11374 = vadd.f32 %v11372, %v11373
    %v11375 = vsel %vm11169, %v11110, 0.0
    %v11376 = vadd.f32 %v11374, %v11375
    %v11377 = vsel %vm11169, %v11111, 0.0
    %v11378 = vadd.f32 %v11376, %v11377
    %v11379 = vsel %vm11169, %v11112, 0.0
    %v11380 = vadd.f32 %v11378, %v11379
    %v11381 = vsel %vm11169, %v11113, 0.0
    %v11382 = vadd.f32 %v11380, %v11381
    %v11383 = vsel %vm11169, %v11114, 0.0
    %v11384 = vadd.f32 %v11382, %v11383
    %v11385 = vsel %vm11169, %v11115, 0.0
    %v11386 = vadd.f32 %v11384, %v11385
    %v11387 = vsel %vm11169, %v11116, 0.0
    %v11388 = vadd.f32 %v11386, %v11387
    %v11389 = vsel %vm11169, %v11117, 0.0
    %v11390 = vadd.f32 %v11388, %v11389
    %v11391 = vsel %vm11169, %v11118, 0.0
    %v11392 = vadd.f32 %v11390, %v11391
    %v11393 = vsel %vm11169, %v11119, 0.0
    %v11394 = vadd.f32 %v11392, %v11393
    %v11395 = vsel %vm11169, %v11120, 0.0
    %v11396 = vadd.f32 %v11394, %v11395
    %v11397 = vsel %vm11169, %v11121, 0.0
    %v11398 = vadd.f32 %v11396, %v11397
    %v11399 = vsel %vm11169, %v11122, 0.0
    %v11400 = vadd.f32 %v11398, %v11399
    %v11401 = vsel %vm11169, %v11123, 0.0
    %v11402 = vadd.f32 %v11400, %v11401
    %v11403 = vsel %vm11169, %v11124, 0.0
    %v11404 = vadd.f32 %v11402, %v11403
    %v11405 = vsel %vm11169, %v11125, 0.0
    %v11406 = vadd.f32 %v11404, %v11405
    %v11407 = vsel %vm11169, %v11126, 0.0
    %v11408 = vadd.f32 %v11406, %v11407
    %v11409 = vsel %vm11169, %v11127, 0.0
    %v11410 = vadd.f32 %v11408, %v11409
    %v11411 = vsel %vm11169, %v11128, 0.0
    %v11412 = vadd.f32 %v11410, %v11411
    %v11413 = vsel %vm11169, %v11129, 0.0
    %v11414 = vadd.f32 %v11412, %v11413
    %v11415 = vsel %vm11169, %v11130, 0.0
    %v11416 = vadd.f32 %v11414, %v11415
    %v11417 = vsel %vm11169, %v11131, 0.0
    %v11418 = vadd.f32 %v11416, %v11417
    %v11419 = vsel %vm11169, %v11132, 0.0
    %v11420 = vadd.f32 %v11418, %v11419
    %v11421 = vsel %vm11169, %v11133, 0.0
    %v11422 = vadd.f32 %v11420, %v11421
    %v11423 = vsel %vm11169, %v11134, 0.0
    %v11424 = vadd.f32 %v11422, %v11423
    %v11425 = vsel %vm11169, %v11135, 0.0
    %v11426 = vadd.f32 %v11424, %v11425
    %v11427 = vsel %vm11169, %v11136, 0.0
    %v11428 = vadd.f32 %v11426, %v11427
    %v11429 = vsel %vm11169, %v11137, 0.0
    %v11430 = vadd.f32 %v11428, %v11429
    %v11431 = vsel %vm11169, %v11138, 0.0
    %v11432 = vadd.f32 %v11430, %v11431
    %v11433 = vsel %vm11169, %v11139, 0.0
    %v11434 = vadd.f32 %v11432, %v11433
    %v11435 = vsel %vm11169, %v11140, 0.0
    %v11436 = vadd.f32 %v11434, %v11435
    %v11437 = vsel %vm11169, %v11141, 0.0
    %v11438 = vadd.f32 %v11436, %v11437
    %v11439 = vsel %vm11169, %v11142, 0.0
    %v11440 = vadd.f32 %v11438, %v11439
    %v11441 = vsel %vm11169, %v11143, 0.0
    %v11442 = vadd.f32 %v11440, %v11441
    %v11443 = vsel %vm11169, %v11144, 0.0
    %v11444 = vadd.f32 %v11442, %v11443
    %v11445 = vsel %vm11169, %v11145, 0.0
    %v11446 = vadd.f32 %v11444, %v11445
    %v11447 = vsel %vm11169, %v11146, 0.0
    %v11448 = vadd.f32 %v11446, %v11447
    %v11449 = vsel %vm11169, %v11147, 0.0
    %v11450 = vadd.f32 %v11448, %v11449
    %v11451 = vsel %vm11169, %v11148, 0.0
    %v11452 = vadd.f32 %v11450, %v11451
    %v11453 = vsel %vm11169, %v11149, 0.0
    %v11454 = vadd.f32 %v11452, %v11453
    %v11455 = vsel %vm11169, %v11150, 0.0
    %v11456 = vadd.f32 %v11454, %v11455
    %v11457 = vsel %vm11169, %v11151, 0.0
    %v11458 = vadd.f32 %v11456, %v11457
    %v11459 = vsel %vm11169, %v11152, 0.0
    %v11460 = vadd.f32 %v11458, %v11459
    %v11461 = vsel %vm11169, %v11153, 0.0
    %v11462 = vadd.f32 %v11460, %v11461
    %v11463 = vsel %vm11169, %v11154, 0.0
    %v11464 = vadd.f32 %v11462, %v11463
    %v11465 = vsel %vm11169, %v11155, 0.0
    %v11466 = vadd.f32 %v11464, %v11465
    %v11467 = vsel %vm11169, %v11156, 0.0
    %v11468 = vadd.f32 %v11466, %v11467
    %v11469 = vsel %vm11169, %v11157, 0.0
    %v11470 = vadd.f32 %v11468, %v11469
    %v11471 = vsel %vm11169, %v11158, 0.0
    %v11472 = vadd.f32 %v11470, %v11471
    %v11473 = vsel %vm11169, %v11159, 0.0
    %v11474 = vadd.f32 %v11472, %v11473
    %v11475 = vsel %vm11169, %v11160, 0.0
    %v11476 = vadd.f32 %v11474, %v11475
    %v11477 = vsel %vm11169, %v11161, 0.0
    %v11478 = vadd.f32 %v11476, %v11477
    %v11479 = vsel %vm11169, %v11162, 0.0
    %v11480 = vadd.f32 %v11478, %v11479
    %v11481 = vsel %vm11169, %v11163, 0.0
    %v11482 = vadd.f32 %v11480, %v11481
    %v11483 = vsel %vm11169, %v11164, 0.0
    %v11484 = vadd.f32 %v11482, %v11483
    %v11485 = vsel %vm11169, %v11165, 0.0
    %v11486 = vadd.f32 %v11484, %v11485
    %v11487 = vsel %vm11169, %v11166, 0.0
    %v11488 = vadd.f32 %v11486, %v11487
    %v11489 = vsel %vm11169, %v11167, 0.0
    %v11490 = vadd.f32 %v11488, %v11489
    %v11491 = vsel %vm11169, %v11168, 0.0
    %v11492 = vadd.f32 %v11490, %v11491
    %11493 = vadd.xlane.f32.xlu0 %v11492
    %v11494 = vpop.xlane.xlu0 %11493
    %v11495 = vrot.slane %v11494, 4
    %v11496 = vadd.f32 %v11494, %v11495
    %v11497 = vrot.slane %v11496, 2
    %v11498 = vadd.f32 %v11496, %v11497
    %v11499 = vrot.slane %v11498, 1
    %v11500 = vadd.f32 %v11498, %v11499
    %s11501 = vtos %v11500
    %v11502 = vstv %s11501
    %11503 = vst [vmem:[#allocation10] sm:$0x1] %v11502
    // Predicated region
    $region26: #{tpu_custom_call.1} parent=1 // pred_check
      _
    $region27: #{tpu_custom_call.1} parent=1 // pred_check_branch
      %11505 = sbr.rel (0) target = $region29
    $region28: #{tpu_custom_call.1} parent=1 // pred_region
      %s11507 = ssub.s32 16, 16
      %11508 = vsyncadd [#allocation6], %s11507
      %s11510 = sshll.u32 [#allocation10], 4
      %s11511 = int_to_ptr.vmem [resolvable:$true] %s11510
      %11513 = dma.vmem_to_hbm [thread:$0]  %s11511, 16, %s3, [#allocation6]
    $region29: #{tpu_custom_call.1} parent=1 // pred_fallthru
      _
    // Predicated region
    $region30: #{tpu_custom_call.1} parent=1 // pred_check
      _
    $region31: #{tpu_custom_call.1} parent=1 // pred_check_branch
      %11515 = sbr.rel (0) target = $region33
    $region32: #{tpu_custom_call.1} parent=1 // pred_region
      %11516 = dma.done [#allocation6], 16
    $region33: #{tpu_custom_call.1} parent=1 // pred_fallthru
      _
    %11517 = vsyncpa [#allocation5], 1
    %11518 = vsyncpa [#allocation8], 1
    %11519 = vsyncpa [#allocation6], 1

</llo_original>
